<compile_context>
chip_gen: v7x
topology: tpu7x:2x2x1
jax: 0.10.0
libtpu: 0.0.40
codegen_flags: <defaults>
</compile_context>

<pallas_src>
import math
import functools

import jax
import jax.numpy as jnp
from jax import lax
from jax.experimental import pallas as pl
from jax.experimental.pallas import tpu as pltpu


def _layernorm(x, w, b, eps=1e-5):
    # x: (rows, C) f32; w, b: (1, C) f32.  Statistics kept in f32.
    mu = jnp.mean(x, axis=-1, keepdims=True)
    xc = x - mu
    var = jnp.mean(xc * xc, axis=-1, keepdims=True)
    inv = lax.rsqrt(var + eps)
    return xc * inv * w + b


def _gelu_tanh(x):
    # GELU(approximate='tanh'), computed in f32 (tanh goes to the EUP slot).
    c = math.sqrt(2.0 / math.pi)
    inner = x * (1.0 + 0.044715 * (x * x))
    return 0.5 * x * (1.0 + jnp.tanh(c * inner))


def block_kernel(n_head, tq, tk,
                 x_ref,
                 ln1w_ref, ln1b_ref,
                 wqkv_ref, bqkv_ref,
                 wo_ref, bo_ref,
                 ln2w_ref, ln2b_ref,
                 wfc_ref, bfc_ref,
                 wp2_ref, bp2_ref,
                 out_ref,
                 q_scr, kt_scr, v_scr, y_scr):
    T, C = x_ref.shape
    hd = C // n_head

    qi = pl.program_id(1)
    q_start = pl.multiple_of(qi * tq, tq)

    # ---------------- Once per batch element: LN1 + fused QKV into scratch ----------------
    # Single (T, C) @ (C, 3C) bf16 matmul (one MXU RHS-push sequence, one bias pass).
    @pl.when(qi == 0)
    def _():
        x_full = x_ref[...]                                                    # (T, C) f32
        h16 = _layernorm(x_full, ln1w_ref[...], ln1b_ref[...]).astype(jnp.bfloat16)
        qkv = jnp.dot(h16, wqkv_ref[...],
                      preferred_element_type=jnp.float32) + bqkv_ref[...]      # (T, 3C) f32
        q_scr[...] = qkv[:, 0:C].astype(jnp.bfloat16)          # Q (1/sqrt(hd) pre-folded)
        kt_scr[...] = jnp.transpose(qkv[:, C:2 * C]).astype(jnp.bfloat16)      # K^T (C, T)
        v_scr[...] = qkv[:, 2 * C:3 * C].astype(jnp.bfloat16)                  # V   (T, C)

    # ---------------- Attention for this query tile (flash-style causal KV tiling) --------
    x_q = x_ref[pl.ds(q_start, tq), :]                          # (tq, C) f32 residual
    q_tile = q_scr[pl.ds(q_start, tq), :]                       # (tq, C) bf16, pre-scaled

    row = q_start + lax.broadcasted_iota(jnp.int32, (tq, tk), 0)
    full_tiles = qi * (tq // tk)        # KV tiles entirely below this query tile (no mask)
    diag_tiles = tq // tk               # KV tiles overlapping the diagonal (masked)

    for hidx in range(n_head):                                  # static unroll over heads
        lo = hidx * hd
        qh = q_tile[:, lo:lo + hd]                              # (tq, hd) bf16

        def kv_step(kv_idx, carry, masked):
            m, l, acc = carry
            kv_start = pl.multiple_of(kv_idx * tk, tk)
            khT = kt_scr[lo:lo + hd, pl.ds(kv_start, tk)]       # (hd, tk) bf16
            vh = v_scr[pl.ds(kv_start, tk), lo:lo + hd]         # (tk, hd) bf16
            s = jnp.dot(qh, khT, preferred_element_type=jnp.float32)   # (tq, tk)
            if masked:
                col = kv_start + lax.broadcasted_iota(jnp.int32, (tq, tk), 1)
                s = jnp.where(row >= col, s, -1e30)             # finite mask (causal-safe)
            m_new = jnp.maximum(m, jnp.max(s, axis=-1, keepdims=True))
            alpha = jnp.exp(m - m_new)
            p = jnp.exp(s - m_new)                              # unnormalized (f32)
            l_new = alpha * l + jnp.sum(p, axis=-1, keepdims=True)
            acc_new = alpha * acc + jnp.dot(p.astype(jnp.bfloat16), vh,
                                            preferred_element_type=jnp.float32)
            return m_new, l_new, acc_new

        carry = (jnp.full((tq, 1), -1e30, jnp.float32),
                 jnp.zeros((tq, 1), jnp.float32),
                 jnp.zeros((tq, hd), jnp.float32))
        # Fully-visible KV tiles: no masking work at all.
        carry = lax.fori_loop(0, full_tiles, lambda i, c: kv_step(i, c, False), carry)
        # Diagonal KV tiles: masked; statically unrolled (usually 1 tile).
        for j in range(diag_tiles):
            carry = kv_step(full_tiles + j, carry, True)
        _, l, acc = carry

        yh = acc * pl.reciprocal(l, approx=True)                # deferred softmax norm (EUP)
        y_scr[:, lo:lo + hd] = yh.astype(jnp.bfloat16)          # stage head output

    # Single full-depth (K = C) output projection.
    att = jnp.dot(y_scr[...], wo_ref[...],
                  preferred_element_type=jnp.float32) + bo_ref[...]
    x1 = x_q + att

    # ---------------- MLP branch ----------------
    # TODO(synk): for large C on v7x (64 MiB VMEM), tile the 4C hidden dim here instead of
    # keeping wfc / wp2 fully resident.
    h2 = _layernorm(x1, ln2w_ref[...], ln2b_ref[...]).astype(jnp.bfloat16)
    ff = jnp.dot(h2, wfc_ref[...], preferred_element_type=jnp.float32) + bfc_ref[...]
    ff = _gelu_tanh(ff).astype(jnp.bfloat16)
    mlp = jnp.dot(ff, wp2_ref[...], preferred_element_type=jnp.float32) + bp2_ref[...]

    out_ref[...] = (x1 + mlp).astype(out_ref.dtype)


def block_forward(x, params, n_head, tq=None, tk=None):
    B, T, C = x.shape
    hd = C // n_head
    if tq is None:
        tq = min(T, 256)          # query-row tile (M dim for the MXU)
    if tk is None:
        tk = min(T, tq)           # KV tile
    assert T % tq == 0, "T must be divisible by the query tile size"
    assert tq % tk == 0, "query tile must be a multiple of the kv tile"
    assert tk % 128 == 0 or tk == T, "kv tile must be lane-aligned (multiple of 128) or == T"
    nq = T // tq

    (ln1w, ln1b, wqkv, bqkv, wo, bo, ln2w, ln2b, wfc, bfc, wp2, bp2) = params
    # Fold 1/sqrt(head_dim) into the Q columns of the QKV projection (one-time weight
    # transform; removes a per-step (tq, C) scale multiply from the kernel).
    scale = 1.0 / math.sqrt(hd)
    col_scale = jnp.concatenate([jnp.full((1, C), scale, jnp.float32),
                                 jnp.ones((1, 2 * C), jnp.float32)], axis=1)
    wqkv_s = (wqkv.astype(jnp.float32) * col_scale).astype(wqkv.dtype)
    bqkv_s = (bqkv * col_scale).astype(bqkv.dtype)
    params_s = (ln1w, ln1b, wqkv_s, bqkv_s, wo, bo, ln2w, ln2b, wfc, bfc, wp2, bp2)

    def resident(arr):
        # Weights/biases: full-array block with constant index_map -> resident in VMEM
        # across the whole grid (no re-DMA per step).
        # TODO(synk): on v7x (64 MiB VMEM) add pipeline_mode=pl.Buffered(1) to these specs
        # (constant blocks don't need double buffering) and/or halve tq for large C.
        return pl.BlockSpec(arr.shape, lambda b, qi: (0, 0))

    kernel = functools.partial(block_kernel, n_head, tq, tk)
    return pl.pallas_call(
        kernel,
        out_shape=jax.ShapeDtypeStruct((B, T, C), x.dtype),
        grid_spec=pltpu.PrefetchScalarGridSpec(
            num_scalar_prefetch=0,
            grid=(B, nq),
            in_specs=[pl.BlockSpec((None, T, C), lambda b, qi: (b, 0, 0))]
                     + [resident(a) for a in params_s],
            out_specs=pl.BlockSpec((None, tq, C), lambda b, qi: (b, qi, 0)),
            scratch_shapes=[
                pltpu.VMEM((T, C), jnp.bfloat16),    # Q (pre-scaled), persists across qi
                pltpu.VMEM((C, T), jnp.bfloat16),    # K^T
                pltpu.VMEM((T, C), jnp.bfloat16),    # V
                pltpu.VMEM((tq, C), jnp.bfloat16),   # per-head attention staging (pre-wo)
            ]),
        compiler_params=pltpu.CompilerParams(
            # qi axis carries the K/V-scratch reuse dependency -> "arbitrary";
            # batch axis stays "parallel" for megacore / 2-TC sharding.
            dimension_semantics=("parallel", "arbitrary"),
            # Raise the scoped VMEM budget (defaults: 16 MiB v5e / 32 MiB v6e,v7x).
            vmem_limit_bytes=64 * 1024 * 1024),
        # Residual update with identical shape/dtype: alias x -> out only when each batch
        # is a single query tile (no grid step can re-read rows already written back).
        input_output_aliases=({0: 0} if nq == 1 else {}),
    )(x, *params_s)


def make_params(key, n_embd):
    C = n_embd
    ks = jax.random.split(key, 8)
    s = 0.02
    f32, bf16 = jnp.float32, jnp.bfloat16
    ln1w = jnp.ones((1, C), f32)
    ln1b = jnp.zeros((1, C), f32)
    ln2w = jnp.ones((1, C), f32)
    ln2b = jnp.zeros((1, C), f32)
    # Matmul weights stored bf16 (MXU peak + half the DMA/VMEM bytes); biases f32.
    wqkv = (s * jax.random.normal(ks[0], (C, 3 * C), f32)).astype(bf16)
    bqkv = s * jax.random.normal(ks[1], (1, 3 * C), f32)
    wo = (s * jax.random.normal(ks[2], (C, C), f32)).astype(bf16)
    bo = s * jax.random.normal(ks[3], (1, C), f32)
    wfc = (s * jax.random.normal(ks[4], (C, 4 * C), f32)).astype(bf16)
    bfc = s * jax.random.normal(ks[5], (1, 4 * C), f32)
    wp2 = (s * jax.random.normal(ks[6], (4 * C, C), f32)).astype(bf16)
    bp2 = s * jax.random.normal(ks[7], (1, C), f32)
    return (ln1w, ln1b, wqkv, bqkv, wo, bo, ln2w, ln2b, wfc, bfc, wp2, bp2)


def block_reference(x, params, n_head):
    # Pure-JAX f32 reference (weights up-cast to f32).
    (ln1w, ln1b, wqkv, bqkv, wo, bo, ln2w, ln2b, wfc, bfc, wp2, bp2) = params
    wqkv, wo, wfc, wp2 = (w.astype(jnp.float32) for w in (wqkv, wo, wfc, wp2))
    B, T, C = x.shape
    hd = C // n_head

    def ln(z, w, b):
        mu = jnp.mean(z, -1, keepdims=True)
        var = jnp.mean((z - mu) ** 2, -1, keepdims=True)
        return (z - mu) / jnp.sqrt(var + 1e-5) * w + b

    h = ln(x, ln1w, ln1b)
    qkv = h @ wqkv + bqkv
    q, k, v = jnp.split(qkv, 3, axis=-1)
    q = q.reshape(B, T, n_head, hd).transpose(0, 2, 1, 3)
    k = k.reshape(B, T, n_head, hd).transpose(0, 2, 1, 3)
    v = v.reshape(B, T, n_head, hd).transpose(0, 2, 1, 3)
    s = jnp.einsum('bhqd,bhkd->bhqk', q, k) / math.sqrt(hd)
    mask = jnp.tril(jnp.ones((T, T), bool))
    s = jnp.where(mask, s, -jnp.inf)
    p = jax.nn.softmax(s, axis=-1)
    y = jnp.einsum('bhqk,bhkd->bhqd', p, v).transpose(0, 2, 1, 3).reshape(B, T, C)
    x = x + (y @ wo + bo)

    h2 = ln(x, ln2w, ln2b)
    ff = h2 @ wfc + bfc
    c = math.sqrt(2.0 / math.pi)
    ff = 0.5 * ff * (1.0 + jnp.tanh(c * (ff + 0.044715 * ff ** 3)))
    x = x + (ff @ wp2 + bp2)
    return x


if __name__ == "__main__":
    # Small config: batch=2, seq=256, n_embd=128, n_head=4 (head_dim=32)
    B, T, C, n_head = 2, 256, 128, 4
    key = jax.random.PRNGKey(0)
    kx, kp = jax.random.split(key)
    x = jax.random.normal(kx, (B, T, C), jnp.float32)
    params = make_params(kp, C)

    ref = block_reference(x, params, n_head)

    # Multi-tile config first: nq=2, 2 KV tiles -> exercises the per-batch K/V scratch reuse,
    # the unmasked fori_loop tiles and the masked diagonal tile.  (nq > 1 => no aliasing,
    # so x stays valid for the second call.)
    out_tiled = jax.block_until_ready(block_forward(x, params, n_head, tq=128, tk=128))
    err_tiled = jnp.max(jnp.abs(out_tiled - ref))
    assert out_tiled.shape == (B, T, C)
    assert jnp.allclose(out_tiled, ref, atol=2e-2, rtol=2e-2), f"max err {err_tiled}"

    # Default single-tile config (nq == 1 -> x/out aliased).  Run last since it donates x.
    out = jax.block_until_ready(block_forward(x, params, n_head))
    err = jnp.max(jnp.abs(out - ref))
    assert out.shape == (B, T, C)
    assert jnp.allclose(out, ref, atol=2e-2, rtol=2e-2), f"max err {err}"
    print("KERNEL_OK")
</pallas_src>

<mosaic_0001>
module attributes {stable_mosaic.version = 11 : i64} {
  func.func @block_kernel(%arg0: i32, %arg1: i32, %arg2: memref<1x256x128xf32, #tpu.memory_space<vmem>>, %arg3: memref<1x128xf32, #tpu.memory_space<vmem>>, %arg4: memref<1x128xf32, #tpu.memory_space<vmem>>, %arg5: memref<128x384xbf16, #tpu.memory_space<vmem>>, %arg6: memref<1x384xf32, #tpu.memory_space<vmem>>, %arg7: memref<128x128xbf16, #tpu.memory_space<vmem>>, %arg8: memref<1x128xf32, #tpu.memory_space<vmem>>, %arg9: memref<1x128xf32, #tpu.memory_space<vmem>>, %arg10: memref<1x128xf32, #tpu.memory_space<vmem>>, %arg11: memref<128x512xbf16, #tpu.memory_space<vmem>>, %arg12: memref<1x512xf32, #tpu.memory_space<vmem>>, %arg13: memref<512x128xbf16, #tpu.memory_space<vmem>>, %arg14: memref<1x128xf32, #tpu.memory_space<vmem>>, %arg15: memref<1x128x128xf32, #tpu.memory_space<vmem>>, %arg16: memref<256x128xbf16, #tpu.memory_space<vmem>>, %arg17: memref<128x256xbf16, #tpu.memory_space<vmem>>, %arg18: memref<256x128xbf16, #tpu.memory_space<vmem>>, %arg19: memref<128x128xbf16, #tpu.memory_space<vmem>>) attributes {dimension_semantics = [#tpu.dimension_semantics<parallel>, #tpu.dimension_semantics<arbitrary>], iteration_bounds = array<i64: 2, 2>, scalar_prefetch = 0 : i64, scratch_operands = 4 : i64, tpu.core_type = #tpu.core_type<tc>, window_params = [{transform_indices = @transform_0, window_bounds = array<i64: 1, 256, 128>}, {pipeline_mode = #tpu.pipeline_mode<synchronous>, transform_indices = @transform_1, window_bounds = array<i64: 1, 128>}, {pipeline_mode = #tpu.pipeline_mode<synchronous>, transform_indices = @transform_2, window_bounds = array<i64: 1, 128>}, {pipeline_mode = #tpu.pipeline_mode<synchronous>, transform_indices = @transform_3, window_bounds = array<i64: 128, 384>}, {pipeline_mode = #tpu.pipeline_mode<synchronous>, transform_indices = @transform_4, window_bounds = array<i64: 1, 384>}, {pipeline_mode = #tpu.pipeline_mode<synchronous>, transform_indices = @transform_5, window_bounds = array<i64: 128, 128>}, {pipeline_mode = #tpu.pipeline_mode<synchronous>, transform_indices = @transform_6, window_bounds = array<i64: 1, 128>}, {pipeline_mode = #tpu.pipeline_mode<synchronous>, transform_indices = @transform_7, window_bounds = array<i64: 1, 128>}, {pipeline_mode = #tpu.pipeline_mode<synchronous>, transform_indices = @transform_8, window_bounds = array<i64: 1, 128>}, {pipeline_mode = #tpu.pipeline_mode<synchronous>, transform_indices = @transform_9, window_bounds = array<i64: 128, 512>}, {pipeline_mode = #tpu.pipeline_mode<synchronous>, transform_indices = @transform_10, window_bounds = array<i64: 1, 512>}, {pipeline_mode = #tpu.pipeline_mode<synchronous>, transform_indices = @transform_11, window_bounds = array<i64: 512, 128>}, {pipeline_mode = #tpu.pipeline_mode<synchronous>, transform_indices = @transform_12, window_bounds = array<i64: 1, 128>}, {transform_indices = @transform_13, window_bounds = array<i64: 1, 128, 128>}]} {
    %c128_i32 = arith.constant 128 : i32
    %0 = arith.muli %arg1, %c128_i32 : i32
    %1 = tpu.assume_multiple %0, 128 : i32
    %c0_i32 = arith.constant 0 : i32
    %2 = arith.cmpi eq, %arg1, %c0_i32 : i32
    %3 = arith.extui %2 : i1 to i32
    %c0_i32_0 = arith.constant 0 : i32
    %4 = arith.cmpi ne, %3, %c0_i32_0 : i32
    scf.if %4 {
      %c0_97 = arith.constant 0 : index
      %c0_98 = arith.constant 0 : index
      %c0_99 = arith.constant 0 : index
      %245 = vector.load %arg2[%c0_97, %c0_98, %c0_99] : memref<1x256x128xf32, #tpu.memory_space<vmem>>, vector<1x256x128xf32>
      %246 = vector.shape_cast %245 : vector<1x256x128xf32> to vector<256x128xf32>
      %c0_100 = arith.constant 0 : index
      %c0_101 = arith.constant 0 : index
      %247 = vector.load %arg3[%c0_100, %c0_101] : memref<1x128xf32, #tpu.memory_space<vmem>>, vector<1x128xf32>
      %c0_102 = arith.constant 0 : index
      %c0_103 = arith.constant 0 : index
      %248 = vector.load %arg4[%c0_102, %c0_103] : memref<1x128xf32, #tpu.memory_space<vmem>>, vector<1x128xf32>
      %cst_104 = arith.constant dense<0.000000e+00> : vector<256xf32>
      %249 = vector.multi_reduction <add>, %246, %cst_104 [1] : vector<256x128xf32> to vector<256xf32>
      %250 = vector.shape_cast %249 : vector<256xf32> to vector<256x1xf32>
      %cst_105 = arith.constant 1.280000e+02 : f32
      %251 = vector.broadcast %cst_105 : f32 to vector<256x1xf32>
      %252 = arith.divf %250, %251 : vector<256x1xf32>
      %253 = vector.broadcast %252 : vector<256x1xf32> to vector<256x128xf32>
      %254 = arith.subf %246, %253 : vector<256x128xf32>
      %255 = arith.mulf %254, %254 : vector<256x128xf32>
      %cst_106 = arith.constant dense<0.000000e+00> : vector<256xf32>
      %256 = vector.multi_reduction <add>, %255, %cst_106 [1] : vector<256x128xf32> to vector<256xf32>
      %257 = vector.shape_cast %256 : vector<256xf32> to vector<256x1xf32>
      %cst_107 = arith.constant 1.280000e+02 : f32
      %258 = vector.broadcast %cst_107 : f32 to vector<256x1xf32>
      %259 = arith.divf %257, %258 : vector<256x1xf32>
      %cst_108 = arith.constant 9.99999974E-6 : f32
      %260 = vector.broadcast %cst_108 : f32 to vector<256x1xf32>
      %261 = arith.addf %259, %260 : vector<256x1xf32>
      %262 = math.rsqrt %261 : vector<256x1xf32>
      %263 = vector.broadcast %262 : vector<256x1xf32> to vector<256x128xf32>
      %264 = arith.mulf %254, %263 : vector<256x128xf32>
      %265 = vector.broadcast %247 : vector<1x128xf32> to vector<256x128xf32>
      %266 = arith.mulf %264, %265 : vector<256x128xf32>
      %267 = vector.broadcast %248 : vector<1x128xf32> to vector<256x128xf32>
      %268 = arith.addf %266, %267 : vector<256x128xf32>
      %269 = arith.truncf %268 : vector<256x128xf32> to vector<256x128xbf16>
      %c0_109 = arith.constant 0 : index
      %c0_110 = arith.constant 0 : index
      %270 = vector.load %arg5[%c0_109, %c0_110] : memref<128x384xbf16, #tpu.memory_space<vmem>>, vector<128x384xbf16>
      %cst_111 = arith.constant dense<0.000000e+00> : vector<256x384xf32>
      %271 = tpu.matmul %269, %270, %cst_111 {dimension_numbers = #tpu.dot_dimension_numbers<[1], [0], [0], [1], [0, 0, 1, 1], [], []>} : vector<256x128xbf16>, vector<128x384xbf16>, vector<256x384xf32> -> vector<256x384xf32>
      %c0_112 = arith.constant 0 : index
      %c0_113 = arith.constant 0 : index
      %272 = vector.load %arg6[%c0_112, %c0_113] : memref<1x384xf32, #tpu.memory_space<vmem>>, vector<1x384xf32>
      %273 = vector.broadcast %272 : vector<1x384xf32> to vector<256x384xf32>
      %274 = arith.addf %271, %273 : vector<256x384xf32>
      %275 = vector.extract_strided_slice %274 {offsets = [0, 0], sizes = [256, 128], strides = [1, 1]} : vector<256x384xf32> to vector<256x128xf32>
      %276 = arith.truncf %275 : vector<256x128xf32> to vector<256x128xbf16>
      %c0_114 = arith.constant 0 : index
      %c0_115 = arith.constant 0 : index
      %277 = vector.load %arg16[%c0_114, %c0_115] : memref<256x128xbf16, #tpu.memory_space<vmem>>, vector<256x128xbf16>
      tpu.vector_store %arg16[%c0_114, %c0_115], %276 {strides = array<i32>} : memref<256x128xbf16, #tpu.memory_space<vmem>>, vector<256x128xbf16>,
      %278 = vector.extract_strided_slice %274 {offsets = [0, 128], sizes = [256, 128], strides = [1, 1]} : vector<256x384xf32> to vector<256x128xf32>
      %279 = tpu.transpose %278, [1, 0] : vector<256x128xf32> -> vector<128x256xf32>
      %280 = arith.truncf %279 : vector<128x256xf32> to vector<128x256xbf16>
      %c0_116 = arith.constant 0 : index
      %c0_117 = arith.constant 0 : index
      %281 = vector.load %arg17[%c0_116, %c0_117] : memref<128x256xbf16, #tpu.memory_space<vmem>>, vector<128x256xbf16>
      tpu.vector_store %arg17[%c0_116, %c0_117], %280 {strides = array<i32>} : memref<128x256xbf16, #tpu.memory_space<vmem>>, vector<128x256xbf16>,
      %282 = vector.extract_strided_slice %274 {offsets = [0, 256], sizes = [256, 128], strides = [1, 1]} : vector<256x384xf32> to vector<256x128xf32>
      %283 = arith.truncf %282 : vector<256x128xf32> to vector<256x128xbf16>
      %c0_118 = arith.constant 0 : index
      %c0_119 = arith.constant 0 : index
      %284 = vector.load %arg18[%c0_118, %c0_119] : memref<256x128xbf16, #tpu.memory_space<vmem>>, vector<256x128xbf16>
      tpu.vector_store %arg18[%c0_118, %c0_119], %283 {strides = array<i32>} : memref<256x128xbf16, #tpu.memory_space<vmem>>, vector<256x128xbf16>,
    } else {
    }
    %c0 = arith.constant 0 : index
    %5 = arith.index_cast %1 : i32 to index
    %c0_1 = arith.constant 0 : index
    %6 = vector.load %arg2[%c0, %5, %c0_1] : memref<1x256x128xf32, #tpu.memory_space<vmem>>, vector<1x128x128xf32>
    %7 = vector.shape_cast %6 : vector<1x128x128xf32> to vector<128x128xf32>
    %8 = arith.index_cast %1 : i32 to index
    %c0_2 = arith.constant 0 : index
    %9 = vector.load %arg16[%8, %c0_2] : memref<256x128xbf16, #tpu.memory_space<vmem>>, vector<128x128xbf16>
    %10 = tpu.iota {dimensions = array<i32: 0>} : vector<128x128xi32>
    %11 = vector.broadcast %1 : i32 to vector<128x128xi32>
    %12 = arith.addi %11, %10 : vector<128x128xi32>
    %c1_i32 = arith.constant 1 : i32
    %13 = arith.muli %arg1, %c1_i32 : i32
    %14 = vector.extract_strided_slice %9 {offsets = [0, 0], sizes = [128, 32], strides = [1, 1]} : vector<128x128xbf16> to vector<128x32xbf16>
    %cst = arith.constant -1.000000e+30 : f32
    %15 = vector.broadcast %cst : f32 to vector<128x1xf32>
    %cst_3 = arith.constant 0.000000e+00 : f32
    %16 = vector.broadcast %cst_3 : f32 to vector<128x1xf32>
    %cst_4 = arith.constant 0.000000e+00 : f32
    %17 = vector.broadcast %cst_4 : f32 to vector<128x32xf32>
    %c0_i32_5 = arith.constant 0 : i32
    %18 = arith.subi %13, %c0_i32_5 : i32
    %19 = arith.addi %c0_i32_5, %18 : i32
    %c1_i32_6 = arith.constant 1 : i32
    %20:3 = scf.for %arg20 = %c0_i32_5 to %19 step %c1_i32_6 iter_args(%arg21 = %15, %arg22 = %16, %arg23 = %17) -> (vector<128x1xf32>, vector<128x1xf32>, vector<128x32xf32>)  : i32 {
      %c128_i32_97 = arith.constant 128 : i32
      %245 = arith.muli %arg20, %c128_i32_97 : i32
      %246 = tpu.assume_multiple %245, 128 : i32
      %c0_98 = arith.constant 0 : index
      %247 = arith.index_cast %246 : i32 to index
      %248 = vector.load %arg17[%c0_98, %247] : memref<128x256xbf16, #tpu.memory_space<vmem>>, vector<32x128xbf16>
      %249 = arith.index_cast %246 : i32 to index
      %c0_99 = arith.constant 0 : index
      %250 = vector.load %arg18[%249, %c0_99] : memref<256x128xbf16, #tpu.memory_space<vmem>>, vector<128x32xbf16>
      %cst_100 = arith.constant dense<0.000000e+00> : vector<128x128xf32>
      %251 = tpu.matmul %14, %248, %cst_100 {dimension_numbers = #tpu.dot_dimension_numbers<[1], [0], [0], [1], [0, 0, 1, 1], [], []>} : vector<128x32xbf16>, vector<32x128xbf16>, vector<128x128xf32> -> vector<128x128xf32>
      %cst_101 = arith.constant dense<0xFF800000> : vector<128xf32>
      %252 = vector.multi_reduction <maximumf>, %251, %cst_101 [1] : vector<128x128xf32> to vector<128xf32>
      %253 = vector.shape_cast %252 : vector<128xf32> to vector<128x1xf32>
      %254 = arith.maximumf %arg21, %253 : vector<128x1xf32>
      %255 = arith.subf %arg21, %254 : vector<128x1xf32>
      %256 = math.exp %255 : vector<128x1xf32>
      %257 = vector.broadcast %254 : vector<128x1xf32> to vector<128x128xf32>
      %258 = arith.subf %251, %257 : vector<128x128xf32>
      %259 = math.exp %258 : vector<128x128xf32>
      %260 = arith.mulf %256, %arg22 : vector<128x1xf32>
      %cst_102 = arith.constant dense<0.000000e+00> : vector<128xf32>
      %261 = vector.multi_reduction <add>, %259, %cst_102 [1] : vector<128x128xf32> to vector<128xf32>
      %262 = vector.shape_cast %261 : vector<128xf32> to vector<128x1xf32>
      %263 = arith.addf %260, %262 : vector<128x1xf32>
      %264 = vector.broadcast %256 : vector<128x1xf32> to vector<128x32xf32>
      %265 = arith.mulf %264, %arg23 : vector<128x32xf32>
      %266 = arith.truncf %259 : vector<128x128xf32> to vector<128x128xbf16>
      %cst_103 = arith.constant dense<0.000000e+00> : vector<128x32xf32>
      %267 = tpu.matmul %266, %250, %cst_103 {dimension_numbers = #tpu.dot_dimension_numbers<[1], [0], [0], [1], [0, 0, 1, 1], [], []>} : vector<128x128xbf16>, vector<128x32xbf16>, vector<128x32xf32> -> vector<128x32xf32>
      %268 = arith.addf %265, %267 : vector<128x32xf32>
      scf.yield %254, %263, %268 : vector<128x1xf32>, vector<128x1xf32>, vector<128x32xf32>
    }
    %c0_i32_7 = arith.constant 0 : i32
    %21 = arith.addi %13, %c0_i32_7 : i32
    %c128_i32_8 = arith.constant 128 : i32
    %22 = arith.muli %21, %c128_i32_8 : i32
    %23 = tpu.assume_multiple %22, 128 : i32
    %c0_9 = arith.constant 0 : index
    %24 = arith.index_cast %23 : i32 to index
    %25 = vector.load %arg17[%c0_9, %24] : memref<128x256xbf16, #tpu.memory_space<vmem>>, vector<32x128xbf16>
    %26 = arith.index_cast %23 : i32 to index
    %c0_10 = arith.constant 0 : index
    %27 = vector.load %arg18[%26, %c0_10] : memref<256x128xbf16, #tpu.memory_space<vmem>>, vector<128x32xbf16>
    %cst_11 = arith.constant dense<0.000000e+00> : vector<128x128xf32>
    %28 = tpu.matmul %14, %25, %cst_11 {dimension_numbers = #tpu.dot_dimension_numbers<[1], [0], [0], [1], [0, 0, 1, 1], [], []>} : vector<128x32xbf16>, vector<32x128xbf16>, vector<128x128xf32> -> vector<128x128xf32>
    %29 = tpu.iota {dimensions = array<i32: 1>} : vector<128x128xi32>
    %30 = vector.broadcast %23 : i32 to vector<128x128xi32>
    %31 = arith.addi %30, %29 : vector<128x128xi32>
    %32 = arith.cmpi sge, %12, %31 : vector<128x128xi32>
    %cst_12 = arith.constant -1.000000e+30 : f32
    %33 = vector.broadcast %cst_12 : f32 to vector<128x128xf32>
    %34 = arith.select %32, %28, %33 : vector<128x128xi1>, vector<128x128xf32>
    %cst_13 = arith.constant dense<0xFF800000> : vector<128xf32>
    %35 = vector.multi_reduction <maximumf>, %34, %cst_13 [1] : vector<128x128xf32> to vector<128xf32>
    %36 = vector.shape_cast %35 : vector<128xf32> to vector<128x1xf32>
    %37 = arith.maximumf %20#0, %36 : vector<128x1xf32>
    %38 = arith.subf %20#0, %37 : vector<128x1xf32>
    %39 = math.exp %38 : vector<128x1xf32>
    %40 = vector.broadcast %37 : vector<128x1xf32> to vector<128x128xf32>
    %41 = arith.subf %34, %40 : vector<128x128xf32>
    %42 = math.exp %41 : vector<128x128xf32>
    %43 = arith.mulf %39, %20#1 : vector<128x1xf32>
    %cst_14 = arith.constant dense<0.000000e+00> : vector<128xf32>
    %44 = vector.multi_reduction <add>, %42, %cst_14 [1] : vector<128x128xf32> to vector<128xf32>
    %45 = vector.shape_cast %44 : vector<128xf32> to vector<128x1xf32>
    %46 = arith.addf %43, %45 : vector<128x1xf32>
    %47 = vector.broadcast %39 : vector<128x1xf32> to vector<128x32xf32>
    %48 = arith.mulf %47, %20#2 : vector<128x32xf32>
    %49 = arith.truncf %42 : vector<128x128xf32> to vector<128x128xbf16>
    %cst_15 = arith.constant dense<0.000000e+00> : vector<128x32xf32>
    %50 = tpu.matmul %49, %27, %cst_15 {dimension_numbers = #tpu.dot_dimension_numbers<[1], [0], [0], [1], [0, 0, 1, 1], [], []>} : vector<128x128xbf16>, vector<128x32xbf16>, vector<128x32xf32> -> vector<128x32xf32>
    %51 = arith.addf %48, %50 : vector<128x32xf32>
    %52 = tpu.reciprocal %46 {approx = true} : vector<128x1xf32> -> vector<128x1xf32>
    %53 = vector.broadcast %52 : vector<128x1xf32> to vector<128x32xf32>
    %54 = arith.mulf %51, %53 : vector<128x32xf32>
    %55 = arith.truncf %54 : vector<128x32xf32> to vector<128x32xbf16>
    %c0_16 = arith.constant 0 : index
    %c0_17 = arith.constant 0 : index
    %56 = vector.load %arg19[%c0_16, %c0_17] : memref<128x128xbf16, #tpu.memory_space<vmem>>, vector<128x32xbf16>
    tpu.vector_store %arg19[%c0_16, %c0_17], %55 {strides = array<i32>} : memref<128x128xbf16, #tpu.memory_space<vmem>>, vector<128x32xbf16>,
    %57 = vector.extract_strided_slice %9 {offsets = [0, 32], sizes = [128, 32], strides = [1, 1]} : vector<128x128xbf16> to vector<128x32xbf16>
    %cst_18 = arith.constant -1.000000e+30 : f32
    %58 = vector.broadcast %cst_18 : f32 to vector<128x1xf32>
    %cst_19 = arith.constant 0.000000e+00 : f32
    %59 = vector.broadcast %cst_19 : f32 to vector<128x1xf32>
    %cst_20 = arith.constant 0.000000e+00 : f32
    %60 = vector.broadcast %cst_20 : f32 to vector<128x32xf32>
    %c0_i32_21 = arith.constant 0 : i32
    %61 = arith.subi %13, %c0_i32_21 : i32
    %62 = arith.addi %c0_i32_21, %61 : i32
    %c1_i32_22 = arith.constant 1 : i32
    %63:3 = scf.for %arg20 = %c0_i32_21 to %62 step %c1_i32_22 iter_args(%arg21 = %58, %arg22 = %59, %arg23 = %60) -> (vector<128x1xf32>, vector<128x1xf32>, vector<128x32xf32>)  : i32 {
      %c128_i32_97 = arith.constant 128 : i32
      %245 = arith.muli %arg20, %c128_i32_97 : i32
      %246 = tpu.assume_multiple %245, 128 : i32
      %c32_98 = arith.constant 32 : index
      %247 = arith.index_cast %246 : i32 to index
      %248 = vector.load %arg17[%c32_98, %247] : memref<128x256xbf16, #tpu.memory_space<vmem>>, vector<32x128xbf16>
      %249 = arith.index_cast %246 : i32 to index
      %c32_99 = arith.constant 32 : index
      %250 = vector.load %arg18[%249, %c32_99] : memref<256x128xbf16, #tpu.memory_space<vmem>>, vector<128x32xbf16>
      %cst_100 = arith.constant dense<0.000000e+00> : vector<128x128xf32>
      %251 = tpu.matmul %57, %248, %cst_100 {dimension_numbers = #tpu.dot_dimension_numbers<[1], [0], [0], [1], [0, 0, 1, 1], [], []>} : vector<128x32xbf16>, vector<32x128xbf16>, vector<128x128xf32> -> vector<128x128xf32>
      %cst_101 = arith.constant dense<0xFF800000> : vector<128xf32>
      %252 = vector.multi_reduction <maximumf>, %251, %cst_101 [1] : vector<128x128xf32> to vector<128xf32>
      %253 = vector.shape_cast %252 : vector<128xf32> to vector<128x1xf32>
      %254 = arith.maximumf %arg21, %253 : vector<128x1xf32>
      %255 = arith.subf %arg21, %254 : vector<128x1xf32>
      %256 = math.exp %255 : vector<128x1xf32>
      %257 = vector.broadcast %254 : vector<128x1xf32> to vector<128x128xf32>
      %258 = arith.subf %251, %257 : vector<128x128xf32>
      %259 = math.exp %258 : vector<128x128xf32>
      %260 = arith.mulf %256, %arg22 : vector<128x1xf32>
      %cst_102 = arith.constant dense<0.000000e+00> : vector<128xf32>
      %261 = vector.multi_reduction <add>, %259, %cst_102 [1] : vector<128x128xf32> to vector<128xf32>
      %262 = vector.shape_cast %261 : vector<128xf32> to vector<128x1xf32>
      %263 = arith.addf %260, %262 : vector<128x1xf32>
      %264 = vector.broadcast %256 : vector<128x1xf32> to vector<128x32xf32>
      %265 = arith.mulf %264, %arg23 : vector<128x32xf32>
      %266 = arith.truncf %259 : vector<128x128xf32> to vector<128x128xbf16>
      %cst_103 = arith.constant dense<0.000000e+00> : vector<128x32xf32>
      %267 = tpu.matmul %266, %250, %cst_103 {dimension_numbers = #tpu.dot_dimension_numbers<[1], [0], [0], [1], [0, 0, 1, 1], [], []>} : vector<128x128xbf16>, vector<128x32xbf16>, vector<128x32xf32> -> vector<128x32xf32>
      %268 = arith.addf %265, %267 : vector<128x32xf32>
      scf.yield %254, %263, %268 : vector<128x1xf32>, vector<128x1xf32>, vector<128x32xf32>
    }
    %c0_i32_23 = arith.constant 0 : i32
    %64 = arith.addi %13, %c0_i32_23 : i32
    %c128_i32_24 = arith.constant 128 : i32
    %65 = arith.muli %64, %c128_i32_24 : i32
    %66 = tpu.assume_multiple %65, 128 : i32
    %c32 = arith.constant 32 : index
    %67 = arith.index_cast %66 : i32 to index
    %68 = vector.load %arg17[%c32, %67] : memref<128x256xbf16, #tpu.memory_space<vmem>>, vector<32x128xbf16>
    %69 = arith.index_cast %66 : i32 to index
    %c32_25 = arith.constant 32 : index
    %70 = vector.load %arg18[%69, %c32_25] : memref<256x128xbf16, #tpu.memory_space<vmem>>, vector<128x32xbf16>
    %cst_26 = arith.constant dense<0.000000e+00> : vector<128x128xf32>
    %71 = tpu.matmul %57, %68, %cst_26 {dimension_numbers = #tpu.dot_dimension_numbers<[1], [0], [0], [1], [0, 0, 1, 1], [], []>} : vector<128x32xbf16>, vector<32x128xbf16>, vector<128x128xf32> -> vector<128x128xf32>
    %72 = tpu.iota {dimensions = array<i32: 1>} : vector<128x128xi32>
    %73 = vector.broadcast %66 : i32 to vector<128x128xi32>
    %74 = arith.addi %73, %72 : vector<128x128xi32>
    %75 = arith.cmpi sge, %12, %74 : vector<128x128xi32>
    %cst_27 = arith.constant -1.000000e+30 : f32
    %76 = vector.broadcast %cst_27 : f32 to vector<128x128xf32>
    %77 = arith.select %75, %71, %76 : vector<128x128xi1>, vector<128x128xf32>
    %cst_28 = arith.constant dense<0xFF800000> : vector<128xf32>
    %78 = vector.multi_reduction <maximumf>, %77, %cst_28 [1] : vector<128x128xf32> to vector<128xf32>
    %79 = vector.shape_cast %78 : vector<128xf32> to vector<128x1xf32>
    %80 = arith.maximumf %63#0, %79 : vector<128x1xf32>
    %81 = arith.subf %63#0, %80 : vector<128x1xf32>
    %82 = math.exp %81 : vector<128x1xf32>
    %83 = vector.broadcast %80 : vector<128x1xf32> to vector<128x128xf32>
    %84 = arith.subf %77, %83 : vector<128x128xf32>
    %85 = math.exp %84 : vector<128x128xf32>
    %86 = arith.mulf %82, %63#1 : vector<128x1xf32>
    %cst_29 = arith.constant dense<0.000000e+00> : vector<128xf32>
    %87 = vector.multi_reduction <add>, %85, %cst_29 [1] : vector<128x128xf32> to vector<128xf32>
    %88 = vector.shape_cast %87 : vector<128xf32> to vector<128x1xf32>
    %89 = arith.addf %86, %88 : vector<128x1xf32>
    %90 = vector.broadcast %82 : vector<128x1xf32> to vector<128x32xf32>
    %91 = arith.mulf %90, %63#2 : vector<128x32xf32>
    %92 = arith.truncf %85 : vector<128x128xf32> to vector<128x128xbf16>
    %cst_30 = arith.constant dense<0.000000e+00> : vector<128x32xf32>
    %93 = tpu.matmul %92, %70, %cst_30 {dimension_numbers = #tpu.dot_dimension_numbers<[1], [0], [0], [1], [0, 0, 1, 1], [], []>} : vector<128x128xbf16>, vector<128x32xbf16>, vector<128x32xf32> -> vector<128x32xf32>
    %94 = arith.addf %91, %93 : vector<128x32xf32>
    %95 = tpu.reciprocal %89 {approx = true} : vector<128x1xf32> -> vector<128x1xf32>
    %96 = vector.broadcast %95 : vector<128x1xf32> to vector<128x32xf32>
    %97 = arith.mulf %94, %96 : vector<128x32xf32>
    %98 = arith.truncf %97 : vector<128x32xf32> to vector<128x32xbf16>
    %c0_31 = arith.constant 0 : index
    %c32_32 = arith.constant 32 : index
    %99 = vector.load %arg19[%c0_31, %c32_32] : memref<128x128xbf16, #tpu.memory_space<vmem>>, vector<128x32xbf16>
    tpu.vector_store %arg19[%c0_31, %c32_32], %98 {strides = array<i32>} : memref<128x128xbf16, #tpu.memory_space<vmem>>, vector<128x32xbf16>,
    %100 = vector.extract_strided_slice %9 {offsets = [0, 64], sizes = [128, 32], strides = [1, 1]} : vector<128x128xbf16> to vector<128x32xbf16>
    %cst_33 = arith.constant -1.000000e+30 : f32
    %101 = vector.broadcast %cst_33 : f32 to vector<128x1xf32>
    %cst_34 = arith.constant 0.000000e+00 : f32
    %102 = vector.broadcast %cst_34 : f32 to vector<128x1xf32>
    %cst_35 = arith.constant 0.000000e+00 : f32
    %103 = vector.broadcast %cst_35 : f32 to vector<128x32xf32>
    %c0_i32_36 = arith.constant 0 : i32
    %104 = arith.subi %13, %c0_i32_36 : i32
    %105 = arith.addi %c0_i32_36, %104 : i32
    %c1_i32_37 = arith.constant 1 : i32
    %106:3 = scf.for %arg20 = %c0_i32_36 to %105 step %c1_i32_37 iter_args(%arg21 = %101, %arg22 = %102, %arg23 = %103) -> (vector<128x1xf32>, vector<128x1xf32>, vector<128x32xf32>)  : i32 {
      %c128_i32_97 = arith.constant 128 : i32
      %245 = arith.muli %arg20, %c128_i32_97 : i32
      %246 = tpu.assume_multiple %245, 128 : i32
      %c64_98 = arith.constant 64 : index
      %247 = arith.index_cast %246 : i32 to index
      %248 = vector.load %arg17[%c64_98, %247] : memref<128x256xbf16, #tpu.memory_space<vmem>>, vector<32x128xbf16>
      %249 = arith.index_cast %246 : i32 to index
      %c64_99 = arith.constant 64 : index
      %250 = vector.load %arg18[%249, %c64_99] : memref<256x128xbf16, #tpu.memory_space<vmem>>, vector<128x32xbf16>
      %cst_100 = arith.constant dense<0.000000e+00> : vector<128x128xf32>
      %251 = tpu.matmul %100, %248, %cst_100 {dimension_numbers = #tpu.dot_dimension_numbers<[1], [0], [0], [1], [0, 0, 1, 1], [], []>} : vector<128x32xbf16>, vector<32x128xbf16>, vector<128x128xf32> -> vector<128x128xf32>
      %cst_101 = arith.constant dense<0xFF800000> : vector<128xf32>
      %252 = vector.multi_reduction <maximumf>, %251, %cst_101 [1] : vector<128x128xf32> to vector<128xf32>
      %253 = vector.shape_cast %252 : vector<128xf32> to vector<128x1xf32>
      %254 = arith.maximumf %arg21, %253 : vector<128x1xf32>
      %255 = arith.subf %arg21, %254 : vector<128x1xf32>
      %256 = math.exp %255 : vector<128x1xf32>
      %257 = vector.broadcast %254 : vector<128x1xf32> to vector<128x128xf32>
      %258 = arith.subf %251, %257 : vector<128x128xf32>
      %259 = math.exp %258 : vector<128x128xf32>
      %260 = arith.mulf %256, %arg22 : vector<128x1xf32>
      %cst_102 = arith.constant dense<0.000000e+00> : vector<128xf32>
      %261 = vector.multi_reduction <add>, %259, %cst_102 [1] : vector<128x128xf32> to vector<128xf32>
      %262 = vector.shape_cast %261 : vector<128xf32> to vector<128x1xf32>
      %263 = arith.addf %260, %262 : vector<128x1xf32>
      %264 = vector.broadcast %256 : vector<128x1xf32> to vector<128x32xf32>
      %265 = arith.mulf %264, %arg23 : vector<128x32xf32>
      %266 = arith.truncf %259 : vector<128x128xf32> to vector<128x128xbf16>
      %cst_103 = arith.constant dense<0.000000e+00> : vector<128x32xf32>
      %267 = tpu.matmul %266, %250, %cst_103 {dimension_numbers = #tpu.dot_dimension_numbers<[1], [0], [0], [1], [0, 0, 1, 1], [], []>} : vector<128x128xbf16>, vector<128x32xbf16>, vector<128x32xf32> -> vector<128x32xf32>
      %268 = arith.addf %265, %267 : vector<128x32xf32>
      scf.yield %254, %263, %268 : vector<128x1xf32>, vector<128x1xf32>, vector<128x32xf32>
    }
    %c0_i32_38 = arith.constant 0 : i32
    %107 = arith.addi %13, %c0_i32_38 : i32
    %c128_i32_39 = arith.constant 128 : i32
    %108 = arith.muli %107, %c128_i32_39 : i32
    %109 = tpu.assume_multiple %108, 128 : i32
    %c64 = arith.constant 64 : index
    %110 = arith.index_cast %109 : i32 to index
    %111 = vector.load %arg17[%c64, %110] : memref<128x256xbf16, #tpu.memory_space<vmem>>, vector<32x128xbf16>
    %112 = arith.index_cast %109 : i32 to index
    %c64_40 = arith.constant 64 : index
    %113 = vector.load %arg18[%112, %c64_40] : memref<256x128xbf16, #tpu.memory_space<vmem>>, vector<128x32xbf16>
    %cst_41 = arith.constant dense<0.000000e+00> : vector<128x128xf32>
    %114 = tpu.matmul %100, %111, %cst_41 {dimension_numbers = #tpu.dot_dimension_numbers<[1], [0], [0], [1], [0, 0, 1, 1], [], []>} : vector<128x32xbf16>, vector<32x128xbf16>, vector<128x128xf32> -> vector<128x128xf32>
    %115 = tpu.iota {dimensions = array<i32: 1>} : vector<128x128xi32>
    %116 = vector.broadcast %109 : i32 to vector<128x128xi32>
    %117 = arith.addi %116, %115 : vector<128x128xi32>
    %118 = arith.cmpi sge, %12, %117 : vector<128x128xi32>
    %cst_42 = arith.constant -1.000000e+30 : f32
    %119 = vector.broadcast %cst_42 : f32 to vector<128x128xf32>
    %120 = arith.select %118, %114, %119 : vector<128x128xi1>, vector<128x128xf32>
    %cst_43 = arith.constant dense<0xFF800000> : vector<128xf32>
    %121 = vector.multi_reduction <maximumf>, %120, %cst_43 [1] : vector<128x128xf32> to vector<128xf32>
    %122 = vector.shape_cast %121 : vector<128xf32> to vector<128x1xf32>
    %123 = arith.maximumf %106#0, %122 : vector<128x1xf32>
    %124 = arith.subf %106#0, %123 : vector<128x1xf32>
    %125 = math.exp %124 : vector<128x1xf32>
    %126 = vector.broadcast %123 : vector<128x1xf32> to vector<128x128xf32>
    %127 = arith.subf %120, %126 : vector<128x128xf32>
    %128 = math.exp %127 : vector<128x128xf32>
    %129 = arith.mulf %125, %106#1 : vector<128x1xf32>
    %cst_44 = arith.constant dense<0.000000e+00> : vector<128xf32>
    %130 = vector.multi_reduction <add>, %128, %cst_44 [1] : vector<128x128xf32> to vector<128xf32>
    %131 = vector.shape_cast %130 : vector<128xf32> to vector<128x1xf32>
    %132 = arith.addf %129, %131 : vector<128x1xf32>
    %133 = vector.broadcast %125 : vector<128x1xf32> to vector<128x32xf32>
    %134 = arith.mulf %133, %106#2 : vector<128x32xf32>
    %135 = arith.truncf %128 : vector<128x128xf32> to vector<128x128xbf16>
    %cst_45 = arith.constant dense<0.000000e+00> : vector<128x32xf32>
    %136 = tpu.matmul %135, %113, %cst_45 {dimension_numbers = #tpu.dot_dimension_numbers<[1], [0], [0], [1], [0, 0, 1, 1], [], []>} : vector<128x128xbf16>, vector<128x32xbf16>, vector<128x32xf32> -> vector<128x32xf32>
    %137 = arith.addf %134, %136 : vector<128x32xf32>
    %138 = tpu.reciprocal %132 {approx = true} : vector<128x1xf32> -> vector<128x1xf32>
    %139 = vector.broadcast %138 : vector<128x1xf32> to vector<128x32xf32>
    %140 = arith.mulf %137, %139 : vector<128x32xf32>
    %141 = arith.truncf %140 : vector<128x32xf32> to vector<128x32xbf16>
    %c0_46 = arith.constant 0 : index
    %c64_47 = arith.constant 64 : index
    %142 = vector.load %arg19[%c0_46, %c64_47] : memref<128x128xbf16, #tpu.memory_space<vmem>>, vector<128x32xbf16>
    tpu.vector_store %arg19[%c0_46, %c64_47], %141 {strides = array<i32>} : memref<128x128xbf16, #tpu.memory_space<vmem>>, vector<128x32xbf16>,
    %143 = vector.extract_strided_slice %9 {offsets = [0, 96], sizes = [128, 32], strides = [1, 1]} : vector<128x128xbf16> to vector<128x32xbf16>
    %cst_48 = arith.constant -1.000000e+30 : f32
    %144 = vector.broadcast %cst_48 : f32 to vector<128x1xf32>
    %cst_49 = arith.constant 0.000000e+00 : f32
    %145 = vector.broadcast %cst_49 : f32 to vector<128x1xf32>
    %cst_50 = arith.constant 0.000000e+00 : f32
    %146 = vector.broadcast %cst_50 : f32 to vector<128x32xf32>
    %c0_i32_51 = arith.constant 0 : i32
    %147 = arith.subi %13, %c0_i32_51 : i32
    %148 = arith.addi %c0_i32_51, %147 : i32
    %c1_i32_52 = arith.constant 1 : i32
    %149:3 = scf.for %arg20 = %c0_i32_51 to %148 step %c1_i32_52 iter_args(%arg21 = %144, %arg22 = %145, %arg23 = %146) -> (vector<128x1xf32>, vector<128x1xf32>, vector<128x32xf32>)  : i32 {
      %c128_i32_97 = arith.constant 128 : i32
      %245 = arith.muli %arg20, %c128_i32_97 : i32
      %246 = tpu.assume_multiple %245, 128 : i32
      %c96_98 = arith.constant 96 : index
      %247 = arith.index_cast %246 : i32 to index
      %248 = vector.load %arg17[%c96_98, %247] : memref<128x256xbf16, #tpu.memory_space<vmem>>, vector<32x128xbf16>
      %249 = arith.index_cast %246 : i32 to index
      %c96_99 = arith.constant 96 : index
      %250 = vector.load %arg18[%249, %c96_99] : memref<256x128xbf16, #tpu.memory_space<vmem>>, vector<128x32xbf16>
      %cst_100 = arith.constant dense<0.000000e+00> : vector<128x128xf32>
      %251 = tpu.matmul %143, %248, %cst_100 {dimension_numbers = #tpu.dot_dimension_numbers<[1], [0], [0], [1], [0, 0, 1, 1], [], []>} : vector<128x32xbf16>, vector<32x128xbf16>, vector<128x128xf32> -> vector<128x128xf32>
      %cst_101 = arith.constant dense<0xFF800000> : vector<128xf32>
      %252 = vector.multi_reduction <maximumf>, %251, %cst_101 [1] : vector<128x128xf32> to vector<128xf32>
      %253 = vector.shape_cast %252 : vector<128xf32> to vector<128x1xf32>
      %254 = arith.maximumf %arg21, %253 : vector<128x1xf32>
      %255 = arith.subf %arg21, %254 : vector<128x1xf32>
      %256 = math.exp %255 : vector<128x1xf32>
      %257 = vector.broadcast %254 : vector<128x1xf32> to vector<128x128xf32>
      %258 = arith.subf %251, %257 : vector<128x128xf32>
      %259 = math.exp %258 : vector<128x128xf32>
      %260 = arith.mulf %256, %arg22 : vector<128x1xf32>
      %cst_102 = arith.constant dense<0.000000e+00> : vector<128xf32>
      %261 = vector.multi_reduction <add>, %259, %cst_102 [1] : vector<128x128xf32> to vector<128xf32>
      %262 = vector.shape_cast %261 : vector<128xf32> to vector<128x1xf32>
      %263 = arith.addf %260, %262 : vector<128x1xf32>
      %264 = vector.broadcast %256 : vector<128x1xf32> to vector<128x32xf32>
      %265 = arith.mulf %264, %arg23 : vector<128x32xf32>
      %266 = arith.truncf %259 : vector<128x128xf32> to vector<128x128xbf16>
      %cst_103 = arith.constant dense<0.000000e+00> : vector<128x32xf32>
      %267 = tpu.matmul %266, %250, %cst_103 {dimension_numbers = #tpu.dot_dimension_numbers<[1], [0], [0], [1], [0, 0, 1, 1], [], []>} : vector<128x128xbf16>, vector<128x32xbf16>, vector<128x32xf32> -> vector<128x32xf32>
      %268 = arith.addf %265, %267 : vector<128x32xf32>
      scf.yield %254, %263, %268 : vector<128x1xf32>, vector<128x1xf32>, vector<128x32xf32>
    }
    %c0_i32_53 = arith.constant 0 : i32
    %150 = arith.addi %13, %c0_i32_53 : i32
    %c128_i32_54 = arith.constant 128 : i32
    %151 = arith.muli %150, %c128_i32_54 : i32
    %152 = tpu.assume_multiple %151, 128 : i32
    %c96 = arith.constant 96 : index
    %153 = arith.index_cast %152 : i32 to index
    %154 = vector.load %arg17[%c96, %153] : memref<128x256xbf16, #tpu.memory_space<vmem>>, vector<32x128xbf16>
    %155 = arith.index_cast %152 : i32 to index
    %c96_55 = arith.constant 96 : index
    %156 = vector.load %arg18[%155, %c96_55] : memref<256x128xbf16, #tpu.memory_space<vmem>>, vector<128x32xbf16>
    %cst_56 = arith.constant dense<0.000000e+00> : vector<128x128xf32>
    %157 = tpu.matmul %143, %154, %cst_56 {dimension_numbers = #tpu.dot_dimension_numbers<[1], [0], [0], [1], [0, 0, 1, 1], [], []>} : vector<128x32xbf16>, vector<32x128xbf16>, vector<128x128xf32> -> vector<128x128xf32>
    %158 = tpu.iota {dimensions = array<i32: 1>} : vector<128x128xi32>
    %159 = vector.broadcast %152 : i32 to vector<128x128xi32>
    %160 = arith.addi %159, %158 : vector<128x128xi32>
    %161 = arith.cmpi sge, %12, %160 : vector<128x128xi32>
    %cst_57 = arith.constant -1.000000e+30 : f32
    %162 = vector.broadcast %cst_57 : f32 to vector<128x128xf32>
    %163 = arith.select %161, %157, %162 : vector<128x128xi1>, vector<128x128xf32>
    %cst_58 = arith.constant dense<0xFF800000> : vector<128xf32>
    %164 = vector.multi_reduction <maximumf>, %163, %cst_58 [1] : vector<128x128xf32> to vector<128xf32>
    %165 = vector.shape_cast %164 : vector<128xf32> to vector<128x1xf32>
    %166 = arith.maximumf %149#0, %165 : vector<128x1xf32>
    %167 = arith.subf %149#0, %166 : vector<128x1xf32>
    %168 = math.exp %167 : vector<128x1xf32>
    %169 = vector.broadcast %166 : vector<128x1xf32> to vector<128x128xf32>
    %170 = arith.subf %163, %169 : vector<128x128xf32>
    %171 = math.exp %170 : vector<128x128xf32>
    %172 = arith.mulf %168, %149#1 : vector<128x1xf32>
    %cst_59 = arith.constant dense<0.000000e+00> : vector<128xf32>
    %173 = vector.multi_reduction <add>, %171, %cst_59 [1] : vector<128x128xf32> to vector<128xf32>
    %174 = vector.shape_cast %173 : vector<128xf32> to vector<128x1xf32>
    %175 = arith.addf %172, %174 : vector<128x1xf32>
    %176 = vector.broadcast %168 : vector<128x1xf32> to vector<128x32xf32>
    %177 = arith.mulf %176, %149#2 : vector<128x32xf32>
    %178 = arith.truncf %171 : vector<128x128xf32> to vector<128x128xbf16>
    %cst_60 = arith.constant dense<0.000000e+00> : vector<128x32xf32>
    %179 = tpu.matmul %178, %156, %cst_60 {dimension_numbers = #tpu.dot_dimension_numbers<[1], [0], [0], [1], [0, 0, 1, 1], [], []>} : vector<128x128xbf16>, vector<128x32xbf16>, vector<128x32xf32> -> vector<128x32xf32>
    %180 = arith.addf %177, %179 : vector<128x32xf32>
    %181 = tpu.reciprocal %175 {approx = true} : vector<128x1xf32> -> vector<128x1xf32>
    %182 = vector.broadcast %181 : vector<128x1xf32> to vector<128x32xf32>
    %183 = arith.mulf %180, %182 : vector<128x32xf32>
    %184 = arith.truncf %183 : vector<128x32xf32> to vector<128x32xbf16>
    %c0_61 = arith.constant 0 : index
    %c96_62 = arith.constant 96 : index
    %185 = vector.load %arg19[%c0_61, %c96_62] : memref<128x128xbf16, #tpu.memory_space<vmem>>, vector<128x32xbf16>
    tpu.vector_store %arg19[%c0_61, %c96_62], %184 {strides = array<i32>} : memref<128x128xbf16, #tpu.memory_space<vmem>>, vector<128x32xbf16>,
    %c0_63 = arith.constant 0 : index
    %c0_64 = arith.constant 0 : index
    %186 = vector.load %arg19[%c0_63, %c0_64] : memref<128x128xbf16, #tpu.memory_space<vmem>>, vector<128x128xbf16>
    %c0_65 = arith.constant 0 : index
    %c0_66 = arith.constant 0 : index
    %187 = vector.load %arg7[%c0_65, %c0_66] : memref<128x128xbf16, #tpu.memory_space<vmem>>, vector<128x128xbf16>
    %cst_67 = arith.constant dense<0.000000e+00> : vector<128x128xf32>
    %188 = tpu.matmul %186, %187, %cst_67 {dimension_numbers = #tpu.dot_dimension_numbers<[1], [0], [0], [1], [0, 0, 1, 1], [], []>} : vector<128x128xbf16>, vector<128x128xbf16>, vector<128x128xf32> -> vector<128x128xf32>
    %c0_68 = arith.constant 0 : index
    %c0_69 = arith.constant 0 : index
    %189 = vector.load %arg8[%c0_68, %c0_69] : memref<1x128xf32, #tpu.memory_space<vmem>>, vector<1x128xf32>
    %190 = vector.broadcast %189 : vector<1x128xf32> to vector<128x128xf32>
    %191 = arith.addf %188, %190 : vector<128x128xf32>
    %192 = arith.addf %7, %191 : vector<128x128xf32>
    %c0_70 = arith.constant 0 : index
    %c0_71 = arith.constant 0 : index
    %193 = vector.load %arg9[%c0_70, %c0_71] : memref<1x128xf32, #tpu.memory_space<vmem>>, vector<1x128xf32>
    %c0_72 = arith.constant 0 : index
    %c0_73 = arith.constant 0 : index
    %194 = vector.load %arg10[%c0_72, %c0_73] : memref<1x128xf32, #tpu.memory_space<vmem>>, vector<1x128xf32>
    %cst_74 = arith.constant dense<0.000000e+00> : vector<128xf32>
    %195 = vector.multi_reduction <add>, %192, %cst_74 [1] : vector<128x128xf32> to vector<128xf32>
    %196 = vector.shape_cast %195 : vector<128xf32> to vector<128x1xf32>
    %cst_75 = arith.constant 1.280000e+02 : f32
    %197 = vector.broadcast %cst_75 : f32 to vector<128x1xf32>
    %198 = arith.divf %196, %197 : vector<128x1xf32>
    %199 = vector.broadcast %198 : vector<128x1xf32> to vector<128x128xf32>
    %200 = arith.subf %192, %199 : vector<128x128xf32>
    %201 = arith.mulf %200, %200 : vector<128x128xf32>
    %cst_76 = arith.constant dense<0.000000e+00> : vector<128xf32>
    %202 = vector.multi_reduction <add>, %201, %cst_76 [1] : vector<128x128xf32> to vector<128xf32>
    %203 = vector.shape_cast %202 : vector<128xf32> to vector<128x1xf32>
    %cst_77 = arith.constant 1.280000e+02 : f32
    %204 = vector.broadcast %cst_77 : f32 to vector<128x1xf32>
    %205 = arith.divf %203, %204 : vector<128x1xf32>
    %cst_78 = arith.constant 9.99999974E-6 : f32
    %206 = vector.broadcast %cst_78 : f32 to vector<128x1xf32>
    %207 = arith.addf %205, %206 : vector<128x1xf32>
    %208 = math.rsqrt %207 : vector<128x1xf32>
    %209 = vector.broadcast %208 : vector<128x1xf32> to vector<128x128xf32>
    %210 = arith.mulf %200, %209 : vector<128x128xf32>
    %211 = vector.broadcast %193 : vector<1x128xf32> to vector<128x128xf32>
    %212 = arith.mulf %210, %211 : vector<128x128xf32>
    %213 = vector.broadcast %194 : vector<1x128xf32> to vector<128x128xf32>
    %214 = arith.addf %212, %213 : vector<128x128xf32>
    %215 = arith.truncf %214 : vector<128x128xf32> to vector<128x128xbf16>
    %c0_79 = arith.constant 0 : index
    %c0_80 = arith.constant 0 : index
    %216 = vector.load %arg11[%c0_79, %c0_80] : memref<128x512xbf16, #tpu.memory_space<vmem>>, vector<128x512xbf16>
    %cst_81 = arith.constant dense<0.000000e+00> : vector<128x512xf32>
    %217 = tpu.matmul %215, %216, %cst_81 {dimension_numbers = #tpu.dot_dimension_numbers<[1], [0], [0], [1], [0, 0, 1, 1], [], []>} : vector<128x128xbf16>, vector<128x512xbf16>, vector<128x512xf32> -> vector<128x512xf32>
    %c0_82 = arith.constant 0 : index
    %c0_83 = arith.constant 0 : index
    %218 = vector.load %arg12[%c0_82, %c0_83] : memref<1x512xf32, #tpu.memory_space<vmem>>, vector<1x512xf32>
    %219 = vector.broadcast %218 : vector<1x512xf32> to vector<128x512xf32>
    %220 = arith.addf %217, %219 : vector<128x512xf32>
    %221 = arith.mulf %220, %220 : vector<128x512xf32>
    %cst_84 = arith.constant 4.471500e-02 : f32
    %222 = vector.broadcast %cst_84 : f32 to vector<128x512xf32>
    %223 = arith.mulf %222, %221 : vector<128x512xf32>
    %cst_85 = arith.constant 1.000000e+00 : f32
    %224 = vector.broadcast %cst_85 : f32 to vector<128x512xf32>
    %225 = arith.addf %224, %223 : vector<128x512xf32>
    %226 = arith.mulf %220, %225 : vector<128x512xf32>
    %cst_86 = arith.constant 5.000000e-01 : f32
    %227 = vector.broadcast %cst_86 : f32 to vector<128x512xf32>
    %228 = arith.mulf %227, %220 : vector<128x512xf32>
    %cst_87 = arith.constant 0.797884583 : f32
    %229 = vector.broadcast %cst_87 : f32 to vector<128x512xf32>
    %230 = arith.mulf %229, %226 : vector<128x512xf32>
    %231 = math.tanh %230 : vector<128x512xf32>
    %cst_88 = arith.constant 1.000000e+00 : f32
    %232 = vector.broadcast %cst_88 : f32 to vector<128x512xf32>
    %233 = arith.addf %232, %231 : vector<128x512xf32>
    %234 = arith.mulf %228, %233 : vector<128x512xf32>
    %235 = arith.truncf %234 : vector<128x512xf32> to vector<128x512xbf16>
    %c0_89 = arith.constant 0 : index
    %c0_90 = arith.constant 0 : index
    %236 = vector.load %arg13[%c0_89, %c0_90] : memref<512x128xbf16, #tpu.memory_space<vmem>>, vector<512x128xbf16>
    %cst_91 = arith.constant dense<0.000000e+00> : vector<128x128xf32>
    %237 = tpu.matmul %235, %236, %cst_91 {dimension_numbers = #tpu.dot_dimension_numbers<[1], [0], [0], [1], [0, 0, 1, 1], [], []>} : vector<128x512xbf16>, vector<512x128xbf16>, vector<128x128xf32> -> vector<128x128xf32>
    %c0_92 = arith.constant 0 : index
    %c0_93 = arith.constant 0 : index
    %238 = vector.load %arg14[%c0_92, %c0_93] : memref<1x128xf32, #tpu.memory_space<vmem>>, vector<1x128xf32>
    %239 = vector.broadcast %238 : vector<1x128xf32> to vector<128x128xf32>
    %240 = arith.addf %237, %239 : vector<128x128xf32>
    %241 = arith.addf %192, %240 : vector<128x128xf32>
    %c0_94 = arith.constant 0 : index
    %c0_95 = arith.constant 0 : index
    %c0_96 = arith.constant 0 : index
    %242 = vector.load %arg15[%c0_94, %c0_95, %c0_96] : memref<1x128x128xf32, #tpu.memory_space<vmem>>, vector<1x128x128xf32>
    %243 = vector.shape_cast %242 : vector<1x128x128xf32> to vector<128x128xf32>
    %244 = vector.shape_cast %241 : vector<128x128xf32> to vector<1x128x128xf32>
    tpu.vector_store %arg15[%c0_94, %c0_95, %c0_96], %244 {strides = array<i32>} : memref<1x128x128xf32, #tpu.memory_space<vmem>>, vector<1x128x128xf32>,
    return
  }
  func.func @transform_0(%arg0: i32, %arg1: i32) -> (i32, i32, i32) {
    %c0_i32 = arith.constant 0 : i32
    %c0_i32_0 = arith.constant 0 : i32
    %c0_i32_1 = arith.constant 0 : i32
    return %arg0, %c0_i32, %c0_i32_0 : i32, i32, i32
  }
  func.func @transform_1(%arg0: i32, %arg1: i32) -> (i32, i32) {
    %c0_i32 = arith.constant 0 : i32
    %c0_i32_0 = arith.constant 0 : i32
    %c0_i32_1 = arith.constant 0 : i32
    return %c0_i32, %c0_i32_0 : i32, i32
  }
  func.func @transform_2(%arg0: i32, %arg1: i32) -> (i32, i32) {
    %c0_i32 = arith.constant 0 : i32
    %c0_i32_0 = arith.constant 0 : i32
    %c0_i32_1 = arith.constant 0 : i32
    return %c0_i32, %c0_i32_0 : i32, i32
  }
  func.func @transform_3(%arg0: i32, %arg1: i32) -> (i32, i32) {
    %c0_i32 = arith.constant 0 : i32
    %c0_i32_0 = arith.constant 0 : i32
    %c0_i32_1 = arith.constant 0 : i32
    return %c0_i32, %c0_i32_0 : i32, i32
  }
  func.func @transform_4(%arg0: i32, %arg1: i32) -> (i32, i32) {
    %c0_i32 = arith.constant 0 : i32
    %c0_i32_0 = arith.constant 0 : i32
    %c0_i32_1 = arith.constant 0 : i32
    return %c0_i32, %c0_i32_0 : i32, i32
  }
  func.func @transform_5(%arg0: i32, %arg1: i32) -> (i32, i32) {
    %c0_i32 = arith.constant 0 : i32
    %c0_i32_0 = arith.constant 0 : i32
    %c0_i32_1 = arith.constant 0 : i32
    return %c0_i32, %c0_i32_0 : i32, i32
  }
  func.func @transform_6(%arg0: i32, %arg1: i32) -> (i32, i32) {
    %c0_i32 = arith.constant 0 : i32
    %c0_i32_0 = arith.constant 0 : i32
    %c0_i32_1 = arith.constant 0 : i32
    return %c0_i32, %c0_i32_0 : i32, i32
  }
  func.func @transform_7(%arg0: i32, %arg1: i32) -> (i32, i32) {
    %c0_i32 = arith.constant 0 : i32
    %c0_i32_0 = arith.constant 0 : i32
    %c0_i32_1 = arith.constant 0 : i32
    return %c0_i32, %c0_i32_0 : i32, i32
  }
  func.func @transform_8(%arg0: i32, %arg1: i32) -> (i32, i32) {
    %c0_i32 = arith.constant 0 : i32
    %c0_i32_0 = arith.constant 0 : i32
    %c0_i32_1 = arith.constant 0 : i32
    return %c0_i32, %c0_i32_0 : i32, i32
  }
  func.func @transform_9(%arg0: i32, %arg1: i32) -> (i32, i32) {
    %c0_i32 = arith.constant 0 : i32
    %c0_i32_0 = arith.constant 0 : i32
    %c0_i32_1 = arith.constant 0 : i32
    return %c0_i32, %c0_i32_0 : i32, i32
  }
  func.func @transform_10(%arg0: i32, %arg1: i32) -> (i32, i32) {
    %c0_i32 = arith.constant 0 : i32
    %c0_i32_0 = arith.constant 0 : i32
    %c0_i32_1 = arith.constant 0 : i32
    return %c0_i32, %c0_i32_0 : i32, i32
  }
  func.func @transform_11(%arg0: i32, %arg1: i32) -> (i32, i32) {
    %c0_i32 = arith.constant 0 : i32
    %c0_i32_0 = arith.constant 0 : i32
    %c0_i32_1 = arith.constant 0 : i32
    return %c0_i32, %c0_i32_0 : i32, i32
  }
  func.func @transform_12(%arg0: i32, %arg1: i32) -> (i32, i32) {
    %c0_i32 = arith.constant 0 : i32
    %c0_i32_0 = arith.constant 0 : i32
    %c0_i32_1 = arith.constant 0 : i32
    return %c0_i32, %c0_i32_0 : i32, i32
  }
  func.func @transform_13(%arg0: i32, %arg1: i32) -> (i32, i32, i32) {
    %c0_i32 = arith.constant 0 : i32
    %c0_i32_0 = arith.constant 0 : i32
    return %arg0, %arg1, %c0_i32 : i32, i32, i32
  }
}

</mosaic_0001>

<llo_original>
// kernel: tpu_custom_call.1
$region0: #{tpu_custom_call.1}
  #allocation0 [shape = 'u32[]', space=smem, size = 0x4, offset = 0x4, fixed_abs, tag = 'smem constant byte address 0x4 - core index']
  #allocation1 [shape = 'u32[144,128]{1,0:T(1,128)}', space=vmem, size = 0x12000, scoped, tag = 'internal scratch']
  #allocation2 [shape = 'bf16[256,128]{1,0:T(16,128)(2,1)}', space=vmem, size = 0x10000, scoped, tag = 'scratch operand']
  #allocation3 [shape = 'bf16[128,256]{1,0:T(16,128)(2,1)}', space=vmem, size = 0x10000, scoped, tag = 'scratch operand']
  #allocation4 [shape = 'bf16[256,128]{1,0:T(16,128)(2,1)}', space=vmem, size = 0x10000, scoped, tag = 'scratch operand']
  #allocation5 [shape = 'bf16[128,128]{1,0:T(16,128)(2,1)}', space=vmem, size = 0x8000, scoped, tag = 'scratch operand']
  %s0 = inlined_call_operand.hbm [shape: f32[2,256,128], index: 0, kind: input, shape index: {}]
  %s1 = inlined_call_operand.hbm [shape: f32[1,128], index: 1, kind: input, shape index: {}]
  %s2 = inlined_call_operand.hbm [shape: f32[1,128], index: 2, kind: input, shape index: {}]
  %s3 = inlined_call_operand.hbm [shape: bf16[128,384], index: 3, kind: input, shape index: {}]
  %s4 = inlined_call_operand.hbm [shape: f32[1,384], index: 4, kind: input, shape index: {}]
  %s5 = inlined_call_operand.hbm [shape: bf16[128,128], index: 5, kind: input, shape index: {}]
  %s6 = inlined_call_operand.hbm [shape: f32[1,128], index: 6, kind: input, shape index: {}]
  %s7 = inlined_call_operand.hbm [shape: f32[1,128], index: 7, kind: input, shape index: {}]
  %s8 = inlined_call_operand.hbm [shape: f32[1,128], index: 8, kind: input, shape index: {}]
  %s9 = inlined_call_operand.hbm [shape: bf16[128,512], index: 9, kind: input, shape index: {}]
  %s10 = inlined_call_operand.hbm [shape: f32[1,512], index: 10, kind: input, shape index: {}]
  %s11 = inlined_call_operand.hbm [shape: bf16[512,128], index: 11, kind: input, shape index: {}]
  %s12 = inlined_call_operand.hbm [shape: f32[1,128], index: 12, kind: input, shape index: {}]
  %s13 = inlined_call_operand.hbm [shape: f32[2,256,128], index: 13, kind: output, shape index: {}]
  %s14 = sld [smem:[#allocation0]]
  $region169: #{tpu_custom_call.1} parent=0
    _
  %s16 = ssub.s32 1, %s14
  %s17 = scalar_select 0, %s16, %s14
  $region1: #{tpu_custom_call.1} parent=0
    #allocation6 [shape = 'u8[262144]{0}', space=vmem, size = 0x40000, scoped, tag = 'input window, operand 0']
    #allocation7 [shape = 's32[2]{0}', space=sflag, size = 0x8, scoped, tag = 'scoped memory for tpu_custom_call.1']
    #allocation8 [shape = 's32[2]{0}', space=sflag, size = 0x8, scoped, tag = 'scoped memory for tpu_custom_call.1']
    #allocation9 [shape = 'u8[512]{0}', space=vmem, size = 0x400, scoped, tag = 'input window, operand 1, single buffered']
    #allocation10 [shape = 's32[1]{0}', space=sflag, size = 0x4, scoped, tag = 'scoped memory for tpu_custom_call.1']
    #allocation11 [shape = 'u8[512]{0}', space=vmem, size = 0x400, scoped, tag = 'input window, operand 2, single buffered']
    #allocation12 [shape = 'u8[98304]{0}', space=vmem, size = 0x18000, scoped, tag = 'input window, operand 3, single buffered']
    #allocation13 [shape = 's32[1]{0}', space=sflag, size = 0x4, scoped, tag = 'scoped memory for tpu_custom_call.1']
    #allocation14 [shape = 'u8[1536]{0}', space=vmem, size = 0x800, scoped, tag = 'input window, operand 4, single buffered']
    #allocation15 [shape = 'u8[32768]{0}', space=vmem, size = 0x8000, scoped, tag = 'input window, operand 5, single buffered']
    #allocation16 [shape = 's32[1]{0}', space=sflag, size = 0x4, scoped, tag = 'scoped memory for tpu_custom_call.1']
    #allocation17 [shape = 'u8[512]{0}', space=vmem, size = 0x400, scoped, tag = 'input window, operand 6, single buffered']
    #allocation18 [shape = 'u8[512]{0}', space=vmem, size = 0x400, scoped, tag = 'input window, operand 7, single buffered']
    #allocation19 [shape = 's32[1]{0}', space=sflag, size = 0x4, scoped, tag = 'scoped memory for tpu_custom_call.1']
    #allocation20 [shape = 'u8[512]{0}', space=vmem, size = 0x400, scoped, tag = 'input window, operand 8, single buffered']
    #allocation21 [shape = 'u8[131072]{0}', space=vmem, size = 0x20000, scoped, tag = 'input window, operand 9, single buffered']
    #allocation22 [shape = 's32[1]{0}', space=sflag, size = 0x4, scoped, tag = 'scoped memory for tpu_custom_call.1']
    #allocation23 [shape = 'u8[2048]{0}', space=vmem, size = 0x800, scoped, tag = 'input window, operand 10, single buffered']
    #allocation24 [shape = 'u8[131072]{0}', space=vmem, size = 0x20000, scoped, tag = 'input window, operand 11, single buffered']
    #allocation25 [shape = 's32[1]{0}', space=sflag, size = 0x4, scoped, tag = 'scoped memory for tpu_custom_call.1']
    #allocation26 [shape = 'u8[512]{0}', space=vmem, size = 0x400, scoped, tag = 'input window, operand 12, single buffered']
    #allocation27 [shape = 'u8[131072]{0}', space=vmem, size = 0x20000, scoped, tag = 'output window, operand 0']
    %18 = vsyncpa [#allocation7], 0
    %s19 = scalar_lea.sflag [#allocation7], 1
    %20 = vsyncpa %s19, 0
    %21 = vsyncpa [#allocation10], 0
    %22 = vsyncpa [#allocation13], 0
    %23 = vsyncpa [#allocation16], 0
    %24 = vsyncpa [#allocation19], 0
    %25 = vsyncpa [#allocation22], 0
    %26 = vsyncpa [#allocation25], 0
    %27 = vsyncpa [#allocation8], 0
    %s28 = scalar_lea.sflag [#allocation8], 1
    %29 = vsyncpa %s28, 0
    loop: start=0, step=1, limit=6
    $region2: #{tpu_custom_call.1} parent=1 // loop_pre_header
      _
    $region3: #{tpu_custom_call.1} parent=1 // loop_header
      %s31 = sphi 0, %s35
      %p32 = scmp.ge.s32.totalorder %s31, 6
      %s38 = sphi 0, %s50
      %s39 = sphi 0, %s46
      %s40 = sphi 0, %s38
      %s41 = sphi 0, %s39
      %s42 = sphi 0, %s40
      %s43 = sphi 0, %s41
      %s53 = sphi 0, %s55
      %s56 = sphi 0, %s53
      %s57 = sphi 0, %s56
      %s73 = sphi 0, %s57
      %s77 = sphi 0, %s77
      %s79 = sphi 0, %s77
      %s80 = sphi 0, %s79
      %s94 = sphi 0, %s80
      %s98 = sphi 0, %s98
      %s100 = sphi 0, %s98
      %s101 = sphi 0, %s100
      %s115 = sphi 0, %s101
      %s119 = sphi 0, %s119
      %s121 = sphi 0, %s119
      %s122 = sphi 0, %s121
      %s136 = sphi 0, %s122
      %s140 = sphi 0, %s140
      %s142 = sphi 0, %s140
      %s143 = sphi 0, %s142
      %s157 = sphi 0, %s143
      %s161 = sphi 0, %s161
      %s163 = sphi 0, %s161
      %s164 = sphi 0, %s163
      %s178 = sphi 0, %s164
      %s182 = sphi 0, %s182
      %s184 = sphi 0, %s182
      %s185 = sphi 0, %s184
      %s199 = sphi 0, %s185
      %s203 = sphi 0, %s203
      %s205 = sphi 0, %s203
      %s206 = sphi 0, %s205
      %s220 = sphi 0, %s206
      %s224 = sphi 0, %s224
      %s226 = sphi 0, %s224
      %s227 = sphi 0, %s226
      %s241 = sphi 0, %s227
      %s245 = sphi 0, %s245
      %s247 = sphi 0, %s245
      %s248 = sphi 0, %s247
      %s262 = sphi 0, %s248
      %s266 = sphi 0, %s266
      %s268 = sphi 0, %s266
      %s269 = sphi 0, %s268
      %s283 = sphi 0, %s269
      %s287 = sphi 0, %s287
      %s289 = sphi 0, %s287
      %s290 = sphi 0, %s289
      %s304 = sphi 0, %s290
      %s308 = sphi 0, %s308
      %s310 = sphi 0, %s308
      %s311 = sphi 0, %s310
      %s325 = sphi 0, %s311
      %s333 = sphi 0, %s335
      %s336 = sphi 0, %s333
      %s337 = sphi 0, %s336
      %s353 = sphi 0, %s337
    $region4: #{tpu_custom_call.1} parent=1 // loop_header_branch
      %34 = sbr.rel (%p32) target = $region8
    $region5: #{tpu_custom_call.1} parent=1 // loop_body
      %s36 = ssub.s32 %s31, 1
      %s37 = ssub.s32 %s31, 2
      %s44 = sadd.s32 1, %s39
      %p45 = scmp.ge.s32.totalorder %s44, 2
      %s46 = scalar_select %p45, 0, %s44
      %s47 = sadd.s32 1, %s38
      %s48 = scalar_select %p45, %s47, %s38
      %p49 = scmp.ge.s32.totalorder %s48, 2
      %s50 = scalar_select %p49, 0, %s48
      %s51 = ssub.s32 %s38, %s50
      %p52 = scmp.eq.s32.totalorder %s51, 0
      %s54 = sadd.s32 %s53, 1
      %s55 = scalar_select %p52, %s53, %s54
      %p58 = pneg %p52
      %p59 = scmp.eq.s32.totalorder %s31, 3
      %p60 = por %p58, %p59
      %p61 = scmp.ne.s32.totalorder %s53, %s56
      %p62 = scmp.eq.s32.totalorder %s31, 0
      %p63 = por %p61, %p62
      %p64 = scmp.ne.s32.totalorder %s53, %s56
      %p65 = scmp.eq.s32.totalorder %s36, 3
      %p66 = por %p64, %p65
      %p67 = scmp.ne.s32.totalorder %s56, %s57
      %p68 = scmp.eq.s32.totalorder %s36, 0
      %p69 = por %p67, %p68
      %p70 = scmp.ne.s32.totalorder %s56, %s57
      %p71 = scmp.eq.s32.totalorder %s37, 3
      %p72 = por %p70, %p71
      %p74 = scmp.ne.s32.totalorder %s57, %s73
      %p75 = scmp.eq.s32.totalorder %s37, 0
      %p76 = por %p74, %p75
      %s78 = sadd.s32 %s77, 1
      %p81 = scmp.eq.s32.totalorder %s31, 3
      %p82 = scmp.ne.s32.totalorder %s77, %s79
      %p83 = scmp.eq.s32.totalorder %s31, 0
      %p84 = por %p82, %p83
      %p85 = scmp.ne.s32.totalorder %s77, %s79
      %p86 = scmp.eq.s32.totalorder %s36, 3
      %p87 = por %p85, %p86
      %p88 = scmp.ne.s32.totalorder %s79, %s80
      %p89 = scmp.eq.s32.totalorder %s36, 0
      %p90 = por %p88, %p89
      %p91 = scmp.ne.s32.totalorder %s79, %s80
      %p92 = scmp.eq.s32.totalorder %s37, 3
      %p93 = por %p91, %p92
      %p95 = scmp.ne.s32.totalorder %s80, %s94
      %p96 = scmp.eq.s32.totalorder %s37, 0
      %p97 = por %p95, %p96
      %s99 = sadd.s32 %s98, 1
      %p102 = scmp.eq.s32.totalorder %s31, 3
      %p103 = scmp.ne.s32.totalorder %s98, %s100
      %p104 = scmp.eq.s32.totalorder %s31, 0
      %p105 = por %p103, %p104
      %p106 = scmp.ne.s32.totalorder %s98, %s100
      %p107 = scmp.eq.s32.totalorder %s36, 3
      %p108 = por %p106, %p107
      %p109 = scmp.ne.s32.totalorder %s100, %s101
      %p110 = scmp.eq.s32.totalorder %s36, 0
      %p111 = por %p109, %p110
      %p112 = scmp.ne.s32.totalorder %s100, %s101
      %p113 = scmp.eq.s32.totalorder %s37, 3
      %p114 = por %p112, %p113
      %p116 = scmp.ne.s32.totalorder %s101, %s115
      %p117 = scmp.eq.s32.totalorder %s37, 0
      %p118 = por %p116, %p117
      %s120 = sadd.s32 %s119, 1
      %p123 = scmp.eq.s32.totalorder %s31, 3
      %p124 = scmp.ne.s32.totalorder %s119, %s121
      %p125 = scmp.eq.s32.totalorder %s31, 0
      %p126 = por %p124, %p125
      %p127 = scmp.ne.s32.totalorder %s119, %s121
      %p128 = scmp.eq.s32.totalorder %s36, 3
      %p129 = por %p127, %p128
      %p130 = scmp.ne.s32.totalorder %s121, %s122
      %p131 = scmp.eq.s32.totalorder %s36, 0
      %p132 = por %p130, %p131
      %p133 = scmp.ne.s32.totalorder %s121, %s122
      %p134 = scmp.eq.s32.totalorder %s37, 3
      %p135 = por %p133, %p134
      %p137 = scmp.ne.s32.totalorder %s122, %s136
      %p138 = scmp.eq.s32.totalorder %s37, 0
      %p139 = por %p137, %p138
      %s141 = sadd.s32 %s140, 1
      %p144 = scmp.eq.s32.totalorder %s31, 3
      %p145 = scmp.ne.s32.totalorder %s140, %s142
      %p146 = scmp.eq.s32.totalorder %s31, 0
      %p147 = por %p145, %p146
      %p148 = scmp.ne.s32.totalorder %s140, %s142
      %p149 = scmp.eq.s32.totalorder %s36, 3
      %p150 = por %p148, %p149
      %p151 = scmp.ne.s32.totalorder %s142, %s143
      %p152 = scmp.eq.s32.totalorder %s36, 0
      %p153 = por %p151, %p152
      %p154 = scmp.ne.s32.totalorder %s142, %s143
      %p155 = scmp.eq.s32.totalorder %s37, 3
      %p156 = por %p154, %p155
      %p158 = scmp.ne.s32.totalorder %s143, %s157
      %p159 = scmp.eq.s32.totalorder %s37, 0
      %p160 = por %p158, %p159
      %s162 = sadd.s32 %s161, 1
      %p165 = scmp.eq.s32.totalorder %s31, 3
      %p166 = scmp.ne.s32.totalorder %s161, %s163
      %p167 = scmp.eq.s32.totalorder %s31, 0
      %p168 = por %p166, %p167
      %p169 = scmp.ne.s32.totalorder %s161, %s163
      %p170 = scmp.eq.s32.totalorder %s36, 3
      %p171 = por %p169, %p170
      %p172 = scmp.ne.s32.totalorder %s163, %s164
      %p173 = scmp.eq.s32.totalorder %s36, 0
      %p174 = por %p172, %p173
      %p175 = scmp.ne.s32.totalorder %s163, %s164
      %p176 = scmp.eq.s32.totalorder %s37, 3
      %p177 = por %p175, %p176
      %p179 = scmp.ne.s32.totalorder %s164, %s178
      %p180 = scmp.eq.s32.totalorder %s37, 0
      %p181 = por %p179, %p180
      %s183 = sadd.s32 %s182, 1
      %p186 = scmp.eq.s32.totalorder %s31, 3
      %p187 = scmp.ne.s32.totalorder %s182, %s184
      %p188 = scmp.eq.s32.totalorder %s31, 0
      %p189 = por %p187, %p188
      %p190 = scmp.ne.s32.totalorder %s182, %s184
      %p191 = scmp.eq.s32.totalorder %s36, 3
      %p192 = por %p190, %p191
      %p193 = scmp.ne.s32.totalorder %s184, %s185
      %p194 = scmp.eq.s32.totalorder %s36, 0
      %p195 = por %p193, %p194
      %p196 = scmp.ne.s32.totalorder %s184, %s185
      %p197 = scmp.eq.s32.totalorder %s37, 3
      %p198 = por %p196, %p197
      %p200 = scmp.ne.s32.totalorder %s185, %s199
      %p201 = scmp.eq.s32.totalorder %s37, 0
      %p202 = por %p200, %p201
      %s204 = sadd.s32 %s203, 1
      %p207 = scmp.eq.s32.totalorder %s31, 3
      %p208 = scmp.ne.s32.totalorder %s203, %s205
      %p209 = scmp.eq.s32.totalorder %s31, 0
      %p210 = por %p208, %p209
      %p211 = scmp.ne.s32.totalorder %s203, %s205
      %p212 = scmp.eq.s32.totalorder %s36, 3
      %p213 = por %p211, %p212
      %p214 = scmp.ne.s32.totalorder %s205, %s206
      %p215 = scmp.eq.s32.totalorder %s36, 0
      %p216 = por %p214, %p215
      %p217 = scmp.ne.s32.totalorder %s205, %s206
      %p218 = scmp.eq.s32.totalorder %s37, 3
      %p219 = por %p217, %p218
      %p221 = scmp.ne.s32.totalorder %s206, %s220
      %p222 = scmp.eq.s32.totalorder %s37, 0
      %p223 = por %p221, %p222
      %s225 = sadd.s32 %s224, 1
      %p228 = scmp.eq.s32.totalorder %s31, 3
      %p229 = scmp.ne.s32.totalorder %s224, %s226
      %p230 = scmp.eq.s32.totalorder %s31, 0
      %p231 = por %p229, %p230
      %p232 = scmp.ne.s32.totalorder %s224, %s226
      %p233 = scmp.eq.s32.totalorder %s36, 3
      %p234 = por %p232, %p233
      %p235 = scmp.ne.s32.totalorder %s226, %s227
      %p236 = scmp.eq.s32.totalorder %s36, 0
      %p237 = por %p235, %p236
      %p238 = scmp.ne.s32.totalorder %s226, %s227
      %p239 = scmp.eq.s32.totalorder %s37, 3
      %p240 = por %p238, %p239
      %p242 = scmp.ne.s32.totalorder %s227, %s241
      %p243 = scmp.eq.s32.totalorder %s37, 0
      %p244 = por %p242, %p243
      %s246 = sadd.s32 %s245, 1
      %p249 = scmp.eq.s32.totalorder %s31, 3
      %p250 = scmp.ne.s32.totalorder %s245, %s247
      %p251 = scmp.eq.s32.totalorder %s31, 0
      %p252 = por %p250, %p251
      %p253 = scmp.ne.s32.totalorder %s245, %s247
      %p254 = scmp.eq.s32.totalorder %s36, 3
      %p255 = por %p253, %p254
      %p256 = scmp.ne.s32.totalorder %s247, %s248
      %p257 = scmp.eq.s32.totalorder %s36, 0
      %p258 = por %p256, %p257
      %p259 = scmp.ne.s32.totalorder %s247, %s248
      %p260 = scmp.eq.s32.totalorder %s37, 3
      %p261 = por %p259, %p260
      %p263 = scmp.ne.s32.totalorder %s248, %s262
      %p264 = scmp.eq.s32.totalorder %s37, 0
      %p265 = por %p263, %p264
      %s267 = sadd.s32 %s266, 1
      %p270 = scmp.eq.s32.totalorder %s31, 3
      %p271 = scmp.ne.s32.totalorder %s266, %s268
      %p272 = scmp.eq.s32.totalorder %s31, 0
      %p273 = por %p271, %p272
      %p274 = scmp.ne.s32.totalorder %s266, %s268
      %p275 = scmp.eq.s32.totalorder %s36, 3
      %p276 = por %p274, %p275
      %p277 = scmp.ne.s32.totalorder %s268, %s269
      %p278 = scmp.eq.s32.totalorder %s36, 0
      %p279 = por %p277, %p278
      %p280 = scmp.ne.s32.totalorder %s268, %s269
      %p281 = scmp.eq.s32.totalorder %s37, 3
      %p282 = por %p280, %p281
      %p284 = scmp.ne.s32.totalorder %s269, %s283
      %p285 = scmp.eq.s32.totalorder %s37, 0
      %p286 = por %p284, %p285
      %s288 = sadd.s32 %s287, 1
      %p291 = scmp.eq.s32.totalorder %s31, 3
      %p292 = scmp.ne.s32.totalorder %s287, %s289
      %p293 = scmp.eq.s32.totalorder %s31, 0
      %p294 = por %p292, %p293
      %p295 = scmp.ne.s32.totalorder %s287, %s289
      %p296 = scmp.eq.s32.totalorder %s36, 3
      %p297 = por %p295, %p296
      %p298 = scmp.ne.s32.totalorder %s289, %s290
      %p299 = scmp.eq.s32.totalorder %s36, 0
      %p300 = por %p298, %p299
      %p301 = scmp.ne.s32.totalorder %s289, %s290
      %p302 = scmp.eq.s32.totalorder %s37, 3
      %p303 = por %p301, %p302
      %p305 = scmp.ne.s32.totalorder %s290, %s304
      %p306 = scmp.eq.s32.totalorder %s37, 0
      %p307 = por %p305, %p306
      %s309 = sadd.s32 %s308, 1
      %p312 = scmp.eq.s32.totalorder %s31, 3
      %p313 = scmp.ne.s32.totalorder %s308, %s310
      %p314 = scmp.eq.s32.totalorder %s31, 0
      %p315 = por %p313, %p314
      %p316 = scmp.ne.s32.totalorder %s308, %s310
      %p317 = scmp.eq.s32.totalorder %s36, 3
      %p318 = por %p316, %p317
      %p319 = scmp.ne.s32.totalorder %s310, %s311
      %p320 = scmp.eq.s32.totalorder %s36, 0
      %p321 = por %p319, %p320
      %p322 = scmp.ne.s32.totalorder %s310, %s311
      %p323 = scmp.eq.s32.totalorder %s37, 3
      %p324 = por %p322, %p323
      %p326 = scmp.ne.s32.totalorder %s311, %s325
      %p327 = scmp.eq.s32.totalorder %s37, 0
      %p328 = por %p326, %p327
      %s329 = ssub.s32 %s38, %s50
      %s330 = ssub.s32 %s39, %s46
      %s331 = sor.u32 %s329, %s330
      %p332 = scmp.eq.s32.totalorder %s331, 0
      %s334 = sadd.s32 %s333, 1
      %s335 = scalar_select %p332, %s333, %s334
      %p338 = pneg %p332
      %p339 = scmp.eq.s32.totalorder %s31, 3
      %p340 = por %p338, %p339
      %p341 = scmp.ne.s32.totalorder %s333, %s336
      %p342 = scmp.eq.s32.totalorder %s31, 0
      %p343 = por %p341, %p342
      %p344 = scmp.ne.s32.totalorder %s333, %s336
      %p345 = scmp.eq.s32.totalorder %s36, 3
      %p346 = por %p344, %p345
      %p347 = scmp.ne.s32.totalorder %s336, %s337
      %p348 = scmp.eq.s32.totalorder %s36, 0
      %p349 = por %p347, %p348
      %p350 = scmp.ne.s32.totalorder %s336, %s337
      %p351 = scmp.eq.s32.totalorder %s37, 3
      %p352 = por %p350, %p351
      %p354 = scmp.ne.s32.totalorder %s337, %s353
      %p355 = scmp.eq.s32.totalorder %s37, 0
      %p356 = por %p354, %p355
      %p357 = scmp.le.s32.totalorder 1, %s31
      %p358 = scmp.lt.s32.totalorder %s31, 5
      %p359 = pnand %p357, %p358
      %p360 = pneg %p359
      // Predicated region
      $region9: #{tpu_custom_call.1} parent=5 // pred_check
        _
      $region10: #{tpu_custom_call.1} parent=5 // pred_check_branch
        %362 = sbr.rel (%p359) target = $region12
      $region11: #{tpu_custom_call.1} parent=5 // pred_region
        %s363 = ssub.s32 %s31, 1
        // Predicated region
        $region13: #{tpu_custom_call.1} parent=11 // pred_check
          %p364 = pneg %p90
        $region14: #{tpu_custom_call.1} parent=11 // pred_check_branch
          %366 = sbr.rel (%p364) target = $region16
        $region15: #{tpu_custom_call.1} parent=11 // pred_region
          %s368 = ssub.s32 16, 16
          %369 = vsyncadd [#allocation10], %s368
          %s371 = sshll.u32 [#allocation9], 4
          %s372 = int_to_ptr.vmem [resolvable:$true] %s371
          %374 = dma.hbm_to_vmem [thread:$0]  %s1, 16, %s372, [#allocation10]
        $region16: #{tpu_custom_call.1} parent=11 // pred_fallthru
          _
        // Predicated region
        $region17: #{tpu_custom_call.1} parent=11 // pred_check
          %p375 = pneg %p111
        $region18: #{tpu_custom_call.1} parent=11 // pred_check_branch
          %377 = sbr.rel (%p375) target = $region20
        $region19: #{tpu_custom_call.1} parent=11 // pred_region
          %s379 = ssub.s32 16, 16
          %380 = vsyncadd [#allocation10], %s379
          %s382 = sshll.u32 [#allocation11], 4
          %s383 = int_to_ptr.vmem [resolvable:$true] %s382
          %385 = dma.hbm_to_vmem [thread:$0]  %s2, 16, %s383, [#allocation10]
        $region20: #{tpu_custom_call.1} parent=11 // pred_fallthru
          _
        // Predicated region
        $region21: #{tpu_custom_call.1} parent=11 // pred_check
          %p386 = pneg %p132
        $region22: #{tpu_custom_call.1} parent=11 // pred_check_branch
          %388 = sbr.rel (%p386) target = $region24
        $region23: #{tpu_custom_call.1} parent=11 // pred_region
          %s390 = ssub.s32 3072, 3072
          %391 = vsyncadd [#allocation13], %s390
          %s392 = sshll.u32 [#allocation12], 4
          %s393 = int_to_ptr.vmem [resolvable:$true] %s392
          %398 = dma.hbm_to_vmem [thread:$0]  %s3, 3072, %s393, [#allocation13], 192, 192, 12
        $region24: #{tpu_custom_call.1} parent=11 // pred_fallthru
          _
        // Predicated region
        $region25: #{tpu_custom_call.1} parent=11 // pred_check
          %p399 = pneg %p153
        $region26: #{tpu_custom_call.1} parent=11 // pred_check_branch
          %401 = sbr.rel (%p399) target = $region28
        $region27: #{tpu_custom_call.1} parent=11 // pred_region
          %s403 = ssub.s32 48, 48
          %404 = vsyncadd [#allocation13], %s403
          %s406 = sshll.u32 [#allocation14], 4
          %s407 = int_to_ptr.vmem [resolvable:$true] %s406
          %409 = dma.hbm_to_vmem [thread:$0]  %s4, 48, %s407, [#allocation13]
        $region28: #{tpu_custom_call.1} parent=11 // pred_fallthru
          _
        // Predicated region
        $region29: #{tpu_custom_call.1} parent=11 // pred_check
          %p410 = pneg %p174
        $region30: #{tpu_custom_call.1} parent=11 // pred_check_branch
          %412 = sbr.rel (%p410) target = $region32
        $region31: #{tpu_custom_call.1} parent=11 // pred_region
          %s414 = ssub.s32 1024, 1024
          %415 = vsyncadd [#allocation16], %s414
          %s416 = sshll.u32 [#allocation15], 4
          %s417 = int_to_ptr.vmem [resolvable:$true] %s416
          %422 = dma.hbm_to_vmem [thread:$0]  %s5, 1024, %s417, [#allocation16], 64, 64, 4
        $region32: #{tpu_custom_call.1} parent=11 // pred_fallthru
          _
        // Predicated region
        $region33: #{tpu_custom_call.1} parent=11 // pred_check
          %p423 = pneg %p195
        $region34: #{tpu_custom_call.1} parent=11 // pred_check_branch
          %425 = sbr.rel (%p423) target = $region36
        $region35: #{tpu_custom_call.1} parent=11 // pred_region
          %s427 = ssub.s32 16, 16
          %428 = vsyncadd [#allocation16], %s427
          %s430 = sshll.u32 [#allocation17], 4
          %s431 = int_to_ptr.vmem [resolvable:$true] %s430
          %433 = dma.hbm_to_vmem [thread:$0]  %s6, 16, %s431, [#allocation16]
        $region36: #{tpu_custom_call.1} parent=11 // pred_fallthru
          _
        // Predicated region
        $region37: #{tpu_custom_call.1} parent=11 // pred_check
          %p434 = pneg %p216
        $region38: #{tpu_custom_call.1} parent=11 // pred_check_branch
          %436 = sbr.rel (%p434) target = $region40
        $region39: #{tpu_custom_call.1} parent=11 // pred_region
          %s438 = ssub.s32 16, 16
          %439 = vsyncadd [#allocation19], %s438
          %s441 = sshll.u32 [#allocation18], 4
          %s442 = int_to_ptr.vmem [resolvable:$true] %s441
          %444 = dma.hbm_to_vmem [thread:$0]  %s7, 16, %s442, [#allocation19]
        $region40: #{tpu_custom_call.1} parent=11 // pred_fallthru
          _
        // Predicated region
        $region41: #{tpu_custom_call.1} parent=11 // pred_check
          %p445 = pneg %p237
        $region42: #{tpu_custom_call.1} parent=11 // pred_check_branch
          %447 = sbr.rel (%p445) target = $region44
        $region43: #{tpu_custom_call.1} parent=11 // pred_region
          %s449 = ssub.s32 16, 16
          %450 = vsyncadd [#allocation19], %s449
          %s452 = sshll.u32 [#allocation20], 4
          %s453 = int_to_ptr.vmem [resolvable:$true] %s452
          %455 = dma.hbm_to_vmem [thread:$0]  %s8, 16, %s453, [#allocation19]
        $region44: #{tpu_custom_call.1} parent=11 // pred_fallthru
          _
        // Predicated region
        $region45: #{tpu_custom_call.1} parent=11 // pred_check
          %p456 = pneg %p258
        $region46: #{tpu_custom_call.1} parent=11 // pred_check_branch
          %458 = sbr.rel (%p456) target = $region48
        $region47: #{tpu_custom_call.1} parent=11 // pred_region
          %s460 = ssub.s32 4096, 4096
          %461 = vsyncadd [#allocation22], %s460
          %s462 = sshll.u32 [#allocation21], 4
          %s463 = int_to_ptr.vmem [resolvable:$true] %s462
          %468 = dma.hbm_to_vmem [thread:$0]  %s9, 4096, %s463, [#allocation22], 256, 256, 16
        $region48: #{tpu_custom_call.1} parent=11 // pred_fallthru
          _
        // Predicated region
        $region49: #{tpu_custom_call.1} parent=11 // pred_check
          %p469 = pneg %p279
        $region50: #{tpu_custom_call.1} parent=11 // pred_check_branch
          %471 = sbr.rel (%p469) target = $region52
        $region51: #{tpu_custom_call.1} parent=11 // pred_region
          %s473 = ssub.s32 64, 64
          %474 = vsyncadd [#allocation22], %s473
          %s476 = sshll.u32 [#allocation23], 4
          %s477 = int_to_ptr.vmem [resolvable:$true] %s476
          %479 = dma.hbm_to_vmem [thread:$0]  %s10, 64, %s477, [#allocation22]
        $region52: #{tpu_custom_call.1} parent=11 // pred_fallthru
          _
        // Predicated region
        $region53: #{tpu_custom_call.1} parent=11 // pred_check
          %p480 = pneg %p300
        $region54: #{tpu_custom_call.1} parent=11 // pred_check_branch
          %482 = sbr.rel (%p480) target = $region56
        $region55: #{tpu_custom_call.1} parent=11 // pred_region
          %s484 = ssub.s32 4096, 4096
          %485 = vsyncadd [#allocation25], %s484
          %s486 = sshll.u32 [#allocation24], 4
          %s487 = int_to_ptr.vmem [resolvable:$true] %s486
          %492 = dma.hbm_to_vmem [thread:$0]  %s11, 4096, %s487, [#allocation25], 64, 64, 4
        $region56: #{tpu_custom_call.1} parent=11 // pred_fallthru
          _
        // Predicated region
        $region57: #{tpu_custom_call.1} parent=11 // pred_check
          %p493 = pneg %p321
        $region58: #{tpu_custom_call.1} parent=11 // pred_check_branch
          %495 = sbr.rel (%p493) target = $region60
        $region59: #{tpu_custom_call.1} parent=11 // pred_region
          %s497 = ssub.s32 16, 16
          %498 = vsyncadd [#allocation25], %s497
          %s500 = sshll.u32 [#allocation26], 4
          %s501 = int_to_ptr.vmem [resolvable:$true] %s500
          %503 = dma.hbm_to_vmem [thread:$0]  %s12, 16, %s501, [#allocation25]
        $region60: #{tpu_custom_call.1} parent=11 // pred_fallthru
          _
      $region12: #{tpu_custom_call.1} parent=5 // pred_fallthru
        _
      %p504 = scmp.lt.s32.totalorder %s31, 4
      // Predicated region
      $region61: #{tpu_custom_call.1} parent=5 // pred_check
        %p505 = pneg %p504
      $region62: #{tpu_custom_call.1} parent=5 // pred_check_branch
        %507 = sbr.rel (%p505) target = $region64
      $region63: #{tpu_custom_call.1} parent=5 // pred_region
        // Predicated region
        $region65: #{tpu_custom_call.1} parent=63 // pred_check
          %p508 = pneg %p63
        $region66: #{tpu_custom_call.1} parent=63 // pred_check_branch
          %510 = sbr.rel (%p508) target = $region68
        $region67: #{tpu_custom_call.1} parent=63 // pred_region
          %s511 = sand.u32 %s53, 1
          %s512 = scalar_lea.sflag [#allocation7], %s511
          %s513 = sand.u32 %s53, 1
          %s514 = smul.addr %s513, 256
          %s515 = scalar_lea.vmem [#allocation6], %s514
          %s517 = ssub.s32 4096, 4096
          %518 = vsyncadd %s512, %s517
          %s519 = smul.addr %s38, 32
          %s520 = smul.addr %s519, 128
          %s521 = scalar_lea.hbm %s0, %s520
          %s522 = sshll.u32 %s515, 4
          %s523 = int_to_ptr.vmem [resolvable:$true] %s522
          %528 = dma.hbm_to_vmem [thread:$0]  %s521, 4096, %s523, %s512, 128, 128, 8
        $region68: #{tpu_custom_call.1} parent=63 // pred_fallthru
          _
      $region64: #{tpu_custom_call.1} parent=5 // pred_fallthru
        _
      %p529 = scmp.le.s32.totalorder 1, %s31
      %p530 = scmp.lt.s32.totalorder %s31, 5
      %p531 = pnand %p529, %p530
      %p532 = pneg %p531
      // Predicated region
      $region69: #{tpu_custom_call.1} parent=5 // pred_check
        _
      $region70: #{tpu_custom_call.1} parent=5 // pred_check_branch
        %534 = sbr.rel (%p531) target = $region72
      $region71: #{tpu_custom_call.1} parent=5 // pred_region
        %s535 = ssub.s32 %s31, 1
        %s536 = sand.u32 %s56, 1
        %s537 = scalar_lea.sflag [#allocation7], %s536
        %s538 = sand.u32 %s56, 1
        %s539 = smul.addr %s538, 256
        %s540 = scalar_lea.vmem [#allocation6], %s539
        // Predicated region
        $region73: #{tpu_custom_call.1} parent=71 // pred_check
          %p541 = pneg %p69
        $region74: #{tpu_custom_call.1} parent=71 // pred_check_branch
          %543 = sbr.rel (%p541) target = $region76
        $region75: #{tpu_custom_call.1} parent=71 // pred_region
          %544 = dma.done %s537, 4096
        $region76: #{tpu_custom_call.1} parent=71 // pred_fallthru
          _
        // Predicated region
        $region77: #{tpu_custom_call.1} parent=71 // pred_check
          %p545 = pneg %p90
        $region78: #{tpu_custom_call.1} parent=71 // pred_check_branch
          %547 = sbr.rel (%p545) target = $region80
        $region79: #{tpu_custom_call.1} parent=71 // pred_region
          %548 = dma.done [#allocation10], 16
        $region80: #{tpu_custom_call.1} parent=71 // pred_fallthru
          _
        // Predicated region
        $region81: #{tpu_custom_call.1} parent=71 // pred_check
          %p549 = pneg %p111
        $region82: #{tpu_custom_call.1} parent=71 // pred_check_branch
          %551 = sbr.rel (%p549) target = $region84
        $region83: #{tpu_custom_call.1} parent=71 // pred_region
          %552 = dma.done [#allocation10], 16
        $region84: #{tpu_custom_call.1} parent=71 // pred_fallthru
          _
        // Predicated region
        $region85: #{tpu_custom_call.1} parent=71 // pred_check
          %p553 = pneg %p132
        $region86: #{tpu_custom_call.1} parent=71 // pred_check_branch
          %555 = sbr.rel (%p553) target = $region88
        $region87: #{tpu_custom_call.1} parent=71 // pred_region
          %556 = dma.done [#allocation13], 3072
        $region88: #{tpu_custom_call.1} parent=71 // pred_fallthru
          _
        // Predicated region
        $region89: #{tpu_custom_call.1} parent=71 // pred_check
          %p557 = pneg %p153
        $region90: #{tpu_custom_call.1} parent=71 // pred_check_branch
          %559 = sbr.rel (%p557) target = $region92
        $region91: #{tpu_custom_call.1} parent=71 // pred_region
          %560 = dma.done [#allocation13], 48
        $region92: #{tpu_custom_call.1} parent=71 // pred_fallthru
          _
        // Predicated region
        $region93: #{tpu_custom_call.1} parent=71 // pred_check
          %p561 = pneg %p174
        $region94: #{tpu_custom_call.1} parent=71 // pred_check_branch
          %563 = sbr.rel (%p561) target = $region96
        $region95: #{tpu_custom_call.1} parent=71 // pred_region
          %564 = dma.done [#allocation16], 1024
        $region96: #{tpu_custom_call.1} parent=71 // pred_fallthru
          _
        // Predicated region
        $region97: #{tpu_custom_call.1} parent=71 // pred_check
          %p565 = pneg %p195
        $region98: #{tpu_custom_call.1} parent=71 // pred_check_branch
          %567 = sbr.rel (%p565) target = $region100
        $region99: #{tpu_custom_call.1} parent=71 // pred_region
          %568 = dma.done [#allocation16], 16
        $region100: #{tpu_custom_call.1} parent=71 // pred_fallthru
          _
        // Predicated region
        $region101: #{tpu_custom_call.1} parent=71 // pred_check
          %p569 = pneg %p216
        $region102: #{tpu_custom_call.1} parent=71 // pred_check_branch
          %571 = sbr.rel (%p569) target = $region104
        $region103: #{tpu_custom_call.1} parent=71 // pred_region
          %572 = dma.done [#allocation19], 16
        $region104: #{tpu_custom_call.1} parent=71 // pred_fallthru
          _
        // Predicated region
        $region105: #{tpu_custom_call.1} parent=71 // pred_check
          %p573 = pneg %p237
        $region106: #{tpu_custom_call.1} parent=71 // pred_check_branch
          %575 = sbr.rel (%p573) target = $region108
        $region107: #{tpu_custom_call.1} parent=71 // pred_region
          %576 = dma.done [#allocation19], 16
        $region108: #{tpu_custom_call.1} parent=71 // pred_fallthru
          _
        // Predicated region
        $region109: #{tpu_custom_call.1} parent=71 // pred_check
          %p577 = pneg %p258
        $region110: #{tpu_custom_call.1} parent=71 // pred_check_branch
          %579 = sbr.rel (%p577) target = $region112
        $region111: #{tpu_custom_call.1} parent=71 // pred_region
          %580 = dma.done [#allocation22], 4096
        $region112: #{tpu_custom_call.1} parent=71 // pred_fallthru
          _
        // Predicated region
        $region113: #{tpu_custom_call.1} parent=71 // pred_check
          %p581 = pneg %p279
        $region114: #{tpu_custom_call.1} parent=71 // pred_check_branch
          %583 = sbr.rel (%p581) target = $region116
        $region115: #{tpu_custom_call.1} parent=71 // pred_region
          %584 = dma.done [#allocation22], 64
        $region116: #{tpu_custom_call.1} parent=71 // pred_fallthru
          _
        // Predicated region
        $region117: #{tpu_custom_call.1} parent=71 // pred_check
          %p585 = pneg %p300
        $region118: #{tpu_custom_call.1} parent=71 // pred_check_branch
          %587 = sbr.rel (%p585) target = $region120
        $region119: #{tpu_custom_call.1} parent=71 // pred_region
          %588 = dma.done [#allocation25], 4096
        $region120: #{tpu_custom_call.1} parent=71 // pred_fallthru
          _
        // Predicated region
        $region121: #{tpu_custom_call.1} parent=71 // pred_check
          %p589 = pneg %p321
        $region122: #{tpu_custom_call.1} parent=71 // pred_check_branch
          %591 = sbr.rel (%p589) target = $region124
        $region123: #{tpu_custom_call.1} parent=71 // pred_region
          %592 = dma.done [#allocation25], 16
        $region124: #{tpu_custom_call.1} parent=71 // pred_fallthru
          _
        %s593 = sand.u32 %s56, 1
        %s594 = scalar_lea.sflag [#allocation7], %s593
        %s595 = sand.u32 %s56, 1
        %s596 = smul.addr %s595, 256
        %s597 = scalar_lea.vmem [#allocation6], %s596
        %p598 = pneg %p69
        %p599 = pneg %p66
        %p600 = pneg %p90
        %p601 = pneg %p87
        %p602 = pneg %p111
        %p603 = pneg %p108
        %p604 = pneg %p132
        %p605 = pneg %p129
        %p606 = pneg %p153
        %p607 = pneg %p150
        %p608 = pneg %p174
        %p609 = pneg %p171
        %p610 = pneg %p195
        %p611 = pneg %p192
        %p612 = pneg %p216
        %p613 = pneg %p213
        %p614 = pneg %p237
        %p615 = pneg %p234
        %p616 = pneg %p258
        %p617 = pneg %p255
        %p618 = pneg %p279
        %p619 = pneg %p276
        %p620 = pneg %p300
        %p621 = pneg %p297
        %p622 = pneg %p321
        %p623 = pneg %p318
        %p624 = pneg %p349
        %p625 = pneg %p346
        %s626 = sand.u32 %s336, 1
        %s627 = scalar_lea.sflag [#allocation8], %s626
        %s628 = sand.u32 %s336, 1
        %s629 = smul.addr %s628, 128
        %s630 = scalar_lea.vmem [#allocation27], %s629
        %s631 = smul.u32 16, %s41
        %s633 = smul.u32 %s41, 128
        %p634 = scmp.eq.s32.totalorder %s41, 0
        // Predicated region
        $region125: #{tpu_custom_call.1} parent=71 // pred_check
          %p635 = pneg %p634
        $region126: #{tpu_custom_call.1} parent=71 // pred_check_branch
          %637 = sbr.rel (%p635) target = $region128
        $region127: #{tpu_custom_call.1} parent=71 // pred_region
          %v638 = vld [vmem:[%s540] sm:$0xff]
          %v639 = vld [vmem:[%s540 + $0x8] sm:$0xff]
          %v640 = vld [vmem:[%s540 + $0x10] sm:$0xff]
          %v641 = vld [vmem:[%s540 + $0x18] sm:$0xff]
          %v642 = vld [vmem:[%s540 + $0x20] sm:$0xff]
          %v643 = vld [vmem:[%s540 + $0x28] sm:$0xff]
          %v644 = vld [vmem:[%s540 + $0x30] sm:$0xff]
          %v645 = vld [vmem:[%s540 + $0x38] sm:$0xff]
          %v646 = vld [vmem:[%s540 + $0x40] sm:$0xff]
          %v647 = vld [vmem:[%s540 + $0x48] sm:$0xff]
          %v648 = vld [vmem:[%s540 + $0x50] sm:$0xff]
          %v649 = vld [vmem:[%s540 + $0x58] sm:$0xff]
          %v650 = vld [vmem:[%s540 + $0x60] sm:$0xff]
          %v651 = vld [vmem:[%s540 + $0x68] sm:$0xff]
          %v652 = vld [vmem:[%s540 + $0x70] sm:$0xff]
          %v653 = vld [vmem:[%s540 + $0x78] sm:$0xff]
          %v654 = vld [vmem:[%s540 + $0x80] sm:$0xff]
          %v655 = vld [vmem:[%s540 + $0x88] sm:$0xff]
          %v656 = vld [vmem:[%s540 + $0x90] sm:$0xff]
          %v657 = vld [vmem:[%s540 + $0x98] sm:$0xff]
          %v658 = vld [vmem:[%s540 + $0xa0] sm:$0xff]
          %v659 = vld [vmem:[%s540 + $0xa8] sm:$0xff]
          %v660 = vld [vmem:[%s540 + $0xb0] sm:$0xff]
          %v661 = vld [vmem:[%s540 + $0xb8] sm:$0xff]
          %v662 = vld [vmem:[%s540 + $0xc0] sm:$0xff]
          %v663 = vld [vmem:[%s540 + $0xc8] sm:$0xff]
          %v664 = vld [vmem:[%s540 + $0xd0] sm:$0xff]
          %v665 = vld [vmem:[%s540 + $0xd8] sm:$0xff]
          %v666 = vld [vmem:[%s540 + $0xe0] sm:$0xff]
          %v667 = vld [vmem:[%s540 + $0xe8] sm:$0xff]
          %v668 = vld [vmem:[%s540 + $0xf0] sm:$0xff]
          %v669 = vld [vmem:[%s540 + $0xf8] sm:$0xff]
          %v670 = vld [vmem:[#allocation9] sm:$0x1]
          %v671 = vld [vmem:[#allocation11] sm:$0x1]
          %672 = vadd.xlane.f32.xlu0 %v638
          %v673 = vpop.xlane.xlu0 %672
          %674 = vadd.xlane.f32.xlu0 %v639
          %v675 = vpop.xlane.xlu0 %674
          %676 = vadd.xlane.f32.xlu0 %v640
          %v677 = vpop.xlane.xlu0 %676
          %678 = vadd.xlane.f32.xlu0 %v641
          %v679 = vpop.xlane.xlu0 %678
          %680 = vadd.xlane.f32.xlu0 %v642
          %v681 = vpop.xlane.xlu0 %680
          %682 = vadd.xlane.f32.xlu0 %v643
          %v683 = vpop.xlane.xlu0 %682
          %684 = vadd.xlane.f32.xlu0 %v644
          %v685 = vpop.xlane.xlu0 %684
          %686 = vadd.xlane.f32.xlu0 %v645
          %v687 = vpop.xlane.xlu0 %686
          %688 = vadd.xlane.f32.xlu0 %v646
          %v689 = vpop.xlane.xlu0 %688
          %690 = vadd.xlane.f32.xlu0 %v647
          %v691 = vpop.xlane.xlu0 %690
          %692 = vadd.xlane.f32.xlu0 %v648
          %v693 = vpop.xlane.xlu0 %692
          %694 = vadd.xlane.f32.xlu0 %v649
          %v695 = vpop.xlane.xlu0 %694
          %696 = vadd.xlane.f32.xlu0 %v650
          %v697 = vpop.xlane.xlu0 %696
          %698 = vadd.xlane.f32.xlu0 %v651
          %v699 = vpop.xlane.xlu0 %698
          %700 = vadd.xlane.f32.xlu0 %v652
          %v701 = vpop.xlane.xlu0 %700
          %702 = vadd.xlane.f32.xlu0 %v653
          %v703 = vpop.xlane.xlu0 %702
          %704 = vadd.xlane.f32.xlu0 %v654
          %v705 = vpop.xlane.xlu0 %704
          %706 = vadd.xlane.f32.xlu0 %v655
          %v707 = vpop.xlane.xlu0 %706
          %708 = vadd.xlane.f32.xlu0 %v656
          %v709 = vpop.xlane.xlu0 %708
          %710 = vadd.xlane.f32.xlu0 %v657
          %v711 = vpop.xlane.xlu0 %710
          %712 = vadd.xlane.f32.xlu0 %v658
          %v713 = vpop.xlane.xlu0 %712
          %714 = vadd.xlane.f32.xlu0 %v659
          %v715 = vpop.xlane.xlu0 %714
          %716 = vadd.xlane.f32.xlu0 %v660
          %v717 = vpop.xlane.xlu0 %716
          %718 = vadd.xlane.f32.xlu0 %v661
          %v719 = vpop.xlane.xlu0 %718
          %720 = vadd.xlane.f32.xlu0 %v662
          %v721 = vpop.xlane.xlu0 %720
          %722 = vadd.xlane.f32.xlu0 %v663
          %v723 = vpop.xlane.xlu0 %722
          %724 = vadd.xlane.f32.xlu0 %v664
          %v725 = vpop.xlane.xlu0 %724
          %726 = vadd.xlane.f32.xlu0 %v665
          %v727 = vpop.xlane.xlu0 %726
          %728 = vadd.xlane.f32.xlu0 %v666
          %v729 = vpop.xlane.xlu0 %728
          %730 = vadd.xlane.f32.xlu0 %v667
          %v731 = vpop.xlane.xlu0 %730
          %732 = vadd.xlane.f32.xlu0 %v668
          %v733 = vpop.xlane.xlu0 %732
          %734 = vadd.xlane.f32.xlu0 %v669
          %v735 = vpop.xlane.xlu0 %734
          %v736 = vrcp.pop 128.0
          %v737 = vmul.f32 %v673, %v736
          %v738 = vmul.f32 %v675, %v736
          %v739 = vmul.f32 %v677, %v736
          %v740 = vmul.f32 %v679, %v736
          %v741 = vmul.f32 %v681, %v736
          %v742 = vmul.f32 %v683, %v736
          %v743 = vmul.f32 %v685, %v736
          %v744 = vmul.f32 %v687, %v736
          %v745 = vmul.f32 %v689, %v736
          %v746 = vmul.f32 %v691, %v736
          %v747 = vmul.f32 %v693, %v736
          %v748 = vmul.f32 %v695, %v736
          %v749 = vmul.f32 %v697, %v736
          %v750 = vmul.f32 %v699, %v736
          %v751 = vmul.f32 %v701, %v736
          %v752 = vmul.f32 %v703, %v736
          %v753 = vmul.f32 %v705, %v736
          %v754 = vmul.f32 %v707, %v736
          %v755 = vmul.f32 %v709, %v736
          %v756 = vmul.f32 %v711, %v736
          %v757 = vmul.f32 %v713, %v736
          %v758 = vmul.f32 %v715, %v736
          %v759 = vmul.f32 %v717, %v736
          %v760 = vmul.f32 %v719, %v736
          %v761 = vmul.f32 %v721, %v736
          %v762 = vmul.f32 %v723, %v736
          %v763 = vmul.f32 %v725, %v736
          %v764 = vmul.f32 %v727, %v736
          %v765 = vmul.f32 %v729, %v736
          %v766 = vmul.f32 %v731, %v736
          %v767 = vmul.f32 %v733, %v736
          %v768 = vmul.f32 %v735, %v736
          %v769 = vsub.f32 %v638, %v737
          %v770 = vsub.f32 %v639, %v738
          %v771 = vsub.f32 %v640, %v739
          %v772 = vsub.f32 %v641, %v740
          %v773 = vsub.f32 %v642, %v741
          %v774 = vsub.f32 %v643, %v742
          %v775 = vsub.f32 %v644, %v743
          %v776 = vsub.f32 %v645, %v744
          %v777 = vsub.f32 %v646, %v745
          %v778 = vsub.f32 %v647, %v746
          %v779 = vsub.f32 %v648, %v747
          %v780 = vsub.f32 %v649, %v748
          %v781 = vsub.f32 %v650, %v749
          %v782 = vsub.f32 %v651, %v750
          %v783 = vsub.f32 %v652, %v751
          %v784 = vsub.f32 %v653, %v752
          %v785 = vsub.f32 %v654, %v753
          %v786 = vsub.f32 %v655, %v754
          %v787 = vsub.f32 %v656, %v755
          %v788 = vsub.f32 %v657, %v756
          %v789 = vsub.f32 %v658, %v757
          %v790 = vsub.f32 %v659, %v758
          %v791 = vsub.f32 %v660, %v759
          %v792 = vsub.f32 %v661, %v760
          %v793 = vsub.f32 %v662, %v761
          %v794 = vsub.f32 %v663, %v762
          %v795 = vsub.f32 %v664, %v763
          %v796 = vsub.f32 %v665, %v764
          %v797 = vsub.f32 %v666, %v765
          %v798 = vsub.f32 %v667, %v766
          %v799 = vsub.f32 %v668, %v767
          %v800 = vsub.f32 %v669, %v768
          %v801 = vmul.f32 %v769, %v769
          %v802 = vmul.f32 %v770, %v770
          %v803 = vmul.f32 %v771, %v771
          %v804 = vmul.f32 %v772, %v772
          %v805 = vmul.f32 %v773, %v773
          %v806 = vmul.f32 %v774, %v774
          %v807 = vmul.f32 %v775, %v775
          %v808 = vmul.f32 %v776, %v776
          %v809 = vmul.f32 %v777, %v777
          %v810 = vmul.f32 %v778, %v778
          %v811 = vmul.f32 %v779, %v779
          %v812 = vmul.f32 %v780, %v780
          %v813 = vmul.f32 %v781, %v781
          %v814 = vmul.f32 %v782, %v782
          %v815 = vmul.f32 %v783, %v783
          %v816 = vmul.f32 %v784, %v784
          %v817 = vmul.f32 %v785, %v785
          %v818 = vmul.f32 %v786, %v786
          %v819 = vmul.f32 %v787, %v787
          %v820 = vmul.f32 %v788, %v788
          %v821 = vmul.f32 %v789, %v789
          %v822 = vmul.f32 %v790, %v790
          %v823 = vmul.f32 %v791, %v791
          %v824 = vmul.f32 %v792, %v792
          %v825 = vmul.f32 %v793, %v793
          %v826 = vmul.f32 %v794, %v794
          %v827 = vmul.f32 %v795, %v795
          %v828 = vmul.f32 %v796, %v796
          %v829 = vmul.f32 %v797, %v797
          %v830 = vmul.f32 %v798, %v798
          %v831 = vmul.f32 %v799, %v799
          %v832 = vmul.f32 %v800, %v800
          %833 = vadd.xlane.f32.xlu0 %v801
          %v834 = vpop.xlane.xlu0 %833
          %835 = vadd.xlane.f32.xlu0 %v802
          %v836 = vpop.xlane.xlu0 %835
          %837 = vadd.xlane.f32.xlu0 %v803
          %v838 = vpop.xlane.xlu0 %837
          %839 = vadd.xlane.f32.xlu0 %v804
          %v840 = vpop.xlane.xlu0 %839
          %841 = vadd.xlane.f32.xlu0 %v805
          %v842 = vpop.xlane.xlu0 %841
          %843 = vadd.xlane.f32.xlu0 %v806
          %v844 = vpop.xlane.xlu0 %843
          %845 = vadd.xlane.f32.xlu0 %v807
          %v846 = vpop.xlane.xlu0 %845
          %847 = vadd.xlane.f32.xlu0 %v808
          %v848 = vpop.xlane.xlu0 %847
          %849 = vadd.xlane.f32.xlu0 %v809
          %v850 = vpop.xlane.xlu0 %849
          %851 = vadd.xlane.f32.xlu0 %v810
          %v852 = vpop.xlane.xlu0 %851
          %853 = vadd.xlane.f32.xlu0 %v811
          %v854 = vpop.xlane.xlu0 %853
          %855 = vadd.xlane.f32.xlu0 %v812
          %v856 = vpop.xlane.xlu0 %855
          %857 = vadd.xlane.f32.xlu0 %v813
          %v858 = vpop.xlane.xlu0 %857
          %859 = vadd.xlane.f32.xlu0 %v814
          %v860 = vpop.xlane.xlu0 %859
          %861 = vadd.xlane.f32.xlu0 %v815
          %v862 = vpop.xlane.xlu0 %861
          %863 = vadd.xlane.f32.xlu0 %v816
          %v864 = vpop.xlane.xlu0 %863
          %865 = vadd.xlane.f32.xlu0 %v817
          %v866 = vpop.xlane.xlu0 %865
          %867 = vadd.xlane.f32.xlu0 %v818
          %v868 = vpop.xlane.xlu0 %867
          %869 = vadd.xlane.f32.xlu0 %v819
          %v870 = vpop.xlane.xlu0 %869
          %871 = vadd.xlane.f32.xlu0 %v820
          %v872 = vpop.xlane.xlu0 %871
          %873 = vadd.xlane.f32.xlu0 %v821
          %v874 = vpop.xlane.xlu0 %873
          %875 = vadd.xlane.f32.xlu0 %v822
          %v876 = vpop.xlane.xlu0 %875
          %877 = vadd.xlane.f32.xlu0 %v823
          %v878 = vpop.xlane.xlu0 %877
          %879 = vadd.xlane.f32.xlu0 %v824
          %v880 = vpop.xlane.xlu0 %879
          %881 = vadd.xlane.f32.xlu0 %v825
          %v882 = vpop.xlane.xlu0 %881
          %883 = vadd.xlane.f32.xlu0 %v826
          %v884 = vpop.xlane.xlu0 %883
          %885 = vadd.xlane.f32.xlu0 %v827
          %v886 = vpop.xlane.xlu0 %885
          %887 = vadd.xlane.f32.xlu0 %v828
          %v888 = vpop.xlane.xlu0 %887
          %889 = vadd.xlane.f32.xlu0 %v829
          %v890 = vpop.xlane.xlu0 %889
          %891 = vadd.xlane.f32.xlu0 %v830
          %v892 = vpop.xlane.xlu0 %891
          %893 = vadd.xlane.f32.xlu0 %v831
          %v894 = vpop.xlane.xlu0 %893
          %895 = vadd.xlane.f32.xlu0 %v832
          %v896 = vpop.xlane.xlu0 %895
          %v897 = vmul.f32 %v834, %v736
          %v898 = vmul.f32 %v836, %v736
          %v899 = vmul.f32 %v838, %v736
          %v900 = vmul.f32 %v840, %v736
          %v901 = vmul.f32 %v842, %v736
          %v902 = vmul.f32 %v844, %v736
          %v903 = vmul.f32 %v846, %v736
          %v904 = vmul.f32 %v848, %v736
          %v905 = vmul.f32 %v850, %v736
          %v906 = vmul.f32 %v852, %v736
          %v907 = vmul.f32 %v854, %v736
          %v908 = vmul.f32 %v856, %v736
          %v909 = vmul.f32 %v858, %v736
          %v910 = vmul.f32 %v860, %v736
          %v911 = vmul.f32 %v862, %v736
          %v912 = vmul.f32 %v864, %v736
          %v913 = vmul.f32 %v866, %v736
          %v914 = vmul.f32 %v868, %v736
          %v915 = vmul.f32 %v870, %v736
          %v916 = vmul.f32 %v872, %v736
          %v917 = vmul.f32 %v874, %v736
          %v918 = vmul.f32 %v876, %v736
          %v919 = vmul.f32 %v878, %v736
          %v920 = vmul.f32 %v880, %v736
          %v921 = vmul.f32 %v882, %v736
          %v922 = vmul.f32 %v884, %v736
          %v923 = vmul.f32 %v886, %v736
          %v924 = vmul.f32 %v888, %v736
          %v925 = vmul.f32 %v890, %v736
          %v926 = vmul.f32 %v892, %v736
          %v927 = vmul.f32 %v894, %v736
          %v928 = vmul.f32 %v896, %v736
          %v929 = vadd.f32 %v897, 1e-05
          %v930 = vadd.f32 %v898, 1e-05
          %v931 = vadd.f32 %v899, 1e-05
          %v932 = vadd.f32 %v900, 1e-05
          %v933 = vadd.f32 %v901, 1e-05
          %v934 = vadd.f32 %v902, 1e-05
          %v935 = vadd.f32 %v903, 1e-05
          %v936 = vadd.f32 %v904, 1e-05
          %v937 = vadd.f32 %v905, 1e-05
          %v938 = vadd.f32 %v906, 1e-05
          %v939 = vadd.f32 %v907, 1e-05
          %v940 = vadd.f32 %v908, 1e-05
          %v941 = vadd.f32 %v909, 1e-05
          %v942 = vadd.f32 %v910, 1e-05
          %v943 = vadd.f32 %v911, 1e-05
          %v944 = vadd.f32 %v912, 1e-05
          %v945 = vadd.f32 %v913, 1e-05
          %v946 = vadd.f32 %v914, 1e-05
          %v947 = vadd.f32 %v915, 1e-05
          %v948 = vadd.f32 %v916, 1e-05
          %v949 = vadd.f32 %v917, 1e-05
          %v950 = vadd.f32 %v918, 1e-05
          %v951 = vadd.f32 %v919, 1e-05
          %v952 = vadd.f32 %v920, 1e-05
          %v953 = vadd.f32 %v921, 1e-05
          %v954 = vadd.f32 %v922, 1e-05
          %v955 = vadd.f32 %v923, 1e-05
          %v956 = vadd.f32 %v924, 1e-05
          %v957 = vadd.f32 %v925, 1e-05
          %v958 = vadd.f32 %v926, 1e-05
          %v959 = vadd.f32 %v927, 1e-05
          %v960 = vadd.f32 %v928, 1e-05
          %v961 = vrsqrt.pop %v929
          %v962 = vrsqrt.pop %v930
          %v963 = vrsqrt.pop %v931
          %v964 = vrsqrt.pop %v932
          %v965 = vrsqrt.pop %v933
          %v966 = vrsqrt.pop %v934
          %v967 = vrsqrt.pop %v935
          %v968 = vrsqrt.pop %v936
          %v969 = vrsqrt.pop %v937
          %v970 = vrsqrt.pop %v938
          %v971 = vrsqrt.pop %v939
          %v972 = vrsqrt.pop %v940
          %v973 = vrsqrt.pop %v941
          %v974 = vrsqrt.pop %v942
          %v975 = vrsqrt.pop %v943
          %v976 = vrsqrt.pop %v944
          %v977 = vrsqrt.pop %v945
          %v978 = vrsqrt.pop %v946
          %v979 = vrsqrt.pop %v947
          %v980 = vrsqrt.pop %v948
          %v981 = vrsqrt.pop %v949
          %v982 = vrsqrt.pop %v950
          %v983 = vrsqrt.pop %v951
          %v984 = vrsqrt.pop %v952
          %v985 = vrsqrt.pop %v953
          %v986 = vrsqrt.pop %v954
          %v987 = vrsqrt.pop %v955
          %v988 = vrsqrt.pop %v956
          %v989 = vrsqrt.pop %v957
          %v990 = vrsqrt.pop %v958
          %v991 = vrsqrt.pop %v959
          %v992 = vrsqrt.pop %v960
          %v993 = vmul.f32 %v769, %v961
          %v994 = vmul.f32 %v770, %v962
          %v995 = vmul.f32 %v771, %v963
          %v996 = vmul.f32 %v772, %v964
          %v997 = vmul.f32 %v773, %v965
          %v998 = vmul.f32 %v774, %v966
          %v999 = vmul.f32 %v775, %v967
          %v1000 = vmul.f32 %v776, %v968
          %v1001 = vmul.f32 %v777, %v969
          %v1002 = vmul.f32 %v778, %v970
          %v1003 = vmul.f32 %v779, %v971
          %v1004 = vmul.f32 %v780, %v972
          %v1005 = vmul.f32 %v781, %v973
          %v1006 = vmul.f32 %v782, %v974
          %v1007 = vmul.f32 %v783, %v975
          %v1008 = vmul.f32 %v784, %v976
          %v1009 = vmul.f32 %v785, %v977
          %v1010 = vmul.f32 %v786, %v978
          %v1011 = vmul.f32 %v787, %v979
          %v1012 = vmul.f32 %v788, %v980
          %v1013 = vmul.f32 %v789, %v981
          %v1014 = vmul.f32 %v790, %v982
          %v1015 = vmul.f32 %v791, %v983
          %v1016 = vmul.f32 %v792, %v984
          %v1017 = vmul.f32 %v793, %v985
          %v1018 = vmul.f32 %v794, %v986
          %v1019 = vmul.f32 %v795, %v987
          %v1020 = vmul.f32 %v796, %v988
          %v1021 = vmul.f32 %v797, %v989
          %v1022 = vmul.f32 %v798, %v990
          %v1023 = vmul.f32 %v799, %v991
          %v1024 = vmul.f32 %v800, %v992
          %v1026 = vlaneseq
          %v1027 = vshrl.u32 %v1026, 7
          %v1028 = vsub.s32 0, %v1027
          %v1029 = vrot.slane %v670, %v1028
          %v1031 = vmul.f32 %v993, %v1029
          %v1032 = vmul.f32 %v994, %v1029
          %v1033 = vmul.f32 %v995, %v1029
          %v1034 = vmul.f32 %v996, %v1029
          %v1035 = vmul.f32 %v997, %v1029
          %v1036 = vmul.f32 %v998, %v1029
          %v1037 = vmul.f32 %v999, %v1029
          %v1038 = vmul.f32 %v1000, %v1029
          %v1039 = vmul.f32 %v1001, %v1029
          %v1040 = vmul.f32 %v1002, %v1029
          %v1041 = vmul.f32 %v1003, %v1029
          %v1042 = vmul.f32 %v1004, %v1029
          %v1043 = vmul.f32 %v1005, %v1029
          %v1044 = vmul.f32 %v1006, %v1029
          %v1045 = vmul.f32 %v1007, %v1029
          %v1046 = vmul.f32 %v1008, %v1029
          %v1047 = vmul.f32 %v1009, %v1029
          %v1048 = vmul.f32 %v1010, %v1029
          %v1049 = vmul.f32 %v1011, %v1029
          %v1050 = vmul.f32 %v1012, %v1029
          %v1051 = vmul.f32 %v1013, %v1029
          %v1052 = vmul.f32 %v1014, %v1029
          %v1053 = vmul.f32 %v1015, %v1029
          %v1054 = vmul.f32 %v1016, %v1029
          %v1055 = vmul.f32 %v1017, %v1029
          %v1056 = vmul.f32 %v1018, %v1029
          %v1057 = vmul.f32 %v1019, %v1029
          %v1058 = vmul.f32 %v1020, %v1029
          %v1059 = vmul.f32 %v1021, %v1029
          %v1060 = vmul.f32 %v1022, %v1029
          %v1061 = vmul.f32 %v1023, %v1029
          %v1062 = vmul.f32 %v1024, %v1029
          %v1064 = vlaneseq
          %v1065 = vshrl.u32 %v1064, 7
          %v1066 = vsub.s32 0, %v1065
          %v1067 = vrot.slane %v671, %v1066
          %v1069 = vadd.f32 %v1031, %v1067
          %v1070 = vadd.f32 %v1032, %v1067
          %v1071 = vadd.f32 %v1033, %v1067
          %v1072 = vadd.f32 %v1034, %v1067
          %v1073 = vadd.f32 %v1035, %v1067
          %v1074 = vadd.f32 %v1036, %v1067
          %v1075 = vadd.f32 %v1037, %v1067
          %v1076 = vadd.f32 %v1038, %v1067
          %v1077 = vadd.f32 %v1039, %v1067
          %v1078 = vadd.f32 %v1040, %v1067
          %v1079 = vadd.f32 %v1041, %v1067
          %v1080 = vadd.f32 %v1042, %v1067
          %v1081 = vadd.f32 %v1043, %v1067
          %v1082 = vadd.f32 %v1044, %v1067
          %v1083 = vadd.f32 %v1045, %v1067
          %v1084 = vadd.f32 %v1046, %v1067
          %v1085 = vadd.f32 %v1047, %v1067
          %v1086 = vadd.f32 %v1048, %v1067
          %v1087 = vadd.f32 %v1049, %v1067
          %v1088 = vadd.f32 %v1050, %v1067
          %v1089 = vadd.f32 %v1051, %v1067
          %v1090 = vadd.f32 %v1052, %v1067
          %v1091 = vadd.f32 %v1053, %v1067
          %v1092 = vadd.f32 %v1054, %v1067
          %v1093 = vadd.f32 %v1055, %v1067
          %v1094 = vadd.f32 %v1056, %v1067
          %v1095 = vadd.f32 %v1057, %v1067
          %v1096 = vadd.f32 %v1058, %v1067
          %v1097 = vadd.f32 %v1059, %v1067
          %v1098 = vadd.f32 %v1060, %v1067
          %v1099 = vadd.f32 %v1061, %v1067
          %v1100 = vadd.f32 %v1062, %v1067
          %v1101 = vpack.c.bf16 %v1070, %v1069
          %v1102 = vpack.c.bf16 %v1072, %v1071
          %v1103 = vpack.c.bf16 %v1074, %v1073
          %v1104 = vpack.c.bf16 %v1076, %v1075
          %v1105 = vpack.c.bf16 %v1078, %v1077
          %v1106 = vpack.c.bf16 %v1080, %v1079
          %v1107 = vpack.c.bf16 %v1082, %v1081
          %v1108 = vpack.c.bf16 %v1084, %v1083
          %v1109 = vpack.c.bf16 %v1086, %v1085
          %v1110 = vpack.c.bf16 %v1088, %v1087
          %v1111 = vpack.c.bf16 %v1090, %v1089
          %v1112 = vpack.c.bf16 %v1092, %v1091
          %v1113 = vpack.c.bf16 %v1094, %v1093
          %v1114 = vpack.c.bf16 %v1096, %v1095
          %v1115 = vpack.c.bf16 %v1098, %v1097
          %v1116 = vpack.c.bf16 %v1100, %v1099
          %v1117 = vld [vmem:[#allocation12] sm:$0xff]
          %v1118 = vld [vmem:[#allocation12 + $0x8] sm:$0xf]
          %v1119 = vld [vmem:[#allocation12 + $0xc] sm:$0xff]
          %v1120 = vld [vmem:[#allocation12 + $0x14] sm:$0xf]
          %v1121 = vld [vmem:[#allocation12 + $0x18] sm:$0xff]
          %v1122 = vld [vmem:[#allocation12 + $0x20] sm:$0xf]
          %v1123 = vld [vmem:[#allocation12 + $0x24] sm:$0xff]
          %v1124 = vld [vmem:[#allocation12 + $0x2c] sm:$0xf]
          %v1125 = vld [vmem:[#allocation12 + $0x30] sm:$0xff]
          %v1126 = vld [vmem:[#allocation12 + $0x38] sm:$0xf]
          %v1127 = vld [vmem:[#allocation12 + $0x3c] sm:$0xff]
          %v1128 = vld [vmem:[#allocation12 + $0x44] sm:$0xf]
          %v1129 = vld [vmem:[#allocation12 + $0x48] sm:$0xff]
          %v1130 = vld [vmem:[#allocation12 + $0x50] sm:$0xf]
          %v1131 = vld [vmem:[#allocation12 + $0x54] sm:$0xff]
          %v1132 = vld [vmem:[#allocation12 + $0x5c] sm:$0xf]
          %v1133 = vld [vmem:[#allocation12 + $0x60] sm:$0xff]
          %v1134 = vld [vmem:[#allocation12 + $0x68] sm:$0xf]
          %v1135 = vld [vmem:[#allocation12 + $0x6c] sm:$0xff]
          %v1136 = vld [vmem:[#allocation12 + $0x74] sm:$0xf]
          %v1137 = vld [vmem:[#allocation12 + $0x78] sm:$0xff]
          %v1138 = vld [vmem:[#allocation12 + $0x80] sm:$0xf]
          %v1139 = vld [vmem:[#allocation12 + $0x84] sm:$0xff]
          %v1140 = vld [vmem:[#allocation12 + $0x8c] sm:$0xf]
          %v1141 = vld [vmem:[#allocation12 + $0x90] sm:$0xff]
          %v1142 = vld [vmem:[#allocation12 + $0x98] sm:$0xf]
          %v1143 = vld [vmem:[#allocation12 + $0x9c] sm:$0xff]
          %v1144 = vld [vmem:[#allocation12 + $0xa4] sm:$0xf]
          %v1145 = vld [vmem:[#allocation12 + $0xa8] sm:$0xff]
          %v1146 = vld [vmem:[#allocation12 + $0xb0] sm:$0xf]
          %v1147 = vld [vmem:[#allocation12 + $0xb4] sm:$0xff]
          %v1148 = vld [vmem:[#allocation12 + $0xbc] sm:$0xf]
          %v1149 = vld [vmem:[#allocation14] sm:$0x7]
          %v1151 = vlaneseq
          %v1152 = vshrl.u32 %v1151, 7
          %v1153 = vsub.s32 0, %v1152
          %v1154 = vrot.slane %v1149, %v1153
          %v1155 = vlaneseq
          %v1156 = vshrl.u32 %v1155, 7
          %v1157 = vsub.s32 1, %v1156
          %v1158 = vrot.slane %v1149, %v1157
          %v1159 = vlaneseq
          %v1160 = vshrl.u32 %v1159, 7
          %v1161 = vsub.s32 2, %v1160
          %v1162 = vrot.slane %v1149, %v1161
          %v1198 = vunpack.c.l.b16 %v1117
          %v1199 = vunpack.c.h.b16 %v1117
          %v1200 = vunpack.c.l.b16 %v1118
          %v1201 = vunpack.c.l.b16 %v1119
          %v1202 = vunpack.c.h.b16 %v1119
          %v1203 = vunpack.c.l.b16 %v1120
          %v1204 = vunpack.c.l.b16 %v1121
          %v1205 = vunpack.c.h.b16 %v1121
          %v1206 = vunpack.c.l.b16 %v1122
          %v1207 = vunpack.c.l.b16 %v1123
          %v1208 = vunpack.c.h.b16 %v1123
          %v1209 = vunpack.c.l.b16 %v1124
          %v1210 = vunpack.c.l.b16 %v1125
          %v1211 = vunpack.c.h.b16 %v1125
          %v1212 = vunpack.c.l.b16 %v1126
          %v1213 = vunpack.c.l.b16 %v1127
          %v1214 = vunpack.c.h.b16 %v1127
          %v1215 = vunpack.c.l.b16 %v1128
          %v1216 = vunpack.c.l.b16 %v1129
          %v1217 = vunpack.c.h.b16 %v1129
          %v1218 = vunpack.c.l.b16 %v1130
          %v1219 = vunpack.c.l.b16 %v1131
          %v1220 = vunpack.c.h.b16 %v1131
          %v1221 = vunpack.c.l.b16 %v1132
          %v1222 = vunpack.c.l.b16 %v1133
          %v1223 = vunpack.c.h.b16 %v1133
          %v1224 = vunpack.c.l.b16 %v1134
          %v1225 = vunpack.c.l.b16 %v1135
          %v1226 = vunpack.c.h.b16 %v1135
          %v1227 = vunpack.c.l.b16 %v1136
          %v1228 = vunpack.c.l.b16 %v1137
          %v1229 = vunpack.c.h.b16 %v1137
          %v1230 = vunpack.c.l.b16 %v1138
          %v1231 = vunpack.c.l.b16 %v1139
          %v1232 = vunpack.c.h.b16 %v1139
          %v1233 = vunpack.c.l.b16 %v1140
          %v1234 = vunpack.c.l.b16 %v1141
          %v1235 = vunpack.c.h.b16 %v1141
          %v1236 = vunpack.c.l.b16 %v1142
          %v1237 = vunpack.c.l.b16 %v1143
          %v1238 = vunpack.c.h.b16 %v1143
          %v1239 = vunpack.c.l.b16 %v1144
          %v1240 = vunpack.c.l.b16 %v1145
          %v1241 = vunpack.c.h.b16 %v1145
          %v1242 = vunpack.c.l.b16 %v1146
          %v1243 = vunpack.c.l.b16 %v1147
          %v1244 = vunpack.c.h.b16 %v1147
          %v1245 = vunpack.c.l.b16 %v1148
          %v1246 = vpack.c.b16 %v1201, %v1198
          %v1247 = vpack.c.b16 %v1202, %v1199
          %v1248 = vpack.c.b16 %v1203, %v1200
          %v1249 = vpack.c.b16 %v1207, %v1204
          %v1250 = vpack.c.b16 %v1208, %v1205
          %v1251 = vpack.c.b16 %v1209, %v1206
          %v1252 = vpack.c.b16 %v1213, %v1210
          %v1253 = vpack.c.b16 %v1214, %v1211
          %v1254 = vpack.c.b16 %v1215, %v1212
          %v1255 = vpack.c.b16 %v1219, %v1216
          %v1256 = vpack.c.b16 %v1220, %v1217
          %v1257 = vpack.c.b16 %v1221, %v1218
          %v1258 = vpack.c.b16 %v1225, %v1222
          %v1259 = vpack.c.b16 %v1226, %v1223
          %v1260 = vpack.c.b16 %v1227, %v1224
          %v1261 = vpack.c.b16 %v1231, %v1228
          %v1262 = vpack.c.b16 %v1232, %v1229
          %v1263 = vpack.c.b16 %v1233, %v1230
          %v1264 = vpack.c.b16 %v1237, %v1234
          %v1265 = vpack.c.b16 %v1238, %v1235
          %v1266 = vpack.c.b16 %v1239, %v1236
          %v1267 = vpack.c.b16 %v1243, %v1240
          %v1268 = vpack.c.b16 %v1244, %v1241
          %v1269 = vpack.c.b16 %v1245, %v1242
          %1294 = vmatprep.subr.bf16.mxu0 %v1247
          %1295 = vmatpush1.bf16.msra.mxu0 %v1246
          %1296 = vmatprep.subr.bf16.mxu0 %v1250
          %1297 = vmatpush1.bf16.msra.mxu0 %v1249
          %1298 = vmatprep.subr.bf16.mxu0 %v1253
          %1299 = vmatpush1.bf16.msra.mxu0 %v1252
          %1300 = vmatprep.subr.bf16.mxu0 %v1256
          %1301 = vmatpush1.bf16.msra.mxu0 %v1255
          %1302 = vmatprep.subr.bf16.mxu0 %v1259
          %1303 = vmatpush1.bf16.msra.mxu0 %v1258
          %1304 = vmatprep.subr.bf16.mxu0 %v1262
          %1305 = vmatpush1.bf16.msra.mxu0 %v1261
          %1306 = vmatprep.subr.bf16.mxu0 %v1265
          %1307 = vmatpush1.bf16.msra.mxu0 %v1264
          %1308 = vmatprep.subr.bf16.mxu0 %v1268
          %1309 = vmatpush1.bf16.msra.mxu0 %v1267
          %1310 = vmatprep.subr.bf16.mxu0 0
          %1311 = vmatpush1.bf16.msra.mxu0 0
          %1312 = vmatprep.subr.bf16.mxu0 0
          %1313 = vmatpush1.bf16.msra.mxu0 0
          %1314 = vmatprep.subr.bf16.mxu0 0
          %1315 = vmatpush1.bf16.msra.mxu0 0
          %1316 = vmatprep.subr.bf16.mxu0 0
          %1317 = vmatpush1.bf16.msra.mxu0 0
          %1318 = vmatprep.subr.bf16.mxu0 0
          %1319 = vmatpush1.bf16.msra.mxu0 0
          %1320 = vmatprep.subr.bf16.mxu0 0
          %1321 = vmatpush1.bf16.msra.mxu0 0
          %1322 = vmatprep.subr.bf16.mxu0 0
          %1323 = vmatpush1.bf16.msra.mxu0 0
          %1324 = vmatprep.subr.bf16.mxu0 0
          %1325 = vmatpush1.bf16.msra.mxu0 0
          %1326 = vmatprep.mubr.bf16.mxu0 0
          %1327 = vmatmul.mubr.bf16.gmra.mrb[0].mxu0 %v1101
          %v1328 = vpop.f32.mrb[0].mxu0
          %v1329 = vadd.f32 %v1154, %v1328
          %v1330 = vpop.f32.mrb[0].mxu0
          %v1331 = vadd.f32 %v1158, %v1330
          %v1332 = vpop.f32.mrb[0].mxu0
          %v1333 = vadd.f32 %v1154, %v1332
          %v1334 = vpop.f32.mrb[0].mxu0
          %v1335 = vadd.f32 %v1158, %v1334
          %1336 = vmatprep.mubr.bf16.mxu0 0
          %1337 = vmatmul.mubr.bf16.gmra.mrb[0].mxu0 %v1102
          %v1338 = vpop.f32.mrb[0].mxu0
          %v1339 = vadd.f32 %v1154, %v1338
          %v1340 = vpop.f32.mrb[0].mxu0
          %v1341 = vadd.f32 %v1158, %v1340
          %v1342 = vpop.f32.mrb[0].mxu0
          %v1343 = vadd.f32 %v1154, %v1342
          %v1344 = vpop.f32.mrb[0].mxu0
          %v1345 = vadd.f32 %v1158, %v1344
          %1346 = vmatprep.mubr.bf16.mxu0 0
          %1347 = vmatmul.mubr.bf16.gmra.mrb[0].mxu0 %v1103
          %v1348 = vpop.f32.mrb[0].mxu0
          %v1349 = vadd.f32 %v1154, %v1348
          %v1350 = vpop.f32.mrb[0].mxu0
          %v1351 = vadd.f32 %v1158, %v1350
          %v1352 = vpop.f32.mrb[0].mxu0
          %v1353 = vadd.f32 %v1154, %v1352
          %v1354 = vpop.f32.mrb[0].mxu0
          %v1355 = vadd.f32 %v1158, %v1354
          %1356 = vmatprep.mubr.bf16.mxu0 0
          %1357 = vmatmul.mubr.bf16.gmra.mrb[0].mxu0 %v1104
          %v1358 = vpop.f32.mrb[0].mxu0
          %v1359 = vadd.f32 %v1154, %v1358
          %v1360 = vpop.f32.mrb[0].mxu0
          %v1361 = vadd.f32 %v1158, %v1360
          %v1362 = vpop.f32.mrb[0].mxu0
          %v1363 = vadd.f32 %v1154, %v1362
          %v1364 = vpop.f32.mrb[0].mxu0
          %v1365 = vadd.f32 %v1158, %v1364
          %1366 = vmatprep.mubr.bf16.mxu0 0
          %1367 = vmatmul.mubr.bf16.gmra.mrb[0].mxu0 %v1105
          %v1368 = vpop.f32.mrb[0].mxu0
          %v1369 = vadd.f32 %v1154, %v1368
          %v1370 = vpop.f32.mrb[0].mxu0
          %v1371 = vadd.f32 %v1158, %v1370
          %v1372 = vpop.f32.mrb[0].mxu0
          %v1373 = vadd.f32 %v1154, %v1372
          %v1374 = vpop.f32.mrb[0].mxu0
          %v1375 = vadd.f32 %v1158, %v1374
          %1376 = vmatprep.mubr.bf16.mxu0 0
          %1377 = vmatmul.mubr.bf16.gmra.mrb[0].mxu0 %v1106
          %v1378 = vpop.f32.mrb[0].mxu0
          %v1379 = vadd.f32 %v1154, %v1378
          %v1380 = vpop.f32.mrb[0].mxu0
          %v1381 = vadd.f32 %v1158, %v1380
          %v1382 = vpop.f32.mrb[0].mxu0
          %v1383 = vadd.f32 %v1154, %v1382
          %v1384 = vpop.f32.mrb[0].mxu0
          %v1385 = vadd.f32 %v1158, %v1384
          %1386 = vmatprep.mubr.bf16.mxu0 0
          %1387 = vmatmul.mubr.bf16.gmra.mrb[0].mxu0 %v1107
          %v1388 = vpop.f32.mrb[0].mxu0
          %v1389 = vadd.f32 %v1154, %v1388
          %v1390 = vpop.f32.mrb[0].mxu0
          %v1391 = vadd.f32 %v1158, %v1390
          %v1392 = vpop.f32.mrb[0].mxu0
          %v1393 = vadd.f32 %v1154, %v1392
          %v1394 = vpop.f32.mrb[0].mxu0
          %v1395 = vadd.f32 %v1158, %v1394
          %1396 = vmatprep.mubr.bf16.mxu0 0
          %1397 = vmatmul.mubr.bf16.gmra.mrb[0].mxu0 %v1108
          %v1398 = vpop.f32.mrb[0].mxu0
          %v1399 = vadd.f32 %v1154, %v1398
          %v1400 = vpop.f32.mrb[0].mxu0
          %v1401 = vadd.f32 %v1158, %v1400
          %v1402 = vpop.f32.mrb[0].mxu0
          %v1403 = vadd.f32 %v1154, %v1402
          %v1404 = vpop.f32.mrb[0].mxu0
          %v1405 = vadd.f32 %v1158, %v1404
          %1406 = vmatprep.mubr.bf16.mxu0 0
          %1407 = vmatmul.mubr.bf16.gmra.mrb[0].mxu0 %v1109
          %v1408 = vpop.f32.mrb[0].mxu0
          %v1409 = vadd.f32 %v1154, %v1408
          %v1410 = vpop.f32.mrb[0].mxu0
          %v1411 = vadd.f32 %v1158, %v1410
          %v1412 = vpop.f32.mrb[0].mxu0
          %v1413 = vadd.f32 %v1154, %v1412
          %v1414 = vpop.f32.mrb[0].mxu0
          %v1415 = vadd.f32 %v1158, %v1414
          %1416 = vmatprep.mubr.bf16.mxu0 0
          %1417 = vmatmul.mubr.bf16.gmra.mrb[0].mxu0 %v1110
          %v1418 = vpop.f32.mrb[0].mxu0
          %v1419 = vadd.f32 %v1154, %v1418
          %v1420 = vpop.f32.mrb[0].mxu0
          %v1421 = vadd.f32 %v1158, %v1420
          %v1422 = vpop.f32.mrb[0].mxu0
          %v1423 = vadd.f32 %v1154, %v1422
          %v1424 = vpop.f32.mrb[0].mxu0
          %v1425 = vadd.f32 %v1158, %v1424
          %1426 = vmatprep.mubr.bf16.mxu0 0
          %1427 = vmatmul.mubr.bf16.gmra.mrb[0].mxu0 %v1111
          %v1428 = vpop.f32.mrb[0].mxu0
          %v1429 = vadd.f32 %v1154, %v1428
          %v1430 = vpop.f32.mrb[0].mxu0
          %v1431 = vadd.f32 %v1158, %v1430
          %v1432 = vpop.f32.mrb[0].mxu0
          %v1433 = vadd.f32 %v1154, %v1432
          %v1434 = vpop.f32.mrb[0].mxu0
          %v1435 = vadd.f32 %v1158, %v1434
          %1436 = vmatprep.mubr.bf16.mxu0 0
          %1437 = vmatmul.mubr.bf16.gmra.mrb[0].mxu0 %v1112
          %v1438 = vpop.f32.mrb[0].mxu0
          %v1439 = vadd.f32 %v1154, %v1438
          %v1440 = vpop.f32.mrb[0].mxu0
          %v1441 = vadd.f32 %v1158, %v1440
          %v1442 = vpop.f32.mrb[0].mxu0
          %v1443 = vadd.f32 %v1154, %v1442
          %v1444 = vpop.f32.mrb[0].mxu0
          %v1445 = vadd.f32 %v1158, %v1444
          %1446 = vmatprep.mubr.bf16.mxu0 0
          %1447 = vmatmul.mubr.bf16.gmra.mrb[0].mxu0 %v1113
          %v1448 = vpop.f32.mrb[0].mxu0
          %v1449 = vadd.f32 %v1154, %v1448
          %v1450 = vpop.f32.mrb[0].mxu0
          %v1451 = vadd.f32 %v1158, %v1450
          %v1452 = vpop.f32.mrb[0].mxu0
          %v1453 = vadd.f32 %v1154, %v1452
          %v1454 = vpop.f32.mrb[0].mxu0
          %v1455 = vadd.f32 %v1158, %v1454
          %1456 = vmatprep.mubr.bf16.mxu0 0
          %1457 = vmatmul.mubr.bf16.gmra.mrb[0].mxu0 %v1114
          %v1458 = vpop.f32.mrb[0].mxu0
          %v1459 = vadd.f32 %v1154, %v1458
          %v1460 = vpop.f32.mrb[0].mxu0
          %v1461 = vadd.f32 %v1158, %v1460
          %v1462 = vpop.f32.mrb[0].mxu0
          %v1463 = vadd.f32 %v1154, %v1462
          %v1464 = vpop.f32.mrb[0].mxu0
          %v1465 = vadd.f32 %v1158, %v1464
          %1466 = vmatprep.mubr.bf16.mxu0 0
          %1467 = vmatmul.mubr.bf16.gmra.mrb[0].mxu0 %v1115
          %v1468 = vpop.f32.mrb[0].mxu0
          %v1469 = vadd.f32 %v1154, %v1468
          %v1470 = vpop.f32.mrb[0].mxu0
          %v1471 = vadd.f32 %v1158, %v1470
          %v1472 = vpop.f32.mrb[0].mxu0
          %v1473 = vadd.f32 %v1154, %v1472
          %v1474 = vpop.f32.mrb[0].mxu0
          %v1475 = vadd.f32 %v1158, %v1474
          %1476 = vmatprep.mubr.bf16.mxu0 0
          %1477 = vmatmul.mubr.bf16.gmra.mrb[0].mxu0 %v1116
          %v1478 = vpop.f32.mrb[0].mxu0
          %v1479 = vadd.f32 %v1154, %v1478
          %v1480 = vpop.f32.mrb[0].mxu0
          %v1481 = vadd.f32 %v1158, %v1480
          %v1482 = vpop.f32.mrb[0].mxu0
          %v1483 = vadd.f32 %v1154, %v1482
          %v1484 = vpop.f32.mrb[0].mxu0
          %v1485 = vadd.f32 %v1158, %v1484
          %1486 = vdwg.mxu0
          %1487 = vmatprep.subr.bf16.mxu0 0
          %1488 = vmatpush1.bf16.msra.mxu0 %v1248
          %1489 = vmatprep.subr.bf16.mxu0 0
          %1490 = vmatpush1.bf16.msra.mxu0 %v1251
          %1491 = vmatprep.subr.bf16.mxu0 0
          %1492 = vmatpush1.bf16.msra.mxu0 %v1254
          %1493 = vmatprep.subr.bf16.mxu0 0
          %1494 = vmatpush1.bf16.msra.mxu0 %v1257
          %1495 = vmatprep.subr.bf16.mxu0 0
          %1496 = vmatpush1.bf16.msra.mxu0 %v1260
          %1497 = vmatprep.subr.bf16.mxu0 0
          %1498 = vmatpush1.bf16.msra.mxu0 %v1263
          %1499 = vmatprep.subr.bf16.mxu0 0
          %1500 = vmatpush1.bf16.msra.mxu0 %v1266
          %1501 = vmatprep.subr.bf16.mxu0 0
          %1502 = vmatpush1.bf16.msra.mxu0 %v1269
          %1503 = vmatprep.subr.bf16.mxu0 0
          %1504 = vmatpush1.bf16.msra.mxu0 0
          %1505 = vmatprep.subr.bf16.mxu0 0
          %1506 = vmatpush1.bf16.msra.mxu0 0
          %1507 = vmatprep.subr.bf16.mxu0 0
          %1508 = vmatpush1.bf16.msra.mxu0 0
          %1509 = vmatprep.subr.bf16.mxu0 0
          %1510 = vmatpush1.bf16.msra.mxu0 0
          %1511 = vmatprep.subr.bf16.mxu0 0
          %1512 = vmatpush1.bf16.msra.mxu0 0
          %1513 = vmatprep.subr.bf16.mxu0 0
          %1514 = vmatpush1.bf16.msra.mxu0 0
          %1515 = vmatprep.subr.bf16.mxu0 0
          %1516 = vmatpush1.bf16.msra.mxu0 0
          %1517 = vmatprep.subr.bf16.mxu0 0
          %1518 = vmatpush1.bf16.msra.mxu0 0
          %1519 = vmatprep.mubr.bf16.mxu0 0
          %1520 = vmatmul.mubr.bf16.gmra.mrb[0].mxu0 %v1101
          %v1521 = vpop.f32.mrb[0].mxu0
          %v1522 = vadd.f32 %v1162, %v1521
          %v1523 = vpop.f32.mrb[0].mxu0
          %v1524 = vpop.f32.mrb[0].mxu0
          %v1525 = vadd.f32 %v1162, %v1524
          %v1526 = vpop.f32.mrb[0].mxu0
          %1527 = vmatprep.mubr.bf16.mxu0 0
          %1528 = vmatmul.mubr.bf16.gmra.mrb[0].mxu0 %v1102
          %v1529 = vpop.f32.mrb[0].mxu0
          %v1530 = vadd.f32 %v1162, %v1529
          %v1531 = vpop.f32.mrb[0].mxu0
          %v1532 = vpop.f32.mrb[0].mxu0
          %v1533 = vadd.f32 %v1162, %v1532
          %v1534 = vpop.f32.mrb[0].mxu0
          %1535 = vmatprep.mubr.bf16.mxu0 0
          %1536 = vmatmul.mubr.bf16.gmra.mrb[0].mxu0 %v1103
          %v1537 = vpop.f32.mrb[0].mxu0
          %v1538 = vadd.f32 %v1162, %v1537
          %v1539 = vpop.f32.mrb[0].mxu0
          %v1540 = vpop.f32.mrb[0].mxu0
          %v1541 = vadd.f32 %v1162, %v1540
          %v1542 = vpop.f32.mrb[0].mxu0
          %1543 = vmatprep.mubr.bf16.mxu0 0
          %1544 = vmatmul.mubr.bf16.gmra.mrb[0].mxu0 %v1104
          %v1545 = vpop.f32.mrb[0].mxu0
          %v1546 = vadd.f32 %v1162, %v1545
          %v1547 = vpop.f32.mrb[0].mxu0
          %v1548 = vpop.f32.mrb[0].mxu0
          %v1549 = vadd.f32 %v1162, %v1548
          %v1550 = vpop.f32.mrb[0].mxu0
          %1551 = vmatprep.mubr.bf16.mxu0 0
          %1552 = vmatmul.mubr.bf16.gmra.mrb[0].mxu0 %v1105
          %v1553 = vpop.f32.mrb[0].mxu0
          %v1554 = vadd.f32 %v1162, %v1553
          %v1555 = vpop.f32.mrb[0].mxu0
          %v1556 = vpop.f32.mrb[0].mxu0
          %v1557 = vadd.f32 %v1162, %v1556
          %v1558 = vpop.f32.mrb[0].mxu0
          %1559 = vmatprep.mubr.bf16.mxu0 0
          %1560 = vmatmul.mubr.bf16.gmra.mrb[0].mxu0 %v1106
          %v1561 = vpop.f32.mrb[0].mxu0
          %v1562 = vadd.f32 %v1162, %v1561
          %v1563 = vpop.f32.mrb[0].mxu0
          %v1564 = vpop.f32.mrb[0].mxu0
          %v1565 = vadd.f32 %v1162, %v1564
          %v1566 = vpop.f32.mrb[0].mxu0
          %1567 = vmatprep.mubr.bf16.mxu0 0
          %1568 = vmatmul.mubr.bf16.gmra.mrb[0].mxu0 %v1107
          %v1569 = vpop.f32.mrb[0].mxu0
          %v1570 = vadd.f32 %v1162, %v1569
          %v1571 = vpop.f32.mrb[0].mxu0
          %v1572 = vpop.f32.mrb[0].mxu0
          %v1573 = vadd.f32 %v1162, %v1572
          %v1574 = vpop.f32.mrb[0].mxu0
          %1575 = vmatprep.mubr.bf16.mxu0 0
          %1576 = vmatmul.mubr.bf16.gmra.mrb[0].mxu0 %v1108
          %v1577 = vpop.f32.mrb[0].mxu0
          %v1578 = vadd.f32 %v1162, %v1577
          %v1579 = vpop.f32.mrb[0].mxu0
          %v1580 = vpop.f32.mrb[0].mxu0
          %v1581 = vadd.f32 %v1162, %v1580
          %v1582 = vpop.f32.mrb[0].mxu0
          %1583 = vmatprep.mubr.bf16.mxu0 0
          %1584 = vmatmul.mubr.bf16.gmra.mrb[0].mxu0 %v1109
          %v1585 = vpop.f32.mrb[0].mxu0
          %v1586 = vadd.f32 %v1162, %v1585
          %v1587 = vpop.f32.mrb[0].mxu0
          %v1588 = vpop.f32.mrb[0].mxu0
          %v1589 = vadd.f32 %v1162, %v1588
          %v1590 = vpop.f32.mrb[0].mxu0
          %1591 = vmatprep.mubr.bf16.mxu0 0
          %1592 = vmatmul.mubr.bf16.gmra.mrb[0].mxu0 %v1110
          %v1593 = vpop.f32.mrb[0].mxu0
          %v1594 = vadd.f32 %v1162, %v1593
          %v1595 = vpop.f32.mrb[0].mxu0
          %v1596 = vpop.f32.mrb[0].mxu0
          %v1597 = vadd.f32 %v1162, %v1596
          %v1598 = vpop.f32.mrb[0].mxu0
          %1599 = vmatprep.mubr.bf16.mxu0 0
          %1600 = vmatmul.mubr.bf16.gmra.mrb[0].mxu0 %v1111
          %v1601 = vpop.f32.mrb[0].mxu0
          %v1602 = vadd.f32 %v1162, %v1601
          %v1603 = vpop.f32.mrb[0].mxu0
          %v1604 = vpop.f32.mrb[0].mxu0
          %v1605 = vadd.f32 %v1162, %v1604
          %v1606 = vpop.f32.mrb[0].mxu0
          %1607 = vmatprep.mubr.bf16.mxu0 0
          %1608 = vmatmul.mubr.bf16.gmra.mrb[0].mxu0 %v1112
          %v1609 = vpop.f32.mrb[0].mxu0
          %v1610 = vadd.f32 %v1162, %v1609
          %v1611 = vpop.f32.mrb[0].mxu0
          %v1612 = vpop.f32.mrb[0].mxu0
          %v1613 = vadd.f32 %v1162, %v1612
          %v1614 = vpop.f32.mrb[0].mxu0
          %1615 = vmatprep.mubr.bf16.mxu0 0
          %1616 = vmatmul.mubr.bf16.gmra.mrb[0].mxu0 %v1113
          %v1617 = vpop.f32.mrb[0].mxu0
          %v1618 = vadd.f32 %v1162, %v1617
          %v1619 = vpop.f32.mrb[0].mxu0
          %v1620 = vpop.f32.mrb[0].mxu0
          %v1621 = vadd.f32 %v1162, %v1620
          %v1622 = vpop.f32.mrb[0].mxu0
          %1623 = vmatprep.mubr.bf16.mxu0 0
          %1624 = vmatmul.mubr.bf16.gmra.mrb[0].mxu0 %v1114
          %v1625 = vpop.f32.mrb[0].mxu0
          %v1626 = vadd.f32 %v1162, %v1625
          %v1627 = vpop.f32.mrb[0].mxu0
          %v1628 = vpop.f32.mrb[0].mxu0
          %v1629 = vadd.f32 %v1162, %v1628
          %v1630 = vpop.f32.mrb[0].mxu0
          %1631 = vmatprep.mubr.bf16.mxu0 0
          %1632 = vmatmul.mubr.bf16.gmra.mrb[0].mxu0 %v1115
          %v1633 = vpop.f32.mrb[0].mxu0
          %v1634 = vadd.f32 %v1162, %v1633
          %v1635 = vpop.f32.mrb[0].mxu0
          %v1636 = vpop.f32.mrb[0].mxu0
          %v1637 = vadd.f32 %v1162, %v1636
          %v1638 = vpop.f32.mrb[0].mxu0
          %1639 = vmatprep.mubr.bf16.mxu0 0
          %1640 = vmatmul.mubr.bf16.gmra.mrb[0].mxu0 %v1116
          %v1641 = vpop.f32.mrb[0].mxu0
          %v1642 = vadd.f32 %v1162, %v1641
          %v1643 = vpop.f32.mrb[0].mxu0
          %v1644 = vpop.f32.mrb[0].mxu0
          %v1645 = vadd.f32 %v1162, %v1644
          %v1646 = vpop.f32.mrb[0].mxu0
          %1647 = vdwg.mxu0
          %v1648 = vpack.c.bf16 %v1333, %v1329
          %v1649 = vpack.c.bf16 %v1343, %v1339
          %v1650 = vpack.c.bf16 %v1353, %v1349
          %v1651 = vpack.c.bf16 %v1363, %v1359
          %v1652 = vpack.c.bf16 %v1373, %v1369
          %v1653 = vpack.c.bf16 %v1383, %v1379
          %v1654 = vpack.c.bf16 %v1393, %v1389
          %v1655 = vpack.c.bf16 %v1403, %v1399
          %v1656 = vpack.c.bf16 %v1413, %v1409
          %v1657 = vpack.c.bf16 %v1423, %v1419
          %v1658 = vpack.c.bf16 %v1433, %v1429
          %v1659 = vpack.c.bf16 %v1443, %v1439
          %v1660 = vpack.c.bf16 %v1453, %v1449
          %v1661 = vpack.c.bf16 %v1463, %v1459
          %v1662 = vpack.c.bf16 %v1473, %v1469
          %v1663 = vpack.c.bf16 %v1483, %v1479
          %1664 = vst [vmem:[#allocation2] sm:$0xff] %v1648
          %1665 = vst [vmem:[#allocation2 + $0x8] sm:$0xff] %v1649
          %1666 = vst [vmem:[#allocation2 + $0x10] sm:$0xff] %v1650
          %1667 = vst [vmem:[#allocation2 + $0x18] sm:$0xff] %v1651
          %1668 = vst [vmem:[#allocation2 + $0x20] sm:$0xff] %v1652
          %1669 = vst [vmem:[#allocation2 + $0x28] sm:$0xff] %v1653
          %1670 = vst [vmem:[#allocation2 + $0x30] sm:$0xff] %v1654
          %1671 = vst [vmem:[#allocation2 + $0x38] sm:$0xff] %v1655
          %1672 = vst [vmem:[#allocation2 + $0x40] sm:$0xff] %v1656
          %1673 = vst [vmem:[#allocation2 + $0x48] sm:$0xff] %v1657
          %1674 = vst [vmem:[#allocation2 + $0x50] sm:$0xff] %v1658
          %1675 = vst [vmem:[#allocation2 + $0x58] sm:$0xff] %v1659
          %1676 = vst [vmem:[#allocation2 + $0x60] sm:$0xff] %v1660
          %1677 = vst [vmem:[#allocation2 + $0x68] sm:$0xff] %v1661
          %1678 = vst [vmem:[#allocation2 + $0x70] sm:$0xff] %v1662
          %1679 = vst [vmem:[#allocation2 + $0x78] sm:$0xff] %v1663
          %1680 = vxpose.xlu0.b32.start [1/16] %v1331, 128
          %1681 = vxpose.xlu0.b32.cont [2/16] %v1335, 128
          %1682 = vxpose.xlu0.b32.cont [3/16] %v1341, 128
          %1683 = vxpose.xlu0.b32.cont [4/16] %v1345, 128
          %1684 = vxpose.xlu0.b32.cont [5/16] %v1351, 128
          %1685 = vxpose.xlu0.b32.cont [6/16] %v1355, 128
          %1686 = vxpose.xlu0.b32.cont [7/16] %v1361, 128
          %1687 = vxpose.xlu0.b32.cont [8/16] %v1365, 128
          %1688 = vxpose.xlu0.b32.cont [9/16] %v1371, 128
          %1689 = vxpose.xlu0.b32.cont [10/16] %v1375, 128
          %1690 = vxpose.xlu0.b32.cont [11/16] %v1381, 128
          %1691 = vxpose.xlu0.b32.cont [12/16] %v1385, 128
          %1692 = vxpose.xlu0.b32.cont [13/16] %v1391, 128
          %1693 = vxpose.xlu0.b32.cont [14/16] %v1395, 128
          %1694 = vxpose.xlu0.b32.cont [15/16] %v1401, 128
          %1695 = vxpose.xlu0.b32.end [16/16] %v1405, 128
          %v1696 = vpop.trf.xlu0
          %v1697 = vpop.trf.xlu0
          %v1698 = vpop.trf.xlu0
          %v1699 = vpop.trf.xlu0
          %v1700 = vpop.trf.xlu0
          %v1701 = vpop.trf.xlu0
          %v1702 = vpop.trf.xlu0
          %v1703 = vpop.trf.xlu0
          %v1704 = vpop.trf.xlu0
          %v1705 = vpop.trf.xlu0
          %v1706 = vpop.trf.xlu0
          %v1707 = vpop.trf.xlu0
          %v1708 = vpop.trf.xlu0
          %v1709 = vpop.trf.xlu0
          %v1710 = vpop.trf.xlu0
          %v1711 = vpop.trf.xlu0
          %1712 = vxpose.xlu0.b32.start [1/16] %v1411, 128
          %1713 = vxpose.xlu0.b32.cont [2/16] %v1415, 128
          %1714 = vxpose.xlu0.b32.cont [3/16] %v1421, 128
          %1715 = vxpose.xlu0.b32.cont [4/16] %v1425, 128
          %1716 = vxpose.xlu0.b32.cont [5/16] %v1431, 128
          %1717 = vxpose.xlu0.b32.cont [6/16] %v1435, 128
          %1718 = vxpose.xlu0.b32.cont [7/16] %v1441, 128
          %1719 = vxpose.xlu0.b32.cont [8/16] %v1445, 128
          %1720 = vxpose.xlu0.b32.cont [9/16] %v1451, 128
          %1721 = vxpose.xlu0.b32.cont [10/16] %v1455, 128
          %1722 = vxpose.xlu0.b32.cont [11/16] %v1461, 128
          %1723 = vxpose.xlu0.b32.cont [12/16] %v1465, 128
          %1724 = vxpose.xlu0.b32.cont [13/16] %v1471, 128
          %1725 = vxpose.xlu0.b32.cont [14/16] %v1475, 128
          %1726 = vxpose.xlu0.b32.cont [15/16] %v1481, 128
          %1727 = vxpose.xlu0.b32.end [16/16] %v1485, 128
          %v1728 = vpop.trf.xlu0
          %v1729 = vpop.trf.xlu0
          %v1730 = vpop.trf.xlu0
          %v1731 = vpop.trf.xlu0
          %v1732 = vpop.trf.xlu0
          %v1733 = vpop.trf.xlu0
          %v1734 = vpop.trf.xlu0
          %v1735 = vpop.trf.xlu0
          %v1736 = vpop.trf.xlu0
          %v1737 = vpop.trf.xlu0
          %v1738 = vpop.trf.xlu0
          %v1739 = vpop.trf.xlu0
          %v1740 = vpop.trf.xlu0
          %v1741 = vpop.trf.xlu0
          %v1742 = vpop.trf.xlu0
          %v1743 = vpop.trf.xlu0
          %v1744 = vpack.c.bf16 %v1697, %v1696
          %v1745 = vpack.c.bf16 %v1729, %v1728
          %v1746 = vpack.c.bf16 %v1699, %v1698
          %v1747 = vpack.c.bf16 %v1731, %v1730
          %v1748 = vpack.c.bf16 %v1701, %v1700
          %v1749 = vpack.c.bf16 %v1733, %v1732
          %v1750 = vpack.c.bf16 %v1703, %v1702
          %v1751 = vpack.c.bf16 %v1735, %v1734
          %v1752 = vpack.c.bf16 %v1705, %v1704
          %v1753 = vpack.c.bf16 %v1737, %v1736
          %v1754 = vpack.c.bf16 %v1707, %v1706
          %v1755 = vpack.c.bf16 %v1739, %v1738
          %v1756 = vpack.c.bf16 %v1709, %v1708
          %v1757 = vpack.c.bf16 %v1741, %v1740
          %v1758 = vpack.c.bf16 %v1711, %v1710
          %v1759 = vpack.c.bf16 %v1743, %v1742
          %1760 = vst [vmem:[#allocation3] sm:$0xff] %v1744
          %1761 = vst [vmem:[#allocation3 + $0x8] sm:$0xff] %v1745
          %1762 = vst [vmem:[#allocation3 + $0x10] sm:$0xff] %v1746
          %1763 = vst [vmem:[#allocation3 + $0x18] sm:$0xff] %v1747
          %1764 = vst [vmem:[#allocation3 + $0x20] sm:$0xff] %v1748
          %1765 = vst [vmem:[#allocation3 + $0x28] sm:$0xff] %v1749
          %1766 = vst [vmem:[#allocation3 + $0x30] sm:$0xff] %v1750
          %1767 = vst [vmem:[#allocation3 + $0x38] sm:$0xff] %v1751
          %1768 = vst [vmem:[#allocation3 + $0x40] sm:$0xff] %v1752
          %1769 = vst [vmem:[#allocation3 + $0x48] sm:$0xff] %v1753
          %1770 = vst [vmem:[#allocation3 + $0x50] sm:$0xff] %v1754
          %1771 = vst [vmem:[#allocation3 + $0x58] sm:$0xff] %v1755
          %1772 = vst [vmem:[#allocation3 + $0x60] sm:$0xff] %v1756
          %1773 = vst [vmem:[#allocation3 + $0x68] sm:$0xff] %v1757
          %1774 = vst [vmem:[#allocation3 + $0x70] sm:$0xff] %v1758
          %1775 = vst [vmem:[#allocation3 + $0x78] sm:$0xff] %v1759
          %v1776 = vpack.c.bf16 %v1525, %v1522
          %v1777 = vpack.c.bf16 %v1533, %v1530
          %v1778 = vpack.c.bf16 %v1541, %v1538
          %v1779 = vpack.c.bf16 %v1549, %v1546
          %v1780 = vpack.c.bf16 %v1557, %v1554
          %v1781 = vpack.c.bf16 %v1565, %v1562
          %v1782 = vpack.c.bf16 %v1573, %v1570
          %v1783 = vpack.c.bf16 %v1581, %v1578
          %v1784 = vpack.c.bf16 %v1589, %v1586
          %v1785 = vpack.c.bf16 %v1597, %v1594
          %v1786 = vpack.c.bf16 %v1605, %v1602
          %v1787 = vpack.c.bf16 %v1613, %v1610
          %v1788 = vpack.c.bf16 %v1621, %v1618
          %v1789 = vpack.c.bf16 %v1629, %v1626
          %v1790 = vpack.c.bf16 %v1637, %v1634
          %v1791 = vpack.c.bf16 %v1645, %v1642
          %1792 = vst [vmem:[#allocation4] sm:$0xff] %v1776
          %1793 = vst [vmem:[#allocation4 + $0x8] sm:$0xff] %v1777
          %1794 = vst [vmem:[#allocation4 + $0x10] sm:$0xff] %v1778
          %1795 = vst [vmem:[#allocation4 + $0x18] sm:$0xff] %v1779
          %1796 = vst [vmem:[#allocation4 + $0x20] sm:$0xff] %v1780
          %1797 = vst [vmem:[#allocation4 + $0x28] sm:$0xff] %v1781
          %1798 = vst [vmem:[#allocation4 + $0x30] sm:$0xff] %v1782
          %1799 = vst [vmem:[#allocation4 + $0x38] sm:$0xff] %v1783
          %1800 = vst [vmem:[#allocation4 + $0x40] sm:$0xff] %v1784
          %1801 = vst [vmem:[#allocation4 + $0x48] sm:$0xff] %v1785
          %1802 = vst [vmem:[#allocation4 + $0x50] sm:$0xff] %v1786
          %1803 = vst [vmem:[#allocation4 + $0x58] sm:$0xff] %v1787
          %1804 = vst [vmem:[#allocation4 + $0x60] sm:$0xff] %v1788
          %1805 = vst [vmem:[#allocation4 + $0x68] sm:$0xff] %v1789
          %1806 = vst [vmem:[#allocation4 + $0x70] sm:$0xff] %v1790
          %1807 = vst [vmem:[#allocation4 + $0x78] sm:$0xff] %v1791
        $region128: #{tpu_custom_call.1} parent=71 // pred_fallthru
          _
        %s1808 = scalar_lea.vmem %s540, %s633 [#allocation6]
        %v1809 = vld [vmem:[%s1808] sm:$0xff]
        %v1810 = vld [vmem:[%s1808 + $0x8] sm:$0xff]
        %v1811 = vld [vmem:[%s1808 + $0x10] sm:$0xff]
        %v1812 = vld [vmem:[%s1808 + $0x18] sm:$0xff]
        %v1813 = vld [vmem:[%s1808 + $0x20] sm:$0xff]
        %v1814 = vld [vmem:[%s1808 + $0x28] sm:$0xff]
        %v1815 = vld [vmem:[%s1808 + $0x30] sm:$0xff]
        %v1816 = vld [vmem:[%s1808 + $0x38] sm:$0xff]
        %v1817 = vld [vmem:[%s1808 + $0x40] sm:$0xff]
        %v1818 = vld [vmem:[%s1808 + $0x48] sm:$0xff]
        %v1819 = vld [vmem:[%s1808 + $0x50] sm:$0xff]
        %v1820 = vld [vmem:[%s1808 + $0x58] sm:$0xff]
        %v1821 = vld [vmem:[%s1808 + $0x60] sm:$0xff]
        %v1822 = vld [vmem:[%s1808 + $0x68] sm:$0xff]
        %v1823 = vld [vmem:[%s1808 + $0x70] sm:$0xff]
        %v1824 = vld [vmem:[%s1808 + $0x78] sm:$0xff]
        %s1825 = sshra.s32 %s633, 4
        %s1826 = sand.u32 %s633, 15
        %s1827 = smul.addr %s1825, 8
        %s1828 = scalar_lea.vmem [#allocation2], %s1827
        %v1829 = vld [vmem:[%s1828] sm:$0xff]
        %v1830 = vld [vmem:[%s1828 + $0x8] sm:$0xff]
        %v1831 = vld [vmem:[%s1828 + $0x10] sm:$0xff]
        %v1832 = vld [vmem:[%s1828 + $0x18] sm:$0xff]
        %v1833 = vld [vmem:[%s1828 + $0x20] sm:$0xff]
        %v1834 = vld [vmem:[%s1828 + $0x28] sm:$0xff]
        %v1835 = vld [vmem:[%s1828 + $0x30] sm:$0xff]
        %v1836 = vld [vmem:[%s1828 + $0x38] sm:$0xff]
        %v1837 = vlaneseq
        %v1838 = vshrl.u32 %v1837, 7
        %v1839 = vadd.s32 %v1838, 8
        %v1840 = vadd.s32 %v1838, 16
        %v1841 = vadd.s32 %v1838, 24
        %v1842 = vadd.s32 %v1838, 32
        %v1843 = vadd.s32 %v1838, 40
        %v1844 = vadd.s32 %v1838, 48
        %v1845 = vadd.s32 %v1838, 56
        %v1846 = vadd.s32 %v1838, 64
        %v1847 = vadd.s32 %v1838, 72
        %v1848 = vadd.s32 %v1838, 80
        %v1849 = vadd.s32 %v1838, 88
        %v1850 = vadd.s32 %v1838, 96
        %v1851 = vadd.s32 %v1838, 104
        %v1852 = vadd.s32 %v1838, 112
        %v1853 = vadd.s32 %v1838, 120
        %v1854 = vstv %s633
        %v1855 = vadd.s32 %v1854, %v1838
        %v1856 = vadd.s32 %v1854, %v1839
        %v1857 = vadd.s32 %v1854, %v1840
        %v1858 = vadd.s32 %v1854, %v1841
        %v1859 = vadd.s32 %v1854, %v1842
        %v1860 = vadd.s32 %v1854, %v1843
        %v1861 = vadd.s32 %v1854, %v1844
        %v1862 = vadd.s32 %v1854, %v1845
        %v1863 = vadd.s32 %v1854, %v1846
        %v1864 = vadd.s32 %v1854, %v1847
        %v1865 = vadd.s32 %v1854, %v1848
        %v1866 = vadd.s32 %v1854, %v1849
        %v1867 = vadd.s32 %v1854, %v1850
        %v1868 = vadd.s32 %v1854, %v1851
        %v1869 = vadd.s32 %v1854, %v1852
        %v1870 = vadd.s32 %v1854, %v1853
        // While loop
        $region129: #{tpu_custom_call.1} parent=71 // loop_pre_header
          _
        $region130: #{tpu_custom_call.1} parent=71 // loop_header
          %s1872 = sphi 0, %s1874
          %p1873 = scmp.ge.s32.totalorder %s1872, %s41
          %v1877 = vphi -1e+30, %v2098
          %v1878 = vphi -1e+30, %v2099
          %v1879 = vphi -1e+30, %v2100
          %v1880 = vphi -1e+30, %v2101
          %v1881 = vphi -1e+30, %v2102
          %v1882 = vphi -1e+30, %v2103
          %v1883 = vphi -1e+30, %v2104
          %v1884 = vphi -1e+30, %v2105
          %v1885 = vphi -1e+30, %v2106
          %v1886 = vphi -1e+30, %v2107
          %v1887 = vphi -1e+30, %v2108
          %v1888 = vphi -1e+30, %v2109
          %v1889 = vphi -1e+30, %v2110
          %v1890 = vphi -1e+30, %v2111
          %v1891 = vphi -1e+30, %v2112
          %v1892 = vphi -1e+30, %v2113
          %v1893 = vphi 0.0, %v2258
          %v1894 = vphi 0.0, %v2259
          %v1895 = vphi 0.0, %v2260
          %v1896 = vphi 0.0, %v2261
          %v1897 = vphi 0.0, %v2262
          %v1898 = vphi 0.0, %v2263
          %v1899 = vphi 0.0, %v2264
          %v1900 = vphi 0.0, %v2265
          %v1901 = vphi 0.0, %v2266
          %v1902 = vphi 0.0, %v2267
          %v1903 = vphi 0.0, %v2268
          %v1904 = vphi 0.0, %v2269
          %v1905 = vphi 0.0, %v2270
          %v1906 = vphi 0.0, %v2271
          %v1907 = vphi 0.0, %v2272
          %v1908 = vphi 0.0, %v2273
          %v1909 = vphi 0.0, %v2395
          %v1910 = vphi 0.0, %v2396
          %v1911 = vphi 0.0, %v2397
          %v1912 = vphi 0.0, %v2398
          %v1913 = vphi 0.0, %v2399
          %v1914 = vphi 0.0, %v2400
          %v1915 = vphi 0.0, %v2401
          %v1916 = vphi 0.0, %v2402
          %v1917 = vphi 0.0, %v2403
          %v1918 = vphi 0.0, %v2404
          %v1919 = vphi 0.0, %v2405
          %v1920 = vphi 0.0, %v2406
          %v1921 = vphi 0.0, %v2407
          %v1922 = vphi 0.0, %v2408
          %v1923 = vphi 0.0, %v2409
          %v1924 = vphi 0.0, %v2410
        $region131: #{tpu_custom_call.1} parent=71 // loop_header_branch
          %1876 = sbr.rel (%p1873) target = $region135
        $region132: #{tpu_custom_call.1} parent=71 // loop_body
          %s1925 = smul.u32 %s1872, 128
          %s1926 = sshra.s32 %s1925, 7
          %s1927 = sand.u32 %s1925, 127
          %s1928 = smul.addr %s1926, 8
          %s1929 = scalar_lea.vmem [#allocation3], %s1928
          %v1930 = vld [vmem:[%s1929] sm:$0xff]
          %v1931 = vld [vmem:[%s1929 + $0x10] sm:$0xff]
          %s1932 = sshra.s32 %s1925, 4
          %s1933 = sand.u32 %s1925, 15
          %s1934 = smul.addr %s1932, 8
          %s1935 = scalar_lea.vmem [#allocation4], %s1934
          %v1936 = vld [vmem:[%s1935] sm:$0xff]
          %v1937 = vld [vmem:[%s1935 + $0x8] sm:$0xff]
          %v1938 = vld [vmem:[%s1935 + $0x10] sm:$0xff]
          %v1939 = vld [vmem:[%s1935 + $0x18] sm:$0xff]
          %v1940 = vld [vmem:[%s1935 + $0x20] sm:$0xff]
          %v1941 = vld [vmem:[%s1935 + $0x28] sm:$0xff]
          %v1942 = vld [vmem:[%s1935 + $0x30] sm:$0xff]
          %v1943 = vld [vmem:[%s1935 + $0x38] sm:$0xff]
          %vm1944 = vcmask 261120
          %v1946 = vsel %vm1944, %v1829, 0
          %v1949 = vsel %vm1944, %v1830, 0
          %v1952 = vsel %vm1944, %v1831, 0
          %v1955 = vsel %vm1944, %v1832, 0
          %v1958 = vsel %vm1944, %v1833, 0
          %v1961 = vsel %vm1944, %v1834, 0
          %v1964 = vsel %vm1944, %v1835, 0
          %v1967 = vsel %vm1944, %v1836, 0
          %1969 = vmatprep.subr.bf16.mxu0 0
          %1970 = vmatpush1.bf16.msra.mxu0 %v1930
          %1971 = vmatprep.subr.bf16.mxu0 0
          %1972 = vmatpush1.bf16.msra.mxu0 %v1931
          %1973 = vmatprep.subr.bf16.mxu0 0
          %1974 = vmatpush1.bf16.msra.mxu0 0
          %1975 = vmatprep.subr.bf16.mxu0 0
          %1976 = vmatpush1.bf16.msra.mxu0 0
          %1977 = vmatprep.subr.bf16.mxu0 0
          %1978 = vmatpush1.bf16.msra.mxu0 0
          %1979 = vmatprep.subr.bf16.mxu0 0
          %1980 = vmatpush1.bf16.msra.mxu0 0
          %1981 = vmatprep.subr.bf16.mxu0 0
          %1982 = vmatpush1.bf16.msra.mxu0 0
          %1983 = vmatprep.subr.bf16.mxu0 0
          %1984 = vmatpush1.bf16.msra.mxu0 0
          %1985 = vmatprep.subr.bf16.mxu0 0
          %1986 = vmatpush1.bf16.msra.mxu0 0
          %1987 = vmatprep.subr.bf16.mxu0 0
          %1988 = vmatpush1.bf16.msra.mxu0 0
          %1989 = vmatprep.subr.bf16.mxu0 0
          %1990 = vmatpush1.bf16.msra.mxu0 0
          %1991 = vmatprep.subr.bf16.mxu0 0
          %1992 = vmatpush1.bf16.msra.mxu0 0
          %1993 = vmatprep.subr.bf16.mxu0 0
          %1994 = vmatpush1.bf16.msra.mxu0 0
          %1995 = vmatprep.subr.bf16.mxu0 0
          %1996 = vmatpush1.bf16.msra.mxu0 0
          %1997 = vmatprep.subr.bf16.mxu0 0
          %1998 = vmatpush1.bf16.msra.mxu0 0
          %1999 = vmatprep.subr.bf16.mxu0 0
          %2000 = vmatpush1.bf16.msra.mxu0 0
          %2001 = vmatprep.mubr.bf16.mxu0 0
          %2002 = vmatmul.mubr.bf16.gmra.mrb[0].mxu0 %v1946
          %v2003 = vpop.f32.mrb[0].mxu0
          %v2004 = vadd.f32 0.0, %v2003
          %v2005 = vpop.f32.mrb[0].mxu0
          %v2006 = vpop.f32.mrb[0].mxu0
          %v2007 = vadd.f32 0.0, %v2006
          %v2008 = vpop.f32.mrb[0].mxu0
          %2009 = vmatprep.mubr.bf16.mxu0 0
          %2010 = vmatmul.mubr.bf16.gmra.mrb[0].mxu0 %v1949
          %v2011 = vpop.f32.mrb[0].mxu0
          %v2012 = vadd.f32 0.0, %v2011
          %v2013 = vpop.f32.mrb[0].mxu0
          %v2014 = vpop.f32.mrb[0].mxu0
          %v2015 = vadd.f32 0.0, %v2014
          %v2016 = vpop.f32.mrb[0].mxu0
          %2017 = vmatprep.mubr.bf16.mxu0 0
          %2018 = vmatmul.mubr.bf16.gmra.mrb[0].mxu0 %v1952
          %v2019 = vpop.f32.mrb[0].mxu0
          %v2020 = vadd.f32 0.0, %v2019
          %v2021 = vpop.f32.mrb[0].mxu0
          %v2022 = vpop.f32.mrb[0].mxu0
          %v2023 = vadd.f32 0.0, %v2022
          %v2024 = vpop.f32.mrb[0].mxu0
          %2025 = vmatprep.mubr.bf16.mxu0 0
          %2026 = vmatmul.mubr.bf16.gmra.mrb[0].mxu0 %v1955
          %v2027 = vpop.f32.mrb[0].mxu0
          %v2028 = vadd.f32 0.0, %v2027
          %v2029 = vpop.f32.mrb[0].mxu0
          %v2030 = vpop.f32.mrb[0].mxu0
          %v2031 = vadd.f32 0.0, %v2030
          %v2032 = vpop.f32.mrb[0].mxu0
          %2033 = vmatprep.mubr.bf16.mxu0 0
          %2034 = vmatmul.mubr.bf16.gmra.mrb[0].mxu0 %v1958
          %v2035 = vpop.f32.mrb[0].mxu0
          %v2036 = vadd.f32 0.0, %v2035
          %v2037 = vpop.f32.mrb[0].mxu0
          %v2038 = vpop.f32.mrb[0].mxu0
          %v2039 = vadd.f32 0.0, %v2038
          %v2040 = vpop.f32.mrb[0].mxu0
          %2041 = vmatprep.mubr.bf16.mxu0 0
          %2042 = vmatmul.mubr.bf16.gmra.mrb[0].mxu0 %v1961
          %v2043 = vpop.f32.mrb[0].mxu0
          %v2044 = vadd.f32 0.0, %v2043
          %v2045 = vpop.f32.mrb[0].mxu0
          %v2046 = vpop.f32.mrb[0].mxu0
          %v2047 = vadd.f32 0.0, %v2046
          %v2048 = vpop.f32.mrb[0].mxu0
          %2049 = vmatprep.mubr.bf16.mxu0 0
          %2050 = vmatmul.mubr.bf16.gmra.mrb[0].mxu0 %v1964
          %v2051 = vpop.f32.mrb[0].mxu0
          %v2052 = vadd.f32 0.0, %v2051
          %v2053 = vpop.f32.mrb[0].mxu0
          %v2054 = vpop.f32.mrb[0].mxu0
          %v2055 = vadd.f32 0.0, %v2054
          %v2056 = vpop.f32.mrb[0].mxu0
          %2057 = vmatprep.mubr.bf16.mxu0 0
          %2058 = vmatmul.mubr.bf16.gmra.mrb[0].mxu0 %v1967
          %v2059 = vpop.f32.mrb[0].mxu0
          %v2060 = vadd.f32 0.0, %v2059
          %v2061 = vpop.f32.mrb[0].mxu0
          %v2062 = vpop.f32.mrb[0].mxu0
          %v2063 = vadd.f32 0.0, %v2062
          %v2064 = vpop.f32.mrb[0].mxu0
          %2065 = vdwg.mxu0
          %2066 = vmax.xlane.f32.xlu0 %v2004
          %v2067 = vpop.xlane.xlu0 %2066
          %2068 = vmax.xlane.f32.xlu0 %v2007
          %v2069 = vpop.xlane.xlu0 %2068
          %2070 = vmax.xlane.f32.xlu0 %v2012
          %v2071 = vpop.xlane.xlu0 %2070
          %2072 = vmax.xlane.f32.xlu0 %v2015
          %v2073 = vpop.xlane.xlu0 %2072
          %2074 = vmax.xlane.f32.xlu0 %v2020
          %v2075 = vpop.xlane.xlu0 %2074
          %2076 = vmax.xlane.f32.xlu0 %v2023
          %v2077 = vpop.xlane.xlu0 %2076
          %2078 = vmax.xlane.f32.xlu0 %v2028
          %v2079 = vpop.xlane.xlu0 %2078
          %2080 = vmax.xlane.f32.xlu0 %v2031
          %v2081 = vpop.xlane.xlu0 %2080
          %2082 = vmax.xlane.f32.xlu0 %v2036
          %v2083 = vpop.xlane.xlu0 %2082
          %2084 = vmax.xlane.f32.xlu0 %v2039
          %v2085 = vpop.xlane.xlu0 %2084
          %2086 = vmax.xlane.f32.xlu0 %v2044
          %v2087 = vpop.xlane.xlu0 %2086
          %2088 = vmax.xlane.f32.xlu0 %v2047
          %v2089 = vpop.xlane.xlu0 %2088
          %2090 = vmax.xlane.f32.xlu0 %v2052
          %v2091 = vpop.xlane.xlu0 %2090
          %2092 = vmax.xlane.f32.xlu0 %v2055
          %v2093 = vpop.xlane.xlu0 %2092
          %2094 = vmax.xlane.f32.xlu0 %v2060
          %v2095 = vpop.xlane.xlu0 %2094
          %2096 = vmax.xlane.f32.xlu0 %v2063
          %v2097 = vpop.xlane.xlu0 %2096
          %v2098 = vmax.f32 %v1877, %v2067
          %v2099 = vmax.f32 %v1878, %v2069
          %v2100 = vmax.f32 %v1879, %v2071
          %v2101 = vmax.f32 %v1880, %v2073
          %v2102 = vmax.f32 %v1881, %v2075
          %v2103 = vmax.f32 %v1882, %v2077
          %v2104 = vmax.f32 %v1883, %v2079
          %v2105 = vmax.f32 %v1884, %v2081
          %v2106 = vmax.f32 %v1885, %v2083
          %v2107 = vmax.f32 %v1886, %v2085
          %v2108 = vmax.f32 %v1887, %v2087
          %v2109 = vmax.f32 %v1888, %v2089
          %v2110 = vmax.f32 %v1889, %v2091
          %v2111 = vmax.f32 %v1890, %v2093
          %v2112 = vmax.f32 %v1891, %v2095
          %v2113 = vmax.f32 %v1892, %v2097
          %v2114 = vsub.f32 %v1877, %v2098
          %v2115 = vsub.f32 %v1878, %v2099
          %v2116 = vsub.f32 %v1879, %v2100
          %v2117 = vsub.f32 %v1880, %v2101
          %v2118 = vsub.f32 %v1881, %v2102
          %v2119 = vsub.f32 %v1882, %v2103
          %v2120 = vsub.f32 %v1883, %v2104
          %v2121 = vsub.f32 %v1884, %v2105
          %v2122 = vsub.f32 %v1885, %v2106
          %v2123 = vsub.f32 %v1886, %v2107
          %v2124 = vsub.f32 %v1887, %v2108
          %v2125 = vsub.f32 %v1888, %v2109
          %v2126 = vsub.f32 %v1889, %v2110
          %v2127 = vsub.f32 %v1890, %v2111
          %v2128 = vsub.f32 %v1891, %v2112
          %v2129 = vsub.f32 %v1892, %v2113
          %v2130 = vmul.f32 %v2114, 1.442695
          %v2131 = vpow.pop %v2130
          %v2132 = vmul.f32 %v2115, 1.442695
          %v2133 = vpow.pop %v2132
          %v2134 = vmul.f32 %v2116, 1.442695
          %v2135 = vpow.pop %v2134
          %v2136 = vmul.f32 %v2117, 1.442695
          %v2137 = vpow.pop %v2136
          %v2138 = vmul.f32 %v2118, 1.442695
          %v2139 = vpow.pop %v2138
          %v2140 = vmul.f32 %v2119, 1.442695
          %v2141 = vpow.pop %v2140
          %v2142 = vmul.f32 %v2120, 1.442695
          %v2143 = vpow.pop %v2142
          %v2144 = vmul.f32 %v2121, 1.442695
          %v2145 = vpow.pop %v2144
          %v2146 = vmul.f32 %v2122, 1.442695
          %v2147 = vpow.pop %v2146
          %v2148 = vmul.f32 %v2123, 1.442695
          %v2149 = vpow.pop %v2148
          %v2150 = vmul.f32 %v2124, 1.442695
          %v2151 = vpow.pop %v2150
          %v2152 = vmul.f32 %v2125, 1.442695
          %v2153 = vpow.pop %v2152
          %v2154 = vmul.f32 %v2126, 1.442695
          %v2155 = vpow.pop %v2154
          %v2156 = vmul.f32 %v2127, 1.442695
          %v2157 = vpow.pop %v2156
          %v2158 = vmul.f32 %v2128, 1.442695
          %v2159 = vpow.pop %v2158
          %v2160 = vmul.f32 %v2129, 1.442695
          %v2161 = vpow.pop %v2160
          %v2162 = vsub.f32 %v2004, %v2098
          %v2163 = vsub.f32 %v2007, %v2099
          %v2164 = vsub.f32 %v2012, %v2100
          %v2165 = vsub.f32 %v2015, %v2101
          %v2166 = vsub.f32 %v2020, %v2102
          %v2167 = vsub.f32 %v2023, %v2103
          %v2168 = vsub.f32 %v2028, %v2104
          %v2169 = vsub.f32 %v2031, %v2105
          %v2170 = vsub.f32 %v2036, %v2106
          %v2171 = vsub.f32 %v2039, %v2107
          %v2172 = vsub.f32 %v2044, %v2108
          %v2173 = vsub.f32 %v2047, %v2109
          %v2174 = vsub.f32 %v2052, %v2110
          %v2175 = vsub.f32 %v2055, %v2111
          %v2176 = vsub.f32 %v2060, %v2112
          %v2177 = vsub.f32 %v2063, %v2113
          %v2178 = vmul.f32 %v2162, 1.442695
          %v2179 = vpow.pop %v2178
          %v2180 = vmul.f32 %v2163, 1.442695
          %v2181 = vpow.pop %v2180
          %v2182 = vmul.f32 %v2164, 1.442695
          %v2183 = vpow.pop %v2182
          %v2184 = vmul.f32 %v2165, 1.442695
          %v2185 = vpow.pop %v2184
          %v2186 = vmul.f32 %v2166, 1.442695
          %v2187 = vpow.pop %v2186
          %v2188 = vmul.f32 %v2167, 1.442695
          %v2189 = vpow.pop %v2188
          %v2190 = vmul.f32 %v2168, 1.442695
          %v2191 = vpow.pop %v2190
          %v2192 = vmul.f32 %v2169, 1.442695
          %v2193 = vpow.pop %v2192
          %v2194 = vmul.f32 %v2170, 1.442695
          %v2195 = vpow.pop %v2194
          %v2196 = vmul.f32 %v2171, 1.442695
          %v2197 = vpow.pop %v2196
          %v2198 = vmul.f32 %v2172, 1.442695
          %v2199 = vpow.pop %v2198
          %v2200 = vmul.f32 %v2173, 1.442695
          %v2201 = vpow.pop %v2200
          %v2202 = vmul.f32 %v2174, 1.442695
          %v2203 = vpow.pop %v2202
          %v2204 = vmul.f32 %v2175, 1.442695
          %v2205 = vpow.pop %v2204
          %v2206 = vmul.f32 %v2176, 1.442695
          %v2207 = vpow.pop %v2206
          %v2208 = vmul.f32 %v2177, 1.442695
          %v2209 = vpow.pop %v2208
          %v2210 = vmul.f32 %v2131, %v1893
          %v2211 = vmul.f32 %v2133, %v1894
          %v2212 = vmul.f32 %v2135, %v1895
          %v2213 = vmul.f32 %v2137, %v1896
          %v2214 = vmul.f32 %v2139, %v1897
          %v2215 = vmul.f32 %v2141, %v1898
          %v2216 = vmul.f32 %v2143, %v1899
          %v2217 = vmul.f32 %v2145, %v1900
          %v2218 = vmul.f32 %v2147, %v1901
          %v2219 = vmul.f32 %v2149, %v1902
          %v2220 = vmul.f32 %v2151, %v1903
          %v2221 = vmul.f32 %v2153, %v1904
          %v2222 = vmul.f32 %v2155, %v1905
          %v2223 = vmul.f32 %v2157, %v1906
          %v2224 = vmul.f32 %v2159, %v1907
          %v2225 = vmul.f32 %v2161, %v1908
          %2226 = vadd.xlane.f32.xlu0 %v2179
          %v2227 = vpop.xlane.xlu0 %2226
          %2228 = vadd.xlane.f32.xlu0 %v2181
          %v2229 = vpop.xlane.xlu0 %2228
          %2230 = vadd.xlane.f32.xlu0 %v2183
          %v2231 = vpop.xlane.xlu0 %2230
          %2232 = vadd.xlane.f32.xlu0 %v2185
          %v2233 = vpop.xlane.xlu0 %2232
          %2234 = vadd.xlane.f32.xlu0 %v2187
          %v2235 = vpop.xlane.xlu0 %2234
          %2236 = vadd.xlane.f32.xlu0 %v2189
          %v2237 = vpop.xlane.xlu0 %2236
          %2238 = vadd.xlane.f32.xlu0 %v2191
          %v2239 = vpop.xlane.xlu0 %2238
          %2240 = vadd.xlane.f32.xlu0 %v2193
          %v2241 = vpop.xlane.xlu0 %2240
          %2242 = vadd.xlane.f32.xlu0 %v2195
          %v2243 = vpop.xlane.xlu0 %2242
          %2244 = vadd.xlane.f32.xlu0 %v2197
          %v2245 = vpop.xlane.xlu0 %2244
          %2246 = vadd.xlane.f32.xlu0 %v2199
          %v2247 = vpop.xlane.xlu0 %2246
          %2248 = vadd.xlane.f32.xlu0 %v2201
          %v2249 = vpop.xlane.xlu0 %2248
          %2250 = vadd.xlane.f32.xlu0 %v2203
          %v2251 = vpop.xlane.xlu0 %2250
          %2252 = vadd.xlane.f32.xlu0 %v2205
          %v2253 = vpop.xlane.xlu0 %2252
          %2254 = vadd.xlane.f32.xlu0 %v2207
          %v2255 = vpop.xlane.xlu0 %2254
          %2256 = vadd.xlane.f32.xlu0 %v2209
          %v2257 = vpop.xlane.xlu0 %2256
          %v2258 = vadd.f32 %v2210, %v2227
          %v2259 = vadd.f32 %v2211, %v2229
          %v2260 = vadd.f32 %v2212, %v2231
          %v2261 = vadd.f32 %v2213, %v2233
          %v2262 = vadd.f32 %v2214, %v2235
          %v2263 = vadd.f32 %v2215, %v2237
          %v2264 = vadd.f32 %v2216, %v2239
          %v2265 = vadd.f32 %v2217, %v2241
          %v2266 = vadd.f32 %v2218, %v2243
          %v2267 = vadd.f32 %v2219, %v2245
          %v2268 = vadd.f32 %v2220, %v2247
          %v2269 = vadd.f32 %v2221, %v2249
          %v2270 = vadd.f32 %v2222, %v2251
          %v2271 = vadd.f32 %v2223, %v2253
          %v2272 = vadd.f32 %v2224, %v2255
          %v2273 = vadd.f32 %v2225, %v2257
          %v2274 = vmul.f32 %v2131, %v1909
          %v2275 = vmul.f32 %v2133, %v1910
          %v2276 = vmul.f32 %v2135, %v1911
          %v2277 = vmul.f32 %v2137, %v1912
          %v2278 = vmul.f32 %v2139, %v1913
          %v2279 = vmul.f32 %v2141, %v1914
          %v2280 = vmul.f32 %v2143, %v1915
          %v2281 = vmul.f32 %v2145, %v1916
          %v2282 = vmul.f32 %v2147, %v1917
          %v2283 = vmul.f32 %v2149, %v1918
          %v2284 = vmul.f32 %v2151, %v1919
          %v2285 = vmul.f32 %v2153, %v1920
          %v2286 = vmul.f32 %v2155, %v1921
          %v2287 = vmul.f32 %v2157, %v1922
          %v2288 = vmul.f32 %v2159, %v1923
          %v2289 = vmul.f32 %v2161, %v1924
          %v2290 = vpack.c.bf16 %v2181, %v2179
          %v2291 = vpack.c.bf16 %v2185, %v2183
          %v2292 = vpack.c.bf16 %v2189, %v2187
          %v2293 = vpack.c.bf16 %v2193, %v2191
          %v2294 = vpack.c.bf16 %v2197, %v2195
          %v2295 = vpack.c.bf16 %v2201, %v2199
          %v2296 = vpack.c.bf16 %v2205, %v2203
          %v2297 = vpack.c.bf16 %v2209, %v2207
          %2298 = vmatprep.subr.bf16.mxu0 0
          %2299 = vmatpush1.bf16.msra.mxu0 %v1936
          %2300 = vmatprep.subr.bf16.mxu0 0
          %2301 = vmatpush1.bf16.msra.mxu0 %v1937
          %2302 = vmatprep.subr.bf16.mxu0 0
          %2303 = vmatpush1.bf16.msra.mxu0 %v1938
          %2304 = vmatprep.subr.bf16.mxu0 0
          %2305 = vmatpush1.bf16.msra.mxu0 %v1939
          %2306 = vmatprep.subr.bf16.mxu0 0
          %2307 = vmatpush1.bf16.msra.mxu0 %v1940
          %2308 = vmatprep.subr.bf16.mxu0 0
          %2309 = vmatpush1.bf16.msra.mxu0 %v1941
          %2310 = vmatprep.subr.bf16.mxu0 0
          %2311 = vmatpush1.bf16.msra.mxu0 %v1942
          %2312 = vmatprep.subr.bf16.mxu0 0
          %2313 = vmatpush1.bf16.msra.mxu0 %v1943
          %2314 = vmatprep.subr.bf16.mxu0 0
          %2315 = vmatpush1.bf16.msra.mxu0 0
          %2316 = vmatprep.subr.bf16.mxu0 0
          %2317 = vmatpush1.bf16.msra.mxu0 0
          %2318 = vmatprep.subr.bf16.mxu0 0
          %2319 = vmatpush1.bf16.msra.mxu0 0
          %2320 = vmatprep.subr.bf16.mxu0 0
          %2321 = vmatpush1.bf16.msra.mxu0 0
          %2322 = vmatprep.subr.bf16.mxu0 0
          %2323 = vmatpush1.bf16.msra.mxu0 0
          %2324 = vmatprep.subr.bf16.mxu0 0
          %2325 = vmatpush1.bf16.msra.mxu0 0
          %2326 = vmatprep.subr.bf16.mxu0 0
          %2327 = vmatpush1.bf16.msra.mxu0 0
          %2328 = vmatprep.subr.bf16.mxu0 0
          %2329 = vmatpush1.bf16.msra.mxu0 0
          %2330 = vmatprep.mubr.bf16.mxu0 0
          %2331 = vmatmul.mubr.bf16.gmra.mrb[0].mxu0 %v2290
          %v2332 = vpop.f32.mrb[0].mxu0
          %v2333 = vadd.f32 0.0, %v2332
          %v2334 = vpop.f32.mrb[0].mxu0
          %v2335 = vpop.f32.mrb[0].mxu0
          %v2336 = vadd.f32 0.0, %v2335
          %v2337 = vpop.f32.mrb[0].mxu0
          %2338 = vmatprep.mubr.bf16.mxu0 0
          %2339 = vmatmul.mubr.bf16.gmra.mrb[0].mxu0 %v2291
          %v2340 = vpop.f32.mrb[0].mxu0
          %v2341 = vadd.f32 0.0, %v2340
          %v2342 = vpop.f32.mrb[0].mxu0
          %v2343 = vpop.f32.mrb[0].mxu0
          %v2344 = vadd.f32 0.0, %v2343
          %v2345 = vpop.f32.mrb[0].mxu0
          %2346 = vmatprep.mubr.bf16.mxu0 0
          %2347 = vmatmul.mubr.bf16.gmra.mrb[0].mxu0 %v2292
          %v2348 = vpop.f32.mrb[0].mxu0
          %v2349 = vadd.f32 0.0, %v2348
          %v2350 = vpop.f32.mrb[0].mxu0
          %v2351 = vpop.f32.mrb[0].mxu0
          %v2352 = vadd.f32 0.0, %v2351
          %v2353 = vpop.f32.mrb[0].mxu0
          %2354 = vmatprep.mubr.bf16.mxu0 0
          %2355 = vmatmul.mubr.bf16.gmra.mrb[0].mxu0 %v2293
          %v2356 = vpop.f32.mrb[0].mxu0
          %v2357 = vadd.f32 0.0, %v2356
          %v2358 = vpop.f32.mrb[0].mxu0
          %v2359 = vpop.f32.mrb[0].mxu0
          %v2360 = vadd.f32 0.0, %v2359
          %v2361 = vpop.f32.mrb[0].mxu0
          %2362 = vmatprep.mubr.bf16.mxu0 0
          %2363 = vmatmul.mubr.bf16.gmra.mrb[0].mxu0 %v2294
          %v2364 = vpop.f32.mrb[0].mxu0
          %v2365 = vadd.f32 0.0, %v2364
          %v2366 = vpop.f32.mrb[0].mxu0
          %v2367 = vpop.f32.mrb[0].mxu0
          %v2368 = vadd.f32 0.0, %v2367
          %v2369 = vpop.f32.mrb[0].mxu0
          %2370 = vmatprep.mubr.bf16.mxu0 0
          %2371 = vmatmul.mubr.bf16.gmra.mrb[0].mxu0 %v2295
          %v2372 = vpop.f32.mrb[0].mxu0
          %v2373 = vadd.f32 0.0, %v2372
          %v2374 = vpop.f32.mrb[0].mxu0
          %v2375 = vpop.f32.mrb[0].mxu0
          %v2376 = vadd.f32 0.0, %v2375
          %v2377 = vpop.f32.mrb[0].mxu0
          %2378 = vmatprep.mubr.bf16.mxu0 0
          %2379 = vmatmul.mubr.bf16.gmra.mrb[0].mxu0 %v2296
          %v2380 = vpop.f32.mrb[0].mxu0
          %v2381 = vadd.f32 0.0, %v2380
          %v2382 = vpop.f32.mrb[0].mxu0
          %v2383 = vpop.f32.mrb[0].mxu0
          %v2384 = vadd.f32 0.0, %v2383
          %v2385 = vpop.f32.mrb[0].mxu0
          %2386 = vmatprep.mubr.bf16.mxu0 0
          %2387 = vmatmul.mubr.bf16.gmra.mrb[0].mxu0 %v2297
          %v2388 = vpop.f32.mrb[0].mxu0
          %v2389 = vadd.f32 0.0, %v2388
          %v2390 = vpop.f32.mrb[0].mxu0
          %v2391 = vpop.f32.mrb[0].mxu0
          %v2392 = vadd.f32 0.0, %v2391
          %v2393 = vpop.f32.mrb[0].mxu0
          %2394 = vdwg.mxu0
          %v2395 = vadd.f32 %v2274, %v2333
          %v2396 = vadd.f32 %v2275, %v2336
          %v2397 = vadd.f32 %v2276, %v2341
          %v2398 = vadd.f32 %v2277, %v2344
          %v2399 = vadd.f32 %v2278, %v2349
          %v2400 = vadd.f32 %v2279, %v2352
          %v2401 = vadd.f32 %v2280, %v2357
          %v2402 = vadd.f32 %v2281, %v2360
          %v2403 = vadd.f32 %v2282, %v2365
          %v2404 = vadd.f32 %v2283, %v2368
          %v2405 = vadd.f32 %v2284, %v2373
          %v2406 = vadd.f32 %v2285, %v2376
          %v2407 = vadd.f32 %v2286, %v2381
          %v2408 = vadd.f32 %v2287, %v2384
          %v2409 = vadd.f32 %v2288, %v2389
          %v2410 = vadd.f32 %v2289, %v2392
        $region133: #{tpu_custom_call.1} parent=71 // loop_footer
          %s1874 = sadd.s32 %s1872, 1
        $region134: #{tpu_custom_call.1} parent=71 // loop_footer_branch
          %1871 = sbr.rel target = $region130
        $region135: #{tpu_custom_call.1} parent=71 // loop_exit
          _
        %s2411 = sshra.s32 %s633, 7
        %s2412 = sand.u32 %s633, 127
        %s2413 = smul.addr %s2411, 8
        %s2414 = scalar_lea.vmem [#allocation3], %s2413
        %v2415 = vld [vmem:[%s2414] sm:$0xff]
        %v2416 = vld [vmem:[%s2414 + $0x10] sm:$0xff]
        %s2417 = smul.addr %s1825, 8
        %s2418 = scalar_lea.vmem [#allocation4], %s2417
        %v2419 = vld [vmem:[%s2418] sm:$0xff]
        %v2420 = vld [vmem:[%s2418 + $0x8] sm:$0xff]
        %v2421 = vld [vmem:[%s2418 + $0x10] sm:$0xff]
        %v2422 = vld [vmem:[%s2418 + $0x18] sm:$0xff]
        %v2423 = vld [vmem:[%s2418 + $0x20] sm:$0xff]
        %v2424 = vld [vmem:[%s2418 + $0x28] sm:$0xff]
        %v2425 = vld [vmem:[%s2418 + $0x30] sm:$0xff]
        %v2426 = vld [vmem:[%s2418 + $0x38] sm:$0xff]
        %vm2427 = vcmask 261120
        %v2429 = vsel %vm2427, %v1829, 0
        %v2432 = vsel %vm2427, %v1830, 0
        %v2435 = vsel %vm2427, %v1831, 0
        %v2438 = vsel %vm2427, %v1832, 0
        %v2441 = vsel %vm2427, %v1833, 0
        %v2444 = vsel %vm2427, %v1834, 0
        %v2447 = vsel %vm2427, %v1835, 0
        %v2450 = vsel %vm2427, %v1836, 0
        %2452 = vmatprep.subr.bf16.mxu0 0
        %2453 = vmatpush1.bf16.msra.mxu0 %v2415
        %2454 = vmatprep.subr.bf16.mxu0 0
        %2455 = vmatpush1.bf16.msra.mxu0 %v2416
        %2456 = vmatprep.subr.bf16.mxu0 0
        %2457 = vmatpush1.bf16.msra.mxu0 0
        %2458 = vmatprep.subr.bf16.mxu0 0
        %2459 = vmatpush1.bf16.msra.mxu0 0
        %2460 = vmatprep.subr.bf16.mxu0 0
        %2461 = vmatpush1.bf16.msra.mxu0 0
        %2462 = vmatprep.subr.bf16.mxu0 0
        %2463 = vmatpush1.bf16.msra.mxu0 0
        %2464 = vmatprep.subr.bf16.mxu0 0
        %2465 = vmatpush1.bf16.msra.mxu0 0
        %2466 = vmatprep.subr.bf16.mxu0 0
        %2467 = vmatpush1.bf16.msra.mxu0 0
        %2468 = vmatprep.subr.bf16.mxu0 0
        %2469 = vmatpush1.bf16.msra.mxu0 0
        %2470 = vmatprep.subr.bf16.mxu0 0
        %2471 = vmatpush1.bf16.msra.mxu0 0
        %2472 = vmatprep.subr.bf16.mxu0 0
        %2473 = vmatpush1.bf16.msra.mxu0 0
        %2474 = vmatprep.subr.bf16.mxu0 0
        %2475 = vmatpush1.bf16.msra.mxu0 0
        %2476 = vmatprep.subr.bf16.mxu0 0
        %2477 = vmatpush1.bf16.msra.mxu0 0
        %2478 = vmatprep.subr.bf16.mxu0 0
        %2479 = vmatpush1.bf16.msra.mxu0 0
        %2480 = vmatprep.subr.bf16.mxu0 0
        %2481 = vmatpush1.bf16.msra.mxu0 0
        %2482 = vmatprep.subr.bf16.mxu0 0
        %2483 = vmatpush1.bf16.msra.mxu0 0
        %2484 = vmatprep.mubr.bf16.mxu0 0
        %2485 = vmatmul.mubr.bf16.gmra.mrb[0].mxu0 %v2429
        %v2486 = vpop.f32.mrb[0].mxu0
        %v2487 = vadd.f32 0.0, %v2486
        %v2488 = vpop.f32.mrb[0].mxu0
        %v2489 = vpop.f32.mrb[0].mxu0
        %v2490 = vadd.f32 0.0, %v2489
        %v2491 = vpop.f32.mrb[0].mxu0
        %2492 = vmatprep.mubr.bf16.mxu0 0
        %2493 = vmatmul.mubr.bf16.gmra.mrb[0].mxu0 %v2432
        %v2494 = vpop.f32.mrb[0].mxu0
        %v2495 = vadd.f32 0.0, %v2494
        %v2496 = vpop.f32.mrb[0].mxu0
        %v2497 = vpop.f32.mrb[0].mxu0
        %v2498 = vadd.f32 0.0, %v2497
        %v2499 = vpop.f32.mrb[0].mxu0
        %2500 = vmatprep.mubr.bf16.mxu0 0
        %2501 = vmatmul.mubr.bf16.gmra.mrb[0].mxu0 %v2435
        %v2502 = vpop.f32.mrb[0].mxu0
        %v2503 = vadd.f32 0.0, %v2502
        %v2504 = vpop.f32.mrb[0].mxu0
        %v2505 = vpop.f32.mrb[0].mxu0
        %v2506 = vadd.f32 0.0, %v2505
        %v2507 = vpop.f32.mrb[0].mxu0
        %2508 = vmatprep.mubr.bf16.mxu0 0
        %2509 = vmatmul.mubr.bf16.gmra.mrb[0].mxu0 %v2438
        %v2510 = vpop.f32.mrb[0].mxu0
        %v2511 = vadd.f32 0.0, %v2510
        %v2512 = vpop.f32.mrb[0].mxu0
        %v2513 = vpop.f32.mrb[0].mxu0
        %v2514 = vadd.f32 0.0, %v2513
        %v2515 = vpop.f32.mrb[0].mxu0
        %2516 = vmatprep.mubr.bf16.mxu0 0
        %2517 = vmatmul.mubr.bf16.gmra.mrb[0].mxu0 %v2441
        %v2518 = vpop.f32.mrb[0].mxu0
        %v2519 = vadd.f32 0.0, %v2518
        %v2520 = vpop.f32.mrb[0].mxu0
        %v2521 = vpop.f32.mrb[0].mxu0
        %v2522 = vadd.f32 0.0, %v2521
        %v2523 = vpop.f32.mrb[0].mxu0
        %2524 = vmatprep.mubr.bf16.mxu0 0
        %2525 = vmatmul.mubr.bf16.gmra.mrb[0].mxu0 %v2444
        %v2526 = vpop.f32.mrb[0].mxu0
        %v2527 = vadd.f32 0.0, %v2526
        %v2528 = vpop.f32.mrb[0].mxu0
        %v2529 = vpop.f32.mrb[0].mxu0
        %v2530 = vadd.f32 0.0, %v2529
        %v2531 = vpop.f32.mrb[0].mxu0
        %2532 = vmatprep.mubr.bf16.mxu0 0
        %2533 = vmatmul.mubr.bf16.gmra.mrb[0].mxu0 %v2447
        %v2534 = vpop.f32.mrb[0].mxu0
        %v2535 = vadd.f32 0.0, %v2534
        %v2536 = vpop.f32.mrb[0].mxu0
        %v2537 = vpop.f32.mrb[0].mxu0
        %v2538 = vadd.f32 0.0, %v2537
        %v2539 = vpop.f32.mrb[0].mxu0
        %2540 = vmatprep.mubr.bf16.mxu0 0
        %2541 = vmatmul.mubr.bf16.gmra.mrb[0].mxu0 %v2450
        %v2542 = vpop.f32.mrb[0].mxu0
        %v2543 = vadd.f32 0.0, %v2542
        %v2544 = vpop.f32.mrb[0].mxu0
        %v2545 = vpop.f32.mrb[0].mxu0
        %v2546 = vadd.f32 0.0, %v2545
        %v2547 = vpop.f32.mrb[0].mxu0
        %2548 = vdwg.mxu0
        %v2549 = vlaneseq
        %v2550 = vand.u32 %v2549, 127
        %v2551 = vadd.s32 %v1854, %v2550
        %vm2552 = vcmp.ge.s32.totalorder %v1855, %v2551
        %vm2553 = vcmp.ge.s32.totalorder %v1856, %v2551
        %vm2554 = vcmp.ge.s32.totalorder %v1857, %v2551
        %vm2555 = vcmp.ge.s32.totalorder %v1858, %v2551
        %vm2556 = vcmp.ge.s32.totalorder %v1859, %v2551
        %vm2557 = vcmp.ge.s32.totalorder %v1860, %v2551
        %vm2558 = vcmp.ge.s32.totalorder %v1861, %v2551
        %vm2559 = vcmp.ge.s32.totalorder %v1862, %v2551
        %vm2560 = vcmp.ge.s32.totalorder %v1863, %v2551
        %vm2561 = vcmp.ge.s32.totalorder %v1864, %v2551
        %vm2562 = vcmp.ge.s32.totalorder %v1865, %v2551
        %vm2563 = vcmp.ge.s32.totalorder %v1866, %v2551
        %vm2564 = vcmp.ge.s32.totalorder %v1867, %v2551
        %vm2565 = vcmp.ge.s32.totalorder %v1868, %v2551
        %vm2566 = vcmp.ge.s32.totalorder %v1869, %v2551
        %vm2567 = vcmp.ge.s32.totalorder %v1870, %v2551
        %v2568 = vsel %vm2552, %v2487, -1e+30
        %v2569 = vsel %vm2553, %v2490, -1e+30
        %v2570 = vsel %vm2554, %v2495, -1e+30
        %v2571 = vsel %vm2555, %v2498, -1e+30
        %v2572 = vsel %vm2556, %v2503, -1e+30
        %v2573 = vsel %vm2557, %v2506, -1e+30
        %v2574 = vsel %vm2558, %v2511, -1e+30
        %v2575 = vsel %vm2559, %v2514, -1e+30
        %v2576 = vsel %vm2560, %v2519, -1e+30
        %v2577 = vsel %vm2561, %v2522, -1e+30
        %v2578 = vsel %vm2562, %v2527, -1e+30
        %v2579 = vsel %vm2563, %v2530, -1e+30
        %v2580 = vsel %vm2564, %v2535, -1e+30
        %v2581 = vsel %vm2565, %v2538, -1e+30
        %v2582 = vsel %vm2566, %v2543, -1e+30
        %v2583 = vsel %vm2567, %v2546, -1e+30
        %2584 = vmax.xlane.f32.xlu0 %v2568
        %v2585 = vpop.xlane.xlu0 %2584
        %2586 = vmax.xlane.f32.xlu0 %v2569
        %v2587 = vpop.xlane.xlu0 %2586
        %2588 = vmax.xlane.f32.xlu0 %v2570
        %v2589 = vpop.xlane.xlu0 %2588
        %2590 = vmax.xlane.f32.xlu0 %v2571
        %v2591 = vpop.xlane.xlu0 %2590
        %2592 = vmax.xlane.f32.xlu0 %v2572
        %v2593 = vpop.xlane.xlu0 %2592
        %2594 = vmax.xlane.f32.xlu0 %v2573
        %v2595 = vpop.xlane.xlu0 %2594
        %2596 = vmax.xlane.f32.xlu0 %v2574
        %v2597 = vpop.xlane.xlu0 %2596
        %2598 = vmax.xlane.f32.xlu0 %v2575
        %v2599 = vpop.xlane.xlu0 %2598
        %2600 = vmax.xlane.f32.xlu0 %v2576
        %v2601 = vpop.xlane.xlu0 %2600
        %2602 = vmax.xlane.f32.xlu0 %v2577
        %v2603 = vpop.xlane.xlu0 %2602
        %2604 = vmax.xlane.f32.xlu0 %v2578
        %v2605 = vpop.xlane.xlu0 %2604
        %2606 = vmax.xlane.f32.xlu0 %v2579
        %v2607 = vpop.xlane.xlu0 %2606
        %2608 = vmax.xlane.f32.xlu0 %v2580
        %v2609 = vpop.xlane.xlu0 %2608
        %2610 = vmax.xlane.f32.xlu0 %v2581
        %v2611 = vpop.xlane.xlu0 %2610
        %2612 = vmax.xlane.f32.xlu0 %v2582
        %v2613 = vpop.xlane.xlu0 %2612
        %2614 = vmax.xlane.f32.xlu0 %v2583
        %v2615 = vpop.xlane.xlu0 %2614
        %v2616 = vmax.f32 %v1877, %v2585
        %v2617 = vmax.f32 %v1878, %v2587
        %v2618 = vmax.f32 %v1879, %v2589
        %v2619 = vmax.f32 %v1880, %v2591
        %v2620 = vmax.f32 %v1881, %v2593
        %v2621 = vmax.f32 %v1882, %v2595
        %v2622 = vmax.f32 %v1883, %v2597
        %v2623 = vmax.f32 %v1884, %v2599
        %v2624 = vmax.f32 %v1885, %v2601
        %v2625 = vmax.f32 %v1886, %v2603
        %v2626 = vmax.f32 %v1887, %v2605
        %v2627 = vmax.f32 %v1888, %v2607
        %v2628 = vmax.f32 %v1889, %v2609
        %v2629 = vmax.f32 %v1890, %v2611
        %v2630 = vmax.f32 %v1891, %v2613
        %v2631 = vmax.f32 %v1892, %v2615
        %v2632 = vsub.f32 %v1877, %v2616
        %v2633 = vsub.f32 %v1878, %v2617
        %v2634 = vsub.f32 %v1879, %v2618
        %v2635 = vsub.f32 %v1880, %v2619
        %v2636 = vsub.f32 %v1881, %v2620
        %v2637 = vsub.f32 %v1882, %v2621
        %v2638 = vsub.f32 %v1883, %v2622
        %v2639 = vsub.f32 %v1884, %v2623
        %v2640 = vsub.f32 %v1885, %v2624
        %v2641 = vsub.f32 %v1886, %v2625
        %v2642 = vsub.f32 %v1887, %v2626
        %v2643 = vsub.f32 %v1888, %v2627
        %v2644 = vsub.f32 %v1889, %v2628
        %v2645 = vsub.f32 %v1890, %v2629
        %v2646 = vsub.f32 %v1891, %v2630
        %v2647 = vsub.f32 %v1892, %v2631
        %v2648 = vmul.f32 %v2632, 1.442695
        %v2649 = vpow.pop %v2648
        %v2650 = vmul.f32 %v2633, 1.442695
        %v2651 = vpow.pop %v2650
        %v2652 = vmul.f32 %v2634, 1.442695
        %v2653 = vpow.pop %v2652
        %v2654 = vmul.f32 %v2635, 1.442695
        %v2655 = vpow.pop %v2654
        %v2656 = vmul.f32 %v2636, 1.442695
        %v2657 = vpow.pop %v2656
        %v2658 = vmul.f32 %v2637, 1.442695
        %v2659 = vpow.pop %v2658
        %v2660 = vmul.f32 %v2638, 1.442695
        %v2661 = vpow.pop %v2660
        %v2662 = vmul.f32 %v2639, 1.442695
        %v2663 = vpow.pop %v2662
        %v2664 = vmul.f32 %v2640, 1.442695
        %v2665 = vpow.pop %v2664
        %v2666 = vmul.f32 %v2641, 1.442695
        %v2667 = vpow.pop %v2666
        %v2668 = vmul.f32 %v2642, 1.442695
        %v2669 = vpow.pop %v2668
        %v2670 = vmul.f32 %v2643, 1.442695
        %v2671 = vpow.pop %v2670
        %v2672 = vmul.f32 %v2644, 1.442695
        %v2673 = vpow.pop %v2672
        %v2674 = vmul.f32 %v2645, 1.442695
        %v2675 = vpow.pop %v2674
        %v2676 = vmul.f32 %v2646, 1.442695
        %v2677 = vpow.pop %v2676
        %v2678 = vmul.f32 %v2647, 1.442695
        %v2679 = vpow.pop %v2678
        %v2680 = vsub.f32 %v2568, %v2616
        %v2681 = vsub.f32 %v2569, %v2617
        %v2682 = vsub.f32 %v2570, %v2618
        %v2683 = vsub.f32 %v2571, %v2619
        %v2684 = vsub.f32 %v2572, %v2620
        %v2685 = vsub.f32 %v2573, %v2621
        %v2686 = vsub.f32 %v2574, %v2622
        %v2687 = vsub.f32 %v2575, %v2623
        %v2688 = vsub.f32 %v2576, %v2624
        %v2689 = vsub.f32 %v2577, %v2625
        %v2690 = vsub.f32 %v2578, %v2626
        %v2691 = vsub.f32 %v2579, %v2627
        %v2692 = vsub.f32 %v2580, %v2628
        %v2693 = vsub.f32 %v2581, %v2629
        %v2694 = vsub.f32 %v2582, %v2630
        %v2695 = vsub.f32 %v2583, %v2631
        %v2696 = vmul.f32 %v2680, 1.442695
        %v2697 = vpow.pop %v2696
        %v2698 = vmul.f32 %v2681, 1.442695
        %v2699 = vpow.pop %v2698
        %v2700 = vmul.f32 %v2682, 1.442695
        %v2701 = vpow.pop %v2700
        %v2702 = vmul.f32 %v2683, 1.442695
        %v2703 = vpow.pop %v2702
        %v2704 = vmul.f32 %v2684, 1.442695
        %v2705 = vpow.pop %v2704
        %v2706 = vmul.f32 %v2685, 1.442695
        %v2707 = vpow.pop %v2706
        %v2708 = vmul.f32 %v2686, 1.442695
        %v2709 = vpow.pop %v2708
        %v2710 = vmul.f32 %v2687, 1.442695
        %v2711 = vpow.pop %v2710
        %v2712 = vmul.f32 %v2688, 1.442695
        %v2713 = vpow.pop %v2712
        %v2714 = vmul.f32 %v2689, 1.442695
        %v2715 = vpow.pop %v2714
        %v2716 = vmul.f32 %v2690, 1.442695
        %v2717 = vpow.pop %v2716
        %v2718 = vmul.f32 %v2691, 1.442695
        %v2719 = vpow.pop %v2718
        %v2720 = vmul.f32 %v2692, 1.442695
        %v2721 = vpow.pop %v2720
        %v2722 = vmul.f32 %v2693, 1.442695
        %v2723 = vpow.pop %v2722
        %v2724 = vmul.f32 %v2694, 1.442695
        %v2725 = vpow.pop %v2724
        %v2726 = vmul.f32 %v2695, 1.442695
        %v2727 = vpow.pop %v2726
        %v2728 = vmul.f32 %v2649, %v1893
        %v2729 = vmul.f32 %v2651, %v1894
        %v2730 = vmul.f32 %v2653, %v1895
        %v2731 = vmul.f32 %v2655, %v1896
        %v2732 = vmul.f32 %v2657, %v1897
        %v2733 = vmul.f32 %v2659, %v1898
        %v2734 = vmul.f32 %v2661, %v1899
        %v2735 = vmul.f32 %v2663, %v1900
        %v2736 = vmul.f32 %v2665, %v1901
        %v2737 = vmul.f32 %v2667, %v1902
        %v2738 = vmul.f32 %v2669, %v1903
        %v2739 = vmul.f32 %v2671, %v1904
        %v2740 = vmul.f32 %v2673, %v1905
        %v2741 = vmul.f32 %v2675, %v1906
        %v2742 = vmul.f32 %v2677, %v1907
        %v2743 = vmul.f32 %v2679, %v1908
        %2744 = vadd.xlane.f32.xlu0 %v2697
        %v2745 = vpop.xlane.xlu0 %2744
        %2746 = vadd.xlane.f32.xlu0 %v2699
        %v2747 = vpop.xlane.xlu0 %2746
        %2748 = vadd.xlane.f32.xlu0 %v2701
        %v2749 = vpop.xlane.xlu0 %2748
        %2750 = vadd.xlane.f32.xlu0 %v2703
        %v2751 = vpop.xlane.xlu0 %2750
        %2752 = vadd.xlane.f32.xlu0 %v2705
        %v2753 = vpop.xlane.xlu0 %2752
        %2754 = vadd.xlane.f32.xlu0 %v2707
        %v2755 = vpop.xlane.xlu0 %2754
        %2756 = vadd.xlane.f32.xlu0 %v2709
        %v2757 = vpop.xlane.xlu0 %2756
        %2758 = vadd.xlane.f32.xlu0 %v2711
        %v2759 = vpop.xlane.xlu0 %2758
        %2760 = vadd.xlane.f32.xlu0 %v2713
        %v2761 = vpop.xlane.xlu0 %2760
        %2762 = vadd.xlane.f32.xlu0 %v2715
        %v2763 = vpop.xlane.xlu0 %2762
        %2764 = vadd.xlane.f32.xlu0 %v2717
        %v2765 = vpop.xlane.xlu0 %2764
        %2766 = vadd.xlane.f32.xlu0 %v2719
        %v2767 = vpop.xlane.xlu0 %2766
        %2768 = vadd.xlane.f32.xlu0 %v2721
        %v2769 = vpop.xlane.xlu0 %2768
        %2770 = vadd.xlane.f32.xlu0 %v2723
        %v2771 = vpop.xlane.xlu0 %2770
        %2772 = vadd.xlane.f32.xlu0 %v2725
        %v2773 = vpop.xlane.xlu0 %2772
        %2774 = vadd.xlane.f32.xlu0 %v2727
        %v2775 = vpop.xlane.xlu0 %2774
        %v2776 = vadd.f32 %v2728, %v2745
        %v2777 = vadd.f32 %v2729, %v2747
        %v2778 = vadd.f32 %v2730, %v2749
        %v2779 = vadd.f32 %v2731, %v2751
        %v2780 = vadd.f32 %v2732, %v2753
        %v2781 = vadd.f32 %v2733, %v2755
        %v2782 = vadd.f32 %v2734, %v2757
        %v2783 = vadd.f32 %v2735, %v2759
        %v2784 = vadd.f32 %v2736, %v2761
        %v2785 = vadd.f32 %v2737, %v2763
        %v2786 = vadd.f32 %v2738, %v2765
        %v2787 = vadd.f32 %v2739, %v2767
        %v2788 = vadd.f32 %v2740, %v2769
        %v2789 = vadd.f32 %v2741, %v2771
        %v2790 = vadd.f32 %v2742, %v2773
        %v2791 = vadd.f32 %v2743, %v2775
        %v2792 = vmul.f32 %v2649, %v1909
        %v2793 = vmul.f32 %v2651, %v1910
        %v2794 = vmul.f32 %v2653, %v1911
        %v2795 = vmul.f32 %v2655, %v1912
        %v2796 = vmul.f32 %v2657, %v1913
        %v2797 = vmul.f32 %v2659, %v1914
        %v2798 = vmul.f32 %v2661, %v1915
        %v2799 = vmul.f32 %v2663, %v1916
        %v2800 = vmul.f32 %v2665, %v1917
        %v2801 = vmul.f32 %v2667, %v1918
        %v2802 = vmul.f32 %v2669, %v1919
        %v2803 = vmul.f32 %v2671, %v1920
        %v2804 = vmul.f32 %v2673, %v1921
        %v2805 = vmul.f32 %v2675, %v1922
        %v2806 = vmul.f32 %v2677, %v1923
        %v2807 = vmul.f32 %v2679, %v1924
        %v2808 = vpack.c.bf16 %v2699, %v2697
        %v2809 = vpack.c.bf16 %v2703, %v2701
        %v2810 = vpack.c.bf16 %v2707, %v2705
        %v2811 = vpack.c.bf16 %v2711, %v2709
        %v2812 = vpack.c.bf16 %v2715, %v2713
        %v2813 = vpack.c.bf16 %v2719, %v2717
        %v2814 = vpack.c.bf16 %v2723, %v2721
        %v2815 = vpack.c.bf16 %v2727, %v2725
        %2816 = vmatprep.subr.bf16.mxu0 0
        %2817 = vmatpush1.bf16.msra.mxu0 %v2419
        %2818 = vmatprep.subr.bf16.mxu0 0
        %2819 = vmatpush1.bf16.msra.mxu0 %v2420
        %2820 = vmatprep.subr.bf16.mxu0 0
        %2821 = vmatpush1.bf16.msra.mxu0 %v2421
        %2822 = vmatprep.subr.bf16.mxu0 0
        %2823 = vmatpush1.bf16.msra.mxu0 %v2422
        %2824 = vmatprep.subr.bf16.mxu0 0
        %2825 = vmatpush1.bf16.msra.mxu0 %v2423
        %2826 = vmatprep.subr.bf16.mxu0 0
        %2827 = vmatpush1.bf16.msra.mxu0 %v2424
        %2828 = vmatprep.subr.bf16.mxu0 0
        %2829 = vmatpush1.bf16.msra.mxu0 %v2425
        %2830 = vmatprep.subr.bf16.mxu0 0
        %2831 = vmatpush1.bf16.msra.mxu0 %v2426
        %2832 = vmatprep.subr.bf16.mxu0 0
        %2833 = vmatpush1.bf16.msra.mxu0 0
        %2834 = vmatprep.subr.bf16.mxu0 0
        %2835 = vmatpush1.bf16.msra.mxu0 0
        %2836 = vmatprep.subr.bf16.mxu0 0
        %2837 = vmatpush1.bf16.msra.mxu0 0
        %2838 = vmatprep.subr.bf16.mxu0 0
        %2839 = vmatpush1.bf16.msra.mxu0 0
        %2840 = vmatprep.subr.bf16.mxu0 0
        %2841 = vmatpush1.bf16.msra.mxu0 0
        %2842 = vmatprep.subr.bf16.mxu0 0
        %2843 = vmatpush1.bf16.msra.mxu0 0
        %2844 = vmatprep.subr.bf16.mxu0 0
        %2845 = vmatpush1.bf16.msra.mxu0 0
        %2846 = vmatprep.subr.bf16.mxu0 0
        %2847 = vmatpush1.bf16.msra.mxu0 0
        %2848 = vmatprep.mubr.bf16.mxu0 0
        %2849 = vmatmul.mubr.bf16.gmra.mrb[0].mxu0 %v2808
        %v2850 = vpop.f32.mrb[0].mxu0
        %v2851 = vadd.f32 0.0, %v2850
        %v2852 = vpop.f32.mrb[0].mxu0
        %v2853 = vpop.f32.mrb[0].mxu0
        %v2854 = vadd.f32 0.0, %v2853
        %v2855 = vpop.f32.mrb[0].mxu0
        %2856 = vmatprep.mubr.bf16.mxu0 0
        %2857 = vmatmul.mubr.bf16.gmra.mrb[0].mxu0 %v2809
        %v2858 = vpop.f32.mrb[0].mxu0
        %v2859 = vadd.f32 0.0, %v2858
        %v2860 = vpop.f32.mrb[0].mxu0
        %v2861 = vpop.f32.mrb[0].mxu0
        %v2862 = vadd.f32 0.0, %v2861
        %v2863 = vpop.f32.mrb[0].mxu0
        %2864 = vmatprep.mubr.bf16.mxu0 0
        %2865 = vmatmul.mubr.bf16.gmra.mrb[0].mxu0 %v2810
        %v2866 = vpop.f32.mrb[0].mxu0
        %v2867 = vadd.f32 0.0, %v2866
        %v2868 = vpop.f32.mrb[0].mxu0
        %v2869 = vpop.f32.mrb[0].mxu0
        %v2870 = vadd.f32 0.0, %v2869
        %v2871 = vpop.f32.mrb[0].mxu0
        %2872 = vmatprep.mubr.bf16.mxu0 0
        %2873 = vmatmul.mubr.bf16.gmra.mrb[0].mxu0 %v2811
        %v2874 = vpop.f32.mrb[0].mxu0
        %v2875 = vadd.f32 0.0, %v2874
        %v2876 = vpop.f32.mrb[0].mxu0
        %v2877 = vpop.f32.mrb[0].mxu0
        %v2878 = vadd.f32 0.0, %v2877
        %v2879 = vpop.f32.mrb[0].mxu0
        %2880 = vmatprep.mubr.bf16.mxu0 0
        %2881 = vmatmul.mubr.bf16.gmra.mrb[0].mxu0 %v2812
        %v2882 = vpop.f32.mrb[0].mxu0
        %v2883 = vadd.f32 0.0, %v2882
        %v2884 = vpop.f32.mrb[0].mxu0
        %v2885 = vpop.f32.mrb[0].mxu0
        %v2886 = vadd.f32 0.0, %v2885
        %v2887 = vpop.f32.mrb[0].mxu0
        %2888 = vmatprep.mubr.bf16.mxu0 0
        %2889 = vmatmul.mubr.bf16.gmra.mrb[0].mxu0 %v2813
        %v2890 = vpop.f32.mrb[0].mxu0
        %v2891 = vadd.f32 0.0, %v2890
        %v2892 = vpop.f32.mrb[0].mxu0
        %v2893 = vpop.f32.mrb[0].mxu0
        %v2894 = vadd.f32 0.0, %v2893
        %v2895 = vpop.f32.mrb[0].mxu0
        %2896 = vmatprep.mubr.bf16.mxu0 0
        %2897 = vmatmul.mubr.bf16.gmra.mrb[0].mxu0 %v2814
        %v2898 = vpop.f32.mrb[0].mxu0
        %v2899 = vadd.f32 0.0, %v2898
        %v2900 = vpop.f32.mrb[0].mxu0
        %v2901 = vpop.f32.mrb[0].mxu0
        %v2902 = vadd.f32 0.0, %v2901
        %v2903 = vpop.f32.mrb[0].mxu0
        %2904 = vmatprep.mubr.bf16.mxu0 0
        %2905 = vmatmul.mubr.bf16.gmra.mrb[0].mxu0 %v2815
        %v2906 = vpop.f32.mrb[0].mxu0
        %v2907 = vadd.f32 0.0, %v2906
        %v2908 = vpop.f32.mrb[0].mxu0
        %v2909 = vpop.f32.mrb[0].mxu0
        %v2910 = vadd.f32 0.0, %v2909
        %v2911 = vpop.f32.mrb[0].mxu0
        %2912 = vdwg.mxu0
        %v2913 = vadd.f32 %v2792, %v2851
        %v2914 = vadd.f32 %v2793, %v2854
        %v2915 = vadd.f32 %v2794, %v2859
        %v2916 = vadd.f32 %v2795, %v2862
        %v2917 = vadd.f32 %v2796, %v2867
        %v2918 = vadd.f32 %v2797, %v2870
        %v2919 = vadd.f32 %v2798, %v2875
        %v2920 = vadd.f32 %v2799, %v2878
        %v2921 = vadd.f32 %v2800, %v2883
        %v2922 = vadd.f32 %v2801, %v2886
        %v2923 = vadd.f32 %v2802, %v2891
        %v2924 = vadd.f32 %v2803, %v2894
        %v2925 = vadd.f32 %v2804, %v2899
        %v2926 = vadd.f32 %v2805, %v2902
        %v2927 = vadd.f32 %v2806, %v2907
        %v2928 = vadd.f32 %v2807, %v2910
        %v2929 = vrcp.pop %v2776
        %v2930 = vrcp.pop %v2777
        %v2931 = vrcp.pop %v2778
        %v2932 = vrcp.pop %v2779
        %v2933 = vrcp.pop %v2780
        %v2934 = vrcp.pop %v2781
        %v2935 = vrcp.pop %v2782
        %v2936 = vrcp.pop %v2783
        %v2937 = vrcp.pop %v2784
        %v2938 = vrcp.pop %v2785
        %v2939 = vrcp.pop %v2786
        %v2940 = vrcp.pop %v2787
        %v2941 = vrcp.pop %v2788
        %v2942 = vrcp.pop %v2789
        %v2943 = vrcp.pop %v2790
        %v2944 = vrcp.pop %v2791
        %v2945 = vmul.f32 %v2913, %v2929
        %v2946 = vmul.f32 %v2914, %v2930
        %v2947 = vmul.f32 %v2915, %v2931
        %v2948 = vmul.f32 %v2916, %v2932
        %v2949 = vmul.f32 %v2917, %v2933
        %v2950 = vmul.f32 %v2918, %v2934
        %v2951 = vmul.f32 %v2919, %v2935
        %v2952 = vmul.f32 %v2920, %v2936
        %v2953 = vmul.f32 %v2921, %v2937
        %v2954 = vmul.f32 %v2922, %v2938
        %v2955 = vmul.f32 %v2923, %v2939
        %v2956 = vmul.f32 %v2924, %v2940
        %v2957 = vmul.f32 %v2925, %v2941
        %v2958 = vmul.f32 %v2926, %v2942
        %v2959 = vmul.f32 %v2927, %v2943
        %v2960 = vmul.f32 %v2928, %v2944
        %v2961 = vpack.c.bf16 %v2946, %v2945
        %v2962 = vpack.c.bf16 %v2948, %v2947
        %v2963 = vpack.c.bf16 %v2950, %v2949
        %v2964 = vpack.c.bf16 %v2952, %v2951
        %v2965 = vpack.c.bf16 %v2954, %v2953
        %v2966 = vpack.c.bf16 %v2956, %v2955
        %v2967 = vpack.c.bf16 %v2958, %v2957
        %v2968 = vpack.c.bf16 %v2960, %v2959
        %2969 = vst.msk [vmem:[#allocation5] sm:$0xff] %vm2427, %v2961
        %2970 = vst.msk [vmem:[#allocation5 + $0x8] sm:$0xff] %vm2427, %v2962
        %2971 = vst.msk [vmem:[#allocation5 + $0x10] sm:$0xff] %vm2427, %v2963
        %2972 = vst.msk [vmem:[#allocation5 + $0x18] sm:$0xff] %vm2427, %v2964
        %2973 = vst.msk [vmem:[#allocation5 + $0x20] sm:$0xff] %vm2427, %v2965
        %2974 = vst.msk [vmem:[#allocation5 + $0x28] sm:$0xff] %vm2427, %v2966
        %2975 = vst.msk [vmem:[#allocation5 + $0x30] sm:$0xff] %vm2427, %v2967
        %2976 = vst.msk [vmem:[#allocation5 + $0x38] sm:$0xff] %vm2427, %v2968
        // While loop
        $region136: #{tpu_custom_call.1} parent=71 // loop_pre_header
          _
        $region137: #{tpu_custom_call.1} parent=71 // loop_header
          %s2978 = sphi 0, %s2980
          %p2979 = scmp.ge.s32.totalorder %s2978, %s41
          %v2983 = vphi -1e+30, %v3227
          %v2984 = vphi -1e+30, %v3228
          %v2985 = vphi -1e+30, %v3229
          %v2986 = vphi -1e+30, %v3230
          %v2987 = vphi -1e+30, %v3231
          %v2988 = vphi -1e+30, %v3232
          %v2989 = vphi -1e+30, %v3233
          %v2990 = vphi -1e+30, %v3234
          %v2991 = vphi -1e+30, %v3235
          %v2992 = vphi -1e+30, %v3236
          %v2993 = vphi -1e+30, %v3237
          %v2994 = vphi -1e+30, %v3238
          %v2995 = vphi -1e+30, %v3239
          %v2996 = vphi -1e+30, %v3240
          %v2997 = vphi -1e+30, %v3241
          %v2998 = vphi -1e+30, %v3242
          %v2999 = vphi 0.0, %v3387
          %v3000 = vphi 0.0, %v3388
          %v3001 = vphi 0.0, %v3389
          %v3002 = vphi 0.0, %v3390
          %v3003 = vphi 0.0, %v3391
          %v3004 = vphi 0.0, %v3392
          %v3005 = vphi 0.0, %v3393
          %v3006 = vphi 0.0, %v3394
          %v3007 = vphi 0.0, %v3395
          %v3008 = vphi 0.0, %v3396
          %v3009 = vphi 0.0, %v3397
          %v3010 = vphi 0.0, %v3398
          %v3011 = vphi 0.0, %v3399
          %v3012 = vphi 0.0, %v3400
          %v3013 = vphi 0.0, %v3401
          %v3014 = vphi 0.0, %v3402
          %v3015 = vphi 0.0, %v3556
          %v3016 = vphi 0.0, %v3557
          %v3017 = vphi 0.0, %v3558
          %v3018 = vphi 0.0, %v3559
          %v3019 = vphi 0.0, %v3560
          %v3020 = vphi 0.0, %v3561
          %v3021 = vphi 0.0, %v3562
          %v3022 = vphi 0.0, %v3563
          %v3023 = vphi 0.0, %v3564
          %v3024 = vphi 0.0, %v3565
          %v3025 = vphi 0.0, %v3566
          %v3026 = vphi 0.0, %v3567
          %v3027 = vphi 0.0, %v3568
          %v3028 = vphi 0.0, %v3569
          %v3029 = vphi 0.0, %v3570
          %v3030 = vphi 0.0, %v3571
        $region138: #{tpu_custom_call.1} parent=71 // loop_header_branch
          %2982 = sbr.rel (%p2979) target = $region142
        $region139: #{tpu_custom_call.1} parent=71 // loop_body
          %s3031 = smul.u32 %s2978, 128
          %s3032 = sshra.s32 %s3031, 7
          %s3033 = sand.u32 %s3031, 127
          %s3034 = smul.addr %s3032, 8
          %s3035 = scalar_lea.vmem [#allocation3], %s3034
          %v3036 = vld [vmem:[%s3035 + $0x20] sm:$0xff]
          %v3037 = vld [vmem:[%s3035 + $0x30] sm:$0xff]
          %s3038 = sshra.s32 %s3031, 4
          %s3039 = sand.u32 %s3031, 15
          %s3040 = smul.addr %s3038, 8
          %s3041 = scalar_lea.vmem [#allocation4], %s3040
          %v3042 = vld [vmem:[%s3041] sm:$0xff]
          %v3043 = vld [vmem:[%s3041 + $0x8] sm:$0xff]
          %v3044 = vld [vmem:[%s3041 + $0x10] sm:$0xff]
          %v3045 = vld [vmem:[%s3041 + $0x18] sm:$0xff]
          %v3046 = vld [vmem:[%s3041 + $0x20] sm:$0xff]
          %v3047 = vld [vmem:[%s3041 + $0x28] sm:$0xff]
          %v3048 = vld [vmem:[%s3041 + $0x30] sm:$0xff]
          %v3049 = vld [vmem:[%s3041 + $0x38] sm:$0xff]
          %3058 = vrot.lane.b32.xlu0 %v1829, 96
          %v3059 = vpop.permute.xlu0 %3058
          %3060 = vrot.lane.b32.xlu0 %v1830, 96
          %v3061 = vpop.permute.xlu0 %3060
          %3062 = vrot.lane.b32.xlu0 %v1831, 96
          %v3063 = vpop.permute.xlu0 %3062
          %3064 = vrot.lane.b32.xlu0 %v1832, 96
          %v3065 = vpop.permute.xlu0 %3064
          %3066 = vrot.lane.b32.xlu0 %v1833, 96
          %v3067 = vpop.permute.xlu0 %3066
          %3068 = vrot.lane.b32.xlu0 %v1834, 96
          %v3069 = vpop.permute.xlu0 %3068
          %3070 = vrot.lane.b32.xlu0 %v1835, 96
          %v3071 = vpop.permute.xlu0 %3070
          %3072 = vrot.lane.b32.xlu0 %v1836, 96
          %v3073 = vpop.permute.xlu0 %3072
          %v3075 = vsel %vm2427, %v3059, 0
          %v3078 = vsel %vm2427, %v3061, 0
          %v3081 = vsel %vm2427, %v3063, 0
          %v3084 = vsel %vm2427, %v3065, 0
          %v3087 = vsel %vm2427, %v3067, 0
          %v3090 = vsel %vm2427, %v3069, 0
          %v3093 = vsel %vm2427, %v3071, 0
          %v3096 = vsel %vm2427, %v3073, 0
          %3098 = vmatprep.subr.bf16.mxu0 0
          %3099 = vmatpush1.bf16.msra.mxu0 %v3036
          %3100 = vmatprep.subr.bf16.mxu0 0
          %3101 = vmatpush1.bf16.msra.mxu0 %v3037
          %3102 = vmatprep.subr.bf16.mxu0 0
          %3103 = vmatpush1.bf16.msra.mxu0 0
          %3104 = vmatprep.subr.bf16.mxu0 0
          %3105 = vmatpush1.bf16.msra.mxu0 0
          %3106 = vmatprep.subr.bf16.mxu0 0
          %3107 = vmatpush1.bf16.msra.mxu0 0
          %3108 = vmatprep.subr.bf16.mxu0 0
          %3109 = vmatpush1.bf16.msra.mxu0 0
          %3110 = vmatprep.subr.bf16.mxu0 0
          %3111 = vmatpush1.bf16.msra.mxu0 0
          %3112 = vmatprep.subr.bf16.mxu0 0
          %3113 = vmatpush1.bf16.msra.mxu0 0
          %3114 = vmatprep.subr.bf16.mxu0 0
          %3115 = vmatpush1.bf16.msra.mxu0 0
          %3116 = vmatprep.subr.bf16.mxu0 0
          %3117 = vmatpush1.bf16.msra.mxu0 0
          %3118 = vmatprep.subr.bf16.mxu0 0
          %3119 = vmatpush1.bf16.msra.mxu0 0
          %3120 = vmatprep.subr.bf16.mxu0 0
          %3121 = vmatpush1.bf16.msra.mxu0 0
          %3122 = vmatprep.subr.bf16.mxu0 0
          %3123 = vmatpush1.bf16.msra.mxu0 0
          %3124 = vmatprep.subr.bf16.mxu0 0
          %3125 = vmatpush1.bf16.msra.mxu0 0
          %3126 = vmatprep.subr.bf16.mxu0 0
          %3127 = vmatpush1.bf16.msra.mxu0 0
          %3128 = vmatprep.subr.bf16.mxu0 0
          %3129 = vmatpush1.bf16.msra.mxu0 0
          %3130 = vmatprep.mubr.bf16.mxu0 0
          %3131 = vmatmul.mubr.bf16.gmra.mrb[0].mxu0 %v3075
          %v3132 = vpop.f32.mrb[0].mxu0
          %v3133 = vadd.f32 0.0, %v3132
          %v3134 = vpop.f32.mrb[0].mxu0
          %v3135 = vpop.f32.mrb[0].mxu0
          %v3136 = vadd.f32 0.0, %v3135
          %v3137 = vpop.f32.mrb[0].mxu0
          %3138 = vmatprep.mubr.bf16.mxu0 0
          %3139 = vmatmul.mubr.bf16.gmra.mrb[0].mxu0 %v3078
          %v3140 = vpop.f32.mrb[0].mxu0
          %v3141 = vadd.f32 0.0, %v3140
          %v3142 = vpop.f32.mrb[0].mxu0
          %v3143 = vpop.f32.mrb[0].mxu0
          %v3144 = vadd.f32 0.0, %v3143
          %v3145 = vpop.f32.mrb[0].mxu0
          %3146 = vmatprep.mubr.bf16.mxu0 0
          %3147 = vmatmul.mubr.bf16.gmra.mrb[0].mxu0 %v3081
          %v3148 = vpop.f32.mrb[0].mxu0
          %v3149 = vadd.f32 0.0, %v3148
          %v3150 = vpop.f32.mrb[0].mxu0
          %v3151 = vpop.f32.mrb[0].mxu0
          %v3152 = vadd.f32 0.0, %v3151
          %v3153 = vpop.f32.mrb[0].mxu0
          %3154 = vmatprep.mubr.bf16.mxu0 0
          %3155 = vmatmul.mubr.bf16.gmra.mrb[0].mxu0 %v3084
          %v3156 = vpop.f32.mrb[0].mxu0
          %v3157 = vadd.f32 0.0, %v3156
          %v3158 = vpop.f32.mrb[0].mxu0
          %v3159 = vpop.f32.mrb[0].mxu0
          %v3160 = vadd.f32 0.0, %v3159
          %v3161 = vpop.f32.mrb[0].mxu0
          %3162 = vmatprep.mubr.bf16.mxu0 0
          %3163 = vmatmul.mubr.bf16.gmra.mrb[0].mxu0 %v3087
          %v3164 = vpop.f32.mrb[0].mxu0
          %v3165 = vadd.f32 0.0, %v3164
          %v3166 = vpop.f32.mrb[0].mxu0
          %v3167 = vpop.f32.mrb[0].mxu0
          %v3168 = vadd.f32 0.0, %v3167
          %v3169 = vpop.f32.mrb[0].mxu0
          %3170 = vmatprep.mubr.bf16.mxu0 0
          %3171 = vmatmul.mubr.bf16.gmra.mrb[0].mxu0 %v3090
          %v3172 = vpop.f32.mrb[0].mxu0
          %v3173 = vadd.f32 0.0, %v3172
          %v3174 = vpop.f32.mrb[0].mxu0
          %v3175 = vpop.f32.mrb[0].mxu0
          %v3176 = vadd.f32 0.0, %v3175
          %v3177 = vpop.f32.mrb[0].mxu0
          %3178 = vmatprep.mubr.bf16.mxu0 0
          %3179 = vmatmul.mubr.bf16.gmra.mrb[0].mxu0 %v3093
          %v3180 = vpop.f32.mrb[0].mxu0
          %v3181 = vadd.f32 0.0, %v3180
          %v3182 = vpop.f32.mrb[0].mxu0
          %v3183 = vpop.f32.mrb[0].mxu0
          %v3184 = vadd.f32 0.0, %v3183
          %v3185 = vpop.f32.mrb[0].mxu0
          %3186 = vmatprep.mubr.bf16.mxu0 0
          %3187 = vmatmul.mubr.bf16.gmra.mrb[0].mxu0 %v3096
          %v3188 = vpop.f32.mrb[0].mxu0
          %v3189 = vadd.f32 0.0, %v3188
          %v3190 = vpop.f32.mrb[0].mxu0
          %v3191 = vpop.f32.mrb[0].mxu0
          %v3192 = vadd.f32 0.0, %v3191
          %v3193 = vpop.f32.mrb[0].mxu0
          %3194 = vdwg.mxu0
          %3195 = vmax.xlane.f32.xlu0 %v3133
          %v3196 = vpop.xlane.xlu0 %3195
          %3197 = vmax.xlane.f32.xlu0 %v3136
          %v3198 = vpop.xlane.xlu0 %3197
          %3199 = vmax.xlane.f32.xlu0 %v3141
          %v3200 = vpop.xlane.xlu0 %3199
          %3201 = vmax.xlane.f32.xlu0 %v3144
          %v3202 = vpop.xlane.xlu0 %3201
          %3203 = vmax.xlane.f32.xlu0 %v3149
          %v3204 = vpop.xlane.xlu0 %3203
          %3205 = vmax.xlane.f32.xlu0 %v3152
          %v3206 = vpop.xlane.xlu0 %3205
          %3207 = vmax.xlane.f32.xlu0 %v3157
          %v3208 = vpop.xlane.xlu0 %3207
          %3209 = vmax.xlane.f32.xlu0 %v3160
          %v3210 = vpop.xlane.xlu0 %3209
          %3211 = vmax.xlane.f32.xlu0 %v3165
          %v3212 = vpop.xlane.xlu0 %3211
          %3213 = vmax.xlane.f32.xlu0 %v3168
          %v3214 = vpop.xlane.xlu0 %3213
          %3215 = vmax.xlane.f32.xlu0 %v3173
          %v3216 = vpop.xlane.xlu0 %3215
          %3217 = vmax.xlane.f32.xlu0 %v3176
          %v3218 = vpop.xlane.xlu0 %3217
          %3219 = vmax.xlane.f32.xlu0 %v3181
          %v3220 = vpop.xlane.xlu0 %3219
          %3221 = vmax.xlane.f32.xlu0 %v3184
          %v3222 = vpop.xlane.xlu0 %3221
          %3223 = vmax.xlane.f32.xlu0 %v3189
          %v3224 = vpop.xlane.xlu0 %3223
          %3225 = vmax.xlane.f32.xlu0 %v3192
          %v3226 = vpop.xlane.xlu0 %3225
          %v3227 = vmax.f32 %v2983, %v3196
          %v3228 = vmax.f32 %v2984, %v3198
          %v3229 = vmax.f32 %v2985, %v3200
          %v3230 = vmax.f32 %v2986, %v3202
          %v3231 = vmax.f32 %v2987, %v3204
          %v3232 = vmax.f32 %v2988, %v3206
          %v3233 = vmax.f32 %v2989, %v3208
          %v3234 = vmax.f32 %v2990, %v3210
          %v3235 = vmax.f32 %v2991, %v3212
          %v3236 = vmax.f32 %v2992, %v3214
          %v3237 = vmax.f32 %v2993, %v3216
          %v3238 = vmax.f32 %v2994, %v3218
          %v3239 = vmax.f32 %v2995, %v3220
          %v3240 = vmax.f32 %v2996, %v3222
          %v3241 = vmax.f32 %v2997, %v3224
          %v3242 = vmax.f32 %v2998, %v3226
          %v3243 = vsub.f32 %v2983, %v3227
          %v3244 = vsub.f32 %v2984, %v3228
          %v3245 = vsub.f32 %v2985, %v3229
          %v3246 = vsub.f32 %v2986, %v3230
          %v3247 = vsub.f32 %v2987, %v3231
          %v3248 = vsub.f32 %v2988, %v3232
          %v3249 = vsub.f32 %v2989, %v3233
          %v3250 = vsub.f32 %v2990, %v3234
          %v3251 = vsub.f32 %v2991, %v3235
          %v3252 = vsub.f32 %v2992, %v3236
          %v3253 = vsub.f32 %v2993, %v3237
          %v3254 = vsub.f32 %v2994, %v3238
          %v3255 = vsub.f32 %v2995, %v3239
          %v3256 = vsub.f32 %v2996, %v3240
          %v3257 = vsub.f32 %v2997, %v3241
          %v3258 = vsub.f32 %v2998, %v3242
          %v3259 = vmul.f32 %v3243, 1.442695
          %v3260 = vpow.pop %v3259
          %v3261 = vmul.f32 %v3244, 1.442695
          %v3262 = vpow.pop %v3261
          %v3263 = vmul.f32 %v3245, 1.442695
          %v3264 = vpow.pop %v3263
          %v3265 = vmul.f32 %v3246, 1.442695
          %v3266 = vpow.pop %v3265
          %v3267 = vmul.f32 %v3247, 1.442695
          %v3268 = vpow.pop %v3267
          %v3269 = vmul.f32 %v3248, 1.442695
          %v3270 = vpow.pop %v3269
          %v3271 = vmul.f32 %v3249, 1.442695
          %v3272 = vpow.pop %v3271
          %v3273 = vmul.f32 %v3250, 1.442695
          %v3274 = vpow.pop %v3273
          %v3275 = vmul.f32 %v3251, 1.442695
          %v3276 = vpow.pop %v3275
          %v3277 = vmul.f32 %v3252, 1.442695
          %v3278 = vpow.pop %v3277
          %v3279 = vmul.f32 %v3253, 1.442695
          %v3280 = vpow.pop %v3279
          %v3281 = vmul.f32 %v3254, 1.442695
          %v3282 = vpow.pop %v3281
          %v3283 = vmul.f32 %v3255, 1.442695
          %v3284 = vpow.pop %v3283
          %v3285 = vmul.f32 %v3256, 1.442695
          %v3286 = vpow.pop %v3285
          %v3287 = vmul.f32 %v3257, 1.442695
          %v3288 = vpow.pop %v3287
          %v3289 = vmul.f32 %v3258, 1.442695
          %v3290 = vpow.pop %v3289
          %v3291 = vsub.f32 %v3133, %v3227
          %v3292 = vsub.f32 %v3136, %v3228
          %v3293 = vsub.f32 %v3141, %v3229
          %v3294 = vsub.f32 %v3144, %v3230
          %v3295 = vsub.f32 %v3149, %v3231
          %v3296 = vsub.f32 %v3152, %v3232
          %v3297 = vsub.f32 %v3157, %v3233
          %v3298 = vsub.f32 %v3160, %v3234
          %v3299 = vsub.f32 %v3165, %v3235
          %v3300 = vsub.f32 %v3168, %v3236
          %v3301 = vsub.f32 %v3173, %v3237
          %v3302 = vsub.f32 %v3176, %v3238
          %v3303 = vsub.f32 %v3181, %v3239
          %v3304 = vsub.f32 %v3184, %v3240
          %v3305 = vsub.f32 %v3189, %v3241
          %v3306 = vsub.f32 %v3192, %v3242
          %v3307 = vmul.f32 %v3291, 1.442695
          %v3308 = vpow.pop %v3307
          %v3309 = vmul.f32 %v3292, 1.442695
          %v3310 = vpow.pop %v3309
          %v3311 = vmul.f32 %v3293, 1.442695
          %v3312 = vpow.pop %v3311
          %v3313 = vmul.f32 %v3294, 1.442695
          %v3314 = vpow.pop %v3313
          %v3315 = vmul.f32 %v3295, 1.442695
          %v3316 = vpow.pop %v3315
          %v3317 = vmul.f32 %v3296, 1.442695
          %v3318 = vpow.pop %v3317
          %v3319 = vmul.f32 %v3297, 1.442695
          %v3320 = vpow.pop %v3319
          %v3321 = vmul.f32 %v3298, 1.442695
          %v3322 = vpow.pop %v3321
          %v3323 = vmul.f32 %v3299, 1.442695
          %v3324 = vpow.pop %v3323
          %v3325 = vmul.f32 %v3300, 1.442695
          %v3326 = vpow.pop %v3325
          %v3327 = vmul.f32 %v3301, 1.442695
          %v3328 = vpow.pop %v3327
          %v3329 = vmul.f32 %v3302, 1.442695
          %v3330 = vpow.pop %v3329
          %v3331 = vmul.f32 %v3303, 1.442695
          %v3332 = vpow.pop %v3331
          %v3333 = vmul.f32 %v3304, 1.442695
          %v3334 = vpow.pop %v3333
          %v3335 = vmul.f32 %v3305, 1.442695
          %v3336 = vpow.pop %v3335
          %v3337 = vmul.f32 %v3306, 1.442695
          %v3338 = vpow.pop %v3337
          %v3339 = vmul.f32 %v3260, %v2999
          %v3340 = vmul.f32 %v3262, %v3000
          %v3341 = vmul.f32 %v3264, %v3001
          %v3342 = vmul.f32 %v3266, %v3002
          %v3343 = vmul.f32 %v3268, %v3003
          %v3344 = vmul.f32 %v3270, %v3004
          %v3345 = vmul.f32 %v3272, %v3005
          %v3346 = vmul.f32 %v3274, %v3006
          %v3347 = vmul.f32 %v3276, %v3007
          %v3348 = vmul.f32 %v3278, %v3008
          %v3349 = vmul.f32 %v3280, %v3009
          %v3350 = vmul.f32 %v3282, %v3010
          %v3351 = vmul.f32 %v3284, %v3011
          %v3352 = vmul.f32 %v3286, %v3012
          %v3353 = vmul.f32 %v3288, %v3013
          %v3354 = vmul.f32 %v3290, %v3014
          %3355 = vadd.xlane.f32.xlu0 %v3308
          %v3356 = vpop.xlane.xlu0 %3355
          %3357 = vadd.xlane.f32.xlu0 %v3310
          %v3358 = vpop.xlane.xlu0 %3357
          %3359 = vadd.xlane.f32.xlu0 %v3312
          %v3360 = vpop.xlane.xlu0 %3359
          %3361 = vadd.xlane.f32.xlu0 %v3314
          %v3362 = vpop.xlane.xlu0 %3361
          %3363 = vadd.xlane.f32.xlu0 %v3316
          %v3364 = vpop.xlane.xlu0 %3363
          %3365 = vadd.xlane.f32.xlu0 %v3318
          %v3366 = vpop.xlane.xlu0 %3365
          %3367 = vadd.xlane.f32.xlu0 %v3320
          %v3368 = vpop.xlane.xlu0 %3367
          %3369 = vadd.xlane.f32.xlu0 %v3322
          %v3370 = vpop.xlane.xlu0 %3369
          %3371 = vadd.xlane.f32.xlu0 %v3324
          %v3372 = vpop.xlane.xlu0 %3371
          %3373 = vadd.xlane.f32.xlu0 %v3326
          %v3374 = vpop.xlane.xlu0 %3373
          %3375 = vadd.xlane.f32.xlu0 %v3328
          %v3376 = vpop.xlane.xlu0 %3375
          %3377 = vadd.xlane.f32.xlu0 %v3330
          %v3378 = vpop.xlane.xlu0 %3377
          %3379 = vadd.xlane.f32.xlu0 %v3332
          %v3380 = vpop.xlane.xlu0 %3379
          %3381 = vadd.xlane.f32.xlu0 %v3334
          %v3382 = vpop.xlane.xlu0 %3381
          %3383 = vadd.xlane.f32.xlu0 %v3336
          %v3384 = vpop.xlane.xlu0 %3383
          %3385 = vadd.xlane.f32.xlu0 %v3338
          %v3386 = vpop.xlane.xlu0 %3385
          %v3387 = vadd.f32 %v3339, %v3356
          %v3388 = vadd.f32 %v3340, %v3358
          %v3389 = vadd.f32 %v3341, %v3360
          %v3390 = vadd.f32 %v3342, %v3362
          %v3391 = vadd.f32 %v3343, %v3364
          %v3392 = vadd.f32 %v3344, %v3366
          %v3393 = vadd.f32 %v3345, %v3368
          %v3394 = vadd.f32 %v3346, %v3370
          %v3395 = vadd.f32 %v3347, %v3372
          %v3396 = vadd.f32 %v3348, %v3374
          %v3397 = vadd.f32 %v3349, %v3376
          %v3398 = vadd.f32 %v3350, %v3378
          %v3399 = vadd.f32 %v3351, %v3380
          %v3400 = vadd.f32 %v3352, %v3382
          %v3401 = vadd.f32 %v3353, %v3384
          %v3402 = vadd.f32 %v3354, %v3386
          %v3403 = vmul.f32 %v3260, %v3015
          %v3404 = vmul.f32 %v3262, %v3016
          %v3405 = vmul.f32 %v3264, %v3017
          %v3406 = vmul.f32 %v3266, %v3018
          %v3407 = vmul.f32 %v3268, %v3019
          %v3408 = vmul.f32 %v3270, %v3020
          %v3409 = vmul.f32 %v3272, %v3021
          %v3410 = vmul.f32 %v3274, %v3022
          %v3411 = vmul.f32 %v3276, %v3023
          %v3412 = vmul.f32 %v3278, %v3024
          %v3413 = vmul.f32 %v3280, %v3025
          %v3414 = vmul.f32 %v3282, %v3026
          %v3415 = vmul.f32 %v3284, %v3027
          %v3416 = vmul.f32 %v3286, %v3028
          %v3417 = vmul.f32 %v3288, %v3029
          %v3418 = vmul.f32 %v3290, %v3030
          %v3419 = vpack.c.bf16 %v3310, %v3308
          %v3420 = vpack.c.bf16 %v3314, %v3312
          %v3421 = vpack.c.bf16 %v3318, %v3316
          %v3422 = vpack.c.bf16 %v3322, %v3320
          %v3423 = vpack.c.bf16 %v3326, %v3324
          %v3424 = vpack.c.bf16 %v3330, %v3328
          %v3425 = vpack.c.bf16 %v3334, %v3332
          %v3426 = vpack.c.bf16 %v3338, %v3336
          %3435 = vrot.lane.b32.xlu0 %v3042, 96
          %v3436 = vpop.permute.xlu0 %3435
          %3437 = vrot.lane.b32.xlu0 %v3043, 96
          %v3438 = vpop.permute.xlu0 %3437
          %3439 = vrot.lane.b32.xlu0 %v3044, 96
          %v3440 = vpop.permute.xlu0 %3439
          %3441 = vrot.lane.b32.xlu0 %v3045, 96
          %v3442 = vpop.permute.xlu0 %3441
          %3443 = vrot.lane.b32.xlu0 %v3046, 96
          %v3444 = vpop.permute.xlu0 %3443
          %3445 = vrot.lane.b32.xlu0 %v3047, 96
          %v3446 = vpop.permute.xlu0 %3445
          %3447 = vrot.lane.b32.xlu0 %v3048, 96
          %v3448 = vpop.permute.xlu0 %3447
          %3449 = vrot.lane.b32.xlu0 %v3049, 96
          %v3450 = vpop.permute.xlu0 %3449
          %3459 = vmatprep.subr.bf16.mxu0 0
          %3460 = vmatpush1.bf16.msra.mxu0 %v3436
          %3461 = vmatprep.subr.bf16.mxu0 0
          %3462 = vmatpush1.bf16.msra.mxu0 %v3438
          %3463 = vmatprep.subr.bf16.mxu0 0
          %3464 = vmatpush1.bf16.msra.mxu0 %v3440
          %3465 = vmatprep.subr.bf16.mxu0 0
          %3466 = vmatpush1.bf16.msra.mxu0 %v3442
          %3467 = vmatprep.subr.bf16.mxu0 0
          %3468 = vmatpush1.bf16.msra.mxu0 %v3444
          %3469 = vmatprep.subr.bf16.mxu0 0
          %3470 = vmatpush1.bf16.msra.mxu0 %v3446
          %3471 = vmatprep.subr.bf16.mxu0 0
          %3472 = vmatpush1.bf16.msra.mxu0 %v3448
          %3473 = vmatprep.subr.bf16.mxu0 0
          %3474 = vmatpush1.bf16.msra.mxu0 %v3450
          %3475 = vmatprep.subr.bf16.mxu0 0
          %3476 = vmatpush1.bf16.msra.mxu0 0
          %3477 = vmatprep.subr.bf16.mxu0 0
          %3478 = vmatpush1.bf16.msra.mxu0 0
          %3479 = vmatprep.subr.bf16.mxu0 0
          %3480 = vmatpush1.bf16.msra.mxu0 0
          %3481 = vmatprep.subr.bf16.mxu0 0
          %3482 = vmatpush1.bf16.msra.mxu0 0
          %3483 = vmatprep.subr.bf16.mxu0 0
          %3484 = vmatpush1.bf16.msra.mxu0 0
          %3485 = vmatprep.subr.bf16.mxu0 0
          %3486 = vmatpush1.bf16.msra.mxu0 0
          %3487 = vmatprep.subr.bf16.mxu0 0
          %3488 = vmatpush1.bf16.msra.mxu0 0
          %3489 = vmatprep.subr.bf16.mxu0 0
          %3490 = vmatpush1.bf16.msra.mxu0 0
          %3491 = vmatprep.mubr.bf16.mxu0 0
          %3492 = vmatmul.mubr.bf16.gmra.mrb[0].mxu0 %v3419
          %v3493 = vpop.f32.mrb[0].mxu0
          %v3494 = vadd.f32 0.0, %v3493
          %v3495 = vpop.f32.mrb[0].mxu0
          %v3496 = vpop.f32.mrb[0].mxu0
          %v3497 = vadd.f32 0.0, %v3496
          %v3498 = vpop.f32.mrb[0].mxu0
          %3499 = vmatprep.mubr.bf16.mxu0 0
          %3500 = vmatmul.mubr.bf16.gmra.mrb[0].mxu0 %v3420
          %v3501 = vpop.f32.mrb[0].mxu0
          %v3502 = vadd.f32 0.0, %v3501
          %v3503 = vpop.f32.mrb[0].mxu0
          %v3504 = vpop.f32.mrb[0].mxu0
          %v3505 = vadd.f32 0.0, %v3504
          %v3506 = vpop.f32.mrb[0].mxu0
          %3507 = vmatprep.mubr.bf16.mxu0 0
          %3508 = vmatmul.mubr.bf16.gmra.mrb[0].mxu0 %v3421
          %v3509 = vpop.f32.mrb[0].mxu0
          %v3510 = vadd.f32 0.0, %v3509
          %v3511 = vpop.f32.mrb[0].mxu0
          %v3512 = vpop.f32.mrb[0].mxu0
          %v3513 = vadd.f32 0.0, %v3512
          %v3514 = vpop.f32.mrb[0].mxu0
          %3515 = vmatprep.mubr.bf16.mxu0 0
          %3516 = vmatmul.mubr.bf16.gmra.mrb[0].mxu0 %v3422
          %v3517 = vpop.f32.mrb[0].mxu0
          %v3518 = vadd.f32 0.0, %v3517
          %v3519 = vpop.f32.mrb[0].mxu0
          %v3520 = vpop.f32.mrb[0].mxu0
          %v3521 = vadd.f32 0.0, %v3520
          %v3522 = vpop.f32.mrb[0].mxu0
          %3523 = vmatprep.mubr.bf16.mxu0 0
          %3524 = vmatmul.mubr.bf16.gmra.mrb[0].mxu0 %v3423
          %v3525 = vpop.f32.mrb[0].mxu0
          %v3526 = vadd.f32 0.0, %v3525
          %v3527 = vpop.f32.mrb[0].mxu0
          %v3528 = vpop.f32.mrb[0].mxu0
          %v3529 = vadd.f32 0.0, %v3528
          %v3530 = vpop.f32.mrb[0].mxu0
          %3531 = vmatprep.mubr.bf16.mxu0 0
          %3532 = vmatmul.mubr.bf16.gmra.mrb[0].mxu0 %v3424
          %v3533 = vpop.f32.mrb[0].mxu0
          %v3534 = vadd.f32 0.0, %v3533
          %v3535 = vpop.f32.mrb[0].mxu0
          %v3536 = vpop.f32.mrb[0].mxu0
          %v3537 = vadd.f32 0.0, %v3536
          %v3538 = vpop.f32.mrb[0].mxu0
          %3539 = vmatprep.mubr.bf16.mxu0 0
          %3540 = vmatmul.mubr.bf16.gmra.mrb[0].mxu0 %v3425
          %v3541 = vpop.f32.mrb[0].mxu0
          %v3542 = vadd.f32 0.0, %v3541
          %v3543 = vpop.f32.mrb[0].mxu0
          %v3544 = vpop.f32.mrb[0].mxu0
          %v3545 = vadd.f32 0.0, %v3544
          %v3546 = vpop.f32.mrb[0].mxu0
          %3547 = vmatprep.mubr.bf16.mxu0 0
          %3548 = vmatmul.mubr.bf16.gmra.mrb[0].mxu0 %v3426
          %v3549 = vpop.f32.mrb[0].mxu0
          %v3550 = vadd.f32 0.0, %v3549
          %v3551 = vpop.f32.mrb[0].mxu0
          %v3552 = vpop.f32.mrb[0].mxu0
          %v3553 = vadd.f32 0.0, %v3552
          %v3554 = vpop.f32.mrb[0].mxu0
          %3555 = vdwg.mxu0
          %v3556 = vadd.f32 %v3403, %v3494
          %v3557 = vadd.f32 %v3404, %v3497
          %v3558 = vadd.f32 %v3405, %v3502
          %v3559 = vadd.f32 %v3406, %v3505
          %v3560 = vadd.f32 %v3407, %v3510
          %v3561 = vadd.f32 %v3408, %v3513
          %v3562 = vadd.f32 %v3409, %v3518
          %v3563 = vadd.f32 %v3410, %v3521
          %v3564 = vadd.f32 %v3411, %v3526
          %v3565 = vadd.f32 %v3412, %v3529
          %v3566 = vadd.f32 %v3413, %v3534
          %v3567 = vadd.f32 %v3414, %v3537
          %v3568 = vadd.f32 %v3415, %v3542
          %v3569 = vadd.f32 %v3416, %v3545
          %v3570 = vadd.f32 %v3417, %v3550
          %v3571 = vadd.f32 %v3418, %v3553
        $region140: #{tpu_custom_call.1} parent=71 // loop_footer
          %s2980 = sadd.s32 %s2978, 1
        $region141: #{tpu_custom_call.1} parent=71 // loop_footer_branch
          %2977 = sbr.rel target = $region137
        $region142: #{tpu_custom_call.1} parent=71 // loop_exit
          _
        %v3572 = vld [vmem:[%s2414 + $0x20] sm:$0xff]
        %v3573 = vld [vmem:[%s2414 + $0x30] sm:$0xff]
        %v3574 = vld [vmem:[%s2418] sm:$0xff]
        %v3575 = vld [vmem:[%s2418 + $0x8] sm:$0xff]
        %v3576 = vld [vmem:[%s2418 + $0x10] sm:$0xff]
        %v3577 = vld [vmem:[%s2418 + $0x18] sm:$0xff]
        %v3578 = vld [vmem:[%s2418 + $0x20] sm:$0xff]
        %v3579 = vld [vmem:[%s2418 + $0x28] sm:$0xff]
        %v3580 = vld [vmem:[%s2418 + $0x30] sm:$0xff]
        %v3581 = vld [vmem:[%s2418 + $0x38] sm:$0xff]
        %3590 = vrot.lane.b32.xlu0 %v1829, 96
        %v3591 = vpop.permute.xlu0 %3590
        %3592 = vrot.lane.b32.xlu0 %v1830, 96
        %v3593 = vpop.permute.xlu0 %3592
        %3594 = vrot.lane.b32.xlu0 %v1831, 96
        %v3595 = vpop.permute.xlu0 %3594
        %3596 = vrot.lane.b32.xlu0 %v1832, 96
        %v3597 = vpop.permute.xlu0 %3596
        %3598 = vrot.lane.b32.xlu0 %v1833, 96
        %v3599 = vpop.permute.xlu0 %3598
        %3600 = vrot.lane.b32.xlu0 %v1834, 96
        %v3601 = vpop.permute.xlu0 %3600
        %3602 = vrot.lane.b32.xlu0 %v1835, 96
        %v3603 = vpop.permute.xlu0 %3602
        %3604 = vrot.lane.b32.xlu0 %v1836, 96
        %v3605 = vpop.permute.xlu0 %3604
        %v3607 = vsel %vm2427, %v3591, 0
        %v3610 = vsel %vm2427, %v3593, 0
        %v3613 = vsel %vm2427, %v3595, 0
        %v3616 = vsel %vm2427, %v3597, 0
        %v3619 = vsel %vm2427, %v3599, 0
        %v3622 = vsel %vm2427, %v3601, 0
        %v3625 = vsel %vm2427, %v3603, 0
        %v3628 = vsel %vm2427, %v3605, 0
        %3630 = vmatprep.subr.bf16.mxu0 0
        %3631 = vmatpush1.bf16.msra.mxu0 %v3572
        %3632 = vmatprep.subr.bf16.mxu0 0
        %3633 = vmatpush1.bf16.msra.mxu0 %v3573
        %3634 = vmatprep.subr.bf16.mxu0 0
        %3635 = vmatpush1.bf16.msra.mxu0 0
        %3636 = vmatprep.subr.bf16.mxu0 0
        %3637 = vmatpush1.bf16.msra.mxu0 0
        %3638 = vmatprep.subr.bf16.mxu0 0
        %3639 = vmatpush1.bf16.msra.mxu0 0
        %3640 = vmatprep.subr.bf16.mxu0 0
        %3641 = vmatpush1.bf16.msra.mxu0 0
        %3642 = vmatprep.subr.bf16.mxu0 0
        %3643 = vmatpush1.bf16.msra.mxu0 0
        %3644 = vmatprep.subr.bf16.mxu0 0
        %3645 = vmatpush1.bf16.msra.mxu0 0
        %3646 = vmatprep.subr.bf16.mxu0 0
        %3647 = vmatpush1.bf16.msra.mxu0 0
        %3648 = vmatprep.subr.bf16.mxu0 0
        %3649 = vmatpush1.bf16.msra.mxu0 0
        %3650 = vmatprep.subr.bf16.mxu0 0
        %3651 = vmatpush1.bf16.msra.mxu0 0
        %3652 = vmatprep.subr.bf16.mxu0 0
        %3653 = vmatpush1.bf16.msra.mxu0 0
        %3654 = vmatprep.subr.bf16.mxu0 0
        %3655 = vmatpush1.bf16.msra.mxu0 0
        %3656 = vmatprep.subr.bf16.mxu0 0
        %3657 = vmatpush1.bf16.msra.mxu0 0
        %3658 = vmatprep.subr.bf16.mxu0 0
        %3659 = vmatpush1.bf16.msra.mxu0 0
        %3660 = vmatprep.subr.bf16.mxu0 0
        %3661 = vmatpush1.bf16.msra.mxu0 0
        %3662 = vmatprep.mubr.bf16.mxu0 0
        %3663 = vmatmul.mubr.bf16.gmra.mrb[0].mxu0 %v3607
        %v3664 = vpop.f32.mrb[0].mxu0
        %v3665 = vadd.f32 0.0, %v3664
        %v3666 = vpop.f32.mrb[0].mxu0
        %v3667 = vpop.f32.mrb[0].mxu0
        %v3668 = vadd.f32 0.0, %v3667
        %v3669 = vpop.f32.mrb[0].mxu0
        %3670 = vmatprep.mubr.bf16.mxu0 0
        %3671 = vmatmul.mubr.bf16.gmra.mrb[0].mxu0 %v3610
        %v3672 = vpop.f32.mrb[0].mxu0
        %v3673 = vadd.f32 0.0, %v3672
        %v3674 = vpop.f32.mrb[0].mxu0
        %v3675 = vpop.f32.mrb[0].mxu0
        %v3676 = vadd.f32 0.0, %v3675
        %v3677 = vpop.f32.mrb[0].mxu0
        %3678 = vmatprep.mubr.bf16.mxu0 0
        %3679 = vmatmul.mubr.bf16.gmra.mrb[0].mxu0 %v3613
        %v3680 = vpop.f32.mrb[0].mxu0
        %v3681 = vadd.f32 0.0, %v3680
        %v3682 = vpop.f32.mrb[0].mxu0
        %v3683 = vpop.f32.mrb[0].mxu0
        %v3684 = vadd.f32 0.0, %v3683
        %v3685 = vpop.f32.mrb[0].mxu0
        %3686 = vmatprep.mubr.bf16.mxu0 0
        %3687 = vmatmul.mubr.bf16.gmra.mrb[0].mxu0 %v3616
        %v3688 = vpop.f32.mrb[0].mxu0
        %v3689 = vadd.f32 0.0, %v3688
        %v3690 = vpop.f32.mrb[0].mxu0
        %v3691 = vpop.f32.mrb[0].mxu0
        %v3692 = vadd.f32 0.0, %v3691
        %v3693 = vpop.f32.mrb[0].mxu0
        %3694 = vmatprep.mubr.bf16.mxu0 0
        %3695 = vmatmul.mubr.bf16.gmra.mrb[0].mxu0 %v3619
        %v3696 = vpop.f32.mrb[0].mxu0
        %v3697 = vadd.f32 0.0, %v3696
        %v3698 = vpop.f32.mrb[0].mxu0
        %v3699 = vpop.f32.mrb[0].mxu0
        %v3700 = vadd.f32 0.0, %v3699
        %v3701 = vpop.f32.mrb[0].mxu0
        %3702 = vmatprep.mubr.bf16.mxu0 0
        %3703 = vmatmul.mubr.bf16.gmra.mrb[0].mxu0 %v3622
        %v3704 = vpop.f32.mrb[0].mxu0
        %v3705 = vadd.f32 0.0, %v3704
        %v3706 = vpop.f32.mrb[0].mxu0
        %v3707 = vpop.f32.mrb[0].mxu0
        %v3708 = vadd.f32 0.0, %v3707
        %v3709 = vpop.f32.mrb[0].mxu0
        %3710 = vmatprep.mubr.bf16.mxu0 0
        %3711 = vmatmul.mubr.bf16.gmra.mrb[0].mxu0 %v3625
        %v3712 = vpop.f32.mrb[0].mxu0
        %v3713 = vadd.f32 0.0, %v3712
        %v3714 = vpop.f32.mrb[0].mxu0
        %v3715 = vpop.f32.mrb[0].mxu0
        %v3716 = vadd.f32 0.0, %v3715
        %v3717 = vpop.f32.mrb[0].mxu0
        %3718 = vmatprep.mubr.bf16.mxu0 0
        %3719 = vmatmul.mubr.bf16.gmra.mrb[0].mxu0 %v3628
        %v3720 = vpop.f32.mrb[0].mxu0
        %v3721 = vadd.f32 0.0, %v3720
        %v3722 = vpop.f32.mrb[0].mxu0
        %v3723 = vpop.f32.mrb[0].mxu0
        %v3724 = vadd.f32 0.0, %v3723
        %v3725 = vpop.f32.mrb[0].mxu0
        %3726 = vdwg.mxu0
        %v3727 = vsel %vm2552, %v3665, -1e+30
        %v3728 = vsel %vm2553, %v3668, -1e+30
        %v3729 = vsel %vm2554, %v3673, -1e+30
        %v3730 = vsel %vm2555, %v3676, -1e+30
        %v3731 = vsel %vm2556, %v3681, -1e+30
        %v3732 = vsel %vm2557, %v3684, -1e+30
        %v3733 = vsel %vm2558, %v3689, -1e+30
        %v3734 = vsel %vm2559, %v3692, -1e+30
        %v3735 = vsel %vm2560, %v3697, -1e+30
        %v3736 = vsel %vm2561, %v3700, -1e+30
        %v3737 = vsel %vm2562, %v3705, -1e+30
        %v3738 = vsel %vm2563, %v3708, -1e+30
        %v3739 = vsel %vm2564, %v3713, -1e+30
        %v3740 = vsel %vm2565, %v3716, -1e+30
        %v3741 = vsel %vm2566, %v3721, -1e+30
        %v3742 = vsel %vm2567, %v3724, -1e+30
        %3743 = vmax.xlane.f32.xlu0 %v3727
        %v3744 = vpop.xlane.xlu0 %3743
        %3745 = vmax.xlane.f32.xlu0 %v3728
        %v3746 = vpop.xlane.xlu0 %3745
        %3747 = vmax.xlane.f32.xlu0 %v3729
        %v3748 = vpop.xlane.xlu0 %3747
        %3749 = vmax.xlane.f32.xlu0 %v3730
        %v3750 = vpop.xlane.xlu0 %3749
        %3751 = vmax.xlane.f32.xlu0 %v3731
        %v3752 = vpop.xlane.xlu0 %3751
        %3753 = vmax.xlane.f32.xlu0 %v3732
        %v3754 = vpop.xlane.xlu0 %3753
        %3755 = vmax.xlane.f32.xlu0 %v3733
        %v3756 = vpop.xlane.xlu0 %3755
        %3757 = vmax.xlane.f32.xlu0 %v3734
        %v3758 = vpop.xlane.xlu0 %3757
        %3759 = vmax.xlane.f32.xlu0 %v3735
        %v3760 = vpop.xlane.xlu0 %3759
        %3761 = vmax.xlane.f32.xlu0 %v3736
        %v3762 = vpop.xlane.xlu0 %3761
        %3763 = vmax.xlane.f32.xlu0 %v3737
        %v3764 = vpop.xlane.xlu0 %3763
        %3765 = vmax.xlane.f32.xlu0 %v3738
        %v3766 = vpop.xlane.xlu0 %3765
        %3767 = vmax.xlane.f32.xlu0 %v3739
        %v3768 = vpop.xlane.xlu0 %3767
        %3769 = vmax.xlane.f32.xlu0 %v3740
        %v3770 = vpop.xlane.xlu0 %3769
        %3771 = vmax.xlane.f32.xlu0 %v3741
        %v3772 = vpop.xlane.xlu0 %3771
        %3773 = vmax.xlane.f32.xlu0 %v3742
        %v3774 = vpop.xlane.xlu0 %3773
        %v3775 = vmax.f32 %v2983, %v3744
        %v3776 = vmax.f32 %v2984, %v3746
        %v3777 = vmax.f32 %v2985, %v3748
        %v3778 = vmax.f32 %v2986, %v3750
        %v3779 = vmax.f32 %v2987, %v3752
        %v3780 = vmax.f32 %v2988, %v3754
        %v3781 = vmax.f32 %v2989, %v3756
        %v3782 = vmax.f32 %v2990, %v3758
        %v3783 = vmax.f32 %v2991, %v3760
        %v3784 = vmax.f32 %v2992, %v3762
        %v3785 = vmax.f32 %v2993, %v3764
        %v3786 = vmax.f32 %v2994, %v3766
        %v3787 = vmax.f32 %v2995, %v3768
        %v3788 = vmax.f32 %v2996, %v3770
        %v3789 = vmax.f32 %v2997, %v3772
        %v3790 = vmax.f32 %v2998, %v3774
        %v3791 = vsub.f32 %v2983, %v3775
        %v3792 = vsub.f32 %v2984, %v3776
        %v3793 = vsub.f32 %v2985, %v3777
        %v3794 = vsub.f32 %v2986, %v3778
        %v3795 = vsub.f32 %v2987, %v3779
        %v3796 = vsub.f32 %v2988, %v3780
        %v3797 = vsub.f32 %v2989, %v3781
        %v3798 = vsub.f32 %v2990, %v3782
        %v3799 = vsub.f32 %v2991, %v3783
        %v3800 = vsub.f32 %v2992, %v3784
        %v3801 = vsub.f32 %v2993, %v3785
        %v3802 = vsub.f32 %v2994, %v3786
        %v3803 = vsub.f32 %v2995, %v3787
        %v3804 = vsub.f32 %v2996, %v3788
        %v3805 = vsub.f32 %v2997, %v3789
        %v3806 = vsub.f32 %v2998, %v3790
        %v3807 = vmul.f32 %v3791, 1.442695
        %v3808 = vpow.pop %v3807
        %v3809 = vmul.f32 %v3792, 1.442695
        %v3810 = vpow.pop %v3809
        %v3811 = vmul.f32 %v3793, 1.442695
        %v3812 = vpow.pop %v3811
        %v3813 = vmul.f32 %v3794, 1.442695
        %v3814 = vpow.pop %v3813
        %v3815 = vmul.f32 %v3795, 1.442695
        %v3816 = vpow.pop %v3815
        %v3817 = vmul.f32 %v3796, 1.442695
        %v3818 = vpow.pop %v3817
        %v3819 = vmul.f32 %v3797, 1.442695
        %v3820 = vpow.pop %v3819
        %v3821 = vmul.f32 %v3798, 1.442695
        %v3822 = vpow.pop %v3821
        %v3823 = vmul.f32 %v3799, 1.442695
        %v3824 = vpow.pop %v3823
        %v3825 = vmul.f32 %v3800, 1.442695
        %v3826 = vpow.pop %v3825
        %v3827 = vmul.f32 %v3801, 1.442695
        %v3828 = vpow.pop %v3827
        %v3829 = vmul.f32 %v3802, 1.442695
        %v3830 = vpow.pop %v3829
        %v3831 = vmul.f32 %v3803, 1.442695
        %v3832 = vpow.pop %v3831
        %v3833 = vmul.f32 %v3804, 1.442695
        %v3834 = vpow.pop %v3833
        %v3835 = vmul.f32 %v3805, 1.442695
        %v3836 = vpow.pop %v3835
        %v3837 = vmul.f32 %v3806, 1.442695
        %v3838 = vpow.pop %v3837
        %v3839 = vsub.f32 %v3727, %v3775
        %v3840 = vsub.f32 %v3728, %v3776
        %v3841 = vsub.f32 %v3729, %v3777
        %v3842 = vsub.f32 %v3730, %v3778
        %v3843 = vsub.f32 %v3731, %v3779
        %v3844 = vsub.f32 %v3732, %v3780
        %v3845 = vsub.f32 %v3733, %v3781
        %v3846 = vsub.f32 %v3734, %v3782
        %v3847 = vsub.f32 %v3735, %v3783
        %v3848 = vsub.f32 %v3736, %v3784
        %v3849 = vsub.f32 %v3737, %v3785
        %v3850 = vsub.f32 %v3738, %v3786
        %v3851 = vsub.f32 %v3739, %v3787
        %v3852 = vsub.f32 %v3740, %v3788
        %v3853 = vsub.f32 %v3741, %v3789
        %v3854 = vsub.f32 %v3742, %v3790
        %v3855 = vmul.f32 %v3839, 1.442695
        %v3856 = vpow.pop %v3855
        %v3857 = vmul.f32 %v3840, 1.442695
        %v3858 = vpow.pop %v3857
        %v3859 = vmul.f32 %v3841, 1.442695
        %v3860 = vpow.pop %v3859
        %v3861 = vmul.f32 %v3842, 1.442695
        %v3862 = vpow.pop %v3861
        %v3863 = vmul.f32 %v3843, 1.442695
        %v3864 = vpow.pop %v3863
        %v3865 = vmul.f32 %v3844, 1.442695
        %v3866 = vpow.pop %v3865
        %v3867 = vmul.f32 %v3845, 1.442695
        %v3868 = vpow.pop %v3867
        %v3869 = vmul.f32 %v3846, 1.442695
        %v3870 = vpow.pop %v3869
        %v3871 = vmul.f32 %v3847, 1.442695
        %v3872 = vpow.pop %v3871
        %v3873 = vmul.f32 %v3848, 1.442695
        %v3874 = vpow.pop %v3873
        %v3875 = vmul.f32 %v3849, 1.442695
        %v3876 = vpow.pop %v3875
        %v3877 = vmul.f32 %v3850, 1.442695
        %v3878 = vpow.pop %v3877
        %v3879 = vmul.f32 %v3851, 1.442695
        %v3880 = vpow.pop %v3879
        %v3881 = vmul.f32 %v3852, 1.442695
        %v3882 = vpow.pop %v3881
        %v3883 = vmul.f32 %v3853, 1.442695
        %v3884 = vpow.pop %v3883
        %v3885 = vmul.f32 %v3854, 1.442695
        %v3886 = vpow.pop %v3885
        %v3887 = vmul.f32 %v3808, %v2999
        %v3888 = vmul.f32 %v3810, %v3000
        %v3889 = vmul.f32 %v3812, %v3001
        %v3890 = vmul.f32 %v3814, %v3002
        %v3891 = vmul.f32 %v3816, %v3003
        %v3892 = vmul.f32 %v3818, %v3004
        %v3893 = vmul.f32 %v3820, %v3005
        %v3894 = vmul.f32 %v3822, %v3006
        %v3895 = vmul.f32 %v3824, %v3007
        %v3896 = vmul.f32 %v3826, %v3008
        %v3897 = vmul.f32 %v3828, %v3009
        %v3898 = vmul.f32 %v3830, %v3010
        %v3899 = vmul.f32 %v3832, %v3011
        %v3900 = vmul.f32 %v3834, %v3012
        %v3901 = vmul.f32 %v3836, %v3013
        %v3902 = vmul.f32 %v3838, %v3014
        %3903 = vadd.xlane.f32.xlu0 %v3856
        %v3904 = vpop.xlane.xlu0 %3903
        %3905 = vadd.xlane.f32.xlu0 %v3858
        %v3906 = vpop.xlane.xlu0 %3905
        %3907 = vadd.xlane.f32.xlu0 %v3860
        %v3908 = vpop.xlane.xlu0 %3907
        %3909 = vadd.xlane.f32.xlu0 %v3862
        %v3910 = vpop.xlane.xlu0 %3909
        %3911 = vadd.xlane.f32.xlu0 %v3864
        %v3912 = vpop.xlane.xlu0 %3911
        %3913 = vadd.xlane.f32.xlu0 %v3866
        %v3914 = vpop.xlane.xlu0 %3913
        %3915 = vadd.xlane.f32.xlu0 %v3868
        %v3916 = vpop.xlane.xlu0 %3915
        %3917 = vadd.xlane.f32.xlu0 %v3870
        %v3918 = vpop.xlane.xlu0 %3917
        %3919 = vadd.xlane.f32.xlu0 %v3872
        %v3920 = vpop.xlane.xlu0 %3919
        %3921 = vadd.xlane.f32.xlu0 %v3874
        %v3922 = vpop.xlane.xlu0 %3921
        %3923 = vadd.xlane.f32.xlu0 %v3876
        %v3924 = vpop.xlane.xlu0 %3923
        %3925 = vadd.xlane.f32.xlu0 %v3878
        %v3926 = vpop.xlane.xlu0 %3925
        %3927 = vadd.xlane.f32.xlu0 %v3880
        %v3928 = vpop.xlane.xlu0 %3927
        %3929 = vadd.xlane.f32.xlu0 %v3882
        %v3930 = vpop.xlane.xlu0 %3929
        %3931 = vadd.xlane.f32.xlu0 %v3884
        %v3932 = vpop.xlane.xlu0 %3931
        %3933 = vadd.xlane.f32.xlu0 %v3886
        %v3934 = vpop.xlane.xlu0 %3933
        %v3935 = vadd.f32 %v3887, %v3904
        %v3936 = vadd.f32 %v3888, %v3906
        %v3937 = vadd.f32 %v3889, %v3908
        %v3938 = vadd.f32 %v3890, %v3910
        %v3939 = vadd.f32 %v3891, %v3912
        %v3940 = vadd.f32 %v3892, %v3914
        %v3941 = vadd.f32 %v3893, %v3916
        %v3942 = vadd.f32 %v3894, %v3918
        %v3943 = vadd.f32 %v3895, %v3920
        %v3944 = vadd.f32 %v3896, %v3922
        %v3945 = vadd.f32 %v3897, %v3924
        %v3946 = vadd.f32 %v3898, %v3926
        %v3947 = vadd.f32 %v3899, %v3928
        %v3948 = vadd.f32 %v3900, %v3930
        %v3949 = vadd.f32 %v3901, %v3932
        %v3950 = vadd.f32 %v3902, %v3934
        %v3951 = vmul.f32 %v3808, %v3015
        %v3952 = vmul.f32 %v3810, %v3016
        %v3953 = vmul.f32 %v3812, %v3017
        %v3954 = vmul.f32 %v3814, %v3018
        %v3955 = vmul.f32 %v3816, %v3019
        %v3956 = vmul.f32 %v3818, %v3020
        %v3957 = vmul.f32 %v3820, %v3021
        %v3958 = vmul.f32 %v3822, %v3022
        %v3959 = vmul.f32 %v3824, %v3023
        %v3960 = vmul.f32 %v3826, %v3024
        %v3961 = vmul.f32 %v3828, %v3025
        %v3962 = vmul.f32 %v3830, %v3026
        %v3963 = vmul.f32 %v3832, %v3027
        %v3964 = vmul.f32 %v3834, %v3028
        %v3965 = vmul.f32 %v3836, %v3029
        %v3966 = vmul.f32 %v3838, %v3030
        %v3967 = vpack.c.bf16 %v3858, %v3856
        %v3968 = vpack.c.bf16 %v3862, %v3860
        %v3969 = vpack.c.bf16 %v3866, %v3864
        %v3970 = vpack.c.bf16 %v3870, %v3868
        %v3971 = vpack.c.bf16 %v3874, %v3872
        %v3972 = vpack.c.bf16 %v3878, %v3876
        %v3973 = vpack.c.bf16 %v3882, %v3880
        %v3974 = vpack.c.bf16 %v3886, %v3884
        %3983 = vrot.lane.b32.xlu0 %v3574, 96
        %v3984 = vpop.permute.xlu0 %3983
        %3985 = vrot.lane.b32.xlu0 %v3575, 96
        %v3986 = vpop.permute.xlu0 %3985
        %3987 = vrot.lane.b32.xlu0 %v3576, 96
        %v3988 = vpop.permute.xlu0 %3987
        %3989 = vrot.lane.b32.xlu0 %v3577, 96
        %v3990 = vpop.permute.xlu0 %3989
        %3991 = vrot.lane.b32.xlu0 %v3578, 96
        %v3992 = vpop.permute.xlu0 %3991
        %3993 = vrot.lane.b32.xlu0 %v3579, 96
        %v3994 = vpop.permute.xlu0 %3993
        %3995 = vrot.lane.b32.xlu0 %v3580, 96
        %v3996 = vpop.permute.xlu0 %3995
        %3997 = vrot.lane.b32.xlu0 %v3581, 96
        %v3998 = vpop.permute.xlu0 %3997
        %4007 = vmatprep.subr.bf16.mxu0 0
        %4008 = vmatpush1.bf16.msra.mxu0 %v3984
        %4009 = vmatprep.subr.bf16.mxu0 0
        %4010 = vmatpush1.bf16.msra.mxu0 %v3986
        %4011 = vmatprep.subr.bf16.mxu0 0
        %4012 = vmatpush1.bf16.msra.mxu0 %v3988
        %4013 = vmatprep.subr.bf16.mxu0 0
        %4014 = vmatpush1.bf16.msra.mxu0 %v3990
        %4015 = vmatprep.subr.bf16.mxu0 0
        %4016 = vmatpush1.bf16.msra.mxu0 %v3992
        %4017 = vmatprep.subr.bf16.mxu0 0
        %4018 = vmatpush1.bf16.msra.mxu0 %v3994
        %4019 = vmatprep.subr.bf16.mxu0 0
        %4020 = vmatpush1.bf16.msra.mxu0 %v3996
        %4021 = vmatprep.subr.bf16.mxu0 0
        %4022 = vmatpush1.bf16.msra.mxu0 %v3998
        %4023 = vmatprep.subr.bf16.mxu0 0
        %4024 = vmatpush1.bf16.msra.mxu0 0
        %4025 = vmatprep.subr.bf16.mxu0 0
        %4026 = vmatpush1.bf16.msra.mxu0 0
        %4027 = vmatprep.subr.bf16.mxu0 0
        %4028 = vmatpush1.bf16.msra.mxu0 0
        %4029 = vmatprep.subr.bf16.mxu0 0
        %4030 = vmatpush1.bf16.msra.mxu0 0
        %4031 = vmatprep.subr.bf16.mxu0 0
        %4032 = vmatpush1.bf16.msra.mxu0 0
        %4033 = vmatprep.subr.bf16.mxu0 0
        %4034 = vmatpush1.bf16.msra.mxu0 0
        %4035 = vmatprep.subr.bf16.mxu0 0
        %4036 = vmatpush1.bf16.msra.mxu0 0
        %4037 = vmatprep.subr.bf16.mxu0 0
        %4038 = vmatpush1.bf16.msra.mxu0 0
        %4039 = vmatprep.mubr.bf16.mxu0 0
        %4040 = vmatmul.mubr.bf16.gmra.mrb[0].mxu0 %v3967
        %v4041 = vpop.f32.mrb[0].mxu0
        %v4042 = vadd.f32 0.0, %v4041
        %v4043 = vpop.f32.mrb[0].mxu0
        %v4044 = vpop.f32.mrb[0].mxu0
        %v4045 = vadd.f32 0.0, %v4044
        %v4046 = vpop.f32.mrb[0].mxu0
        %4047 = vmatprep.mubr.bf16.mxu0 0
        %4048 = vmatmul.mubr.bf16.gmra.mrb[0].mxu0 %v3968
        %v4049 = vpop.f32.mrb[0].mxu0
        %v4050 = vadd.f32 0.0, %v4049
        %v4051 = vpop.f32.mrb[0].mxu0
        %v4052 = vpop.f32.mrb[0].mxu0
        %v4053 = vadd.f32 0.0, %v4052
        %v4054 = vpop.f32.mrb[0].mxu0
        %4055 = vmatprep.mubr.bf16.mxu0 0
        %4056 = vmatmul.mubr.bf16.gmra.mrb[0].mxu0 %v3969
        %v4057 = vpop.f32.mrb[0].mxu0
        %v4058 = vadd.f32 0.0, %v4057
        %v4059 = vpop.f32.mrb[0].mxu0
        %v4060 = vpop.f32.mrb[0].mxu0
        %v4061 = vadd.f32 0.0, %v4060
        %v4062 = vpop.f32.mrb[0].mxu0
        %4063 = vmatprep.mubr.bf16.mxu0 0
        %4064 = vmatmul.mubr.bf16.gmra.mrb[0].mxu0 %v3970
        %v4065 = vpop.f32.mrb[0].mxu0
        %v4066 = vadd.f32 0.0, %v4065
        %v4067 = vpop.f32.mrb[0].mxu0
        %v4068 = vpop.f32.mrb[0].mxu0
        %v4069 = vadd.f32 0.0, %v4068
        %v4070 = vpop.f32.mrb[0].mxu0
        %4071 = vmatprep.mubr.bf16.mxu0 0
        %4072 = vmatmul.mubr.bf16.gmra.mrb[0].mxu0 %v3971
        %v4073 = vpop.f32.mrb[0].mxu0
        %v4074 = vadd.f32 0.0, %v4073
        %v4075 = vpop.f32.mrb[0].mxu0
        %v4076 = vpop.f32.mrb[0].mxu0
        %v4077 = vadd.f32 0.0, %v4076
        %v4078 = vpop.f32.mrb[0].mxu0
        %4079 = vmatprep.mubr.bf16.mxu0 0
        %4080 = vmatmul.mubr.bf16.gmra.mrb[0].mxu0 %v3972
        %v4081 = vpop.f32.mrb[0].mxu0
        %v4082 = vadd.f32 0.0, %v4081
        %v4083 = vpop.f32.mrb[0].mxu0
        %v4084 = vpop.f32.mrb[0].mxu0
        %v4085 = vadd.f32 0.0, %v4084
        %v4086 = vpop.f32.mrb[0].mxu0
        %4087 = vmatprep.mubr.bf16.mxu0 0
        %4088 = vmatmul.mubr.bf16.gmra.mrb[0].mxu0 %v3973
        %v4089 = vpop.f32.mrb[0].mxu0
        %v4090 = vadd.f32 0.0, %v4089
        %v4091 = vpop.f32.mrb[0].mxu0
        %v4092 = vpop.f32.mrb[0].mxu0
        %v4093 = vadd.f32 0.0, %v4092
        %v4094 = vpop.f32.mrb[0].mxu0
        %4095 = vmatprep.mubr.bf16.mxu0 0
        %4096 = vmatmul.mubr.bf16.gmra.mrb[0].mxu0 %v3974
        %v4097 = vpop.f32.mrb[0].mxu0
        %v4098 = vadd.f32 0.0, %v4097
        %v4099 = vpop.f32.mrb[0].mxu0
        %v4100 = vpop.f32.mrb[0].mxu0
        %v4101 = vadd.f32 0.0, %v4100
        %v4102 = vpop.f32.mrb[0].mxu0
        %4103 = vdwg.mxu0
        %v4104 = vadd.f32 %v3951, %v4042
        %v4105 = vadd.f32 %v3952, %v4045
        %v4106 = vadd.f32 %v3953, %v4050
        %v4107 = vadd.f32 %v3954, %v4053
        %v4108 = vadd.f32 %v3955, %v4058
        %v4109 = vadd.f32 %v3956, %v4061
        %v4110 = vadd.f32 %v3957, %v4066
        %v4111 = vadd.f32 %v3958, %v4069
        %v4112 = vadd.f32 %v3959, %v4074
        %v4113 = vadd.f32 %v3960, %v4077
        %v4114 = vadd.f32 %v3961, %v4082
        %v4115 = vadd.f32 %v3962, %v4085
        %v4116 = vadd.f32 %v3963, %v4090
        %v4117 = vadd.f32 %v3964, %v4093
        %v4118 = vadd.f32 %v3965, %v4098
        %v4119 = vadd.f32 %v3966, %v4101
        %v4120 = vrcp.pop %v3935
        %v4121 = vrcp.pop %v3936
        %v4122 = vrcp.pop %v3937
        %v4123 = vrcp.pop %v3938
        %v4124 = vrcp.pop %v3939
        %v4125 = vrcp.pop %v3940
        %v4126 = vrcp.pop %v3941
        %v4127 = vrcp.pop %v3942
        %v4128 = vrcp.pop %v3943
        %v4129 = vrcp.pop %v3944
        %v4130 = vrcp.pop %v3945
        %v4131 = vrcp.pop %v3946
        %v4132 = vrcp.pop %v3947
        %v4133 = vrcp.pop %v3948
        %v4134 = vrcp.pop %v3949
        %v4135 = vrcp.pop %v3950
        %v4136 = vmul.f32 %v4104, %v4120
        %v4137 = vmul.f32 %v4105, %v4121
        %v4138 = vmul.f32 %v4106, %v4122
        %v4139 = vmul.f32 %v4107, %v4123
        %v4140 = vmul.f32 %v4108, %v4124
        %v4141 = vmul.f32 %v4109, %v4125
        %v4142 = vmul.f32 %v4110, %v4126
        %v4143 = vmul.f32 %v4111, %v4127
        %v4144 = vmul.f32 %v4112, %v4128
        %v4145 = vmul.f32 %v4113, %v4129
        %v4146 = vmul.f32 %v4114, %v4130
        %v4147 = vmul.f32 %v4115, %v4131
        %v4148 = vmul.f32 %v4116, %v4132
        %v4149 = vmul.f32 %v4117, %v4133
        %v4150 = vmul.f32 %v4118, %v4134
        %v4151 = vmul.f32 %v4119, %v4135
        %v4152 = vpack.c.bf16 %v4137, %v4136
        %v4153 = vpack.c.bf16 %v4139, %v4138
        %v4154 = vpack.c.bf16 %v4141, %v4140
        %v4155 = vpack.c.bf16 %v4143, %v4142
        %v4156 = vpack.c.bf16 %v4145, %v4144
        %v4157 = vpack.c.bf16 %v4147, %v4146
        %v4158 = vpack.c.bf16 %v4149, %v4148
        %v4159 = vpack.c.bf16 %v4151, %v4150
        %4168 = vrot.lane.b32.xlu0 %v4152, 32
        %v4169 = vpop.permute.xlu0 %4168
        %4170 = vrot.lane.b32.xlu0 %v4153, 32
        %v4171 = vpop.permute.xlu0 %4170
        %4172 = vrot.lane.b32.xlu0 %v4154, 32
        %v4173 = vpop.permute.xlu0 %4172
        %4174 = vrot.lane.b32.xlu0 %v4155, 32
        %v4175 = vpop.permute.xlu0 %4174
        %4176 = vrot.lane.b32.xlu0 %v4156, 32
        %v4177 = vpop.permute.xlu0 %4176
        %4178 = vrot.lane.b32.xlu0 %v4157, 32
        %v4179 = vpop.permute.xlu0 %4178
        %4180 = vrot.lane.b32.xlu0 %v4158, 32
        %v4181 = vpop.permute.xlu0 %4180
        %4182 = vrot.lane.b32.xlu0 %v4159, 32
        %v4183 = vpop.permute.xlu0 %4182
        %vm4192 = vcmask 523520
        %4193 = vst.msk [vmem:[#allocation5] sm:$0xff] %vm4192, %v4169
        %4194 = vst.msk [vmem:[#allocation5 + $0x8] sm:$0xff] %vm4192, %v4171
        %4195 = vst.msk [vmem:[#allocation5 + $0x10] sm:$0xff] %vm4192, %v4173
        %4196 = vst.msk [vmem:[#allocation5 + $0x18] sm:$0xff] %vm4192, %v4175
        %4197 = vst.msk [vmem:[#allocation5 + $0x20] sm:$0xff] %vm4192, %v4177
        %4198 = vst.msk [vmem:[#allocation5 + $0x28] sm:$0xff] %vm4192, %v4179
        %4199 = vst.msk [vmem:[#allocation5 + $0x30] sm:$0xff] %vm4192, %v4181
        %4200 = vst.msk [vmem:[#allocation5 + $0x38] sm:$0xff] %vm4192, %v4183
        // While loop
        $region143: #{tpu_custom_call.1} parent=71 // loop_pre_header
          _
        $region144: #{tpu_custom_call.1} parent=71 // loop_header
          %s4202 = sphi 0, %s4204
          %p4203 = scmp.ge.s32.totalorder %s4202, %s41
          %v4207 = vphi -1e+30, %v4443
          %v4208 = vphi -1e+30, %v4444
          %v4209 = vphi -1e+30, %v4445
          %v4210 = vphi -1e+30, %v4446
          %v4211 = vphi -1e+30, %v4447
          %v4212 = vphi -1e+30, %v4448
          %v4213 = vphi -1e+30, %v4449
          %v4214 = vphi -1e+30, %v4450
          %v4215 = vphi -1e+30, %v4451
          %v4216 = vphi -1e+30, %v4452
          %v4217 = vphi -1e+30, %v4453
          %v4218 = vphi -1e+30, %v4454
          %v4219 = vphi -1e+30, %v4455
          %v4220 = vphi -1e+30, %v4456
          %v4221 = vphi -1e+30, %v4457
          %v4222 = vphi -1e+30, %v4458
          %v4223 = vphi 0.0, %v4603
          %v4224 = vphi 0.0, %v4604
          %v4225 = vphi 0.0, %v4605
          %v4226 = vphi 0.0, %v4606
          %v4227 = vphi 0.0, %v4607
          %v4228 = vphi 0.0, %v4608
          %v4229 = vphi 0.0, %v4609
          %v4230 = vphi 0.0, %v4610
          %v4231 = vphi 0.0, %v4611
          %v4232 = vphi 0.0, %v4612
          %v4233 = vphi 0.0, %v4613
          %v4234 = vphi 0.0, %v4614
          %v4235 = vphi 0.0, %v4615
          %v4236 = vphi 0.0, %v4616
          %v4237 = vphi 0.0, %v4617
          %v4238 = vphi 0.0, %v4618
          %v4239 = vphi 0.0, %v4772
          %v4240 = vphi 0.0, %v4773
          %v4241 = vphi 0.0, %v4774
          %v4242 = vphi 0.0, %v4775
          %v4243 = vphi 0.0, %v4776
          %v4244 = vphi 0.0, %v4777
          %v4245 = vphi 0.0, %v4778
          %v4246 = vphi 0.0, %v4779
          %v4247 = vphi 0.0, %v4780
          %v4248 = vphi 0.0, %v4781
          %v4249 = vphi 0.0, %v4782
          %v4250 = vphi 0.0, %v4783
          %v4251 = vphi 0.0, %v4784
          %v4252 = vphi 0.0, %v4785
          %v4253 = vphi 0.0, %v4786
          %v4254 = vphi 0.0, %v4787
        $region145: #{tpu_custom_call.1} parent=71 // loop_header_branch
          %4206 = sbr.rel (%p4203) target = $region149
        $region146: #{tpu_custom_call.1} parent=71 // loop_body
          %s4255 = smul.u32 %s4202, 128
          %s4256 = sshra.s32 %s4255, 7
          %s4257 = sand.u32 %s4255, 127
          %s4258 = smul.addr %s4256, 8
          %s4259 = scalar_lea.vmem [#allocation3], %s4258
          %v4260 = vld [vmem:[%s4259 + $0x40] sm:$0xff]
          %v4261 = vld [vmem:[%s4259 + $0x50] sm:$0xff]
          %s4262 = sshra.s32 %s4255, 4
          %s4263 = sand.u32 %s4255, 15
          %s4264 = smul.addr %s4262, 8
          %s4265 = scalar_lea.vmem [#allocation4], %s4264
          %v4266 = vld [vmem:[%s4265] sm:$0xff]
          %v4267 = vld [vmem:[%s4265 + $0x8] sm:$0xff]
          %v4268 = vld [vmem:[%s4265 + $0x10] sm:$0xff]
          %v4269 = vld [vmem:[%s4265 + $0x18] sm:$0xff]
          %v4270 = vld [vmem:[%s4265 + $0x20] sm:$0xff]
          %v4271 = vld [vmem:[%s4265 + $0x28] sm:$0xff]
          %v4272 = vld [vmem:[%s4265 + $0x30] sm:$0xff]
          %v4273 = vld [vmem:[%s4265 + $0x38] sm:$0xff]
          %4274 = vrot.lane.b32.xlu0 %v1829, 64
          %v4275 = vpop.permute.xlu0 %4274
          %4276 = vrot.lane.b32.xlu0 %v1830, 64
          %v4277 = vpop.permute.xlu0 %4276
          %4278 = vrot.lane.b32.xlu0 %v1831, 64
          %v4279 = vpop.permute.xlu0 %4278
          %4280 = vrot.lane.b32.xlu0 %v1832, 64
          %v4281 = vpop.permute.xlu0 %4280
          %4282 = vrot.lane.b32.xlu0 %v1833, 64
          %v4283 = vpop.permute.xlu0 %4282
          %4284 = vrot.lane.b32.xlu0 %v1834, 64
          %v4285 = vpop.permute.xlu0 %4284
          %4286 = vrot.lane.b32.xlu0 %v1835, 64
          %v4287 = vpop.permute.xlu0 %4286
          %4288 = vrot.lane.b32.xlu0 %v1836, 64
          %v4289 = vpop.permute.xlu0 %4288
          %v4291 = vsel %vm2427, %v4275, 0
          %v4294 = vsel %vm2427, %v4277, 0
          %v4297 = vsel %vm2427, %v4279, 0
          %v4300 = vsel %vm2427, %v4281, 0
          %v4303 = vsel %vm2427, %v4283, 0
          %v4306 = vsel %vm2427, %v4285, 0
          %v4309 = vsel %vm2427, %v4287, 0
          %v4312 = vsel %vm2427, %v4289, 0
          %4314 = vmatprep.subr.bf16.mxu0 0
          %4315 = vmatpush1.bf16.msra.mxu0 %v4260
          %4316 = vmatprep.subr.bf16.mxu0 0
          %4317 = vmatpush1.bf16.msra.mxu0 %v4261
          %4318 = vmatprep.subr.bf16.mxu0 0
          %4319 = vmatpush1.bf16.msra.mxu0 0
          %4320 = vmatprep.subr.bf16.mxu0 0
          %4321 = vmatpush1.bf16.msra.mxu0 0
          %4322 = vmatprep.subr.bf16.mxu0 0
          %4323 = vmatpush1.bf16.msra.mxu0 0
          %4324 = vmatprep.subr.bf16.mxu0 0
          %4325 = vmatpush1.bf16.msra.mxu0 0
          %4326 = vmatprep.subr.bf16.mxu0 0
          %4327 = vmatpush1.bf16.msra.mxu0 0
          %4328 = vmatprep.subr.bf16.mxu0 0
          %4329 = vmatpush1.bf16.msra.mxu0 0
          %4330 = vmatprep.subr.bf16.mxu0 0
          %4331 = vmatpush1.bf16.msra.mxu0 0
          %4332 = vmatprep.subr.bf16.mxu0 0
          %4333 = vmatpush1.bf16.msra.mxu0 0
          %4334 = vmatprep.subr.bf16.mxu0 0
          %4335 = vmatpush1.bf16.msra.mxu0 0
          %4336 = vmatprep.subr.bf16.mxu0 0
          %4337 = vmatpush1.bf16.msra.mxu0 0
          %4338 = vmatprep.subr.bf16.mxu0 0
          %4339 = vmatpush1.bf16.msra.mxu0 0
          %4340 = vmatprep.subr.bf16.mxu0 0
          %4341 = vmatpush1.bf16.msra.mxu0 0
          %4342 = vmatprep.subr.bf16.mxu0 0
          %4343 = vmatpush1.bf16.msra.mxu0 0
          %4344 = vmatprep.subr.bf16.mxu0 0
          %4345 = vmatpush1.bf16.msra.mxu0 0
          %4346 = vmatprep.mubr.bf16.mxu0 0
          %4347 = vmatmul.mubr.bf16.gmra.mrb[0].mxu0 %v4291
          %v4348 = vpop.f32.mrb[0].mxu0
          %v4349 = vadd.f32 0.0, %v4348
          %v4350 = vpop.f32.mrb[0].mxu0
          %v4351 = vpop.f32.mrb[0].mxu0
          %v4352 = vadd.f32 0.0, %v4351
          %v4353 = vpop.f32.mrb[0].mxu0
          %4354 = vmatprep.mubr.bf16.mxu0 0
          %4355 = vmatmul.mubr.bf16.gmra.mrb[0].mxu0 %v4294
          %v4356 = vpop.f32.mrb[0].mxu0
          %v4357 = vadd.f32 0.0, %v4356
          %v4358 = vpop.f32.mrb[0].mxu0
          %v4359 = vpop.f32.mrb[0].mxu0
          %v4360 = vadd.f32 0.0, %v4359
          %v4361 = vpop.f32.mrb[0].mxu0
          %4362 = vmatprep.mubr.bf16.mxu0 0
          %4363 = vmatmul.mubr.bf16.gmra.mrb[0].mxu0 %v4297
          %v4364 = vpop.f32.mrb[0].mxu0
          %v4365 = vadd.f32 0.0, %v4364
          %v4366 = vpop.f32.mrb[0].mxu0
          %v4367 = vpop.f32.mrb[0].mxu0
          %v4368 = vadd.f32 0.0, %v4367
          %v4369 = vpop.f32.mrb[0].mxu0
          %4370 = vmatprep.mubr.bf16.mxu0 0
          %4371 = vmatmul.mubr.bf16.gmra.mrb[0].mxu0 %v4300
          %v4372 = vpop.f32.mrb[0].mxu0
          %v4373 = vadd.f32 0.0, %v4372
          %v4374 = vpop.f32.mrb[0].mxu0
          %v4375 = vpop.f32.mrb[0].mxu0
          %v4376 = vadd.f32 0.0, %v4375
          %v4377 = vpop.f32.mrb[0].mxu0
          %4378 = vmatprep.mubr.bf16.mxu0 0
          %4379 = vmatmul.mubr.bf16.gmra.mrb[0].mxu0 %v4303
          %v4380 = vpop.f32.mrb[0].mxu0
          %v4381 = vadd.f32 0.0, %v4380
          %v4382 = vpop.f32.mrb[0].mxu0
          %v4383 = vpop.f32.mrb[0].mxu0
          %v4384 = vadd.f32 0.0, %v4383
          %v4385 = vpop.f32.mrb[0].mxu0
          %4386 = vmatprep.mubr.bf16.mxu0 0
          %4387 = vmatmul.mubr.bf16.gmra.mrb[0].mxu0 %v4306
          %v4388 = vpop.f32.mrb[0].mxu0
          %v4389 = vadd.f32 0.0, %v4388
          %v4390 = vpop.f32.mrb[0].mxu0
          %v4391 = vpop.f32.mrb[0].mxu0
          %v4392 = vadd.f32 0.0, %v4391
          %v4393 = vpop.f32.mrb[0].mxu0
          %4394 = vmatprep.mubr.bf16.mxu0 0
          %4395 = vmatmul.mubr.bf16.gmra.mrb[0].mxu0 %v4309
          %v4396 = vpop.f32.mrb[0].mxu0
          %v4397 = vadd.f32 0.0, %v4396
          %v4398 = vpop.f32.mrb[0].mxu0
          %v4399 = vpop.f32.mrb[0].mxu0
          %v4400 = vadd.f32 0.0, %v4399
          %v4401 = vpop.f32.mrb[0].mxu0
          %4402 = vmatprep.mubr.bf16.mxu0 0
          %4403 = vmatmul.mubr.bf16.gmra.mrb[0].mxu0 %v4312
          %v4404 = vpop.f32.mrb[0].mxu0
          %v4405 = vadd.f32 0.0, %v4404
          %v4406 = vpop.f32.mrb[0].mxu0
          %v4407 = vpop.f32.mrb[0].mxu0
          %v4408 = vadd.f32 0.0, %v4407
          %v4409 = vpop.f32.mrb[0].mxu0
          %4410 = vdwg.mxu0
          %4411 = vmax.xlane.f32.xlu0 %v4349
          %v4412 = vpop.xlane.xlu0 %4411
          %4413 = vmax.xlane.f32.xlu0 %v4352
          %v4414 = vpop.xlane.xlu0 %4413
          %4415 = vmax.xlane.f32.xlu0 %v4357
          %v4416 = vpop.xlane.xlu0 %4415
          %4417 = vmax.xlane.f32.xlu0 %v4360
          %v4418 = vpop.xlane.xlu0 %4417
          %4419 = vmax.xlane.f32.xlu0 %v4365
          %v4420 = vpop.xlane.xlu0 %4419
          %4421 = vmax.xlane.f32.xlu0 %v4368
          %v4422 = vpop.xlane.xlu0 %4421
          %4423 = vmax.xlane.f32.xlu0 %v4373
          %v4424 = vpop.xlane.xlu0 %4423
          %4425 = vmax.xlane.f32.xlu0 %v4376
          %v4426 = vpop.xlane.xlu0 %4425
          %4427 = vmax.xlane.f32.xlu0 %v4381
          %v4428 = vpop.xlane.xlu0 %4427
          %4429 = vmax.xlane.f32.xlu0 %v4384
          %v4430 = vpop.xlane.xlu0 %4429
          %4431 = vmax.xlane.f32.xlu0 %v4389
          %v4432 = vpop.xlane.xlu0 %4431
          %4433 = vmax.xlane.f32.xlu0 %v4392
          %v4434 = vpop.xlane.xlu0 %4433
          %4435 = vmax.xlane.f32.xlu0 %v4397
          %v4436 = vpop.xlane.xlu0 %4435
          %4437 = vmax.xlane.f32.xlu0 %v4400
          %v4438 = vpop.xlane.xlu0 %4437
          %4439 = vmax.xlane.f32.xlu0 %v4405
          %v4440 = vpop.xlane.xlu0 %4439
          %4441 = vmax.xlane.f32.xlu0 %v4408
          %v4442 = vpop.xlane.xlu0 %4441
          %v4443 = vmax.f32 %v4207, %v4412
          %v4444 = vmax.f32 %v4208, %v4414
          %v4445 = vmax.f32 %v4209, %v4416
          %v4446 = vmax.f32 %v4210, %v4418
          %v4447 = vmax.f32 %v4211, %v4420
          %v4448 = vmax.f32 %v4212, %v4422
          %v4449 = vmax.f32 %v4213, %v4424
          %v4450 = vmax.f32 %v4214, %v4426
          %v4451 = vmax.f32 %v4215, %v4428
          %v4452 = vmax.f32 %v4216, %v4430
          %v4453 = vmax.f32 %v4217, %v4432
          %v4454 = vmax.f32 %v4218, %v4434
          %v4455 = vmax.f32 %v4219, %v4436
          %v4456 = vmax.f32 %v4220, %v4438
          %v4457 = vmax.f32 %v4221, %v4440
          %v4458 = vmax.f32 %v4222, %v4442
          %v4459 = vsub.f32 %v4207, %v4443
          %v4460 = vsub.f32 %v4208, %v4444
          %v4461 = vsub.f32 %v4209, %v4445
          %v4462 = vsub.f32 %v4210, %v4446
          %v4463 = vsub.f32 %v4211, %v4447
          %v4464 = vsub.f32 %v4212, %v4448
          %v4465 = vsub.f32 %v4213, %v4449
          %v4466 = vsub.f32 %v4214, %v4450
          %v4467 = vsub.f32 %v4215, %v4451
          %v4468 = vsub.f32 %v4216, %v4452
          %v4469 = vsub.f32 %v4217, %v4453
          %v4470 = vsub.f32 %v4218, %v4454
          %v4471 = vsub.f32 %v4219, %v4455
          %v4472 = vsub.f32 %v4220, %v4456
          %v4473 = vsub.f32 %v4221, %v4457
          %v4474 = vsub.f32 %v4222, %v4458
          %v4475 = vmul.f32 %v4459, 1.442695
          %v4476 = vpow.pop %v4475
          %v4477 = vmul.f32 %v4460, 1.442695
          %v4478 = vpow.pop %v4477
          %v4479 = vmul.f32 %v4461, 1.442695
          %v4480 = vpow.pop %v4479
          %v4481 = vmul.f32 %v4462, 1.442695
          %v4482 = vpow.pop %v4481
          %v4483 = vmul.f32 %v4463, 1.442695
          %v4484 = vpow.pop %v4483
          %v4485 = vmul.f32 %v4464, 1.442695
          %v4486 = vpow.pop %v4485
          %v4487 = vmul.f32 %v4465, 1.442695
          %v4488 = vpow.pop %v4487
          %v4489 = vmul.f32 %v4466, 1.442695
          %v4490 = vpow.pop %v4489
          %v4491 = vmul.f32 %v4467, 1.442695
          %v4492 = vpow.pop %v4491
          %v4493 = vmul.f32 %v4468, 1.442695
          %v4494 = vpow.pop %v4493
          %v4495 = vmul.f32 %v4469, 1.442695
          %v4496 = vpow.pop %v4495
          %v4497 = vmul.f32 %v4470, 1.442695
          %v4498 = vpow.pop %v4497
          %v4499 = vmul.f32 %v4471, 1.442695
          %v4500 = vpow.pop %v4499
          %v4501 = vmul.f32 %v4472, 1.442695
          %v4502 = vpow.pop %v4501
          %v4503 = vmul.f32 %v4473, 1.442695
          %v4504 = vpow.pop %v4503
          %v4505 = vmul.f32 %v4474, 1.442695
          %v4506 = vpow.pop %v4505
          %v4507 = vsub.f32 %v4349, %v4443
          %v4508 = vsub.f32 %v4352, %v4444
          %v4509 = vsub.f32 %v4357, %v4445
          %v4510 = vsub.f32 %v4360, %v4446
          %v4511 = vsub.f32 %v4365, %v4447
          %v4512 = vsub.f32 %v4368, %v4448
          %v4513 = vsub.f32 %v4373, %v4449
          %v4514 = vsub.f32 %v4376, %v4450
          %v4515 = vsub.f32 %v4381, %v4451
          %v4516 = vsub.f32 %v4384, %v4452
          %v4517 = vsub.f32 %v4389, %v4453
          %v4518 = vsub.f32 %v4392, %v4454
          %v4519 = vsub.f32 %v4397, %v4455
          %v4520 = vsub.f32 %v4400, %v4456
          %v4521 = vsub.f32 %v4405, %v4457
          %v4522 = vsub.f32 %v4408, %v4458
          %v4523 = vmul.f32 %v4507, 1.442695
          %v4524 = vpow.pop %v4523
          %v4525 = vmul.f32 %v4508, 1.442695
          %v4526 = vpow.pop %v4525
          %v4527 = vmul.f32 %v4509, 1.442695
          %v4528 = vpow.pop %v4527
          %v4529 = vmul.f32 %v4510, 1.442695
          %v4530 = vpow.pop %v4529
          %v4531 = vmul.f32 %v4511, 1.442695
          %v4532 = vpow.pop %v4531
          %v4533 = vmul.f32 %v4512, 1.442695
          %v4534 = vpow.pop %v4533
          %v4535 = vmul.f32 %v4513, 1.442695
          %v4536 = vpow.pop %v4535
          %v4537 = vmul.f32 %v4514, 1.442695
          %v4538 = vpow.pop %v4537
          %v4539 = vmul.f32 %v4515, 1.442695
          %v4540 = vpow.pop %v4539
          %v4541 = vmul.f32 %v4516, 1.442695
          %v4542 = vpow.pop %v4541
          %v4543 = vmul.f32 %v4517, 1.442695
          %v4544 = vpow.pop %v4543
          %v4545 = vmul.f32 %v4518, 1.442695
          %v4546 = vpow.pop %v4545
          %v4547 = vmul.f32 %v4519, 1.442695
          %v4548 = vpow.pop %v4547
          %v4549 = vmul.f32 %v4520, 1.442695
          %v4550 = vpow.pop %v4549
          %v4551 = vmul.f32 %v4521, 1.442695
          %v4552 = vpow.pop %v4551
          %v4553 = vmul.f32 %v4522, 1.442695
          %v4554 = vpow.pop %v4553
          %v4555 = vmul.f32 %v4476, %v4223
          %v4556 = vmul.f32 %v4478, %v4224
          %v4557 = vmul.f32 %v4480, %v4225
          %v4558 = vmul.f32 %v4482, %v4226
          %v4559 = vmul.f32 %v4484, %v4227
          %v4560 = vmul.f32 %v4486, %v4228
          %v4561 = vmul.f32 %v4488, %v4229
          %v4562 = vmul.f32 %v4490, %v4230
          %v4563 = vmul.f32 %v4492, %v4231
          %v4564 = vmul.f32 %v4494, %v4232
          %v4565 = vmul.f32 %v4496, %v4233
          %v4566 = vmul.f32 %v4498, %v4234
          %v4567 = vmul.f32 %v4500, %v4235
          %v4568 = vmul.f32 %v4502, %v4236
          %v4569 = vmul.f32 %v4504, %v4237
          %v4570 = vmul.f32 %v4506, %v4238
          %4571 = vadd.xlane.f32.xlu0 %v4524
          %v4572 = vpop.xlane.xlu0 %4571
          %4573 = vadd.xlane.f32.xlu0 %v4526
          %v4574 = vpop.xlane.xlu0 %4573
          %4575 = vadd.xlane.f32.xlu0 %v4528
          %v4576 = vpop.xlane.xlu0 %4575
          %4577 = vadd.xlane.f32.xlu0 %v4530
          %v4578 = vpop.xlane.xlu0 %4577
          %4579 = vadd.xlane.f32.xlu0 %v4532
          %v4580 = vpop.xlane.xlu0 %4579
          %4581 = vadd.xlane.f32.xlu0 %v4534
          %v4582 = vpop.xlane.xlu0 %4581
          %4583 = vadd.xlane.f32.xlu0 %v4536
          %v4584 = vpop.xlane.xlu0 %4583
          %4585 = vadd.xlane.f32.xlu0 %v4538
          %v4586 = vpop.xlane.xlu0 %4585
          %4587 = vadd.xlane.f32.xlu0 %v4540
          %v4588 = vpop.xlane.xlu0 %4587
          %4589 = vadd.xlane.f32.xlu0 %v4542
          %v4590 = vpop.xlane.xlu0 %4589
          %4591 = vadd.xlane.f32.xlu0 %v4544
          %v4592 = vpop.xlane.xlu0 %4591
          %4593 = vadd.xlane.f32.xlu0 %v4546
          %v4594 = vpop.xlane.xlu0 %4593
          %4595 = vadd.xlane.f32.xlu0 %v4548
          %v4596 = vpop.xlane.xlu0 %4595
          %4597 = vadd.xlane.f32.xlu0 %v4550
          %v4598 = vpop.xlane.xlu0 %4597
          %4599 = vadd.xlane.f32.xlu0 %v4552
          %v4600 = vpop.xlane.xlu0 %4599
          %4601 = vadd.xlane.f32.xlu0 %v4554
          %v4602 = vpop.xlane.xlu0 %4601
          %v4603 = vadd.f32 %v4555, %v4572
          %v4604 = vadd.f32 %v4556, %v4574
          %v4605 = vadd.f32 %v4557, %v4576
          %v4606 = vadd.f32 %v4558, %v4578
          %v4607 = vadd.f32 %v4559, %v4580
          %v4608 = vadd.f32 %v4560, %v4582
          %v4609 = vadd.f32 %v4561, %v4584
          %v4610 = vadd.f32 %v4562, %v4586
          %v4611 = vadd.f32 %v4563, %v4588
          %v4612 = vadd.f32 %v4564, %v4590
          %v4613 = vadd.f32 %v4565, %v4592
          %v4614 = vadd.f32 %v4566, %v4594
          %v4615 = vadd.f32 %v4567, %v4596
          %v4616 = vadd.f32 %v4568, %v4598
          %v4617 = vadd.f32 %v4569, %v4600
          %v4618 = vadd.f32 %v4570, %v4602
          %v4619 = vmul.f32 %v4476, %v4239
          %v4620 = vmul.f32 %v4478, %v4240
          %v4621 = vmul.f32 %v4480, %v4241
          %v4622 = vmul.f32 %v4482, %v4242
          %v4623 = vmul.f32 %v4484, %v4243
          %v4624 = vmul.f32 %v4486, %v4244
          %v4625 = vmul.f32 %v4488, %v4245
          %v4626 = vmul.f32 %v4490, %v4246
          %v4627 = vmul.f32 %v4492, %v4247
          %v4628 = vmul.f32 %v4494, %v4248
          %v4629 = vmul.f32 %v4496, %v4249
          %v4630 = vmul.f32 %v4498, %v4250
          %v4631 = vmul.f32 %v4500, %v4251
          %v4632 = vmul.f32 %v4502, %v4252
          %v4633 = vmul.f32 %v4504, %v4253
          %v4634 = vmul.f32 %v4506, %v4254
          %v4635 = vpack.c.bf16 %v4526, %v4524
          %v4636 = vpack.c.bf16 %v4530, %v4528
          %v4637 = vpack.c.bf16 %v4534, %v4532
          %v4638 = vpack.c.bf16 %v4538, %v4536
          %v4639 = vpack.c.bf16 %v4542, %v4540
          %v4640 = vpack.c.bf16 %v4546, %v4544
          %v4641 = vpack.c.bf16 %v4550, %v4548
          %v4642 = vpack.c.bf16 %v4554, %v4552
          %4651 = vrot.lane.b32.xlu0 %v4266, 64
          %v4652 = vpop.permute.xlu0 %4651
          %4653 = vrot.lane.b32.xlu0 %v4267, 64
          %v4654 = vpop.permute.xlu0 %4653
          %4655 = vrot.lane.b32.xlu0 %v4268, 64
          %v4656 = vpop.permute.xlu0 %4655
          %4657 = vrot.lane.b32.xlu0 %v4269, 64
          %v4658 = vpop.permute.xlu0 %4657
          %4659 = vrot.lane.b32.xlu0 %v4270, 64
          %v4660 = vpop.permute.xlu0 %4659
          %4661 = vrot.lane.b32.xlu0 %v4271, 64
          %v4662 = vpop.permute.xlu0 %4661
          %4663 = vrot.lane.b32.xlu0 %v4272, 64
          %v4664 = vpop.permute.xlu0 %4663
          %4665 = vrot.lane.b32.xlu0 %v4273, 64
          %v4666 = vpop.permute.xlu0 %4665
          %4675 = vmatprep.subr.bf16.mxu0 0
          %4676 = vmatpush1.bf16.msra.mxu0 %v4652
          %4677 = vmatprep.subr.bf16.mxu0 0
          %4678 = vmatpush1.bf16.msra.mxu0 %v4654
          %4679 = vmatprep.subr.bf16.mxu0 0
          %4680 = vmatpush1.bf16.msra.mxu0 %v4656
          %4681 = vmatprep.subr.bf16.mxu0 0
          %4682 = vmatpush1.bf16.msra.mxu0 %v4658
          %4683 = vmatprep.subr.bf16.mxu0 0
          %4684 = vmatpush1.bf16.msra.mxu0 %v4660
          %4685 = vmatprep.subr.bf16.mxu0 0
          %4686 = vmatpush1.bf16.msra.mxu0 %v4662
          %4687 = vmatprep.subr.bf16.mxu0 0
          %4688 = vmatpush1.bf16.msra.mxu0 %v4664
          %4689 = vmatprep.subr.bf16.mxu0 0
          %4690 = vmatpush1.bf16.msra.mxu0 %v4666
          %4691 = vmatprep.subr.bf16.mxu0 0
          %4692 = vmatpush1.bf16.msra.mxu0 0
          %4693 = vmatprep.subr.bf16.mxu0 0
          %4694 = vmatpush1.bf16.msra.mxu0 0
          %4695 = vmatprep.subr.bf16.mxu0 0
          %4696 = vmatpush1.bf16.msra.mxu0 0
          %4697 = vmatprep.subr.bf16.mxu0 0
          %4698 = vmatpush1.bf16.msra.mxu0 0
          %4699 = vmatprep.subr.bf16.mxu0 0
          %4700 = vmatpush1.bf16.msra.mxu0 0
          %4701 = vmatprep.subr.bf16.mxu0 0
          %4702 = vmatpush1.bf16.msra.mxu0 0
          %4703 = vmatprep.subr.bf16.mxu0 0
          %4704 = vmatpush1.bf16.msra.mxu0 0
          %4705 = vmatprep.subr.bf16.mxu0 0
          %4706 = vmatpush1.bf16.msra.mxu0 0
          %4707 = vmatprep.mubr.bf16.mxu0 0
          %4708 = vmatmul.mubr.bf16.gmra.mrb[0].mxu0 %v4635
          %v4709 = vpop.f32.mrb[0].mxu0
          %v4710 = vadd.f32 0.0, %v4709
          %v4711 = vpop.f32.mrb[0].mxu0
          %v4712 = vpop.f32.mrb[0].mxu0
          %v4713 = vadd.f32 0.0, %v4712
          %v4714 = vpop.f32.mrb[0].mxu0
          %4715 = vmatprep.mubr.bf16.mxu0 0
          %4716 = vmatmul.mubr.bf16.gmra.mrb[0].mxu0 %v4636
          %v4717 = vpop.f32.mrb[0].mxu0
          %v4718 = vadd.f32 0.0, %v4717
          %v4719 = vpop.f32.mrb[0].mxu0
          %v4720 = vpop.f32.mrb[0].mxu0
          %v4721 = vadd.f32 0.0, %v4720
          %v4722 = vpop.f32.mrb[0].mxu0
          %4723 = vmatprep.mubr.bf16.mxu0 0
          %4724 = vmatmul.mubr.bf16.gmra.mrb[0].mxu0 %v4637
          %v4725 = vpop.f32.mrb[0].mxu0
          %v4726 = vadd.f32 0.0, %v4725
          %v4727 = vpop.f32.mrb[0].mxu0
          %v4728 = vpop.f32.mrb[0].mxu0
          %v4729 = vadd.f32 0.0, %v4728
          %v4730 = vpop.f32.mrb[0].mxu0
          %4731 = vmatprep.mubr.bf16.mxu0 0
          %4732 = vmatmul.mubr.bf16.gmra.mrb[0].mxu0 %v4638
          %v4733 = vpop.f32.mrb[0].mxu0
          %v4734 = vadd.f32 0.0, %v4733
          %v4735 = vpop.f32.mrb[0].mxu0
          %v4736 = vpop.f32.mrb[0].mxu0
          %v4737 = vadd.f32 0.0, %v4736
          %v4738 = vpop.f32.mrb[0].mxu0
          %4739 = vmatprep.mubr.bf16.mxu0 0
          %4740 = vmatmul.mubr.bf16.gmra.mrb[0].mxu0 %v4639
          %v4741 = vpop.f32.mrb[0].mxu0
          %v4742 = vadd.f32 0.0, %v4741
          %v4743 = vpop.f32.mrb[0].mxu0
          %v4744 = vpop.f32.mrb[0].mxu0
          %v4745 = vadd.f32 0.0, %v4744
          %v4746 = vpop.f32.mrb[0].mxu0
          %4747 = vmatprep.mubr.bf16.mxu0 0
          %4748 = vmatmul.mubr.bf16.gmra.mrb[0].mxu0 %v4640
          %v4749 = vpop.f32.mrb[0].mxu0
          %v4750 = vadd.f32 0.0, %v4749
          %v4751 = vpop.f32.mrb[0].mxu0
          %v4752 = vpop.f32.mrb[0].mxu0
          %v4753 = vadd.f32 0.0, %v4752
          %v4754 = vpop.f32.mrb[0].mxu0
          %4755 = vmatprep.mubr.bf16.mxu0 0
          %4756 = vmatmul.mubr.bf16.gmra.mrb[0].mxu0 %v4641
          %v4757 = vpop.f32.mrb[0].mxu0
          %v4758 = vadd.f32 0.0, %v4757
          %v4759 = vpop.f32.mrb[0].mxu0
          %v4760 = vpop.f32.mrb[0].mxu0
          %v4761 = vadd.f32 0.0, %v4760
          %v4762 = vpop.f32.mrb[0].mxu0
          %4763 = vmatprep.mubr.bf16.mxu0 0
          %4764 = vmatmul.mubr.bf16.gmra.mrb[0].mxu0 %v4642
          %v4765 = vpop.f32.mrb[0].mxu0
          %v4766 = vadd.f32 0.0, %v4765
          %v4767 = vpop.f32.mrb[0].mxu0
          %v4768 = vpop.f32.mrb[0].mxu0
          %v4769 = vadd.f32 0.0, %v4768
          %v4770 = vpop.f32.mrb[0].mxu0
          %4771 = vdwg.mxu0
          %v4772 = vadd.f32 %v4619, %v4710
          %v4773 = vadd.f32 %v4620, %v4713
          %v4774 = vadd.f32 %v4621, %v4718
          %v4775 = vadd.f32 %v4622, %v4721
          %v4776 = vadd.f32 %v4623, %v4726
          %v4777 = vadd.f32 %v4624, %v4729
          %v4778 = vadd.f32 %v4625, %v4734
          %v4779 = vadd.f32 %v4626, %v4737
          %v4780 = vadd.f32 %v4627, %v4742
          %v4781 = vadd.f32 %v4628, %v4745
          %v4782 = vadd.f32 %v4629, %v4750
          %v4783 = vadd.f32 %v4630, %v4753
          %v4784 = vadd.f32 %v4631, %v4758
          %v4785 = vadd.f32 %v4632, %v4761
          %v4786 = vadd.f32 %v4633, %v4766
          %v4787 = vadd.f32 %v4634, %v4769
        $region147: #{tpu_custom_call.1} parent=71 // loop_footer
          %s4204 = sadd.s32 %s4202, 1
        $region148: #{tpu_custom_call.1} parent=71 // loop_footer_branch
          %4201 = sbr.rel target = $region144
        $region149: #{tpu_custom_call.1} parent=71 // loop_exit
          _
        %v4788 = vld [vmem:[%s2414 + $0x40] sm:$0xff]
        %v4789 = vld [vmem:[%s2414 + $0x50] sm:$0xff]
        %v4790 = vld [vmem:[%s2418] sm:$0xff]
        %v4791 = vld [vmem:[%s2418 + $0x8] sm:$0xff]
        %v4792 = vld [vmem:[%s2418 + $0x10] sm:$0xff]
        %v4793 = vld [vmem:[%s2418 + $0x18] sm:$0xff]
        %v4794 = vld [vmem:[%s2418 + $0x20] sm:$0xff]
        %v4795 = vld [vmem:[%s2418 + $0x28] sm:$0xff]
        %v4796 = vld [vmem:[%s2418 + $0x30] sm:$0xff]
        %v4797 = vld [vmem:[%s2418 + $0x38] sm:$0xff]
        %4798 = vrot.lane.b32.xlu0 %v1829, 64
        %v4799 = vpop.permute.xlu0 %4798
        %4800 = vrot.lane.b32.xlu0 %v1830, 64
        %v4801 = vpop.permute.xlu0 %4800
        %4802 = vrot.lane.b32.xlu0 %v1831, 64
        %v4803 = vpop.permute.xlu0 %4802
        %4804 = vrot.lane.b32.xlu0 %v1832, 64
        %v4805 = vpop.permute.xlu0 %4804
        %4806 = vrot.lane.b32.xlu0 %v1833, 64
        %v4807 = vpop.permute.xlu0 %4806
        %4808 = vrot.lane.b32.xlu0 %v1834, 64
        %v4809 = vpop.permute.xlu0 %4808
        %4810 = vrot.lane.b32.xlu0 %v1835, 64
        %v4811 = vpop.permute.xlu0 %4810
        %4812 = vrot.lane.b32.xlu0 %v1836, 64
        %v4813 = vpop.permute.xlu0 %4812
        %v4815 = vsel %vm2427, %v4799, 0
        %v4818 = vsel %vm2427, %v4801, 0
        %v4821 = vsel %vm2427, %v4803, 0
        %v4824 = vsel %vm2427, %v4805, 0
        %v4827 = vsel %vm2427, %v4807, 0
        %v4830 = vsel %vm2427, %v4809, 0
        %v4833 = vsel %vm2427, %v4811, 0
        %v4836 = vsel %vm2427, %v4813, 0
        %4838 = vmatprep.subr.bf16.mxu0 0
        %4839 = vmatpush1.bf16.msra.mxu0 %v4788
        %4840 = vmatprep.subr.bf16.mxu0 0
        %4841 = vmatpush1.bf16.msra.mxu0 %v4789
        %4842 = vmatprep.subr.bf16.mxu0 0
        %4843 = vmatpush1.bf16.msra.mxu0 0
        %4844 = vmatprep.subr.bf16.mxu0 0
        %4845 = vmatpush1.bf16.msra.mxu0 0
        %4846 = vmatprep.subr.bf16.mxu0 0
        %4847 = vmatpush1.bf16.msra.mxu0 0
        %4848 = vmatprep.subr.bf16.mxu0 0
        %4849 = vmatpush1.bf16.msra.mxu0 0
        %4850 = vmatprep.subr.bf16.mxu0 0
        %4851 = vmatpush1.bf16.msra.mxu0 0
        %4852 = vmatprep.subr.bf16.mxu0 0
        %4853 = vmatpush1.bf16.msra.mxu0 0
        %4854 = vmatprep.subr.bf16.mxu0 0
        %4855 = vmatpush1.bf16.msra.mxu0 0
        %4856 = vmatprep.subr.bf16.mxu0 0
        %4857 = vmatpush1.bf16.msra.mxu0 0
        %4858 = vmatprep.subr.bf16.mxu0 0
        %4859 = vmatpush1.bf16.msra.mxu0 0
        %4860 = vmatprep.subr.bf16.mxu0 0
        %4861 = vmatpush1.bf16.msra.mxu0 0
        %4862 = vmatprep.subr.bf16.mxu0 0
        %4863 = vmatpush1.bf16.msra.mxu0 0
        %4864 = vmatprep.subr.bf16.mxu0 0
        %4865 = vmatpush1.bf16.msra.mxu0 0
        %4866 = vmatprep.subr.bf16.mxu0 0
        %4867 = vmatpush1.bf16.msra.mxu0 0
        %4868 = vmatprep.subr.bf16.mxu0 0
        %4869 = vmatpush1.bf16.msra.mxu0 0
        %4870 = vmatprep.mubr.bf16.mxu0 0
        %4871 = vmatmul.mubr.bf16.gmra.mrb[0].mxu0 %v4815
        %v4872 = vpop.f32.mrb[0].mxu0
        %v4873 = vadd.f32 0.0, %v4872
        %v4874 = vpop.f32.mrb[0].mxu0
        %v4875 = vpop.f32.mrb[0].mxu0
        %v4876 = vadd.f32 0.0, %v4875
        %v4877 = vpop.f32.mrb[0].mxu0
        %4878 = vmatprep.mubr.bf16.mxu0 0
        %4879 = vmatmul.mubr.bf16.gmra.mrb[0].mxu0 %v4818
        %v4880 = vpop.f32.mrb[0].mxu0
        %v4881 = vadd.f32 0.0, %v4880
        %v4882 = vpop.f32.mrb[0].mxu0
        %v4883 = vpop.f32.mrb[0].mxu0
        %v4884 = vadd.f32 0.0, %v4883
        %v4885 = vpop.f32.mrb[0].mxu0
        %4886 = vmatprep.mubr.bf16.mxu0 0
        %4887 = vmatmul.mubr.bf16.gmra.mrb[0].mxu0 %v4821
        %v4888 = vpop.f32.mrb[0].mxu0
        %v4889 = vadd.f32 0.0, %v4888
        %v4890 = vpop.f32.mrb[0].mxu0
        %v4891 = vpop.f32.mrb[0].mxu0
        %v4892 = vadd.f32 0.0, %v4891
        %v4893 = vpop.f32.mrb[0].mxu0
        %4894 = vmatprep.mubr.bf16.mxu0 0
        %4895 = vmatmul.mubr.bf16.gmra.mrb[0].mxu0 %v4824
        %v4896 = vpop.f32.mrb[0].mxu0
        %v4897 = vadd.f32 0.0, %v4896
        %v4898 = vpop.f32.mrb[0].mxu0
        %v4899 = vpop.f32.mrb[0].mxu0
        %v4900 = vadd.f32 0.0, %v4899
        %v4901 = vpop.f32.mrb[0].mxu0
        %4902 = vmatprep.mubr.bf16.mxu0 0
        %4903 = vmatmul.mubr.bf16.gmra.mrb[0].mxu0 %v4827
        %v4904 = vpop.f32.mrb[0].mxu0
        %v4905 = vadd.f32 0.0, %v4904
        %v4906 = vpop.f32.mrb[0].mxu0
        %v4907 = vpop.f32.mrb[0].mxu0
        %v4908 = vadd.f32 0.0, %v4907
        %v4909 = vpop.f32.mrb[0].mxu0
        %4910 = vmatprep.mubr.bf16.mxu0 0
        %4911 = vmatmul.mubr.bf16.gmra.mrb[0].mxu0 %v4830
        %v4912 = vpop.f32.mrb[0].mxu0
        %v4913 = vadd.f32 0.0, %v4912
        %v4914 = vpop.f32.mrb[0].mxu0
        %v4915 = vpop.f32.mrb[0].mxu0
        %v4916 = vadd.f32 0.0, %v4915
        %v4917 = vpop.f32.mrb[0].mxu0
        %4918 = vmatprep.mubr.bf16.mxu0 0
        %4919 = vmatmul.mubr.bf16.gmra.mrb[0].mxu0 %v4833
        %v4920 = vpop.f32.mrb[0].mxu0
        %v4921 = vadd.f32 0.0, %v4920
        %v4922 = vpop.f32.mrb[0].mxu0
        %v4923 = vpop.f32.mrb[0].mxu0
        %v4924 = vadd.f32 0.0, %v4923
        %v4925 = vpop.f32.mrb[0].mxu0
        %4926 = vmatprep.mubr.bf16.mxu0 0
        %4927 = vmatmul.mubr.bf16.gmra.mrb[0].mxu0 %v4836
        %v4928 = vpop.f32.mrb[0].mxu0
        %v4929 = vadd.f32 0.0, %v4928
        %v4930 = vpop.f32.mrb[0].mxu0
        %v4931 = vpop.f32.mrb[0].mxu0
        %v4932 = vadd.f32 0.0, %v4931
        %v4933 = vpop.f32.mrb[0].mxu0
        %4934 = vdwg.mxu0
        %v4935 = vsel %vm2552, %v4873, -1e+30
        %v4936 = vsel %vm2553, %v4876, -1e+30
        %v4937 = vsel %vm2554, %v4881, -1e+30
        %v4938 = vsel %vm2555, %v4884, -1e+30
        %v4939 = vsel %vm2556, %v4889, -1e+30
        %v4940 = vsel %vm2557, %v4892, -1e+30
        %v4941 = vsel %vm2558, %v4897, -1e+30
        %v4942 = vsel %vm2559, %v4900, -1e+30
        %v4943 = vsel %vm2560, %v4905, -1e+30
        %v4944 = vsel %vm2561, %v4908, -1e+30
        %v4945 = vsel %vm2562, %v4913, -1e+30
        %v4946 = vsel %vm2563, %v4916, -1e+30
        %v4947 = vsel %vm2564, %v4921, -1e+30
        %v4948 = vsel %vm2565, %v4924, -1e+30
        %v4949 = vsel %vm2566, %v4929, -1e+30
        %v4950 = vsel %vm2567, %v4932, -1e+30
        %4951 = vmax.xlane.f32.xlu0 %v4935
        %v4952 = vpop.xlane.xlu0 %4951
        %4953 = vmax.xlane.f32.xlu0 %v4936
        %v4954 = vpop.xlane.xlu0 %4953
        %4955 = vmax.xlane.f32.xlu0 %v4937
        %v4956 = vpop.xlane.xlu0 %4955
        %4957 = vmax.xlane.f32.xlu0 %v4938
        %v4958 = vpop.xlane.xlu0 %4957
        %4959 = vmax.xlane.f32.xlu0 %v4939
        %v4960 = vpop.xlane.xlu0 %4959
        %4961 = vmax.xlane.f32.xlu0 %v4940
        %v4962 = vpop.xlane.xlu0 %4961
        %4963 = vmax.xlane.f32.xlu0 %v4941
        %v4964 = vpop.xlane.xlu0 %4963
        %4965 = vmax.xlane.f32.xlu0 %v4942
        %v4966 = vpop.xlane.xlu0 %4965
        %4967 = vmax.xlane.f32.xlu0 %v4943
        %v4968 = vpop.xlane.xlu0 %4967
        %4969 = vmax.xlane.f32.xlu0 %v4944
        %v4970 = vpop.xlane.xlu0 %4969
        %4971 = vmax.xlane.f32.xlu0 %v4945
        %v4972 = vpop.xlane.xlu0 %4971
        %4973 = vmax.xlane.f32.xlu0 %v4946
        %v4974 = vpop.xlane.xlu0 %4973
        %4975 = vmax.xlane.f32.xlu0 %v4947
        %v4976 = vpop.xlane.xlu0 %4975
        %4977 = vmax.xlane.f32.xlu0 %v4948
        %v4978 = vpop.xlane.xlu0 %4977
        %4979 = vmax.xlane.f32.xlu0 %v4949
        %v4980 = vpop.xlane.xlu0 %4979
        %4981 = vmax.xlane.f32.xlu0 %v4950
        %v4982 = vpop.xlane.xlu0 %4981
        %v4983 = vmax.f32 %v4207, %v4952
        %v4984 = vmax.f32 %v4208, %v4954
        %v4985 = vmax.f32 %v4209, %v4956
        %v4986 = vmax.f32 %v4210, %v4958
        %v4987 = vmax.f32 %v4211, %v4960
        %v4988 = vmax.f32 %v4212, %v4962
        %v4989 = vmax.f32 %v4213, %v4964
        %v4990 = vmax.f32 %v4214, %v4966
        %v4991 = vmax.f32 %v4215, %v4968
        %v4992 = vmax.f32 %v4216, %v4970
        %v4993 = vmax.f32 %v4217, %v4972
        %v4994 = vmax.f32 %v4218, %v4974
        %v4995 = vmax.f32 %v4219, %v4976
        %v4996 = vmax.f32 %v4220, %v4978
        %v4997 = vmax.f32 %v4221, %v4980
        %v4998 = vmax.f32 %v4222, %v4982
        %v4999 = vsub.f32 %v4207, %v4983
        %v5000 = vsub.f32 %v4208, %v4984
        %v5001 = vsub.f32 %v4209, %v4985
        %v5002 = vsub.f32 %v4210, %v4986
        %v5003 = vsub.f32 %v4211, %v4987
        %v5004 = vsub.f32 %v4212, %v4988
        %v5005 = vsub.f32 %v4213, %v4989
        %v5006 = vsub.f32 %v4214, %v4990
        %v5007 = vsub.f32 %v4215, %v4991
        %v5008 = vsub.f32 %v4216, %v4992
        %v5009 = vsub.f32 %v4217, %v4993
        %v5010 = vsub.f32 %v4218, %v4994
        %v5011 = vsub.f32 %v4219, %v4995
        %v5012 = vsub.f32 %v4220, %v4996
        %v5013 = vsub.f32 %v4221, %v4997
        %v5014 = vsub.f32 %v4222, %v4998
        %v5015 = vmul.f32 %v4999, 1.442695
        %v5016 = vpow.pop %v5015
        %v5017 = vmul.f32 %v5000, 1.442695
        %v5018 = vpow.pop %v5017
        %v5019 = vmul.f32 %v5001, 1.442695
        %v5020 = vpow.pop %v5019
        %v5021 = vmul.f32 %v5002, 1.442695
        %v5022 = vpow.pop %v5021
        %v5023 = vmul.f32 %v5003, 1.442695
        %v5024 = vpow.pop %v5023
        %v5025 = vmul.f32 %v5004, 1.442695
        %v5026 = vpow.pop %v5025
        %v5027 = vmul.f32 %v5005, 1.442695
        %v5028 = vpow.pop %v5027
        %v5029 = vmul.f32 %v5006, 1.442695
        %v5030 = vpow.pop %v5029
        %v5031 = vmul.f32 %v5007, 1.442695
        %v5032 = vpow.pop %v5031
        %v5033 = vmul.f32 %v5008, 1.442695
        %v5034 = vpow.pop %v5033
        %v5035 = vmul.f32 %v5009, 1.442695
        %v5036 = vpow.pop %v5035
        %v5037 = vmul.f32 %v5010, 1.442695
        %v5038 = vpow.pop %v5037
        %v5039 = vmul.f32 %v5011, 1.442695
        %v5040 = vpow.pop %v5039
        %v5041 = vmul.f32 %v5012, 1.442695
        %v5042 = vpow.pop %v5041
        %v5043 = vmul.f32 %v5013, 1.442695
        %v5044 = vpow.pop %v5043
        %v5045 = vmul.f32 %v5014, 1.442695
        %v5046 = vpow.pop %v5045
        %v5047 = vsub.f32 %v4935, %v4983
        %v5048 = vsub.f32 %v4936, %v4984
        %v5049 = vsub.f32 %v4937, %v4985
        %v5050 = vsub.f32 %v4938, %v4986
        %v5051 = vsub.f32 %v4939, %v4987
        %v5052 = vsub.f32 %v4940, %v4988
        %v5053 = vsub.f32 %v4941, %v4989
        %v5054 = vsub.f32 %v4942, %v4990
        %v5055 = vsub.f32 %v4943, %v4991
        %v5056 = vsub.f32 %v4944, %v4992
        %v5057 = vsub.f32 %v4945, %v4993
        %v5058 = vsub.f32 %v4946, %v4994
        %v5059 = vsub.f32 %v4947, %v4995
        %v5060 = vsub.f32 %v4948, %v4996
        %v5061 = vsub.f32 %v4949, %v4997
        %v5062 = vsub.f32 %v4950, %v4998
        %v5063 = vmul.f32 %v5047, 1.442695
        %v5064 = vpow.pop %v5063
        %v5065 = vmul.f32 %v5048, 1.442695
        %v5066 = vpow.pop %v5065
        %v5067 = vmul.f32 %v5049, 1.442695
        %v5068 = vpow.pop %v5067
        %v5069 = vmul.f32 %v5050, 1.442695
        %v5070 = vpow.pop %v5069
        %v5071 = vmul.f32 %v5051, 1.442695
        %v5072 = vpow.pop %v5071
        %v5073 = vmul.f32 %v5052, 1.442695
        %v5074 = vpow.pop %v5073
        %v5075 = vmul.f32 %v5053, 1.442695
        %v5076 = vpow.pop %v5075
        %v5077 = vmul.f32 %v5054, 1.442695
        %v5078 = vpow.pop %v5077
        %v5079 = vmul.f32 %v5055, 1.442695
        %v5080 = vpow.pop %v5079
        %v5081 = vmul.f32 %v5056, 1.442695
        %v5082 = vpow.pop %v5081
        %v5083 = vmul.f32 %v5057, 1.442695
        %v5084 = vpow.pop %v5083
        %v5085 = vmul.f32 %v5058, 1.442695
        %v5086 = vpow.pop %v5085
        %v5087 = vmul.f32 %v5059, 1.442695
        %v5088 = vpow.pop %v5087
        %v5089 = vmul.f32 %v5060, 1.442695
        %v5090 = vpow.pop %v5089
        %v5091 = vmul.f32 %v5061, 1.442695
        %v5092 = vpow.pop %v5091
        %v5093 = vmul.f32 %v5062, 1.442695
        %v5094 = vpow.pop %v5093
        %v5095 = vmul.f32 %v5016, %v4223
        %v5096 = vmul.f32 %v5018, %v4224
        %v5097 = vmul.f32 %v5020, %v4225
        %v5098 = vmul.f32 %v5022, %v4226
        %v5099 = vmul.f32 %v5024, %v4227
        %v5100 = vmul.f32 %v5026, %v4228
        %v5101 = vmul.f32 %v5028, %v4229
        %v5102 = vmul.f32 %v5030, %v4230
        %v5103 = vmul.f32 %v5032, %v4231
        %v5104 = vmul.f32 %v5034, %v4232
        %v5105 = vmul.f32 %v5036, %v4233
        %v5106 = vmul.f32 %v5038, %v4234
        %v5107 = vmul.f32 %v5040, %v4235
        %v5108 = vmul.f32 %v5042, %v4236
        %v5109 = vmul.f32 %v5044, %v4237
        %v5110 = vmul.f32 %v5046, %v4238
        %5111 = vadd.xlane.f32.xlu0 %v5064
        %v5112 = vpop.xlane.xlu0 %5111
        %5113 = vadd.xlane.f32.xlu0 %v5066
        %v5114 = vpop.xlane.xlu0 %5113
        %5115 = vadd.xlane.f32.xlu0 %v5068
        %v5116 = vpop.xlane.xlu0 %5115
        %5117 = vadd.xlane.f32.xlu0 %v5070
        %v5118 = vpop.xlane.xlu0 %5117
        %5119 = vadd.xlane.f32.xlu0 %v5072
        %v5120 = vpop.xlane.xlu0 %5119
        %5121 = vadd.xlane.f32.xlu0 %v5074
        %v5122 = vpop.xlane.xlu0 %5121
        %5123 = vadd.xlane.f32.xlu0 %v5076
        %v5124 = vpop.xlane.xlu0 %5123
        %5125 = vadd.xlane.f32.xlu0 %v5078
        %v5126 = vpop.xlane.xlu0 %5125
        %5127 = vadd.xlane.f32.xlu0 %v5080
        %v5128 = vpop.xlane.xlu0 %5127
        %5129 = vadd.xlane.f32.xlu0 %v5082
        %v5130 = vpop.xlane.xlu0 %5129
        %5131 = vadd.xlane.f32.xlu0 %v5084
        %v5132 = vpop.xlane.xlu0 %5131
        %5133 = vadd.xlane.f32.xlu0 %v5086
        %v5134 = vpop.xlane.xlu0 %5133
        %5135 = vadd.xlane.f32.xlu0 %v5088
        %v5136 = vpop.xlane.xlu0 %5135
        %5137 = vadd.xlane.f32.xlu0 %v5090
        %v5138 = vpop.xlane.xlu0 %5137
        %5139 = vadd.xlane.f32.xlu0 %v5092
        %v5140 = vpop.xlane.xlu0 %5139
        %5141 = vadd.xlane.f32.xlu0 %v5094
        %v5142 = vpop.xlane.xlu0 %5141
        %v5143 = vadd.f32 %v5095, %v5112
        %v5144 = vadd.f32 %v5096, %v5114
        %v5145 = vadd.f32 %v5097, %v5116
        %v5146 = vadd.f32 %v5098, %v5118
        %v5147 = vadd.f32 %v5099, %v5120
        %v5148 = vadd.f32 %v5100, %v5122
        %v5149 = vadd.f32 %v5101, %v5124
        %v5150 = vadd.f32 %v5102, %v5126
        %v5151 = vadd.f32 %v5103, %v5128
        %v5152 = vadd.f32 %v5104, %v5130
        %v5153 = vadd.f32 %v5105, %v5132
        %v5154 = vadd.f32 %v5106, %v5134
        %v5155 = vadd.f32 %v5107, %v5136
        %v5156 = vadd.f32 %v5108, %v5138
        %v5157 = vadd.f32 %v5109, %v5140
        %v5158 = vadd.f32 %v5110, %v5142
        %v5159 = vmul.f32 %v5016, %v4239
        %v5160 = vmul.f32 %v5018, %v4240
        %v5161 = vmul.f32 %v5020, %v4241
        %v5162 = vmul.f32 %v5022, %v4242
        %v5163 = vmul.f32 %v5024, %v4243
        %v5164 = vmul.f32 %v5026, %v4244
        %v5165 = vmul.f32 %v5028, %v4245
        %v5166 = vmul.f32 %v5030, %v4246
        %v5167 = vmul.f32 %v5032, %v4247
        %v5168 = vmul.f32 %v5034, %v4248
        %v5169 = vmul.f32 %v5036, %v4249
        %v5170 = vmul.f32 %v5038, %v4250
        %v5171 = vmul.f32 %v5040, %v4251
        %v5172 = vmul.f32 %v5042, %v4252
        %v5173 = vmul.f32 %v5044, %v4253
        %v5174 = vmul.f32 %v5046, %v4254
        %v5175 = vpack.c.bf16 %v5066, %v5064
        %v5176 = vpack.c.bf16 %v5070, %v5068
        %v5177 = vpack.c.bf16 %v5074, %v5072
        %v5178 = vpack.c.bf16 %v5078, %v5076
        %v5179 = vpack.c.bf16 %v5082, %v5080
        %v5180 = vpack.c.bf16 %v5086, %v5084
        %v5181 = vpack.c.bf16 %v5090, %v5088
        %v5182 = vpack.c.bf16 %v5094, %v5092
        %5191 = vrot.lane.b32.xlu0 %v4790, 64
        %v5192 = vpop.permute.xlu0 %5191
        %5193 = vrot.lane.b32.xlu0 %v4791, 64
        %v5194 = vpop.permute.xlu0 %5193
        %5195 = vrot.lane.b32.xlu0 %v4792, 64
        %v5196 = vpop.permute.xlu0 %5195
        %5197 = vrot.lane.b32.xlu0 %v4793, 64
        %v5198 = vpop.permute.xlu0 %5197
        %5199 = vrot.lane.b32.xlu0 %v4794, 64
        %v5200 = vpop.permute.xlu0 %5199
        %5201 = vrot.lane.b32.xlu0 %v4795, 64
        %v5202 = vpop.permute.xlu0 %5201
        %5203 = vrot.lane.b32.xlu0 %v4796, 64
        %v5204 = vpop.permute.xlu0 %5203
        %5205 = vrot.lane.b32.xlu0 %v4797, 64
        %v5206 = vpop.permute.xlu0 %5205
        %5215 = vmatprep.subr.bf16.mxu0 0
        %5216 = vmatpush1.bf16.msra.mxu0 %v5192
        %5217 = vmatprep.subr.bf16.mxu0 0
        %5218 = vmatpush1.bf16.msra.mxu0 %v5194
        %5219 = vmatprep.subr.bf16.mxu0 0
        %5220 = vmatpush1.bf16.msra.mxu0 %v5196
        %5221 = vmatprep.subr.bf16.mxu0 0
        %5222 = vmatpush1.bf16.msra.mxu0 %v5198
        %5223 = vmatprep.subr.bf16.mxu0 0
        %5224 = vmatpush1.bf16.msra.mxu0 %v5200
        %5225 = vmatprep.subr.bf16.mxu0 0
        %5226 = vmatpush1.bf16.msra.mxu0 %v5202
        %5227 = vmatprep.subr.bf16.mxu0 0
        %5228 = vmatpush1.bf16.msra.mxu0 %v5204
        %5229 = vmatprep.subr.bf16.mxu0 0
        %5230 = vmatpush1.bf16.msra.mxu0 %v5206
        %5231 = vmatprep.subr.bf16.mxu0 0
        %5232 = vmatpush1.bf16.msra.mxu0 0
        %5233 = vmatprep.subr.bf16.mxu0 0
        %5234 = vmatpush1.bf16.msra.mxu0 0
        %5235 = vmatprep.subr.bf16.mxu0 0
        %5236 = vmatpush1.bf16.msra.mxu0 0
        %5237 = vmatprep.subr.bf16.mxu0 0
        %5238 = vmatpush1.bf16.msra.mxu0 0
        %5239 = vmatprep.subr.bf16.mxu0 0
        %5240 = vmatpush1.bf16.msra.mxu0 0
        %5241 = vmatprep.subr.bf16.mxu0 0
        %5242 = vmatpush1.bf16.msra.mxu0 0
        %5243 = vmatprep.subr.bf16.mxu0 0
        %5244 = vmatpush1.bf16.msra.mxu0 0
        %5245 = vmatprep.subr.bf16.mxu0 0
        %5246 = vmatpush1.bf16.msra.mxu0 0
        %5247 = vmatprep.mubr.bf16.mxu0 0
        %5248 = vmatmul.mubr.bf16.gmra.mrb[0].mxu0 %v5175
        %v5249 = vpop.f32.mrb[0].mxu0
        %v5250 = vadd.f32 0.0, %v5249
        %v5251 = vpop.f32.mrb[0].mxu0
        %v5252 = vpop.f32.mrb[0].mxu0
        %v5253 = vadd.f32 0.0, %v5252
        %v5254 = vpop.f32.mrb[0].mxu0
        %5255 = vmatprep.mubr.bf16.mxu0 0
        %5256 = vmatmul.mubr.bf16.gmra.mrb[0].mxu0 %v5176
        %v5257 = vpop.f32.mrb[0].mxu0
        %v5258 = vadd.f32 0.0, %v5257
        %v5259 = vpop.f32.mrb[0].mxu0
        %v5260 = vpop.f32.mrb[0].mxu0
        %v5261 = vadd.f32 0.0, %v5260
        %v5262 = vpop.f32.mrb[0].mxu0
        %5263 = vmatprep.mubr.bf16.mxu0 0
        %5264 = vmatmul.mubr.bf16.gmra.mrb[0].mxu0 %v5177
        %v5265 = vpop.f32.mrb[0].mxu0
        %v5266 = vadd.f32 0.0, %v5265
        %v5267 = vpop.f32.mrb[0].mxu0
        %v5268 = vpop.f32.mrb[0].mxu0
        %v5269 = vadd.f32 0.0, %v5268
        %v5270 = vpop.f32.mrb[0].mxu0
        %5271 = vmatprep.mubr.bf16.mxu0 0
        %5272 = vmatmul.mubr.bf16.gmra.mrb[0].mxu0 %v5178
        %v5273 = vpop.f32.mrb[0].mxu0
        %v5274 = vadd.f32 0.0, %v5273
        %v5275 = vpop.f32.mrb[0].mxu0
        %v5276 = vpop.f32.mrb[0].mxu0
        %v5277 = vadd.f32 0.0, %v5276
        %v5278 = vpop.f32.mrb[0].mxu0
        %5279 = vmatprep.mubr.bf16.mxu0 0
        %5280 = vmatmul.mubr.bf16.gmra.mrb[0].mxu0 %v5179
        %v5281 = vpop.f32.mrb[0].mxu0
        %v5282 = vadd.f32 0.0, %v5281
        %v5283 = vpop.f32.mrb[0].mxu0
        %v5284 = vpop.f32.mrb[0].mxu0
        %v5285 = vadd.f32 0.0, %v5284
        %v5286 = vpop.f32.mrb[0].mxu0
        %5287 = vmatprep.mubr.bf16.mxu0 0
        %5288 = vmatmul.mubr.bf16.gmra.mrb[0].mxu0 %v5180
        %v5289 = vpop.f32.mrb[0].mxu0
        %v5290 = vadd.f32 0.0, %v5289
        %v5291 = vpop.f32.mrb[0].mxu0
        %v5292 = vpop.f32.mrb[0].mxu0
        %v5293 = vadd.f32 0.0, %v5292
        %v5294 = vpop.f32.mrb[0].mxu0
        %5295 = vmatprep.mubr.bf16.mxu0 0
        %5296 = vmatmul.mubr.bf16.gmra.mrb[0].mxu0 %v5181
        %v5297 = vpop.f32.mrb[0].mxu0
        %v5298 = vadd.f32 0.0, %v5297
        %v5299 = vpop.f32.mrb[0].mxu0
        %v5300 = vpop.f32.mrb[0].mxu0
        %v5301 = vadd.f32 0.0, %v5300
        %v5302 = vpop.f32.mrb[0].mxu0
        %5303 = vmatprep.mubr.bf16.mxu0 0
        %5304 = vmatmul.mubr.bf16.gmra.mrb[0].mxu0 %v5182
        %v5305 = vpop.f32.mrb[0].mxu0
        %v5306 = vadd.f32 0.0, %v5305
        %v5307 = vpop.f32.mrb[0].mxu0
        %v5308 = vpop.f32.mrb[0].mxu0
        %v5309 = vadd.f32 0.0, %v5308
        %v5310 = vpop.f32.mrb[0].mxu0
        %5311 = vdwg.mxu0
        %v5312 = vadd.f32 %v5159, %v5250
        %v5313 = vadd.f32 %v5160, %v5253
        %v5314 = vadd.f32 %v5161, %v5258
        %v5315 = vadd.f32 %v5162, %v5261
        %v5316 = vadd.f32 %v5163, %v5266
        %v5317 = vadd.f32 %v5164, %v5269
        %v5318 = vadd.f32 %v5165, %v5274
        %v5319 = vadd.f32 %v5166, %v5277
        %v5320 = vadd.f32 %v5167, %v5282
        %v5321 = vadd.f32 %v5168, %v5285
        %v5322 = vadd.f32 %v5169, %v5290
        %v5323 = vadd.f32 %v5170, %v5293
        %v5324 = vadd.f32 %v5171, %v5298
        %v5325 = vadd.f32 %v5172, %v5301
        %v5326 = vadd.f32 %v5173, %v5306
        %v5327 = vadd.f32 %v5174, %v5309
        %v5328 = vrcp.pop %v5143
        %v5329 = vrcp.pop %v5144
        %v5330 = vrcp.pop %v5145
        %v5331 = vrcp.pop %v5146
        %v5332 = vrcp.pop %v5147
        %v5333 = vrcp.pop %v5148
        %v5334 = vrcp.pop %v5149
        %v5335 = vrcp.pop %v5150
        %v5336 = vrcp.pop %v5151
        %v5337 = vrcp.pop %v5152
        %v5338 = vrcp.pop %v5153
        %v5339 = vrcp.pop %v5154
        %v5340 = vrcp.pop %v5155
        %v5341 = vrcp.pop %v5156
        %v5342 = vrcp.pop %v5157
        %v5343 = vrcp.pop %v5158
        %v5344 = vmul.f32 %v5312, %v5328
        %v5345 = vmul.f32 %v5313, %v5329
        %v5346 = vmul.f32 %v5314, %v5330
        %v5347 = vmul.f32 %v5315, %v5331
        %v5348 = vmul.f32 %v5316, %v5332
        %v5349 = vmul.f32 %v5317, %v5333
        %v5350 = vmul.f32 %v5318, %v5334
        %v5351 = vmul.f32 %v5319, %v5335
        %v5352 = vmul.f32 %v5320, %v5336
        %v5353 = vmul.f32 %v5321, %v5337
        %v5354 = vmul.f32 %v5322, %v5338
        %v5355 = vmul.f32 %v5323, %v5339
        %v5356 = vmul.f32 %v5324, %v5340
        %v5357 = vmul.f32 %v5325, %v5341
        %v5358 = vmul.f32 %v5326, %v5342
        %v5359 = vmul.f32 %v5327, %v5343
        %v5360 = vpack.c.bf16 %v5345, %v5344
        %v5361 = vpack.c.bf16 %v5347, %v5346
        %v5362 = vpack.c.bf16 %v5349, %v5348
        %v5363 = vpack.c.bf16 %v5351, %v5350
        %v5364 = vpack.c.bf16 %v5353, %v5352
        %v5365 = vpack.c.bf16 %v5355, %v5354
        %v5366 = vpack.c.bf16 %v5357, %v5356
        %v5367 = vpack.c.bf16 %v5359, %v5358
        %5376 = vrot.lane.b32.xlu0 %v5360, 64
        %v5377 = vpop.permute.xlu0 %5376
        %5378 = vrot.lane.b32.xlu0 %v5361, 64
        %v5379 = vpop.permute.xlu0 %5378
        %5380 = vrot.lane.b32.xlu0 %v5362, 64
        %v5381 = vpop.permute.xlu0 %5380
        %5382 = vrot.lane.b32.xlu0 %v5363, 64
        %v5383 = vpop.permute.xlu0 %5382
        %5384 = vrot.lane.b32.xlu0 %v5364, 64
        %v5385 = vpop.permute.xlu0 %5384
        %5386 = vrot.lane.b32.xlu0 %v5365, 64
        %v5387 = vpop.permute.xlu0 %5386
        %5388 = vrot.lane.b32.xlu0 %v5366, 64
        %v5389 = vpop.permute.xlu0 %5388
        %5390 = vrot.lane.b32.xlu0 %v5367, 64
        %v5391 = vpop.permute.xlu0 %5390
        %vm5400 = vcmask 785920
        %5401 = vst.msk [vmem:[#allocation5] sm:$0xff] %vm5400, %v5377
        %5402 = vst.msk [vmem:[#allocation5 + $0x8] sm:$0xff] %vm5400, %v5379
        %5403 = vst.msk [vmem:[#allocation5 + $0x10] sm:$0xff] %vm5400, %v5381
        %5404 = vst.msk [vmem:[#allocation5 + $0x18] sm:$0xff] %vm5400, %v5383
        %5405 = vst.msk [vmem:[#allocation5 + $0x20] sm:$0xff] %vm5400, %v5385
        %5406 = vst.msk [vmem:[#allocation5 + $0x28] sm:$0xff] %vm5400, %v5387
        %5407 = vst.msk [vmem:[#allocation5 + $0x30] sm:$0xff] %vm5400, %v5389
        %5408 = vst.msk [vmem:[#allocation5 + $0x38] sm:$0xff] %vm5400, %v5391
        // While loop
        $region150: #{tpu_custom_call.1} parent=71 // loop_pre_header
          _
        $region151: #{tpu_custom_call.1} parent=71 // loop_header
          %s5410 = sphi 0, %s5412
          %p5411 = scmp.ge.s32.totalorder %s5410, %s41
          %v5415 = vphi -1e+30, %v5651
          %v5416 = vphi -1e+30, %v5652
          %v5417 = vphi -1e+30, %v5653
          %v5418 = vphi -1e+30, %v5654
          %v5419 = vphi -1e+30, %v5655
          %v5420 = vphi -1e+30, %v5656
          %v5421 = vphi -1e+30, %v5657
          %v5422 = vphi -1e+30, %v5658
          %v5423 = vphi -1e+30, %v5659
          %v5424 = vphi -1e+30, %v5660
          %v5425 = vphi -1e+30, %v5661
          %v5426 = vphi -1e+30, %v5662
          %v5427 = vphi -1e+30, %v5663
          %v5428 = vphi -1e+30, %v5664
          %v5429 = vphi -1e+30, %v5665
          %v5430 = vphi -1e+30, %v5666
          %v5431 = vphi 0.0, %v5811
          %v5432 = vphi 0.0, %v5812
          %v5433 = vphi 0.0, %v5813
          %v5434 = vphi 0.0, %v5814
          %v5435 = vphi 0.0, %v5815
          %v5436 = vphi 0.0, %v5816
          %v5437 = vphi 0.0, %v5817
          %v5438 = vphi 0.0, %v5818
          %v5439 = vphi 0.0, %v5819
          %v5440 = vphi 0.0, %v5820
          %v5441 = vphi 0.0, %v5821
          %v5442 = vphi 0.0, %v5822
          %v5443 = vphi 0.0, %v5823
          %v5444 = vphi 0.0, %v5824
          %v5445 = vphi 0.0, %v5825
          %v5446 = vphi 0.0, %v5826
          %v5447 = vphi 0.0, %v5980
          %v5448 = vphi 0.0, %v5981
          %v5449 = vphi 0.0, %v5982
          %v5450 = vphi 0.0, %v5983
          %v5451 = vphi 0.0, %v5984
          %v5452 = vphi 0.0, %v5985
          %v5453 = vphi 0.0, %v5986
          %v5454 = vphi 0.0, %v5987
          %v5455 = vphi 0.0, %v5988
          %v5456 = vphi 0.0, %v5989
          %v5457 = vphi 0.0, %v5990
          %v5458 = vphi 0.0, %v5991
          %v5459 = vphi 0.0, %v5992
          %v5460 = vphi 0.0, %v5993
          %v5461 = vphi 0.0, %v5994
          %v5462 = vphi 0.0, %v5995
        $region152: #{tpu_custom_call.1} parent=71 // loop_header_branch
          %5414 = sbr.rel (%p5411) target = $region156
        $region153: #{tpu_custom_call.1} parent=71 // loop_body
          %s5463 = smul.u32 %s5410, 128
          %s5464 = sshra.s32 %s5463, 7
          %s5465 = sand.u32 %s5463, 127
          %s5466 = smul.addr %s5464, 8
          %s5467 = scalar_lea.vmem [#allocation3], %s5466
          %v5468 = vld [vmem:[%s5467 + $0x60] sm:$0xff]
          %v5469 = vld [vmem:[%s5467 + $0x70] sm:$0xff]
          %s5470 = sshra.s32 %s5463, 4
          %s5471 = sand.u32 %s5463, 15
          %s5472 = smul.addr %s5470, 8
          %s5473 = scalar_lea.vmem [#allocation4], %s5472
          %v5474 = vld [vmem:[%s5473] sm:$0xff]
          %v5475 = vld [vmem:[%s5473 + $0x8] sm:$0xff]
          %v5476 = vld [vmem:[%s5473 + $0x10] sm:$0xff]
          %v5477 = vld [vmem:[%s5473 + $0x18] sm:$0xff]
          %v5478 = vld [vmem:[%s5473 + $0x20] sm:$0xff]
          %v5479 = vld [vmem:[%s5473 + $0x28] sm:$0xff]
          %v5480 = vld [vmem:[%s5473 + $0x30] sm:$0xff]
          %v5481 = vld [vmem:[%s5473 + $0x38] sm:$0xff]
          %5482 = vrot.lane.b32.xlu0 %v1829, 32
          %v5483 = vpop.permute.xlu0 %5482
          %5484 = vrot.lane.b32.xlu0 %v1830, 32
          %v5485 = vpop.permute.xlu0 %5484
          %5486 = vrot.lane.b32.xlu0 %v1831, 32
          %v5487 = vpop.permute.xlu0 %5486
          %5488 = vrot.lane.b32.xlu0 %v1832, 32
          %v5489 = vpop.permute.xlu0 %5488
          %5490 = vrot.lane.b32.xlu0 %v1833, 32
          %v5491 = vpop.permute.xlu0 %5490
          %5492 = vrot.lane.b32.xlu0 %v1834, 32
          %v5493 = vpop.permute.xlu0 %5492
          %5494 = vrot.lane.b32.xlu0 %v1835, 32
          %v5495 = vpop.permute.xlu0 %5494
          %5496 = vrot.lane.b32.xlu0 %v1836, 32
          %v5497 = vpop.permute.xlu0 %5496
          %v5499 = vsel %vm2427, %v5483, 0
          %v5502 = vsel %vm2427, %v5485, 0
          %v5505 = vsel %vm2427, %v5487, 0
          %v5508 = vsel %vm2427, %v5489, 0
          %v5511 = vsel %vm2427, %v5491, 0
          %v5514 = vsel %vm2427, %v5493, 0
          %v5517 = vsel %vm2427, %v5495, 0
          %v5520 = vsel %vm2427, %v5497, 0
          %5522 = vmatprep.subr.bf16.mxu0 0
          %5523 = vmatpush1.bf16.msra.mxu0 %v5468
          %5524 = vmatprep.subr.bf16.mxu0 0
          %5525 = vmatpush1.bf16.msra.mxu0 %v5469
          %5526 = vmatprep.subr.bf16.mxu0 0
          %5527 = vmatpush1.bf16.msra.mxu0 0
          %5528 = vmatprep.subr.bf16.mxu0 0
          %5529 = vmatpush1.bf16.msra.mxu0 0
          %5530 = vmatprep.subr.bf16.mxu0 0
          %5531 = vmatpush1.bf16.msra.mxu0 0
          %5532 = vmatprep.subr.bf16.mxu0 0
          %5533 = vmatpush1.bf16.msra.mxu0 0
          %5534 = vmatprep.subr.bf16.mxu0 0
          %5535 = vmatpush1.bf16.msra.mxu0 0
          %5536 = vmatprep.subr.bf16.mxu0 0
          %5537 = vmatpush1.bf16.msra.mxu0 0
          %5538 = vmatprep.subr.bf16.mxu0 0
          %5539 = vmatpush1.bf16.msra.mxu0 0
          %5540 = vmatprep.subr.bf16.mxu0 0
          %5541 = vmatpush1.bf16.msra.mxu0 0
          %5542 = vmatprep.subr.bf16.mxu0 0
          %5543 = vmatpush1.bf16.msra.mxu0 0
          %5544 = vmatprep.subr.bf16.mxu0 0
          %5545 = vmatpush1.bf16.msra.mxu0 0
          %5546 = vmatprep.subr.bf16.mxu0 0
          %5547 = vmatpush1.bf16.msra.mxu0 0
          %5548 = vmatprep.subr.bf16.mxu0 0
          %5549 = vmatpush1.bf16.msra.mxu0 0
          %5550 = vmatprep.subr.bf16.mxu0 0
          %5551 = vmatpush1.bf16.msra.mxu0 0
          %5552 = vmatprep.subr.bf16.mxu0 0
          %5553 = vmatpush1.bf16.msra.mxu0 0
          %5554 = vmatprep.mubr.bf16.mxu0 0
          %5555 = vmatmul.mubr.bf16.gmra.mrb[0].mxu0 %v5499
          %v5556 = vpop.f32.mrb[0].mxu0
          %v5557 = vadd.f32 0.0, %v5556
          %v5558 = vpop.f32.mrb[0].mxu0
          %v5559 = vpop.f32.mrb[0].mxu0
          %v5560 = vadd.f32 0.0, %v5559
          %v5561 = vpop.f32.mrb[0].mxu0
          %5562 = vmatprep.mubr.bf16.mxu0 0
          %5563 = vmatmul.mubr.bf16.gmra.mrb[0].mxu0 %v5502
          %v5564 = vpop.f32.mrb[0].mxu0
          %v5565 = vadd.f32 0.0, %v5564
          %v5566 = vpop.f32.mrb[0].mxu0
          %v5567 = vpop.f32.mrb[0].mxu0
          %v5568 = vadd.f32 0.0, %v5567
          %v5569 = vpop.f32.mrb[0].mxu0
          %5570 = vmatprep.mubr.bf16.mxu0 0
          %5571 = vmatmul.mubr.bf16.gmra.mrb[0].mxu0 %v5505
          %v5572 = vpop.f32.mrb[0].mxu0
          %v5573 = vadd.f32 0.0, %v5572
          %v5574 = vpop.f32.mrb[0].mxu0
          %v5575 = vpop.f32.mrb[0].mxu0
          %v5576 = vadd.f32 0.0, %v5575
          %v5577 = vpop.f32.mrb[0].mxu0
          %5578 = vmatprep.mubr.bf16.mxu0 0
          %5579 = vmatmul.mubr.bf16.gmra.mrb[0].mxu0 %v5508
          %v5580 = vpop.f32.mrb[0].mxu0
          %v5581 = vadd.f32 0.0, %v5580
          %v5582 = vpop.f32.mrb[0].mxu0
          %v5583 = vpop.f32.mrb[0].mxu0
          %v5584 = vadd.f32 0.0, %v5583
          %v5585 = vpop.f32.mrb[0].mxu0
          %5586 = vmatprep.mubr.bf16.mxu0 0
          %5587 = vmatmul.mubr.bf16.gmra.mrb[0].mxu0 %v5511
          %v5588 = vpop.f32.mrb[0].mxu0
          %v5589 = vadd.f32 0.0, %v5588
          %v5590 = vpop.f32.mrb[0].mxu0
          %v5591 = vpop.f32.mrb[0].mxu0
          %v5592 = vadd.f32 0.0, %v5591
          %v5593 = vpop.f32.mrb[0].mxu0
          %5594 = vmatprep.mubr.bf16.mxu0 0
          %5595 = vmatmul.mubr.bf16.gmra.mrb[0].mxu0 %v5514
          %v5596 = vpop.f32.mrb[0].mxu0
          %v5597 = vadd.f32 0.0, %v5596
          %v5598 = vpop.f32.mrb[0].mxu0
          %v5599 = vpop.f32.mrb[0].mxu0
          %v5600 = vadd.f32 0.0, %v5599
          %v5601 = vpop.f32.mrb[0].mxu0
          %5602 = vmatprep.mubr.bf16.mxu0 0
          %5603 = vmatmul.mubr.bf16.gmra.mrb[0].mxu0 %v5517
          %v5604 = vpop.f32.mrb[0].mxu0
          %v5605 = vadd.f32 0.0, %v5604
          %v5606 = vpop.f32.mrb[0].mxu0
          %v5607 = vpop.f32.mrb[0].mxu0
          %v5608 = vadd.f32 0.0, %v5607
          %v5609 = vpop.f32.mrb[0].mxu0
          %5610 = vmatprep.mubr.bf16.mxu0 0
          %5611 = vmatmul.mubr.bf16.gmra.mrb[0].mxu0 %v5520
          %v5612 = vpop.f32.mrb[0].mxu0
          %v5613 = vadd.f32 0.0, %v5612
          %v5614 = vpop.f32.mrb[0].mxu0
          %v5615 = vpop.f32.mrb[0].mxu0
          %v5616 = vadd.f32 0.0, %v5615
          %v5617 = vpop.f32.mrb[0].mxu0
          %5618 = vdwg.mxu0
          %5619 = vmax.xlane.f32.xlu0 %v5557
          %v5620 = vpop.xlane.xlu0 %5619
          %5621 = vmax.xlane.f32.xlu0 %v5560
          %v5622 = vpop.xlane.xlu0 %5621
          %5623 = vmax.xlane.f32.xlu0 %v5565
          %v5624 = vpop.xlane.xlu0 %5623
          %5625 = vmax.xlane.f32.xlu0 %v5568
          %v5626 = vpop.xlane.xlu0 %5625
          %5627 = vmax.xlane.f32.xlu0 %v5573
          %v5628 = vpop.xlane.xlu0 %5627
          %5629 = vmax.xlane.f32.xlu0 %v5576
          %v5630 = vpop.xlane.xlu0 %5629
          %5631 = vmax.xlane.f32.xlu0 %v5581
          %v5632 = vpop.xlane.xlu0 %5631
          %5633 = vmax.xlane.f32.xlu0 %v5584
          %v5634 = vpop.xlane.xlu0 %5633
          %5635 = vmax.xlane.f32.xlu0 %v5589
          %v5636 = vpop.xlane.xlu0 %5635
          %5637 = vmax.xlane.f32.xlu0 %v5592
          %v5638 = vpop.xlane.xlu0 %5637
          %5639 = vmax.xlane.f32.xlu0 %v5597
          %v5640 = vpop.xlane.xlu0 %5639
          %5641 = vmax.xlane.f32.xlu0 %v5600
          %v5642 = vpop.xlane.xlu0 %5641
          %5643 = vmax.xlane.f32.xlu0 %v5605
          %v5644 = vpop.xlane.xlu0 %5643
          %5645 = vmax.xlane.f32.xlu0 %v5608
          %v5646 = vpop.xlane.xlu0 %5645
          %5647 = vmax.xlane.f32.xlu0 %v5613
          %v5648 = vpop.xlane.xlu0 %5647
          %5649 = vmax.xlane.f32.xlu0 %v5616
          %v5650 = vpop.xlane.xlu0 %5649
          %v5651 = vmax.f32 %v5415, %v5620
          %v5652 = vmax.f32 %v5416, %v5622
          %v5653 = vmax.f32 %v5417, %v5624
          %v5654 = vmax.f32 %v5418, %v5626
          %v5655 = vmax.f32 %v5419, %v5628
          %v5656 = vmax.f32 %v5420, %v5630
          %v5657 = vmax.f32 %v5421, %v5632
          %v5658 = vmax.f32 %v5422, %v5634
          %v5659 = vmax.f32 %v5423, %v5636
          %v5660 = vmax.f32 %v5424, %v5638
          %v5661 = vmax.f32 %v5425, %v5640
          %v5662 = vmax.f32 %v5426, %v5642
          %v5663 = vmax.f32 %v5427, %v5644
          %v5664 = vmax.f32 %v5428, %v5646
          %v5665 = vmax.f32 %v5429, %v5648
          %v5666 = vmax.f32 %v5430, %v5650
          %v5667 = vsub.f32 %v5415, %v5651
          %v5668 = vsub.f32 %v5416, %v5652
          %v5669 = vsub.f32 %v5417, %v5653
          %v5670 = vsub.f32 %v5418, %v5654
          %v5671 = vsub.f32 %v5419, %v5655
          %v5672 = vsub.f32 %v5420, %v5656
          %v5673 = vsub.f32 %v5421, %v5657
          %v5674 = vsub.f32 %v5422, %v5658
          %v5675 = vsub.f32 %v5423, %v5659
          %v5676 = vsub.f32 %v5424, %v5660
          %v5677 = vsub.f32 %v5425, %v5661
          %v5678 = vsub.f32 %v5426, %v5662
          %v5679 = vsub.f32 %v5427, %v5663
          %v5680 = vsub.f32 %v5428, %v5664
          %v5681 = vsub.f32 %v5429, %v5665
          %v5682 = vsub.f32 %v5430, %v5666
          %v5683 = vmul.f32 %v5667, 1.442695
          %v5684 = vpow.pop %v5683
          %v5685 = vmul.f32 %v5668, 1.442695
          %v5686 = vpow.pop %v5685
          %v5687 = vmul.f32 %v5669, 1.442695
          %v5688 = vpow.pop %v5687
          %v5689 = vmul.f32 %v5670, 1.442695
          %v5690 = vpow.pop %v5689
          %v5691 = vmul.f32 %v5671, 1.442695
          %v5692 = vpow.pop %v5691
          %v5693 = vmul.f32 %v5672, 1.442695
          %v5694 = vpow.pop %v5693
          %v5695 = vmul.f32 %v5673, 1.442695
          %v5696 = vpow.pop %v5695
          %v5697 = vmul.f32 %v5674, 1.442695
          %v5698 = vpow.pop %v5697
          %v5699 = vmul.f32 %v5675, 1.442695
          %v5700 = vpow.pop %v5699
          %v5701 = vmul.f32 %v5676, 1.442695
          %v5702 = vpow.pop %v5701
          %v5703 = vmul.f32 %v5677, 1.442695
          %v5704 = vpow.pop %v5703
          %v5705 = vmul.f32 %v5678, 1.442695
          %v5706 = vpow.pop %v5705
          %v5707 = vmul.f32 %v5679, 1.442695
          %v5708 = vpow.pop %v5707
          %v5709 = vmul.f32 %v5680, 1.442695
          %v5710 = vpow.pop %v5709
          %v5711 = vmul.f32 %v5681, 1.442695
          %v5712 = vpow.pop %v5711
          %v5713 = vmul.f32 %v5682, 1.442695
          %v5714 = vpow.pop %v5713
          %v5715 = vsub.f32 %v5557, %v5651
          %v5716 = vsub.f32 %v5560, %v5652
          %v5717 = vsub.f32 %v5565, %v5653
          %v5718 = vsub.f32 %v5568, %v5654
          %v5719 = vsub.f32 %v5573, %v5655
          %v5720 = vsub.f32 %v5576, %v5656
          %v5721 = vsub.f32 %v5581, %v5657
          %v5722 = vsub.f32 %v5584, %v5658
          %v5723 = vsub.f32 %v5589, %v5659
          %v5724 = vsub.f32 %v5592, %v5660
          %v5725 = vsub.f32 %v5597, %v5661
          %v5726 = vsub.f32 %v5600, %v5662
          %v5727 = vsub.f32 %v5605, %v5663
          %v5728 = vsub.f32 %v5608, %v5664
          %v5729 = vsub.f32 %v5613, %v5665
          %v5730 = vsub.f32 %v5616, %v5666
          %v5731 = vmul.f32 %v5715, 1.442695
          %v5732 = vpow.pop %v5731
          %v5733 = vmul.f32 %v5716, 1.442695
          %v5734 = vpow.pop %v5733
          %v5735 = vmul.f32 %v5717, 1.442695
          %v5736 = vpow.pop %v5735
          %v5737 = vmul.f32 %v5718, 1.442695
          %v5738 = vpow.pop %v5737
          %v5739 = vmul.f32 %v5719, 1.442695
          %v5740 = vpow.pop %v5739
          %v5741 = vmul.f32 %v5720, 1.442695
          %v5742 = vpow.pop %v5741
          %v5743 = vmul.f32 %v5721, 1.442695
          %v5744 = vpow.pop %v5743
          %v5745 = vmul.f32 %v5722, 1.442695
          %v5746 = vpow.pop %v5745
          %v5747 = vmul.f32 %v5723, 1.442695
          %v5748 = vpow.pop %v5747
          %v5749 = vmul.f32 %v5724, 1.442695
          %v5750 = vpow.pop %v5749
          %v5751 = vmul.f32 %v5725, 1.442695
          %v5752 = vpow.pop %v5751
          %v5753 = vmul.f32 %v5726, 1.442695
          %v5754 = vpow.pop %v5753
          %v5755 = vmul.f32 %v5727, 1.442695
          %v5756 = vpow.pop %v5755
          %v5757 = vmul.f32 %v5728, 1.442695
          %v5758 = vpow.pop %v5757
          %v5759 = vmul.f32 %v5729, 1.442695
          %v5760 = vpow.pop %v5759
          %v5761 = vmul.f32 %v5730, 1.442695
          %v5762 = vpow.pop %v5761
          %v5763 = vmul.f32 %v5684, %v5431
          %v5764 = vmul.f32 %v5686, %v5432
          %v5765 = vmul.f32 %v5688, %v5433
          %v5766 = vmul.f32 %v5690, %v5434
          %v5767 = vmul.f32 %v5692, %v5435
          %v5768 = vmul.f32 %v5694, %v5436
          %v5769 = vmul.f32 %v5696, %v5437
          %v5770 = vmul.f32 %v5698, %v5438
          %v5771 = vmul.f32 %v5700, %v5439
          %v5772 = vmul.f32 %v5702, %v5440
          %v5773 = vmul.f32 %v5704, %v5441
          %v5774 = vmul.f32 %v5706, %v5442
          %v5775 = vmul.f32 %v5708, %v5443
          %v5776 = vmul.f32 %v5710, %v5444
          %v5777 = vmul.f32 %v5712, %v5445
          %v5778 = vmul.f32 %v5714, %v5446
          %5779 = vadd.xlane.f32.xlu0 %v5732
          %v5780 = vpop.xlane.xlu0 %5779
          %5781 = vadd.xlane.f32.xlu0 %v5734
          %v5782 = vpop.xlane.xlu0 %5781
          %5783 = vadd.xlane.f32.xlu0 %v5736
          %v5784 = vpop.xlane.xlu0 %5783
          %5785 = vadd.xlane.f32.xlu0 %v5738
          %v5786 = vpop.xlane.xlu0 %5785
          %5787 = vadd.xlane.f32.xlu0 %v5740
          %v5788 = vpop.xlane.xlu0 %5787
          %5789 = vadd.xlane.f32.xlu0 %v5742
          %v5790 = vpop.xlane.xlu0 %5789
          %5791 = vadd.xlane.f32.xlu0 %v5744
          %v5792 = vpop.xlane.xlu0 %5791
          %5793 = vadd.xlane.f32.xlu0 %v5746
          %v5794 = vpop.xlane.xlu0 %5793
          %5795 = vadd.xlane.f32.xlu0 %v5748
          %v5796 = vpop.xlane.xlu0 %5795
          %5797 = vadd.xlane.f32.xlu0 %v5750
          %v5798 = vpop.xlane.xlu0 %5797
          %5799 = vadd.xlane.f32.xlu0 %v5752
          %v5800 = vpop.xlane.xlu0 %5799
          %5801 = vadd.xlane.f32.xlu0 %v5754
          %v5802 = vpop.xlane.xlu0 %5801
          %5803 = vadd.xlane.f32.xlu0 %v5756
          %v5804 = vpop.xlane.xlu0 %5803
          %5805 = vadd.xlane.f32.xlu0 %v5758
          %v5806 = vpop.xlane.xlu0 %5805
          %5807 = vadd.xlane.f32.xlu0 %v5760
          %v5808 = vpop.xlane.xlu0 %5807
          %5809 = vadd.xlane.f32.xlu0 %v5762
          %v5810 = vpop.xlane.xlu0 %5809
          %v5811 = vadd.f32 %v5763, %v5780
          %v5812 = vadd.f32 %v5764, %v5782
          %v5813 = vadd.f32 %v5765, %v5784
          %v5814 = vadd.f32 %v5766, %v5786
          %v5815 = vadd.f32 %v5767, %v5788
          %v5816 = vadd.f32 %v5768, %v5790
          %v5817 = vadd.f32 %v5769, %v5792
          %v5818 = vadd.f32 %v5770, %v5794
          %v5819 = vadd.f32 %v5771, %v5796
          %v5820 = vadd.f32 %v5772, %v5798
          %v5821 = vadd.f32 %v5773, %v5800
          %v5822 = vadd.f32 %v5774, %v5802
          %v5823 = vadd.f32 %v5775, %v5804
          %v5824 = vadd.f32 %v5776, %v5806
          %v5825 = vadd.f32 %v5777, %v5808
          %v5826 = vadd.f32 %v5778, %v5810
          %v5827 = vmul.f32 %v5684, %v5447
          %v5828 = vmul.f32 %v5686, %v5448
          %v5829 = vmul.f32 %v5688, %v5449
          %v5830 = vmul.f32 %v5690, %v5450
          %v5831 = vmul.f32 %v5692, %v5451
          %v5832 = vmul.f32 %v5694, %v5452
          %v5833 = vmul.f32 %v5696, %v5453
          %v5834 = vmul.f32 %v5698, %v5454
          %v5835 = vmul.f32 %v5700, %v5455
          %v5836 = vmul.f32 %v5702, %v5456
          %v5837 = vmul.f32 %v5704, %v5457
          %v5838 = vmul.f32 %v5706, %v5458
          %v5839 = vmul.f32 %v5708, %v5459
          %v5840 = vmul.f32 %v5710, %v5460
          %v5841 = vmul.f32 %v5712, %v5461
          %v5842 = vmul.f32 %v5714, %v5462
          %v5843 = vpack.c.bf16 %v5734, %v5732
          %v5844 = vpack.c.bf16 %v5738, %v5736
          %v5845 = vpack.c.bf16 %v5742, %v5740
          %v5846 = vpack.c.bf16 %v5746, %v5744
          %v5847 = vpack.c.bf16 %v5750, %v5748
          %v5848 = vpack.c.bf16 %v5754, %v5752
          %v5849 = vpack.c.bf16 %v5758, %v5756
          %v5850 = vpack.c.bf16 %v5762, %v5760
          %5859 = vrot.lane.b32.xlu0 %v5474, 32
          %v5860 = vpop.permute.xlu0 %5859
          %5861 = vrot.lane.b32.xlu0 %v5475, 32
          %v5862 = vpop.permute.xlu0 %5861
          %5863 = vrot.lane.b32.xlu0 %v5476, 32
          %v5864 = vpop.permute.xlu0 %5863
          %5865 = vrot.lane.b32.xlu0 %v5477, 32
          %v5866 = vpop.permute.xlu0 %5865
          %5867 = vrot.lane.b32.xlu0 %v5478, 32
          %v5868 = vpop.permute.xlu0 %5867
          %5869 = vrot.lane.b32.xlu0 %v5479, 32
          %v5870 = vpop.permute.xlu0 %5869
          %5871 = vrot.lane.b32.xlu0 %v5480, 32
          %v5872 = vpop.permute.xlu0 %5871
          %5873 = vrot.lane.b32.xlu0 %v5481, 32
          %v5874 = vpop.permute.xlu0 %5873
          %5883 = vmatprep.subr.bf16.mxu0 0
          %5884 = vmatpush1.bf16.msra.mxu0 %v5860
          %5885 = vmatprep.subr.bf16.mxu0 0
          %5886 = vmatpush1.bf16.msra.mxu0 %v5862
          %5887 = vmatprep.subr.bf16.mxu0 0
          %5888 = vmatpush1.bf16.msra.mxu0 %v5864
          %5889 = vmatprep.subr.bf16.mxu0 0
          %5890 = vmatpush1.bf16.msra.mxu0 %v5866
          %5891 = vmatprep.subr.bf16.mxu0 0
          %5892 = vmatpush1.bf16.msra.mxu0 %v5868
          %5893 = vmatprep.subr.bf16.mxu0 0
          %5894 = vmatpush1.bf16.msra.mxu0 %v5870
          %5895 = vmatprep.subr.bf16.mxu0 0
          %5896 = vmatpush1.bf16.msra.mxu0 %v5872
          %5897 = vmatprep.subr.bf16.mxu0 0
          %5898 = vmatpush1.bf16.msra.mxu0 %v5874
          %5899 = vmatprep.subr.bf16.mxu0 0
          %5900 = vmatpush1.bf16.msra.mxu0 0
          %5901 = vmatprep.subr.bf16.mxu0 0
          %5902 = vmatpush1.bf16.msra.mxu0 0
          %5903 = vmatprep.subr.bf16.mxu0 0
          %5904 = vmatpush1.bf16.msra.mxu0 0
          %5905 = vmatprep.subr.bf16.mxu0 0
          %5906 = vmatpush1.bf16.msra.mxu0 0
          %5907 = vmatprep.subr.bf16.mxu0 0
          %5908 = vmatpush1.bf16.msra.mxu0 0
          %5909 = vmatprep.subr.bf16.mxu0 0
          %5910 = vmatpush1.bf16.msra.mxu0 0
          %5911 = vmatprep.subr.bf16.mxu0 0
          %5912 = vmatpush1.bf16.msra.mxu0 0
          %5913 = vmatprep.subr.bf16.mxu0 0
          %5914 = vmatpush1.bf16.msra.mxu0 0
          %5915 = vmatprep.mubr.bf16.mxu0 0
          %5916 = vmatmul.mubr.bf16.gmra.mrb[0].mxu0 %v5843
          %v5917 = vpop.f32.mrb[0].mxu0
          %v5918 = vadd.f32 0.0, %v5917
          %v5919 = vpop.f32.mrb[0].mxu0
          %v5920 = vpop.f32.mrb[0].mxu0
          %v5921 = vadd.f32 0.0, %v5920
          %v5922 = vpop.f32.mrb[0].mxu0
          %5923 = vmatprep.mubr.bf16.mxu0 0
          %5924 = vmatmul.mubr.bf16.gmra.mrb[0].mxu0 %v5844
          %v5925 = vpop.f32.mrb[0].mxu0
          %v5926 = vadd.f32 0.0, %v5925
          %v5927 = vpop.f32.mrb[0].mxu0
          %v5928 = vpop.f32.mrb[0].mxu0
          %v5929 = vadd.f32 0.0, %v5928
          %v5930 = vpop.f32.mrb[0].mxu0
          %5931 = vmatprep.mubr.bf16.mxu0 0
          %5932 = vmatmul.mubr.bf16.gmra.mrb[0].mxu0 %v5845
          %v5933 = vpop.f32.mrb[0].mxu0
          %v5934 = vadd.f32 0.0, %v5933
          %v5935 = vpop.f32.mrb[0].mxu0
          %v5936 = vpop.f32.mrb[0].mxu0
          %v5937 = vadd.f32 0.0, %v5936
          %v5938 = vpop.f32.mrb[0].mxu0
          %5939 = vmatprep.mubr.bf16.mxu0 0
          %5940 = vmatmul.mubr.bf16.gmra.mrb[0].mxu0 %v5846
          %v5941 = vpop.f32.mrb[0].mxu0
          %v5942 = vadd.f32 0.0, %v5941
          %v5943 = vpop.f32.mrb[0].mxu0
          %v5944 = vpop.f32.mrb[0].mxu0
          %v5945 = vadd.f32 0.0, %v5944
          %v5946 = vpop.f32.mrb[0].mxu0
          %5947 = vmatprep.mubr.bf16.mxu0 0
          %5948 = vmatmul.mubr.bf16.gmra.mrb[0].mxu0 %v5847
          %v5949 = vpop.f32.mrb[0].mxu0
          %v5950 = vadd.f32 0.0, %v5949
          %v5951 = vpop.f32.mrb[0].mxu0
          %v5952 = vpop.f32.mrb[0].mxu0
          %v5953 = vadd.f32 0.0, %v5952
          %v5954 = vpop.f32.mrb[0].mxu0
          %5955 = vmatprep.mubr.bf16.mxu0 0
          %5956 = vmatmul.mubr.bf16.gmra.mrb[0].mxu0 %v5848
          %v5957 = vpop.f32.mrb[0].mxu0
          %v5958 = vadd.f32 0.0, %v5957
          %v5959 = vpop.f32.mrb[0].mxu0
          %v5960 = vpop.f32.mrb[0].mxu0
          %v5961 = vadd.f32 0.0, %v5960
          %v5962 = vpop.f32.mrb[0].mxu0
          %5963 = vmatprep.mubr.bf16.mxu0 0
          %5964 = vmatmul.mubr.bf16.gmra.mrb[0].mxu0 %v5849
          %v5965 = vpop.f32.mrb[0].mxu0
          %v5966 = vadd.f32 0.0, %v5965
          %v5967 = vpop.f32.mrb[0].mxu0
          %v5968 = vpop.f32.mrb[0].mxu0
          %v5969 = vadd.f32 0.0, %v5968
          %v5970 = vpop.f32.mrb[0].mxu0
          %5971 = vmatprep.mubr.bf16.mxu0 0
          %5972 = vmatmul.mubr.bf16.gmra.mrb[0].mxu0 %v5850
          %v5973 = vpop.f32.mrb[0].mxu0
          %v5974 = vadd.f32 0.0, %v5973
          %v5975 = vpop.f32.mrb[0].mxu0
          %v5976 = vpop.f32.mrb[0].mxu0
          %v5977 = vadd.f32 0.0, %v5976
          %v5978 = vpop.f32.mrb[0].mxu0
          %5979 = vdwg.mxu0
          %v5980 = vadd.f32 %v5827, %v5918
          %v5981 = vadd.f32 %v5828, %v5921
          %v5982 = vadd.f32 %v5829, %v5926
          %v5983 = vadd.f32 %v5830, %v5929
          %v5984 = vadd.f32 %v5831, %v5934
          %v5985 = vadd.f32 %v5832, %v5937
          %v5986 = vadd.f32 %v5833, %v5942
          %v5987 = vadd.f32 %v5834, %v5945
          %v5988 = vadd.f32 %v5835, %v5950
          %v5989 = vadd.f32 %v5836, %v5953
          %v5990 = vadd.f32 %v5837, %v5958
          %v5991 = vadd.f32 %v5838, %v5961
          %v5992 = vadd.f32 %v5839, %v5966
          %v5993 = vadd.f32 %v5840, %v5969
          %v5994 = vadd.f32 %v5841, %v5974
          %v5995 = vadd.f32 %v5842, %v5977
        $region154: #{tpu_custom_call.1} parent=71 // loop_footer
          %s5412 = sadd.s32 %s5410, 1
        $region155: #{tpu_custom_call.1} parent=71 // loop_footer_branch
          %5409 = sbr.rel target = $region151
        $region156: #{tpu_custom_call.1} parent=71 // loop_exit
          _
        %v5996 = vld [vmem:[%s2414 + $0x60] sm:$0xff]
        %v5997 = vld [vmem:[%s2414 + $0x70] sm:$0xff]
        %v5998 = vld [vmem:[%s2418] sm:$0xff]
        %v5999 = vld [vmem:[%s2418 + $0x8] sm:$0xff]
        %v6000 = vld [vmem:[%s2418 + $0x10] sm:$0xff]
        %v6001 = vld [vmem:[%s2418 + $0x18] sm:$0xff]
        %v6002 = vld [vmem:[%s2418 + $0x20] sm:$0xff]
        %v6003 = vld [vmem:[%s2418 + $0x28] sm:$0xff]
        %v6004 = vld [vmem:[%s2418 + $0x30] sm:$0xff]
        %v6005 = vld [vmem:[%s2418 + $0x38] sm:$0xff]
        %6006 = vrot.lane.b32.xlu0 %v1829, 32
        %v6007 = vpop.permute.xlu0 %6006
        %6008 = vrot.lane.b32.xlu0 %v1830, 32
        %v6009 = vpop.permute.xlu0 %6008
        %6010 = vrot.lane.b32.xlu0 %v1831, 32
        %v6011 = vpop.permute.xlu0 %6010
        %6012 = vrot.lane.b32.xlu0 %v1832, 32
        %v6013 = vpop.permute.xlu0 %6012
        %6014 = vrot.lane.b32.xlu0 %v1833, 32
        %v6015 = vpop.permute.xlu0 %6014
        %6016 = vrot.lane.b32.xlu0 %v1834, 32
        %v6017 = vpop.permute.xlu0 %6016
        %6018 = vrot.lane.b32.xlu0 %v1835, 32
        %v6019 = vpop.permute.xlu0 %6018
        %6020 = vrot.lane.b32.xlu0 %v1836, 32
        %v6021 = vpop.permute.xlu0 %6020
        %v6023 = vsel %vm2427, %v6007, 0
        %v6026 = vsel %vm2427, %v6009, 0
        %v6029 = vsel %vm2427, %v6011, 0
        %v6032 = vsel %vm2427, %v6013, 0
        %v6035 = vsel %vm2427, %v6015, 0
        %v6038 = vsel %vm2427, %v6017, 0
        %v6041 = vsel %vm2427, %v6019, 0
        %v6044 = vsel %vm2427, %v6021, 0
        %6046 = vmatprep.subr.bf16.mxu0 0
        %6047 = vmatpush1.bf16.msra.mxu0 %v5996
        %6048 = vmatprep.subr.bf16.mxu0 0
        %6049 = vmatpush1.bf16.msra.mxu0 %v5997
        %6050 = vmatprep.subr.bf16.mxu0 0
        %6051 = vmatpush1.bf16.msra.mxu0 0
        %6052 = vmatprep.subr.bf16.mxu0 0
        %6053 = vmatpush1.bf16.msra.mxu0 0
        %6054 = vmatprep.subr.bf16.mxu0 0
        %6055 = vmatpush1.bf16.msra.mxu0 0
        %6056 = vmatprep.subr.bf16.mxu0 0
        %6057 = vmatpush1.bf16.msra.mxu0 0
        %6058 = vmatprep.subr.bf16.mxu0 0
        %6059 = vmatpush1.bf16.msra.mxu0 0
        %6060 = vmatprep.subr.bf16.mxu0 0
        %6061 = vmatpush1.bf16.msra.mxu0 0
        %6062 = vmatprep.subr.bf16.mxu0 0
        %6063 = vmatpush1.bf16.msra.mxu0 0
        %6064 = vmatprep.subr.bf16.mxu0 0
        %6065 = vmatpush1.bf16.msra.mxu0 0
        %6066 = vmatprep.subr.bf16.mxu0 0
        %6067 = vmatpush1.bf16.msra.mxu0 0
        %6068 = vmatprep.subr.bf16.mxu0 0
        %6069 = vmatpush1.bf16.msra.mxu0 0
        %6070 = vmatprep.subr.bf16.mxu0 0
        %6071 = vmatpush1.bf16.msra.mxu0 0
        %6072 = vmatprep.subr.bf16.mxu0 0
        %6073 = vmatpush1.bf16.msra.mxu0 0
        %6074 = vmatprep.subr.bf16.mxu0 0
        %6075 = vmatpush1.bf16.msra.mxu0 0
        %6076 = vmatprep.subr.bf16.mxu0 0
        %6077 = vmatpush1.bf16.msra.mxu0 0
        %6078 = vmatprep.mubr.bf16.mxu0 0
        %6079 = vmatmul.mubr.bf16.gmra.mrb[0].mxu0 %v6023
        %v6080 = vpop.f32.mrb[0].mxu0
        %v6081 = vadd.f32 0.0, %v6080
        %v6082 = vpop.f32.mrb[0].mxu0
        %v6083 = vpop.f32.mrb[0].mxu0
        %v6084 = vadd.f32 0.0, %v6083
        %v6085 = vpop.f32.mrb[0].mxu0
        %6086 = vmatprep.mubr.bf16.mxu0 0
        %6087 = vmatmul.mubr.bf16.gmra.mrb[0].mxu0 %v6026
        %v6088 = vpop.f32.mrb[0].mxu0
        %v6089 = vadd.f32 0.0, %v6088
        %v6090 = vpop.f32.mrb[0].mxu0
        %v6091 = vpop.f32.mrb[0].mxu0
        %v6092 = vadd.f32 0.0, %v6091
        %v6093 = vpop.f32.mrb[0].mxu0
        %6094 = vmatprep.mubr.bf16.mxu0 0
        %6095 = vmatmul.mubr.bf16.gmra.mrb[0].mxu0 %v6029
        %v6096 = vpop.f32.mrb[0].mxu0
        %v6097 = vadd.f32 0.0, %v6096
        %v6098 = vpop.f32.mrb[0].mxu0
        %v6099 = vpop.f32.mrb[0].mxu0
        %v6100 = vadd.f32 0.0, %v6099
        %v6101 = vpop.f32.mrb[0].mxu0
        %6102 = vmatprep.mubr.bf16.mxu0 0
        %6103 = vmatmul.mubr.bf16.gmra.mrb[0].mxu0 %v6032
        %v6104 = vpop.f32.mrb[0].mxu0
        %v6105 = vadd.f32 0.0, %v6104
        %v6106 = vpop.f32.mrb[0].mxu0
        %v6107 = vpop.f32.mrb[0].mxu0
        %v6108 = vadd.f32 0.0, %v6107
        %v6109 = vpop.f32.mrb[0].mxu0
        %6110 = vmatprep.mubr.bf16.mxu0 0
        %6111 = vmatmul.mubr.bf16.gmra.mrb[0].mxu0 %v6035
        %v6112 = vpop.f32.mrb[0].mxu0
        %v6113 = vadd.f32 0.0, %v6112
        %v6114 = vpop.f32.mrb[0].mxu0
        %v6115 = vpop.f32.mrb[0].mxu0
        %v6116 = vadd.f32 0.0, %v6115
        %v6117 = vpop.f32.mrb[0].mxu0
        %6118 = vmatprep.mubr.bf16.mxu0 0
        %6119 = vmatmul.mubr.bf16.gmra.mrb[0].mxu0 %v6038
        %v6120 = vpop.f32.mrb[0].mxu0
        %v6121 = vadd.f32 0.0, %v6120
        %v6122 = vpop.f32.mrb[0].mxu0
        %v6123 = vpop.f32.mrb[0].mxu0
        %v6124 = vadd.f32 0.0, %v6123
        %v6125 = vpop.f32.mrb[0].mxu0
        %6126 = vmatprep.mubr.bf16.mxu0 0
        %6127 = vmatmul.mubr.bf16.gmra.mrb[0].mxu0 %v6041
        %v6128 = vpop.f32.mrb[0].mxu0
        %v6129 = vadd.f32 0.0, %v6128
        %v6130 = vpop.f32.mrb[0].mxu0
        %v6131 = vpop.f32.mrb[0].mxu0
        %v6132 = vadd.f32 0.0, %v6131
        %v6133 = vpop.f32.mrb[0].mxu0
        %6134 = vmatprep.mubr.bf16.mxu0 0
        %6135 = vmatmul.mubr.bf16.gmra.mrb[0].mxu0 %v6044
        %v6136 = vpop.f32.mrb[0].mxu0
        %v6137 = vadd.f32 0.0, %v6136
        %v6138 = vpop.f32.mrb[0].mxu0
        %v6139 = vpop.f32.mrb[0].mxu0
        %v6140 = vadd.f32 0.0, %v6139
        %v6141 = vpop.f32.mrb[0].mxu0
        %6142 = vdwg.mxu0
        %v6143 = vsel %vm2552, %v6081, -1e+30
        %v6144 = vsel %vm2553, %v6084, -1e+30
        %v6145 = vsel %vm2554, %v6089, -1e+30
        %v6146 = vsel %vm2555, %v6092, -1e+30
        %v6147 = vsel %vm2556, %v6097, -1e+30
        %v6148 = vsel %vm2557, %v6100, -1e+30
        %v6149 = vsel %vm2558, %v6105, -1e+30
        %v6150 = vsel %vm2559, %v6108, -1e+30
        %v6151 = vsel %vm2560, %v6113, -1e+30
        %v6152 = vsel %vm2561, %v6116, -1e+30
        %v6153 = vsel %vm2562, %v6121, -1e+30
        %v6154 = vsel %vm2563, %v6124, -1e+30
        %v6155 = vsel %vm2564, %v6129, -1e+30
        %v6156 = vsel %vm2565, %v6132, -1e+30
        %v6157 = vsel %vm2566, %v6137, -1e+30
        %v6158 = vsel %vm2567, %v6140, -1e+30
        %6159 = vmax.xlane.f32.xlu0 %v6143
        %v6160 = vpop.xlane.xlu0 %6159
        %6161 = vmax.xlane.f32.xlu0 %v6144
        %v6162 = vpop.xlane.xlu0 %6161
        %6163 = vmax.xlane.f32.xlu0 %v6145
        %v6164 = vpop.xlane.xlu0 %6163
        %6165 = vmax.xlane.f32.xlu0 %v6146
        %v6166 = vpop.xlane.xlu0 %6165
        %6167 = vmax.xlane.f32.xlu0 %v6147
        %v6168 = vpop.xlane.xlu0 %6167
        %6169 = vmax.xlane.f32.xlu0 %v6148
        %v6170 = vpop.xlane.xlu0 %6169
        %6171 = vmax.xlane.f32.xlu0 %v6149
        %v6172 = vpop.xlane.xlu0 %6171
        %6173 = vmax.xlane.f32.xlu0 %v6150
        %v6174 = vpop.xlane.xlu0 %6173
        %6175 = vmax.xlane.f32.xlu0 %v6151
        %v6176 = vpop.xlane.xlu0 %6175
        %6177 = vmax.xlane.f32.xlu0 %v6152
        %v6178 = vpop.xlane.xlu0 %6177
        %6179 = vmax.xlane.f32.xlu0 %v6153
        %v6180 = vpop.xlane.xlu0 %6179
        %6181 = vmax.xlane.f32.xlu0 %v6154
        %v6182 = vpop.xlane.xlu0 %6181
        %6183 = vmax.xlane.f32.xlu0 %v6155
        %v6184 = vpop.xlane.xlu0 %6183
        %6185 = vmax.xlane.f32.xlu0 %v6156
        %v6186 = vpop.xlane.xlu0 %6185
        %6187 = vmax.xlane.f32.xlu0 %v6157
        %v6188 = vpop.xlane.xlu0 %6187
        %6189 = vmax.xlane.f32.xlu0 %v6158
        %v6190 = vpop.xlane.xlu0 %6189
        %v6191 = vmax.f32 %v5415, %v6160
        %v6192 = vmax.f32 %v5416, %v6162
        %v6193 = vmax.f32 %v5417, %v6164
        %v6194 = vmax.f32 %v5418, %v6166
        %v6195 = vmax.f32 %v5419, %v6168
        %v6196 = vmax.f32 %v5420, %v6170
        %v6197 = vmax.f32 %v5421, %v6172
        %v6198 = vmax.f32 %v5422, %v6174
        %v6199 = vmax.f32 %v5423, %v6176
        %v6200 = vmax.f32 %v5424, %v6178
        %v6201 = vmax.f32 %v5425, %v6180
        %v6202 = vmax.f32 %v5426, %v6182
        %v6203 = vmax.f32 %v5427, %v6184
        %v6204 = vmax.f32 %v5428, %v6186
        %v6205 = vmax.f32 %v5429, %v6188
        %v6206 = vmax.f32 %v5430, %v6190
        %v6207 = vsub.f32 %v5415, %v6191
        %v6208 = vsub.f32 %v5416, %v6192
        %v6209 = vsub.f32 %v5417, %v6193
        %v6210 = vsub.f32 %v5418, %v6194
        %v6211 = vsub.f32 %v5419, %v6195
        %v6212 = vsub.f32 %v5420, %v6196
        %v6213 = vsub.f32 %v5421, %v6197
        %v6214 = vsub.f32 %v5422, %v6198
        %v6215 = vsub.f32 %v5423, %v6199
        %v6216 = vsub.f32 %v5424, %v6200
        %v6217 = vsub.f32 %v5425, %v6201
        %v6218 = vsub.f32 %v5426, %v6202
        %v6219 = vsub.f32 %v5427, %v6203
        %v6220 = vsub.f32 %v5428, %v6204
        %v6221 = vsub.f32 %v5429, %v6205
        %v6222 = vsub.f32 %v5430, %v6206
        %v6223 = vmul.f32 %v6207, 1.442695
        %v6224 = vpow.pop %v6223
        %v6225 = vmul.f32 %v6208, 1.442695
        %v6226 = vpow.pop %v6225
        %v6227 = vmul.f32 %v6209, 1.442695
        %v6228 = vpow.pop %v6227
        %v6229 = vmul.f32 %v6210, 1.442695
        %v6230 = vpow.pop %v6229
        %v6231 = vmul.f32 %v6211, 1.442695
        %v6232 = vpow.pop %v6231
        %v6233 = vmul.f32 %v6212, 1.442695
        %v6234 = vpow.pop %v6233
        %v6235 = vmul.f32 %v6213, 1.442695
        %v6236 = vpow.pop %v6235
        %v6237 = vmul.f32 %v6214, 1.442695
        %v6238 = vpow.pop %v6237
        %v6239 = vmul.f32 %v6215, 1.442695
        %v6240 = vpow.pop %v6239
        %v6241 = vmul.f32 %v6216, 1.442695
        %v6242 = vpow.pop %v6241
        %v6243 = vmul.f32 %v6217, 1.442695
        %v6244 = vpow.pop %v6243
        %v6245 = vmul.f32 %v6218, 1.442695
        %v6246 = vpow.pop %v6245
        %v6247 = vmul.f32 %v6219, 1.442695
        %v6248 = vpow.pop %v6247
        %v6249 = vmul.f32 %v6220, 1.442695
        %v6250 = vpow.pop %v6249
        %v6251 = vmul.f32 %v6221, 1.442695
        %v6252 = vpow.pop %v6251
        %v6253 = vmul.f32 %v6222, 1.442695
        %v6254 = vpow.pop %v6253
        %v6255 = vsub.f32 %v6143, %v6191
        %v6256 = vsub.f32 %v6144, %v6192
        %v6257 = vsub.f32 %v6145, %v6193
        %v6258 = vsub.f32 %v6146, %v6194
        %v6259 = vsub.f32 %v6147, %v6195
        %v6260 = vsub.f32 %v6148, %v6196
        %v6261 = vsub.f32 %v6149, %v6197
        %v6262 = vsub.f32 %v6150, %v6198
        %v6263 = vsub.f32 %v6151, %v6199
        %v6264 = vsub.f32 %v6152, %v6200
        %v6265 = vsub.f32 %v6153, %v6201
        %v6266 = vsub.f32 %v6154, %v6202
        %v6267 = vsub.f32 %v6155, %v6203
        %v6268 = vsub.f32 %v6156, %v6204
        %v6269 = vsub.f32 %v6157, %v6205
        %v6270 = vsub.f32 %v6158, %v6206
        %v6271 = vmul.f32 %v6255, 1.442695
        %v6272 = vpow.pop %v6271
        %v6273 = vmul.f32 %v6256, 1.442695
        %v6274 = vpow.pop %v6273
        %v6275 = vmul.f32 %v6257, 1.442695
        %v6276 = vpow.pop %v6275
        %v6277 = vmul.f32 %v6258, 1.442695
        %v6278 = vpow.pop %v6277
        %v6279 = vmul.f32 %v6259, 1.442695
        %v6280 = vpow.pop %v6279
        %v6281 = vmul.f32 %v6260, 1.442695
        %v6282 = vpow.pop %v6281
        %v6283 = vmul.f32 %v6261, 1.442695
        %v6284 = vpow.pop %v6283
        %v6285 = vmul.f32 %v6262, 1.442695
        %v6286 = vpow.pop %v6285
        %v6287 = vmul.f32 %v6263, 1.442695
        %v6288 = vpow.pop %v6287
        %v6289 = vmul.f32 %v6264, 1.442695
        %v6290 = vpow.pop %v6289
        %v6291 = vmul.f32 %v6265, 1.442695
        %v6292 = vpow.pop %v6291
        %v6293 = vmul.f32 %v6266, 1.442695
        %v6294 = vpow.pop %v6293
        %v6295 = vmul.f32 %v6267, 1.442695
        %v6296 = vpow.pop %v6295
        %v6297 = vmul.f32 %v6268, 1.442695
        %v6298 = vpow.pop %v6297
        %v6299 = vmul.f32 %v6269, 1.442695
        %v6300 = vpow.pop %v6299
        %v6301 = vmul.f32 %v6270, 1.442695
        %v6302 = vpow.pop %v6301
        %v6303 = vmul.f32 %v6224, %v5431
        %v6304 = vmul.f32 %v6226, %v5432
        %v6305 = vmul.f32 %v6228, %v5433
        %v6306 = vmul.f32 %v6230, %v5434
        %v6307 = vmul.f32 %v6232, %v5435
        %v6308 = vmul.f32 %v6234, %v5436
        %v6309 = vmul.f32 %v6236, %v5437
        %v6310 = vmul.f32 %v6238, %v5438
        %v6311 = vmul.f32 %v6240, %v5439
        %v6312 = vmul.f32 %v6242, %v5440
        %v6313 = vmul.f32 %v6244, %v5441
        %v6314 = vmul.f32 %v6246, %v5442
        %v6315 = vmul.f32 %v6248, %v5443
        %v6316 = vmul.f32 %v6250, %v5444
        %v6317 = vmul.f32 %v6252, %v5445
        %v6318 = vmul.f32 %v6254, %v5446
        %6319 = vadd.xlane.f32.xlu0 %v6272
        %v6320 = vpop.xlane.xlu0 %6319
        %6321 = vadd.xlane.f32.xlu0 %v6274
        %v6322 = vpop.xlane.xlu0 %6321
        %6323 = vadd.xlane.f32.xlu0 %v6276
        %v6324 = vpop.xlane.xlu0 %6323
        %6325 = vadd.xlane.f32.xlu0 %v6278
        %v6326 = vpop.xlane.xlu0 %6325
        %6327 = vadd.xlane.f32.xlu0 %v6280
        %v6328 = vpop.xlane.xlu0 %6327
        %6329 = vadd.xlane.f32.xlu0 %v6282
        %v6330 = vpop.xlane.xlu0 %6329
        %6331 = vadd.xlane.f32.xlu0 %v6284
        %v6332 = vpop.xlane.xlu0 %6331
        %6333 = vadd.xlane.f32.xlu0 %v6286
        %v6334 = vpop.xlane.xlu0 %6333
        %6335 = vadd.xlane.f32.xlu0 %v6288
        %v6336 = vpop.xlane.xlu0 %6335
        %6337 = vadd.xlane.f32.xlu0 %v6290
        %v6338 = vpop.xlane.xlu0 %6337
        %6339 = vadd.xlane.f32.xlu0 %v6292
        %v6340 = vpop.xlane.xlu0 %6339
        %6341 = vadd.xlane.f32.xlu0 %v6294
        %v6342 = vpop.xlane.xlu0 %6341
        %6343 = vadd.xlane.f32.xlu0 %v6296
        %v6344 = vpop.xlane.xlu0 %6343
        %6345 = vadd.xlane.f32.xlu0 %v6298
        %v6346 = vpop.xlane.xlu0 %6345
        %6347 = vadd.xlane.f32.xlu0 %v6300
        %v6348 = vpop.xlane.xlu0 %6347
        %6349 = vadd.xlane.f32.xlu0 %v6302
        %v6350 = vpop.xlane.xlu0 %6349
        %v6351 = vadd.f32 %v6303, %v6320
        %v6352 = vadd.f32 %v6304, %v6322
        %v6353 = vadd.f32 %v6305, %v6324
        %v6354 = vadd.f32 %v6306, %v6326
        %v6355 = vadd.f32 %v6307, %v6328
        %v6356 = vadd.f32 %v6308, %v6330
        %v6357 = vadd.f32 %v6309, %v6332
        %v6358 = vadd.f32 %v6310, %v6334
        %v6359 = vadd.f32 %v6311, %v6336
        %v6360 = vadd.f32 %v6312, %v6338
        %v6361 = vadd.f32 %v6313, %v6340
        %v6362 = vadd.f32 %v6314, %v6342
        %v6363 = vadd.f32 %v6315, %v6344
        %v6364 = vadd.f32 %v6316, %v6346
        %v6365 = vadd.f32 %v6317, %v6348
        %v6366 = vadd.f32 %v6318, %v6350
        %v6367 = vmul.f32 %v6224, %v5447
        %v6368 = vmul.f32 %v6226, %v5448
        %v6369 = vmul.f32 %v6228, %v5449
        %v6370 = vmul.f32 %v6230, %v5450
        %v6371 = vmul.f32 %v6232, %v5451
        %v6372 = vmul.f32 %v6234, %v5452
        %v6373 = vmul.f32 %v6236, %v5453
        %v6374 = vmul.f32 %v6238, %v5454
        %v6375 = vmul.f32 %v6240, %v5455
        %v6376 = vmul.f32 %v6242, %v5456
        %v6377 = vmul.f32 %v6244, %v5457
        %v6378 = vmul.f32 %v6246, %v5458
        %v6379 = vmul.f32 %v6248, %v5459
        %v6380 = vmul.f32 %v6250, %v5460
        %v6381 = vmul.f32 %v6252, %v5461
        %v6382 = vmul.f32 %v6254, %v5462
        %v6383 = vpack.c.bf16 %v6274, %v6272
        %v6384 = vpack.c.bf16 %v6278, %v6276
        %v6385 = vpack.c.bf16 %v6282, %v6280
        %v6386 = vpack.c.bf16 %v6286, %v6284
        %v6387 = vpack.c.bf16 %v6290, %v6288
        %v6388 = vpack.c.bf16 %v6294, %v6292
        %v6389 = vpack.c.bf16 %v6298, %v6296
        %v6390 = vpack.c.bf16 %v6302, %v6300
        %6399 = vrot.lane.b32.xlu0 %v5998, 32
        %v6400 = vpop.permute.xlu0 %6399
        %6401 = vrot.lane.b32.xlu0 %v5999, 32
        %v6402 = vpop.permute.xlu0 %6401
        %6403 = vrot.lane.b32.xlu0 %v6000, 32
        %v6404 = vpop.permute.xlu0 %6403
        %6405 = vrot.lane.b32.xlu0 %v6001, 32
        %v6406 = vpop.permute.xlu0 %6405
        %6407 = vrot.lane.b32.xlu0 %v6002, 32
        %v6408 = vpop.permute.xlu0 %6407
        %6409 = vrot.lane.b32.xlu0 %v6003, 32
        %v6410 = vpop.permute.xlu0 %6409
        %6411 = vrot.lane.b32.xlu0 %v6004, 32
        %v6412 = vpop.permute.xlu0 %6411
        %6413 = vrot.lane.b32.xlu0 %v6005, 32
        %v6414 = vpop.permute.xlu0 %6413
        %6423 = vmatprep.subr.bf16.mxu0 0
        %6424 = vmatpush1.bf16.msra.mxu0 %v6400
        %6425 = vmatprep.subr.bf16.mxu0 0
        %6426 = vmatpush1.bf16.msra.mxu0 %v6402
        %6427 = vmatprep.subr.bf16.mxu0 0
        %6428 = vmatpush1.bf16.msra.mxu0 %v6404
        %6429 = vmatprep.subr.bf16.mxu0 0
        %6430 = vmatpush1.bf16.msra.mxu0 %v6406
        %6431 = vmatprep.subr.bf16.mxu0 0
        %6432 = vmatpush1.bf16.msra.mxu0 %v6408
        %6433 = vmatprep.subr.bf16.mxu0 0
        %6434 = vmatpush1.bf16.msra.mxu0 %v6410
        %6435 = vmatprep.subr.bf16.mxu0 0
        %6436 = vmatpush1.bf16.msra.mxu0 %v6412
        %6437 = vmatprep.subr.bf16.mxu0 0
        %6438 = vmatpush1.bf16.msra.mxu0 %v6414
        %6439 = vmatprep.subr.bf16.mxu0 0
        %6440 = vmatpush1.bf16.msra.mxu0 0
        %6441 = vmatprep.subr.bf16.mxu0 0
        %6442 = vmatpush1.bf16.msra.mxu0 0
        %6443 = vmatprep.subr.bf16.mxu0 0
        %6444 = vmatpush1.bf16.msra.mxu0 0
        %6445 = vmatprep.subr.bf16.mxu0 0
        %6446 = vmatpush1.bf16.msra.mxu0 0
        %6447 = vmatprep.subr.bf16.mxu0 0
        %6448 = vmatpush1.bf16.msra.mxu0 0
        %6449 = vmatprep.subr.bf16.mxu0 0
        %6450 = vmatpush1.bf16.msra.mxu0 0
        %6451 = vmatprep.subr.bf16.mxu0 0
        %6452 = vmatpush1.bf16.msra.mxu0 0
        %6453 = vmatprep.subr.bf16.mxu0 0
        %6454 = vmatpush1.bf16.msra.mxu0 0
        %6455 = vmatprep.mubr.bf16.mxu0 0
        %6456 = vmatmul.mubr.bf16.gmra.mrb[0].mxu0 %v6383
        %v6457 = vpop.f32.mrb[0].mxu0
        %v6458 = vadd.f32 0.0, %v6457
        %v6459 = vpop.f32.mrb[0].mxu0
        %v6460 = vpop.f32.mrb[0].mxu0
        %v6461 = vadd.f32 0.0, %v6460
        %v6462 = vpop.f32.mrb[0].mxu0
        %6463 = vmatprep.mubr.bf16.mxu0 0
        %6464 = vmatmul.mubr.bf16.gmra.mrb[0].mxu0 %v6384
        %v6465 = vpop.f32.mrb[0].mxu0
        %v6466 = vadd.f32 0.0, %v6465
        %v6467 = vpop.f32.mrb[0].mxu0
        %v6468 = vpop.f32.mrb[0].mxu0
        %v6469 = vadd.f32 0.0, %v6468
        %v6470 = vpop.f32.mrb[0].mxu0
        %6471 = vmatprep.mubr.bf16.mxu0 0
        %6472 = vmatmul.mubr.bf16.gmra.mrb[0].mxu0 %v6385
        %v6473 = vpop.f32.mrb[0].mxu0
        %v6474 = vadd.f32 0.0, %v6473
        %v6475 = vpop.f32.mrb[0].mxu0
        %v6476 = vpop.f32.mrb[0].mxu0
        %v6477 = vadd.f32 0.0, %v6476
        %v6478 = vpop.f32.mrb[0].mxu0
        %6479 = vmatprep.mubr.bf16.mxu0 0
        %6480 = vmatmul.mubr.bf16.gmra.mrb[0].mxu0 %v6386
        %v6481 = vpop.f32.mrb[0].mxu0
        %v6482 = vadd.f32 0.0, %v6481
        %v6483 = vpop.f32.mrb[0].mxu0
        %v6484 = vpop.f32.mrb[0].mxu0
        %v6485 = vadd.f32 0.0, %v6484
        %v6486 = vpop.f32.mrb[0].mxu0
        %6487 = vmatprep.mubr.bf16.mxu0 0
        %6488 = vmatmul.mubr.bf16.gmra.mrb[0].mxu0 %v6387
        %v6489 = vpop.f32.mrb[0].mxu0
        %v6490 = vadd.f32 0.0, %v6489
        %v6491 = vpop.f32.mrb[0].mxu0
        %v6492 = vpop.f32.mrb[0].mxu0
        %v6493 = vadd.f32 0.0, %v6492
        %v6494 = vpop.f32.mrb[0].mxu0
        %6495 = vmatprep.mubr.bf16.mxu0 0
        %6496 = vmatmul.mubr.bf16.gmra.mrb[0].mxu0 %v6388
        %v6497 = vpop.f32.mrb[0].mxu0
        %v6498 = vadd.f32 0.0, %v6497
        %v6499 = vpop.f32.mrb[0].mxu0
        %v6500 = vpop.f32.mrb[0].mxu0
        %v6501 = vadd.f32 0.0, %v6500
        %v6502 = vpop.f32.mrb[0].mxu0
        %6503 = vmatprep.mubr.bf16.mxu0 0
        %6504 = vmatmul.mubr.bf16.gmra.mrb[0].mxu0 %v6389
        %v6505 = vpop.f32.mrb[0].mxu0
        %v6506 = vadd.f32 0.0, %v6505
        %v6507 = vpop.f32.mrb[0].mxu0
        %v6508 = vpop.f32.mrb[0].mxu0
        %v6509 = vadd.f32 0.0, %v6508
        %v6510 = vpop.f32.mrb[0].mxu0
        %6511 = vmatprep.mubr.bf16.mxu0 0
        %6512 = vmatmul.mubr.bf16.gmra.mrb[0].mxu0 %v6390
        %v6513 = vpop.f32.mrb[0].mxu0
        %v6514 = vadd.f32 0.0, %v6513
        %v6515 = vpop.f32.mrb[0].mxu0
        %v6516 = vpop.f32.mrb[0].mxu0
        %v6517 = vadd.f32 0.0, %v6516
        %v6518 = vpop.f32.mrb[0].mxu0
        %6519 = vdwg.mxu0
        %v6520 = vadd.f32 %v6367, %v6458
        %v6521 = vadd.f32 %v6368, %v6461
        %v6522 = vadd.f32 %v6369, %v6466
        %v6523 = vadd.f32 %v6370, %v6469
        %v6524 = vadd.f32 %v6371, %v6474
        %v6525 = vadd.f32 %v6372, %v6477
        %v6526 = vadd.f32 %v6373, %v6482
        %v6527 = vadd.f32 %v6374, %v6485
        %v6528 = vadd.f32 %v6375, %v6490
        %v6529 = vadd.f32 %v6376, %v6493
        %v6530 = vadd.f32 %v6377, %v6498
        %v6531 = vadd.f32 %v6378, %v6501
        %v6532 = vadd.f32 %v6379, %v6506
        %v6533 = vadd.f32 %v6380, %v6509
        %v6534 = vadd.f32 %v6381, %v6514
        %v6535 = vadd.f32 %v6382, %v6517
        %v6536 = vrcp.pop %v6351
        %v6537 = vrcp.pop %v6352
        %v6538 = vrcp.pop %v6353
        %v6539 = vrcp.pop %v6354
        %v6540 = vrcp.pop %v6355
        %v6541 = vrcp.pop %v6356
        %v6542 = vrcp.pop %v6357
        %v6543 = vrcp.pop %v6358
        %v6544 = vrcp.pop %v6359
        %v6545 = vrcp.pop %v6360
        %v6546 = vrcp.pop %v6361
        %v6547 = vrcp.pop %v6362
        %v6548 = vrcp.pop %v6363
        %v6549 = vrcp.pop %v6364
        %v6550 = vrcp.pop %v6365
        %v6551 = vrcp.pop %v6366
        %v6552 = vmul.f32 %v6520, %v6536
        %v6553 = vmul.f32 %v6521, %v6537
        %v6554 = vmul.f32 %v6522, %v6538
        %v6555 = vmul.f32 %v6523, %v6539
        %v6556 = vmul.f32 %v6524, %v6540
        %v6557 = vmul.f32 %v6525, %v6541
        %v6558 = vmul.f32 %v6526, %v6542
        %v6559 = vmul.f32 %v6527, %v6543
        %v6560 = vmul.f32 %v6528, %v6544
        %v6561 = vmul.f32 %v6529, %v6545
        %v6562 = vmul.f32 %v6530, %v6546
        %v6563 = vmul.f32 %v6531, %v6547
        %v6564 = vmul.f32 %v6532, %v6548
        %v6565 = vmul.f32 %v6533, %v6549
        %v6566 = vmul.f32 %v6534, %v6550
        %v6567 = vmul.f32 %v6535, %v6551
        %v6568 = vpack.c.bf16 %v6553, %v6552
        %v6569 = vpack.c.bf16 %v6555, %v6554
        %v6570 = vpack.c.bf16 %v6557, %v6556
        %v6571 = vpack.c.bf16 %v6559, %v6558
        %v6572 = vpack.c.bf16 %v6561, %v6560
        %v6573 = vpack.c.bf16 %v6563, %v6562
        %v6574 = vpack.c.bf16 %v6565, %v6564
        %v6575 = vpack.c.bf16 %v6567, %v6566
        %6584 = vrot.lane.b32.xlu0 %v6568, 96
        %v6585 = vpop.permute.xlu0 %6584
        %6586 = vrot.lane.b32.xlu0 %v6569, 96
        %v6587 = vpop.permute.xlu0 %6586
        %6588 = vrot.lane.b32.xlu0 %v6570, 96
        %v6589 = vpop.permute.xlu0 %6588
        %6590 = vrot.lane.b32.xlu0 %v6571, 96
        %v6591 = vpop.permute.xlu0 %6590
        %6592 = vrot.lane.b32.xlu0 %v6572, 96
        %v6593 = vpop.permute.xlu0 %6592
        %6594 = vrot.lane.b32.xlu0 %v6573, 96
        %v6595 = vpop.permute.xlu0 %6594
        %6596 = vrot.lane.b32.xlu0 %v6574, 96
        %v6597 = vpop.permute.xlu0 %6596
        %6598 = vrot.lane.b32.xlu0 %v6575, 96
        %v6599 = vpop.permute.xlu0 %6598
        %vm6608 = vcmask 1048320
        %6609 = vst.msk [vmem:[#allocation5] sm:$0xff] %vm6608, %v6585
        %6610 = vst.msk [vmem:[#allocation5 + $0x8] sm:$0xff] %vm6608, %v6587
        %6611 = vst.msk [vmem:[#allocation5 + $0x10] sm:$0xff] %vm6608, %v6589
        %6612 = vst.msk [vmem:[#allocation5 + $0x18] sm:$0xff] %vm6608, %v6591
        %6613 = vst.msk [vmem:[#allocation5 + $0x20] sm:$0xff] %vm6608, %v6593
        %6614 = vst.msk [vmem:[#allocation5 + $0x28] sm:$0xff] %vm6608, %v6595
        %6615 = vst.msk [vmem:[#allocation5 + $0x30] sm:$0xff] %vm6608, %v6597
        %6616 = vst.msk [vmem:[#allocation5 + $0x38] sm:$0xff] %vm6608, %v6599
        %v6617 = vld [vmem:[#allocation5] sm:$0xff]
        %v6618 = vld [vmem:[#allocation5 + $0x8] sm:$0xff]
        %v6619 = vld [vmem:[#allocation5 + $0x10] sm:$0xff]
        %v6620 = vld [vmem:[#allocation5 + $0x18] sm:$0xff]
        %v6621 = vld [vmem:[#allocation5 + $0x20] sm:$0xff]
        %v6622 = vld [vmem:[#allocation5 + $0x28] sm:$0xff]
        %v6623 = vld [vmem:[#allocation5 + $0x30] sm:$0xff]
        %v6624 = vld [vmem:[#allocation5 + $0x38] sm:$0xff]
        %v6625 = vld [vmem:[#allocation15] sm:$0xf]
        %v6626 = vld [vmem:[#allocation15 + $0x4] sm:$0xf]
        %v6627 = vld [vmem:[#allocation15 + $0x8] sm:$0xf]
        %v6628 = vld [vmem:[#allocation15 + $0xc] sm:$0xf]
        %v6629 = vld [vmem:[#allocation15 + $0x10] sm:$0xf]
        %v6630 = vld [vmem:[#allocation15 + $0x14] sm:$0xf]
        %v6631 = vld [vmem:[#allocation15 + $0x18] sm:$0xf]
        %v6632 = vld [vmem:[#allocation15 + $0x1c] sm:$0xf]
        %v6633 = vld [vmem:[#allocation15 + $0x20] sm:$0xf]
        %v6634 = vld [vmem:[#allocation15 + $0x24] sm:$0xf]
        %v6635 = vld [vmem:[#allocation15 + $0x28] sm:$0xf]
        %v6636 = vld [vmem:[#allocation15 + $0x2c] sm:$0xf]
        %v6637 = vld [vmem:[#allocation15 + $0x30] sm:$0xf]
        %v6638 = vld [vmem:[#allocation15 + $0x34] sm:$0xf]
        %v6639 = vld [vmem:[#allocation15 + $0x38] sm:$0xf]
        %v6640 = vld [vmem:[#allocation15 + $0x3c] sm:$0xf]
        %v6641 = vld [vmem:[#allocation17] sm:$0x1]
        %v6643 = vlaneseq
        %v6644 = vshrl.u32 %v6643, 7
        %v6645 = vsub.s32 0, %v6644
        %v6646 = vrot.slane %v6641, %v6645
        %v6664 = vunpack.c.l.b16 %v6625
        %v6665 = vunpack.c.l.b16 %v6626
        %v6666 = vunpack.c.l.b16 %v6627
        %v6667 = vunpack.c.l.b16 %v6628
        %v6668 = vunpack.c.l.b16 %v6629
        %v6669 = vunpack.c.l.b16 %v6630
        %v6670 = vunpack.c.l.b16 %v6631
        %v6671 = vunpack.c.l.b16 %v6632
        %v6672 = vunpack.c.l.b16 %v6633
        %v6673 = vunpack.c.l.b16 %v6634
        %v6674 = vunpack.c.l.b16 %v6635
        %v6675 = vunpack.c.l.b16 %v6636
        %v6676 = vunpack.c.l.b16 %v6637
        %v6677 = vunpack.c.l.b16 %v6638
        %v6678 = vunpack.c.l.b16 %v6639
        %v6679 = vunpack.c.l.b16 %v6640
        %v6680 = vpack.c.b16 %v6665, %v6664
        %v6681 = vpack.c.b16 %v6667, %v6666
        %v6682 = vpack.c.b16 %v6669, %v6668
        %v6683 = vpack.c.b16 %v6671, %v6670
        %v6684 = vpack.c.b16 %v6673, %v6672
        %v6685 = vpack.c.b16 %v6675, %v6674
        %v6686 = vpack.c.b16 %v6677, %v6676
        %v6687 = vpack.c.b16 %v6679, %v6678
        %6696 = vmatprep.subr.bf16.mxu0 0
        %6697 = vmatpush1.bf16.msra.mxu0 %v6680
        %6698 = vmatprep.subr.bf16.mxu0 0
        %6699 = vmatpush1.bf16.msra.mxu0 %v6681
        %6700 = vmatprep.subr.bf16.mxu0 0
        %6701 = vmatpush1.bf16.msra.mxu0 %v6682
        %6702 = vmatprep.subr.bf16.mxu0 0
        %6703 = vmatpush1.bf16.msra.mxu0 %v6683
        %6704 = vmatprep.subr.bf16.mxu0 0
        %6705 = vmatpush1.bf16.msra.mxu0 %v6684
        %6706 = vmatprep.subr.bf16.mxu0 0
        %6707 = vmatpush1.bf16.msra.mxu0 %v6685
        %6708 = vmatprep.subr.bf16.mxu0 0
        %6709 = vmatpush1.bf16.msra.mxu0 %v6686
        %6710 = vmatprep.subr.bf16.mxu0 0
        %6711 = vmatpush1.bf16.msra.mxu0 %v6687
        %6712 = vmatprep.subr.bf16.mxu0 0
        %6713 = vmatpush1.bf16.msra.mxu0 0
        %6714 = vmatprep.subr.bf16.mxu0 0
        %6715 = vmatpush1.bf16.msra.mxu0 0
        %6716 = vmatprep.subr.bf16.mxu0 0
        %6717 = vmatpush1.bf16.msra.mxu0 0
        %6718 = vmatprep.subr.bf16.mxu0 0
        %6719 = vmatpush1.bf16.msra.mxu0 0
        %6720 = vmatprep.subr.bf16.mxu0 0
        %6721 = vmatpush1.bf16.msra.mxu0 0
        %6722 = vmatprep.subr.bf16.mxu0 0
        %6723 = vmatpush1.bf16.msra.mxu0 0
        %6724 = vmatprep.subr.bf16.mxu0 0
        %6725 = vmatpush1.bf16.msra.mxu0 0
        %6726 = vmatprep.subr.bf16.mxu0 0
        %6727 = vmatpush1.bf16.msra.mxu0 0
        %6728 = vmatprep.mubr.bf16.mxu0 0
        %6729 = vmatmul.mubr.bf16.gmra.mrb[0].mxu0 %v6617
        %v6730 = vpop.f32.mrb[0].mxu0
        %v6731 = vadd.f32 %v6646, %v6730
        %v6732 = vpop.f32.mrb[0].mxu0
        %v6733 = vpop.f32.mrb[0].mxu0
        %v6734 = vadd.f32 %v6646, %v6733
        %v6735 = vpop.f32.mrb[0].mxu0
        %6736 = vmatprep.mubr.bf16.mxu0 0
        %6737 = vmatmul.mubr.bf16.gmra.mrb[0].mxu0 %v6618
        %v6738 = vpop.f32.mrb[0].mxu0
        %v6739 = vadd.f32 %v6646, %v6738
        %v6740 = vpop.f32.mrb[0].mxu0
        %v6741 = vpop.f32.mrb[0].mxu0
        %v6742 = vadd.f32 %v6646, %v6741
        %v6743 = vpop.f32.mrb[0].mxu0
        %6744 = vmatprep.mubr.bf16.mxu0 0
        %6745 = vmatmul.mubr.bf16.gmra.mrb[0].mxu0 %v6619
        %v6746 = vpop.f32.mrb[0].mxu0
        %v6747 = vadd.f32 %v6646, %v6746
        %v6748 = vpop.f32.mrb[0].mxu0
        %v6749 = vpop.f32.mrb[0].mxu0
        %v6750 = vadd.f32 %v6646, %v6749
        %v6751 = vpop.f32.mrb[0].mxu0
        %6752 = vmatprep.mubr.bf16.mxu0 0
        %6753 = vmatmul.mubr.bf16.gmra.mrb[0].mxu0 %v6620
        %v6754 = vpop.f32.mrb[0].mxu0
        %v6755 = vadd.f32 %v6646, %v6754
        %v6756 = vpop.f32.mrb[0].mxu0
        %v6757 = vpop.f32.mrb[0].mxu0
        %v6758 = vadd.f32 %v6646, %v6757
        %v6759 = vpop.f32.mrb[0].mxu0
        %6760 = vmatprep.mubr.bf16.mxu0 0
        %6761 = vmatmul.mubr.bf16.gmra.mrb[0].mxu0 %v6621
        %v6762 = vpop.f32.mrb[0].mxu0
        %v6763 = vadd.f32 %v6646, %v6762
        %v6764 = vpop.f32.mrb[0].mxu0
        %v6765 = vpop.f32.mrb[0].mxu0
        %v6766 = vadd.f32 %v6646, %v6765
        %v6767 = vpop.f32.mrb[0].mxu0
        %6768 = vmatprep.mubr.bf16.mxu0 0
        %6769 = vmatmul.mubr.bf16.gmra.mrb[0].mxu0 %v6622
        %v6770 = vpop.f32.mrb[0].mxu0
        %v6771 = vadd.f32 %v6646, %v6770
        %v6772 = vpop.f32.mrb[0].mxu0
        %v6773 = vpop.f32.mrb[0].mxu0
        %v6774 = vadd.f32 %v6646, %v6773
        %v6775 = vpop.f32.mrb[0].mxu0
        %6776 = vmatprep.mubr.bf16.mxu0 0
        %6777 = vmatmul.mubr.bf16.gmra.mrb[0].mxu0 %v6623
        %v6778 = vpop.f32.mrb[0].mxu0
        %v6779 = vadd.f32 %v6646, %v6778
        %v6780 = vpop.f32.mrb[0].mxu0
        %v6781 = vpop.f32.mrb[0].mxu0
        %v6782 = vadd.f32 %v6646, %v6781
        %v6783 = vpop.f32.mrb[0].mxu0
        %6784 = vmatprep.mubr.bf16.mxu0 0
        %6785 = vmatmul.mubr.bf16.gmra.mrb[0].mxu0 %v6624
        %v6786 = vpop.f32.mrb[0].mxu0
        %v6787 = vadd.f32 %v6646, %v6786
        %v6788 = vpop.f32.mrb[0].mxu0
        %v6789 = vpop.f32.mrb[0].mxu0
        %v6790 = vadd.f32 %v6646, %v6789
        %v6791 = vpop.f32.mrb[0].mxu0
        %6792 = vdwg.mxu0
        %v6793 = vadd.f32 %v1809, %v6731
        %v6794 = vadd.f32 %v1810, %v6734
        %v6795 = vadd.f32 %v1811, %v6739
        %v6796 = vadd.f32 %v1812, %v6742
        %v6797 = vadd.f32 %v1813, %v6747
        %v6798 = vadd.f32 %v1814, %v6750
        %v6799 = vadd.f32 %v1815, %v6755
        %v6800 = vadd.f32 %v1816, %v6758
        %v6801 = vadd.f32 %v1817, %v6763
        %v6802 = vadd.f32 %v1818, %v6766
        %v6803 = vadd.f32 %v1819, %v6771
        %v6804 = vadd.f32 %v1820, %v6774
        %v6805 = vadd.f32 %v1821, %v6779
        %v6806 = vadd.f32 %v1822, %v6782
        %v6807 = vadd.f32 %v1823, %v6787
        %v6808 = vadd.f32 %v1824, %v6790
        %v6809 = vld [vmem:[#allocation18] sm:$0x1]
        %v6810 = vld [vmem:[#allocation20] sm:$0x1]
        %6811 = vadd.xlane.f32.xlu0 %v6793
        %v6812 = vpop.xlane.xlu0 %6811
        %6813 = vadd.xlane.f32.xlu0 %v6794
        %v6814 = vpop.xlane.xlu0 %6813
        %6815 = vadd.xlane.f32.xlu0 %v6795
        %v6816 = vpop.xlane.xlu0 %6815
        %6817 = vadd.xlane.f32.xlu0 %v6796
        %v6818 = vpop.xlane.xlu0 %6817
        %6819 = vadd.xlane.f32.xlu0 %v6797
        %v6820 = vpop.xlane.xlu0 %6819
        %6821 = vadd.xlane.f32.xlu0 %v6798
        %v6822 = vpop.xlane.xlu0 %6821
        %6823 = vadd.xlane.f32.xlu0 %v6799
        %v6824 = vpop.xlane.xlu0 %6823
        %6825 = vadd.xlane.f32.xlu0 %v6800
        %v6826 = vpop.xlane.xlu0 %6825
        %6827 = vadd.xlane.f32.xlu0 %v6801
        %v6828 = vpop.xlane.xlu0 %6827
        %6829 = vadd.xlane.f32.xlu0 %v6802
        %v6830 = vpop.xlane.xlu0 %6829
        %6831 = vadd.xlane.f32.xlu0 %v6803
        %v6832 = vpop.xlane.xlu0 %6831
        %6833 = vadd.xlane.f32.xlu0 %v6804
        %v6834 = vpop.xlane.xlu0 %6833
        %6835 = vadd.xlane.f32.xlu0 %v6805
        %v6836 = vpop.xlane.xlu0 %6835
        %6837 = vadd.xlane.f32.xlu0 %v6806
        %v6838 = vpop.xlane.xlu0 %6837
        %6839 = vadd.xlane.f32.xlu0 %v6807
        %v6840 = vpop.xlane.xlu0 %6839
        %6841 = vadd.xlane.f32.xlu0 %v6808
        %v6842 = vpop.xlane.xlu0 %6841
        %v6843 = vrcp.pop 128.0
        %v6844 = vmul.f32 %v6812, %v6843
        %v6845 = vmul.f32 %v6814, %v6843
        %v6846 = vmul.f32 %v6816, %v6843
        %v6847 = vmul.f32 %v6818, %v6843
        %v6848 = vmul.f32 %v6820, %v6843
        %v6849 = vmul.f32 %v6822, %v6843
        %v6850 = vmul.f32 %v6824, %v6843
        %v6851 = vmul.f32 %v6826, %v6843
        %v6852 = vmul.f32 %v6828, %v6843
        %v6853 = vmul.f32 %v6830, %v6843
        %v6854 = vmul.f32 %v6832, %v6843
        %v6855 = vmul.f32 %v6834, %v6843
        %v6856 = vmul.f32 %v6836, %v6843
        %v6857 = vmul.f32 %v6838, %v6843
        %v6858 = vmul.f32 %v6840, %v6843
        %v6859 = vmul.f32 %v6842, %v6843
        %v6860 = vsub.f32 %v6793, %v6844
        %v6861 = vsub.f32 %v6794, %v6845
        %v6862 = vsub.f32 %v6795, %v6846
        %v6863 = vsub.f32 %v6796, %v6847
        %v6864 = vsub.f32 %v6797, %v6848
        %v6865 = vsub.f32 %v6798, %v6849
        %v6866 = vsub.f32 %v6799, %v6850
        %v6867 = vsub.f32 %v6800, %v6851
        %v6868 = vsub.f32 %v6801, %v6852
        %v6869 = vsub.f32 %v6802, %v6853
        %v6870 = vsub.f32 %v6803, %v6854
        %v6871 = vsub.f32 %v6804, %v6855
        %v6872 = vsub.f32 %v6805, %v6856
        %v6873 = vsub.f32 %v6806, %v6857
        %v6874 = vsub.f32 %v6807, %v6858
        %v6875 = vsub.f32 %v6808, %v6859
        %v6876 = vmul.f32 %v6860, %v6860
        %v6877 = vmul.f32 %v6861, %v6861
        %v6878 = vmul.f32 %v6862, %v6862
        %v6879 = vmul.f32 %v6863, %v6863
        %v6880 = vmul.f32 %v6864, %v6864
        %v6881 = vmul.f32 %v6865, %v6865
        %v6882 = vmul.f32 %v6866, %v6866
        %v6883 = vmul.f32 %v6867, %v6867
        %v6884 = vmul.f32 %v6868, %v6868
        %v6885 = vmul.f32 %v6869, %v6869
        %v6886 = vmul.f32 %v6870, %v6870
        %v6887 = vmul.f32 %v6871, %v6871
        %v6888 = vmul.f32 %v6872, %v6872
        %v6889 = vmul.f32 %v6873, %v6873
        %v6890 = vmul.f32 %v6874, %v6874
        %v6891 = vmul.f32 %v6875, %v6875
        %6892 = vadd.xlane.f32.xlu0 %v6876
        %v6893 = vpop.xlane.xlu0 %6892
        %6894 = vadd.xlane.f32.xlu0 %v6877
        %v6895 = vpop.xlane.xlu0 %6894
        %6896 = vadd.xlane.f32.xlu0 %v6878
        %v6897 = vpop.xlane.xlu0 %6896
        %6898 = vadd.xlane.f32.xlu0 %v6879
        %v6899 = vpop.xlane.xlu0 %6898
        %6900 = vadd.xlane.f32.xlu0 %v6880
        %v6901 = vpop.xlane.xlu0 %6900
        %6902 = vadd.xlane.f32.xlu0 %v6881
        %v6903 = vpop.xlane.xlu0 %6902
        %6904 = vadd.xlane.f32.xlu0 %v6882
        %v6905 = vpop.xlane.xlu0 %6904
        %6906 = vadd.xlane.f32.xlu0 %v6883
        %v6907 = vpop.xlane.xlu0 %6906
        %6908 = vadd.xlane.f32.xlu0 %v6884
        %v6909 = vpop.xlane.xlu0 %6908
        %6910 = vadd.xlane.f32.xlu0 %v6885
        %v6911 = vpop.xlane.xlu0 %6910
        %6912 = vadd.xlane.f32.xlu0 %v6886
        %v6913 = vpop.xlane.xlu0 %6912
        %6914 = vadd.xlane.f32.xlu0 %v6887
        %v6915 = vpop.xlane.xlu0 %6914
        %6916 = vadd.xlane.f32.xlu0 %v6888
        %v6917 = vpop.xlane.xlu0 %6916
        %6918 = vadd.xlane.f32.xlu0 %v6889
        %v6919 = vpop.xlane.xlu0 %6918
        %6920 = vadd.xlane.f32.xlu0 %v6890
        %v6921 = vpop.xlane.xlu0 %6920
        %6922 = vadd.xlane.f32.xlu0 %v6891
        %v6923 = vpop.xlane.xlu0 %6922
        %v6924 = vmul.f32 %v6893, %v6843
        %v6925 = vmul.f32 %v6895, %v6843
        %v6926 = vmul.f32 %v6897, %v6843
        %v6927 = vmul.f32 %v6899, %v6843
        %v6928 = vmul.f32 %v6901, %v6843
        %v6929 = vmul.f32 %v6903, %v6843
        %v6930 = vmul.f32 %v6905, %v6843
        %v6931 = vmul.f32 %v6907, %v6843
        %v6932 = vmul.f32 %v6909, %v6843
        %v6933 = vmul.f32 %v6911, %v6843
        %v6934 = vmul.f32 %v6913, %v6843
        %v6935 = vmul.f32 %v6915, %v6843
        %v6936 = vmul.f32 %v6917, %v6843
        %v6937 = vmul.f32 %v6919, %v6843
        %v6938 = vmul.f32 %v6921, %v6843
        %v6939 = vmul.f32 %v6923, %v6843
        %v6940 = vadd.f32 %v6924, 1e-05
        %v6941 = vadd.f32 %v6925, 1e-05
        %v6942 = vadd.f32 %v6926, 1e-05
        %v6943 = vadd.f32 %v6927, 1e-05
        %v6944 = vadd.f32 %v6928, 1e-05
        %v6945 = vadd.f32 %v6929, 1e-05
        %v6946 = vadd.f32 %v6930, 1e-05
        %v6947 = vadd.f32 %v6931, 1e-05
        %v6948 = vadd.f32 %v6932, 1e-05
        %v6949 = vadd.f32 %v6933, 1e-05
        %v6950 = vadd.f32 %v6934, 1e-05
        %v6951 = vadd.f32 %v6935, 1e-05
        %v6952 = vadd.f32 %v6936, 1e-05
        %v6953 = vadd.f32 %v6937, 1e-05
        %v6954 = vadd.f32 %v6938, 1e-05
        %v6955 = vadd.f32 %v6939, 1e-05
        %v6956 = vrsqrt.pop %v6940
        %v6957 = vrsqrt.pop %v6941
        %v6958 = vrsqrt.pop %v6942
        %v6959 = vrsqrt.pop %v6943
        %v6960 = vrsqrt.pop %v6944
        %v6961 = vrsqrt.pop %v6945
        %v6962 = vrsqrt.pop %v6946
        %v6963 = vrsqrt.pop %v6947
        %v6964 = vrsqrt.pop %v6948
        %v6965 = vrsqrt.pop %v6949
        %v6966 = vrsqrt.pop %v6950
        %v6967 = vrsqrt.pop %v6951
        %v6968 = vrsqrt.pop %v6952
        %v6969 = vrsqrt.pop %v6953
        %v6970 = vrsqrt.pop %v6954
        %v6971 = vrsqrt.pop %v6955
        %v6972 = vmul.f32 %v6860, %v6956
        %v6973 = vmul.f32 %v6861, %v6957
        %v6974 = vmul.f32 %v6862, %v6958
        %v6975 = vmul.f32 %v6863, %v6959
        %v6976 = vmul.f32 %v6864, %v6960
        %v6977 = vmul.f32 %v6865, %v6961
        %v6978 = vmul.f32 %v6866, %v6962
        %v6979 = vmul.f32 %v6867, %v6963
        %v6980 = vmul.f32 %v6868, %v6964
        %v6981 = vmul.f32 %v6869, %v6965
        %v6982 = vmul.f32 %v6870, %v6966
        %v6983 = vmul.f32 %v6871, %v6967
        %v6984 = vmul.f32 %v6872, %v6968
        %v6985 = vmul.f32 %v6873, %v6969
        %v6986 = vmul.f32 %v6874, %v6970
        %v6987 = vmul.f32 %v6875, %v6971
        %v6989 = vlaneseq
        %v6990 = vshrl.u32 %v6989, 7
        %v6991 = vsub.s32 0, %v6990
        %v6992 = vrot.slane %v6809, %v6991
        %v6994 = vmul.f32 %v6972, %v6992
        %v6995 = vmul.f32 %v6973, %v6992
        %v6996 = vmul.f32 %v6974, %v6992
        %v6997 = vmul.f32 %v6975, %v6992
        %v6998 = vmul.f32 %v6976, %v6992
        %v6999 = vmul.f32 %v6977, %v6992
        %v7000 = vmul.f32 %v6978, %v6992
        %v7001 = vmul.f32 %v6979, %v6992
        %v7002 = vmul.f32 %v6980, %v6992
        %v7003 = vmul.f32 %v6981, %v6992
        %v7004 = vmul.f32 %v6982, %v6992
        %v7005 = vmul.f32 %v6983, %v6992
        %v7006 = vmul.f32 %v6984, %v6992
        %v7007 = vmul.f32 %v6985, %v6992
        %v7008 = vmul.f32 %v6986, %v6992
        %v7009 = vmul.f32 %v6987, %v6992
        %v7011 = vlaneseq
        %v7012 = vshrl.u32 %v7011, 7
        %v7013 = vsub.s32 0, %v7012
        %v7014 = vrot.slane %v6810, %v7013
        %v7016 = vadd.f32 %v6994, %v7014
        %v7017 = vadd.f32 %v6995, %v7014
        %v7018 = vadd.f32 %v6996, %v7014
        %v7019 = vadd.f32 %v6997, %v7014
        %v7020 = vadd.f32 %v6998, %v7014
        %v7021 = vadd.f32 %v6999, %v7014
        %v7022 = vadd.f32 %v7000, %v7014
        %v7023 = vadd.f32 %v7001, %v7014
        %v7024 = vadd.f32 %v7002, %v7014
        %v7025 = vadd.f32 %v7003, %v7014
        %v7026 = vadd.f32 %v7004, %v7014
        %v7027 = vadd.f32 %v7005, %v7014
        %v7028 = vadd.f32 %v7006, %v7014
        %v7029 = vadd.f32 %v7007, %v7014
        %v7030 = vadd.f32 %v7008, %v7014
        %v7031 = vadd.f32 %v7009, %v7014
        %v7032 = vpack.c.bf16 %v7017, %v7016
        %v7033 = vpack.c.bf16 %v7019, %v7018
        %v7034 = vpack.c.bf16 %v7021, %v7020
        %v7035 = vpack.c.bf16 %v7023, %v7022
        %v7036 = vpack.c.bf16 %v7025, %v7024
        %v7037 = vpack.c.bf16 %v7027, %v7026
        %v7038 = vpack.c.bf16 %v7029, %v7028
        %v7039 = vpack.c.bf16 %v7031, %v7030
        %v7040 = vld [vmem:[#allocation21] sm:$0xff]
        %v7041 = vld [vmem:[#allocation21 + $0x8] sm:$0xff]
        %v7042 = vld [vmem:[#allocation21 + $0x10] sm:$0xff]
        %v7043 = vld [vmem:[#allocation21 + $0x18] sm:$0xff]
        %v7044 = vld [vmem:[#allocation21 + $0x20] sm:$0xff]
        %v7045 = vld [vmem:[#allocation21 + $0x28] sm:$0xff]
        %v7046 = vld [vmem:[#allocation21 + $0x30] sm:$0xff]
        %v7047 = vld [vmem:[#allocation21 + $0x38] sm:$0xff]
        %v7048 = vld [vmem:[#allocation21 + $0x40] sm:$0xff]
        %v7049 = vld [vmem:[#allocation21 + $0x48] sm:$0xff]
        %v7050 = vld [vmem:[#allocation21 + $0x50] sm:$0xff]
        %v7051 = vld [vmem:[#allocation21 + $0x58] sm:$0xff]
        %v7052 = vld [vmem:[#allocation21 + $0x60] sm:$0xff]
        %v7053 = vld [vmem:[#allocation21 + $0x68] sm:$0xff]
        %v7054 = vld [vmem:[#allocation21 + $0x70] sm:$0xff]
        %v7055 = vld [vmem:[#allocation21 + $0x78] sm:$0xff]
        %v7056 = vld [vmem:[#allocation21 + $0x80] sm:$0xff]
        %v7057 = vld [vmem:[#allocation21 + $0x88] sm:$0xff]
        %v7058 = vld [vmem:[#allocation21 + $0x90] sm:$0xff]
        %v7059 = vld [vmem:[#allocation21 + $0x98] sm:$0xff]
        %v7060 = vld [vmem:[#allocation21 + $0xa0] sm:$0xff]
        %v7061 = vld [vmem:[#allocation21 + $0xa8] sm:$0xff]
        %v7062 = vld [vmem:[#allocation21 + $0xb0] sm:$0xff]
        %v7063 = vld [vmem:[#allocation21 + $0xb8] sm:$0xff]
        %v7064 = vld [vmem:[#allocation21 + $0xc0] sm:$0xff]
        %v7065 = vld [vmem:[#allocation21 + $0xc8] sm:$0xff]
        %v7066 = vld [vmem:[#allocation21 + $0xd0] sm:$0xff]
        %v7067 = vld [vmem:[#allocation21 + $0xd8] sm:$0xff]
        %v7068 = vld [vmem:[#allocation21 + $0xe0] sm:$0xff]
        %v7069 = vld [vmem:[#allocation21 + $0xe8] sm:$0xff]
        %v7070 = vld [vmem:[#allocation21 + $0xf0] sm:$0xff]
        %v7071 = vld [vmem:[#allocation21 + $0xf8] sm:$0xff]
        %v7072 = vld [vmem:[#allocation23] sm:$0xf]
        %v7074 = vlaneseq
        %v7075 = vshrl.u32 %v7074, 7
        %v7076 = vsub.s32 0, %v7075
        %v7077 = vrot.slane %v7072, %v7076
        %v7078 = vlaneseq
        %v7079 = vshrl.u32 %v7078, 7
        %v7080 = vsub.s32 1, %v7079
        %v7081 = vrot.slane %v7072, %v7080
        %v7082 = vlaneseq
        %v7083 = vshrl.u32 %v7082, 7
        %v7084 = vsub.s32 2, %v7083
        %v7085 = vrot.slane %v7072, %v7084
        %v7086 = vlaneseq
        %v7087 = vshrl.u32 %v7086, 7
        %v7088 = vsub.s32 3, %v7087
        %v7089 = vrot.slane %v7072, %v7088
        %v7126 = vunpack.c.l.b16 %v7040
        %v7127 = vunpack.c.h.b16 %v7040
        %v7128 = vunpack.c.l.b16 %v7041
        %v7129 = vunpack.c.h.b16 %v7041
        %v7130 = vunpack.c.l.b16 %v7042
        %v7131 = vunpack.c.h.b16 %v7042
        %v7132 = vunpack.c.l.b16 %v7043
        %v7133 = vunpack.c.h.b16 %v7043
        %v7134 = vunpack.c.l.b16 %v7044
        %v7135 = vunpack.c.h.b16 %v7044
        %v7136 = vunpack.c.l.b16 %v7045
        %v7137 = vunpack.c.h.b16 %v7045
        %v7138 = vunpack.c.l.b16 %v7046
        %v7139 = vunpack.c.h.b16 %v7046
        %v7140 = vunpack.c.l.b16 %v7047
        %v7141 = vunpack.c.h.b16 %v7047
        %v7142 = vunpack.c.l.b16 %v7048
        %v7143 = vunpack.c.h.b16 %v7048
        %v7144 = vunpack.c.l.b16 %v7049
        %v7145 = vunpack.c.h.b16 %v7049
        %v7146 = vunpack.c.l.b16 %v7050
        %v7147 = vunpack.c.h.b16 %v7050
        %v7148 = vunpack.c.l.b16 %v7051
        %v7149 = vunpack.c.h.b16 %v7051
        %v7150 = vunpack.c.l.b16 %v7052
        %v7151 = vunpack.c.h.b16 %v7052
        %v7152 = vunpack.c.l.b16 %v7053
        %v7153 = vunpack.c.h.b16 %v7053
        %v7154 = vunpack.c.l.b16 %v7054
        %v7155 = vunpack.c.h.b16 %v7054
        %v7156 = vunpack.c.l.b16 %v7055
        %v7157 = vunpack.c.h.b16 %v7055
        %v7158 = vunpack.c.l.b16 %v7056
        %v7159 = vunpack.c.h.b16 %v7056
        %v7160 = vunpack.c.l.b16 %v7057
        %v7161 = vunpack.c.h.b16 %v7057
        %v7162 = vunpack.c.l.b16 %v7058
        %v7163 = vunpack.c.h.b16 %v7058
        %v7164 = vunpack.c.l.b16 %v7059
        %v7165 = vunpack.c.h.b16 %v7059
        %v7166 = vunpack.c.l.b16 %v7060
        %v7167 = vunpack.c.h.b16 %v7060
        %v7168 = vunpack.c.l.b16 %v7061
        %v7169 = vunpack.c.h.b16 %v7061
        %v7170 = vunpack.c.l.b16 %v7062
        %v7171 = vunpack.c.h.b16 %v7062
        %v7172 = vunpack.c.l.b16 %v7063
        %v7173 = vunpack.c.h.b16 %v7063
        %v7174 = vunpack.c.l.b16 %v7064
        %v7175 = vunpack.c.h.b16 %v7064
        %v7176 = vunpack.c.l.b16 %v7065
        %v7177 = vunpack.c.h.b16 %v7065
        %v7178 = vunpack.c.l.b16 %v7066
        %v7179 = vunpack.c.h.b16 %v7066
        %v7180 = vunpack.c.l.b16 %v7067
        %v7181 = vunpack.c.h.b16 %v7067
        %v7182 = vunpack.c.l.b16 %v7068
        %v7183 = vunpack.c.h.b16 %v7068
        %v7184 = vunpack.c.l.b16 %v7069
        %v7185 = vunpack.c.h.b16 %v7069
        %v7186 = vunpack.c.l.b16 %v7070
        %v7187 = vunpack.c.h.b16 %v7070
        %v7188 = vunpack.c.l.b16 %v7071
        %v7189 = vunpack.c.h.b16 %v7071
        %v7190 = vpack.c.b16 %v7130, %v7126
        %v7191 = vpack.c.b16 %v7131, %v7127
        %v7192 = vpack.c.b16 %v7132, %v7128
        %v7193 = vpack.c.b16 %v7133, %v7129
        %v7194 = vpack.c.b16 %v7138, %v7134
        %v7195 = vpack.c.b16 %v7139, %v7135
        %v7196 = vpack.c.b16 %v7140, %v7136
        %v7197 = vpack.c.b16 %v7141, %v7137
        %v7198 = vpack.c.b16 %v7146, %v7142
        %v7199 = vpack.c.b16 %v7147, %v7143
        %v7200 = vpack.c.b16 %v7148, %v7144
        %v7201 = vpack.c.b16 %v7149, %v7145
        %v7202 = vpack.c.b16 %v7154, %v7150
        %v7203 = vpack.c.b16 %v7155, %v7151
        %v7204 = vpack.c.b16 %v7156, %v7152
        %v7205 = vpack.c.b16 %v7157, %v7153
        %v7206 = vpack.c.b16 %v7162, %v7158
        %v7207 = vpack.c.b16 %v7163, %v7159
        %v7208 = vpack.c.b16 %v7164, %v7160
        %v7209 = vpack.c.b16 %v7165, %v7161
        %v7210 = vpack.c.b16 %v7170, %v7166
        %v7211 = vpack.c.b16 %v7171, %v7167
        %v7212 = vpack.c.b16 %v7172, %v7168
        %v7213 = vpack.c.b16 %v7173, %v7169
        %v7214 = vpack.c.b16 %v7178, %v7174
        %v7215 = vpack.c.b16 %v7179, %v7175
        %v7216 = vpack.c.b16 %v7180, %v7176
        %v7217 = vpack.c.b16 %v7181, %v7177
        %v7218 = vpack.c.b16 %v7186, %v7182
        %v7219 = vpack.c.b16 %v7187, %v7183
        %v7220 = vpack.c.b16 %v7188, %v7184
        %v7221 = vpack.c.b16 %v7189, %v7185
        %7254 = vmatprep.subr.bf16.mxu0 %v7191
        %7255 = vmatpush1.bf16.msra.mxu0 %v7190
        %7256 = vmatprep.subr.bf16.mxu0 %v7195
        %7257 = vmatpush1.bf16.msra.mxu0 %v7194
        %7258 = vmatprep.subr.bf16.mxu0 %v7199
        %7259 = vmatpush1.bf16.msra.mxu0 %v7198
        %7260 = vmatprep.subr.bf16.mxu0 %v7203
        %7261 = vmatpush1.bf16.msra.mxu0 %v7202
        %7262 = vmatprep.subr.bf16.mxu0 %v7207
        %7263 = vmatpush1.bf16.msra.mxu0 %v7206
        %7264 = vmatprep.subr.bf16.mxu0 %v7211
        %7265 = vmatpush1.bf16.msra.mxu0 %v7210
        %7266 = vmatprep.subr.bf16.mxu0 %v7215
        %7267 = vmatpush1.bf16.msra.mxu0 %v7214
        %7268 = vmatprep.subr.bf16.mxu0 %v7219
        %7269 = vmatpush1.bf16.msra.mxu0 %v7218
        %7270 = vmatprep.subr.bf16.mxu0 0
        %7271 = vmatpush1.bf16.msra.mxu0 0
        %7272 = vmatprep.subr.bf16.mxu0 0
        %7273 = vmatpush1.bf16.msra.mxu0 0
        %7274 = vmatprep.subr.bf16.mxu0 0
        %7275 = vmatpush1.bf16.msra.mxu0 0
        %7276 = vmatprep.subr.bf16.mxu0 0
        %7277 = vmatpush1.bf16.msra.mxu0 0
        %7278 = vmatprep.subr.bf16.mxu0 0
        %7279 = vmatpush1.bf16.msra.mxu0 0
        %7280 = vmatprep.subr.bf16.mxu0 0
        %7281 = vmatpush1.bf16.msra.mxu0 0
        %7282 = vmatprep.subr.bf16.mxu0 0
        %7283 = vmatpush1.bf16.msra.mxu0 0
        %7284 = vmatprep.subr.bf16.mxu0 0
        %7285 = vmatpush1.bf16.msra.mxu0 0
        %7286 = vmatprep.mubr.bf16.mxu0 0
        %7287 = vmatmul.mubr.bf16.gmra.mrb[0].mxu0 %v7032
        %v7288 = vpop.f32.mrb[0].mxu0
        %v7289 = vadd.f32 %v7077, %v7288
        %v7290 = vpop.f32.mrb[0].mxu0
        %v7291 = vadd.f32 %v7081, %v7290
        %v7292 = vpop.f32.mrb[0].mxu0
        %v7293 = vadd.f32 %v7077, %v7292
        %v7294 = vpop.f32.mrb[0].mxu0
        %v7295 = vadd.f32 %v7081, %v7294
        %7296 = vmatprep.mubr.bf16.mxu0 0
        %7297 = vmatmul.mubr.bf16.gmra.mrb[0].mxu0 %v7033
        %v7298 = vpop.f32.mrb[0].mxu0
        %v7299 = vadd.f32 %v7077, %v7298
        %v7300 = vpop.f32.mrb[0].mxu0
        %v7301 = vadd.f32 %v7081, %v7300
        %v7302 = vpop.f32.mrb[0].mxu0
        %v7303 = vadd.f32 %v7077, %v7302
        %v7304 = vpop.f32.mrb[0].mxu0
        %v7305 = vadd.f32 %v7081, %v7304
        %7306 = vmatprep.mubr.bf16.mxu0 0
        %7307 = vmatmul.mubr.bf16.gmra.mrb[0].mxu0 %v7034
        %v7308 = vpop.f32.mrb[0].mxu0
        %v7309 = vadd.f32 %v7077, %v7308
        %v7310 = vpop.f32.mrb[0].mxu0
        %v7311 = vadd.f32 %v7081, %v7310
        %v7312 = vpop.f32.mrb[0].mxu0
        %v7313 = vadd.f32 %v7077, %v7312
        %v7314 = vpop.f32.mrb[0].mxu0
        %v7315 = vadd.f32 %v7081, %v7314
        %7316 = vmatprep.mubr.bf16.mxu0 0
        %7317 = vmatmul.mubr.bf16.gmra.mrb[0].mxu0 %v7035
        %v7318 = vpop.f32.mrb[0].mxu0
        %v7319 = vadd.f32 %v7077, %v7318
        %v7320 = vpop.f32.mrb[0].mxu0
        %v7321 = vadd.f32 %v7081, %v7320
        %v7322 = vpop.f32.mrb[0].mxu0
        %v7323 = vadd.f32 %v7077, %v7322
        %v7324 = vpop.f32.mrb[0].mxu0
        %v7325 = vadd.f32 %v7081, %v7324
        %7326 = vmatprep.mubr.bf16.mxu0 0
        %7327 = vmatmul.mubr.bf16.gmra.mrb[0].mxu0 %v7036
        %v7328 = vpop.f32.mrb[0].mxu0
        %v7329 = vadd.f32 %v7077, %v7328
        %v7330 = vpop.f32.mrb[0].mxu0
        %v7331 = vadd.f32 %v7081, %v7330
        %v7332 = vpop.f32.mrb[0].mxu0
        %v7333 = vadd.f32 %v7077, %v7332
        %v7334 = vpop.f32.mrb[0].mxu0
        %v7335 = vadd.f32 %v7081, %v7334
        %7336 = vmatprep.mubr.bf16.mxu0 0
        %7337 = vmatmul.mubr.bf16.gmra.mrb[0].mxu0 %v7037
        %v7338 = vpop.f32.mrb[0].mxu0
        %v7339 = vadd.f32 %v7077, %v7338
        %v7340 = vpop.f32.mrb[0].mxu0
        %v7341 = vadd.f32 %v7081, %v7340
        %v7342 = vpop.f32.mrb[0].mxu0
        %v7343 = vadd.f32 %v7077, %v7342
        %v7344 = vpop.f32.mrb[0].mxu0
        %v7345 = vadd.f32 %v7081, %v7344
        %7346 = vmatprep.mubr.bf16.mxu0 0
        %7347 = vmatmul.mubr.bf16.gmra.mrb[0].mxu0 %v7038
        %v7348 = vpop.f32.mrb[0].mxu0
        %v7349 = vadd.f32 %v7077, %v7348
        %v7350 = vpop.f32.mrb[0].mxu0
        %v7351 = vadd.f32 %v7081, %v7350
        %v7352 = vpop.f32.mrb[0].mxu0
        %v7353 = vadd.f32 %v7077, %v7352
        %v7354 = vpop.f32.mrb[0].mxu0
        %v7355 = vadd.f32 %v7081, %v7354
        %7356 = vmatprep.mubr.bf16.mxu0 0
        %7357 = vmatmul.mubr.bf16.gmra.mrb[0].mxu0 %v7039
        %v7358 = vpop.f32.mrb[0].mxu0
        %v7359 = vadd.f32 %v7077, %v7358
        %v7360 = vpop.f32.mrb[0].mxu0
        %v7361 = vadd.f32 %v7081, %v7360
        %v7362 = vpop.f32.mrb[0].mxu0
        %v7363 = vadd.f32 %v7077, %v7362
        %v7364 = vpop.f32.mrb[0].mxu0
        %v7365 = vadd.f32 %v7081, %v7364
        %7366 = vdwg.mxu0
        %7367 = vmatprep.subr.bf16.mxu0 %v7193
        %7368 = vmatpush1.bf16.msra.mxu0 %v7192
        %7369 = vmatprep.subr.bf16.mxu0 %v7197
        %7370 = vmatpush1.bf16.msra.mxu0 %v7196
        %7371 = vmatprep.subr.bf16.mxu0 %v7201
        %7372 = vmatpush1.bf16.msra.mxu0 %v7200
        %7373 = vmatprep.subr.bf16.mxu0 %v7205
        %7374 = vmatpush1.bf16.msra.mxu0 %v7204
        %7375 = vmatprep.subr.bf16.mxu0 %v7209
        %7376 = vmatpush1.bf16.msra.mxu0 %v7208
        %7377 = vmatprep.subr.bf16.mxu0 %v7213
        %7378 = vmatpush1.bf16.msra.mxu0 %v7212
        %7379 = vmatprep.subr.bf16.mxu0 %v7217
        %7380 = vmatpush1.bf16.msra.mxu0 %v7216
        %7381 = vmatprep.subr.bf16.mxu0 %v7221
        %7382 = vmatpush1.bf16.msra.mxu0 %v7220
        %7383 = vmatprep.subr.bf16.mxu0 0
        %7384 = vmatpush1.bf16.msra.mxu0 0
        %7385 = vmatprep.subr.bf16.mxu0 0
        %7386 = vmatpush1.bf16.msra.mxu0 0
        %7387 = vmatprep.subr.bf16.mxu0 0
        %7388 = vmatpush1.bf16.msra.mxu0 0
        %7389 = vmatprep.subr.bf16.mxu0 0
        %7390 = vmatpush1.bf16.msra.mxu0 0
        %7391 = vmatprep.subr.bf16.mxu0 0
        %7392 = vmatpush1.bf16.msra.mxu0 0
        %7393 = vmatprep.subr.bf16.mxu0 0
        %7394 = vmatpush1.bf16.msra.mxu0 0
        %7395 = vmatprep.subr.bf16.mxu0 0
        %7396 = vmatpush1.bf16.msra.mxu0 0
        %7397 = vmatprep.subr.bf16.mxu0 0
        %7398 = vmatpush1.bf16.msra.mxu0 0
        %7399 = vmatprep.mubr.bf16.mxu0 0
        %7400 = vmatmul.mubr.bf16.gmra.mrb[0].mxu0 %v7032
        %v7401 = vpop.f32.mrb[0].mxu0
        %v7402 = vadd.f32 %v7085, %v7401
        %v7403 = vpop.f32.mrb[0].mxu0
        %v7404 = vadd.f32 %v7089, %v7403
        %v7405 = vpop.f32.mrb[0].mxu0
        %v7406 = vadd.f32 %v7085, %v7405
        %v7407 = vpop.f32.mrb[0].mxu0
        %v7408 = vadd.f32 %v7089, %v7407
        %7409 = vmatprep.mubr.bf16.mxu0 0
        %7410 = vmatmul.mubr.bf16.gmra.mrb[0].mxu0 %v7033
        %v7411 = vpop.f32.mrb[0].mxu0
        %v7412 = vadd.f32 %v7085, %v7411
        %v7413 = vpop.f32.mrb[0].mxu0
        %v7414 = vadd.f32 %v7089, %v7413
        %v7415 = vpop.f32.mrb[0].mxu0
        %v7416 = vadd.f32 %v7085, %v7415
        %v7417 = vpop.f32.mrb[0].mxu0
        %v7418 = vadd.f32 %v7089, %v7417
        %7419 = vmatprep.mubr.bf16.mxu0 0
        %7420 = vmatmul.mubr.bf16.gmra.mrb[0].mxu0 %v7034
        %v7421 = vpop.f32.mrb[0].mxu0
        %v7422 = vadd.f32 %v7085, %v7421
        %v7423 = vpop.f32.mrb[0].mxu0
        %v7424 = vadd.f32 %v7089, %v7423
        %v7425 = vpop.f32.mrb[0].mxu0
        %v7426 = vadd.f32 %v7085, %v7425
        %v7427 = vpop.f32.mrb[0].mxu0
        %v7428 = vadd.f32 %v7089, %v7427
        %7429 = vmatprep.mubr.bf16.mxu0 0
        %7430 = vmatmul.mubr.bf16.gmra.mrb[0].mxu0 %v7035
        %v7431 = vpop.f32.mrb[0].mxu0
        %v7432 = vadd.f32 %v7085, %v7431
        %v7433 = vpop.f32.mrb[0].mxu0
        %v7434 = vadd.f32 %v7089, %v7433
        %v7435 = vpop.f32.mrb[0].mxu0
        %v7436 = vadd.f32 %v7085, %v7435
        %v7437 = vpop.f32.mrb[0].mxu0
        %v7438 = vadd.f32 %v7089, %v7437
        %7439 = vmatprep.mubr.bf16.mxu0 0
        %7440 = vmatmul.mubr.bf16.gmra.mrb[0].mxu0 %v7036
        %v7441 = vpop.f32.mrb[0].mxu0
        %v7442 = vadd.f32 %v7085, %v7441
        %v7443 = vpop.f32.mrb[0].mxu0
        %v7444 = vadd.f32 %v7089, %v7443
        %v7445 = vpop.f32.mrb[0].mxu0
        %v7446 = vadd.f32 %v7085, %v7445
        %v7447 = vpop.f32.mrb[0].mxu0
        %v7448 = vadd.f32 %v7089, %v7447
        %7449 = vmatprep.mubr.bf16.mxu0 0
        %7450 = vmatmul.mubr.bf16.gmra.mrb[0].mxu0 %v7037
        %v7451 = vpop.f32.mrb[0].mxu0
        %v7452 = vadd.f32 %v7085, %v7451
        %v7453 = vpop.f32.mrb[0].mxu0
        %v7454 = vadd.f32 %v7089, %v7453
        %v7455 = vpop.f32.mrb[0].mxu0
        %v7456 = vadd.f32 %v7085, %v7455
        %v7457 = vpop.f32.mrb[0].mxu0
        %v7458 = vadd.f32 %v7089, %v7457
        %7459 = vmatprep.mubr.bf16.mxu0 0
        %7460 = vmatmul.mubr.bf16.gmra.mrb[0].mxu0 %v7038
        %v7461 = vpop.f32.mrb[0].mxu0
        %v7462 = vadd.f32 %v7085, %v7461
        %v7463 = vpop.f32.mrb[0].mxu0
        %v7464 = vadd.f32 %v7089, %v7463
        %v7465 = vpop.f32.mrb[0].mxu0
        %v7466 = vadd.f32 %v7085, %v7465
        %v7467 = vpop.f32.mrb[0].mxu0
        %v7468 = vadd.f32 %v7089, %v7467
        %7469 = vmatprep.mubr.bf16.mxu0 0
        %7470 = vmatmul.mubr.bf16.gmra.mrb[0].mxu0 %v7039
        %v7471 = vpop.f32.mrb[0].mxu0
        %v7472 = vadd.f32 %v7085, %v7471
        %v7473 = vpop.f32.mrb[0].mxu0
        %v7474 = vadd.f32 %v7089, %v7473
        %v7475 = vpop.f32.mrb[0].mxu0
        %v7476 = vadd.f32 %v7085, %v7475
        %v7477 = vpop.f32.mrb[0].mxu0
        %v7478 = vadd.f32 %v7089, %v7477
        %7479 = vdwg.mxu0
        %v7480 = vmul.f32 %v7289, %v7289
        %v7481 = vmul.f32 %v7291, %v7291
        %v7482 = vmul.f32 %v7402, %v7402
        %v7483 = vmul.f32 %v7404, %v7404
        %v7484 = vmul.f32 %v7293, %v7293
        %v7485 = vmul.f32 %v7295, %v7295
        %v7486 = vmul.f32 %v7406, %v7406
        %v7487 = vmul.f32 %v7408, %v7408
        %v7488 = vmul.f32 %v7299, %v7299
        %v7489 = vmul.f32 %v7301, %v7301
        %v7490 = vmul.f32 %v7412, %v7412
        %v7491 = vmul.f32 %v7414, %v7414
        %v7492 = vmul.f32 %v7303, %v7303
        %v7493 = vmul.f32 %v7305, %v7305
        %v7494 = vmul.f32 %v7416, %v7416
        %v7495 = vmul.f32 %v7418, %v7418
        %v7496 = vmul.f32 %v7309, %v7309
        %v7497 = vmul.f32 %v7311, %v7311
        %v7498 = vmul.f32 %v7422, %v7422
        %v7499 = vmul.f32 %v7424, %v7424
        %v7500 = vmul.f32 %v7313, %v7313
        %v7501 = vmul.f32 %v7315, %v7315
        %v7502 = vmul.f32 %v7426, %v7426
        %v7503 = vmul.f32 %v7428, %v7428
        %v7504 = vmul.f32 %v7319, %v7319
        %v7505 = vmul.f32 %v7321, %v7321
        %v7506 = vmul.f32 %v7432, %v7432
        %v7507 = vmul.f32 %v7434, %v7434
        %v7508 = vmul.f32 %v7323, %v7323
        %v7509 = vmul.f32 %v7325, %v7325
        %v7510 = vmul.f32 %v7436, %v7436
        %v7511 = vmul.f32 %v7438, %v7438
        %v7512 = vmul.f32 %v7329, %v7329
        %v7513 = vmul.f32 %v7331, %v7331
        %v7514 = vmul.f32 %v7442, %v7442
        %v7515 = vmul.f32 %v7444, %v7444
        %v7516 = vmul.f32 %v7333, %v7333
        %v7517 = vmul.f32 %v7335, %v7335
        %v7518 = vmul.f32 %v7446, %v7446
        %v7519 = vmul.f32 %v7448, %v7448
        %v7520 = vmul.f32 %v7339, %v7339
        %v7521 = vmul.f32 %v7341, %v7341
        %v7522 = vmul.f32 %v7452, %v7452
        %v7523 = vmul.f32 %v7454, %v7454
        %v7524 = vmul.f32 %v7343, %v7343
        %v7525 = vmul.f32 %v7345, %v7345
        %v7526 = vmul.f32 %v7456, %v7456
        %v7527 = vmul.f32 %v7458, %v7458
        %v7528 = vmul.f32 %v7349, %v7349
        %v7529 = vmul.f32 %v7351, %v7351
        %v7530 = vmul.f32 %v7462, %v7462
        %v7531 = vmul.f32 %v7464, %v7464
        %v7532 = vmul.f32 %v7353, %v7353
        %v7533 = vmul.f32 %v7355, %v7355
        %v7534 = vmul.f32 %v7466, %v7466
        %v7535 = vmul.f32 %v7468, %v7468
        %v7536 = vmul.f32 %v7359, %v7359
        %v7537 = vmul.f32 %v7361, %v7361
        %v7538 = vmul.f32 %v7472, %v7472
        %v7539 = vmul.f32 %v7474, %v7474
        %v7540 = vmul.f32 %v7363, %v7363
        %v7541 = vmul.f32 %v7365, %v7365
        %v7542 = vmul.f32 %v7476, %v7476
        %v7543 = vmul.f32 %v7478, %v7478
        %v7544 = vmul.f32 %v7480, 0.044715
        %v7545 = vmul.f32 %v7481, 0.044715
        %v7546 = vmul.f32 %v7482, 0.044715
        %v7547 = vmul.f32 %v7483, 0.044715
        %v7548 = vmul.f32 %v7484, 0.044715
        %v7549 = vmul.f32 %v7485, 0.044715
        %v7550 = vmul.f32 %v7486, 0.044715
        %v7551 = vmul.f32 %v7487, 0.044715
        %v7552 = vmul.f32 %v7488, 0.044715
        %v7553 = vmul.f32 %v7489, 0.044715
        %v7554 = vmul.f32 %v7490, 0.044715
        %v7555 = vmul.f32 %v7491, 0.044715
        %v7556 = vmul.f32 %v7492, 0.044715
        %v7557 = vmul.f32 %v7493, 0.044715
        %v7558 = vmul.f32 %v7494, 0.044715
        %v7559 = vmul.f32 %v7495, 0.044715
        %v7560 = vmul.f32 %v7496, 0.044715
        %v7561 = vmul.f32 %v7497, 0.044715
        %v7562 = vmul.f32 %v7498, 0.044715
        %v7563 = vmul.f32 %v7499, 0.044715
        %v7564 = vmul.f32 %v7500, 0.044715
        %v7565 = vmul.f32 %v7501, 0.044715
        %v7566 = vmul.f32 %v7502, 0.044715
        %v7567 = vmul.f32 %v7503, 0.044715
        %v7568 = vmul.f32 %v7504, 0.044715
        %v7569 = vmul.f32 %v7505, 0.044715
        %v7570 = vmul.f32 %v7506, 0.044715
        %v7571 = vmul.f32 %v7507, 0.044715
        %v7572 = vmul.f32 %v7508, 0.044715
        %v7573 = vmul.f32 %v7509, 0.044715
        %v7574 = vmul.f32 %v7510, 0.044715
        %v7575 = vmul.f32 %v7511, 0.044715
        %v7576 = vmul.f32 %v7512, 0.044715
        %v7577 = vmul.f32 %v7513, 0.044715
        %v7578 = vmul.f32 %v7514, 0.044715
        %v7579 = vmul.f32 %v7515, 0.044715
        %v7580 = vmul.f32 %v7516, 0.044715
        %v7581 = vmul.f32 %v7517, 0.044715
        %v7582 = vmul.f32 %v7518, 0.044715
        %v7583 = vmul.f32 %v7519, 0.044715
        %v7584 = vmul.f32 %v7520, 0.044715
        %v7585 = vmul.f32 %v7521, 0.044715
        %v7586 = vmul.f32 %v7522, 0.044715
        %v7587 = vmul.f32 %v7523, 0.044715
        %v7588 = vmul.f32 %v7524, 0.044715
        %v7589 = vmul.f32 %v7525, 0.044715
        %v7590 = vmul.f32 %v7526, 0.044715
        %v7591 = vmul.f32 %v7527, 0.044715
        %v7592 = vmul.f32 %v7528, 0.044715
        %v7593 = vmul.f32 %v7529, 0.044715
        %v7594 = vmul.f32 %v7530, 0.044715
        %v7595 = vmul.f32 %v7531, 0.044715
        %v7596 = vmul.f32 %v7532, 0.044715
        %v7597 = vmul.f32 %v7533, 0.044715
        %v7598 = vmul.f32 %v7534, 0.044715
        %v7599 = vmul.f32 %v7535, 0.044715
        %v7600 = vmul.f32 %v7536, 0.044715
        %v7601 = vmul.f32 %v7537, 0.044715
        %v7602 = vmul.f32 %v7538, 0.044715
        %v7603 = vmul.f32 %v7539, 0.044715
        %v7604 = vmul.f32 %v7540, 0.044715
        %v7605 = vmul.f32 %v7541, 0.044715
        %v7606 = vmul.f32 %v7542, 0.044715
        %v7607 = vmul.f32 %v7543, 0.044715
        %v7608 = vadd.f32 %v7544, 1.0
        %v7609 = vadd.f32 %v7545, 1.0
        %v7610 = vadd.f32 %v7546, 1.0
        %v7611 = vadd.f32 %v7547, 1.0
        %v7612 = vadd.f32 %v7548, 1.0
        %v7613 = vadd.f32 %v7549, 1.0
        %v7614 = vadd.f32 %v7550, 1.0
        %v7615 = vadd.f32 %v7551, 1.0
        %v7616 = vadd.f32 %v7552, 1.0
        %v7617 = vadd.f32 %v7553, 1.0
        %v7618 = vadd.f32 %v7554, 1.0
        %v7619 = vadd.f32 %v7555, 1.0
        %v7620 = vadd.f32 %v7556, 1.0
        %v7621 = vadd.f32 %v7557, 1.0
        %v7622 = vadd.f32 %v7558, 1.0
        %v7623 = vadd.f32 %v7559, 1.0
        %v7624 = vadd.f32 %v7560, 1.0
        %v7625 = vadd.f32 %v7561, 1.0
        %v7626 = vadd.f32 %v7562, 1.0
        %v7627 = vadd.f32 %v7563, 1.0
        %v7628 = vadd.f32 %v7564, 1.0
        %v7629 = vadd.f32 %v7565, 1.0
        %v7630 = vadd.f32 %v7566, 1.0
        %v7631 = vadd.f32 %v7567, 1.0
        %v7632 = vadd.f32 %v7568, 1.0
        %v7633 = vadd.f32 %v7569, 1.0
        %v7634 = vadd.f32 %v7570, 1.0
        %v7635 = vadd.f32 %v7571, 1.0
        %v7636 = vadd.f32 %v7572, 1.0
        %v7637 = vadd.f32 %v7573, 1.0
        %v7638 = vadd.f32 %v7574, 1.0
        %v7639 = vadd.f32 %v7575, 1.0
        %v7640 = vadd.f32 %v7576, 1.0
        %v7641 = vadd.f32 %v7577, 1.0
        %v7642 = vadd.f32 %v7578, 1.0
        %v7643 = vadd.f32 %v7579, 1.0
        %v7644 = vadd.f32 %v7580, 1.0
        %v7645 = vadd.f32 %v7581, 1.0
        %v7646 = vadd.f32 %v7582, 1.0
        %v7647 = vadd.f32 %v7583, 1.0
        %v7648 = vadd.f32 %v7584, 1.0
        %v7649 = vadd.f32 %v7585, 1.0
        %v7650 = vadd.f32 %v7586, 1.0
        %v7651 = vadd.f32 %v7587, 1.0
        %v7652 = vadd.f32 %v7588, 1.0
        %v7653 = vadd.f32 %v7589, 1.0
        %v7654 = vadd.f32 %v7590, 1.0
        %v7655 = vadd.f32 %v7591, 1.0
        %v7656 = vadd.f32 %v7592, 1.0
        %v7657 = vadd.f32 %v7593, 1.0
        %v7658 = vadd.f32 %v7594, 1.0
        %v7659 = vadd.f32 %v7595, 1.0
        %v7660 = vadd.f32 %v7596, 1.0
        %v7661 = vadd.f32 %v7597, 1.0
        %v7662 = vadd.f32 %v7598, 1.0
        %v7663 = vadd.f32 %v7599, 1.0
        %v7664 = vadd.f32 %v7600, 1.0
        %v7665 = vadd.f32 %v7601, 1.0
        %v7666 = vadd.f32 %v7602, 1.0
        %v7667 = vadd.f32 %v7603, 1.0
        %v7668 = vadd.f32 %v7604, 1.0
        %v7669 = vadd.f32 %v7605, 1.0
        %v7670 = vadd.f32 %v7606, 1.0
        %v7671 = vadd.f32 %v7607, 1.0
        %v7672 = vmul.f32 %v7289, %v7608
        %v7673 = vmul.f32 %v7291, %v7609
        %v7674 = vmul.f32 %v7402, %v7610
        %v7675 = vmul.f32 %v7404, %v7611
        %v7676 = vmul.f32 %v7293, %v7612
        %v7677 = vmul.f32 %v7295, %v7613
        %v7678 = vmul.f32 %v7406, %v7614
        %v7679 = vmul.f32 %v7408, %v7615
        %v7680 = vmul.f32 %v7299, %v7616
        %v7681 = vmul.f32 %v7301, %v7617
        %v7682 = vmul.f32 %v7412, %v7618
        %v7683 = vmul.f32 %v7414, %v7619
        %v7684 = vmul.f32 %v7303, %v7620
        %v7685 = vmul.f32 %v7305, %v7621
        %v7686 = vmul.f32 %v7416, %v7622
        %v7687 = vmul.f32 %v7418, %v7623
        %v7688 = vmul.f32 %v7309, %v7624
        %v7689 = vmul.f32 %v7311, %v7625
        %v7690 = vmul.f32 %v7422, %v7626
        %v7691 = vmul.f32 %v7424, %v7627
        %v7692 = vmul.f32 %v7313, %v7628
        %v7693 = vmul.f32 %v7315, %v7629
        %v7694 = vmul.f32 %v7426, %v7630
        %v7695 = vmul.f32 %v7428, %v7631
        %v7696 = vmul.f32 %v7319, %v7632
        %v7697 = vmul.f32 %v7321, %v7633
        %v7698 = vmul.f32 %v7432, %v7634
        %v7699 = vmul.f32 %v7434, %v7635
        %v7700 = vmul.f32 %v7323, %v7636
        %v7701 = vmul.f32 %v7325, %v7637
        %v7702 = vmul.f32 %v7436, %v7638
        %v7703 = vmul.f32 %v7438, %v7639
        %v7704 = vmul.f32 %v7329, %v7640
        %v7705 = vmul.f32 %v7331, %v7641
        %v7706 = vmul.f32 %v7442, %v7642
        %v7707 = vmul.f32 %v7444, %v7643
        %v7708 = vmul.f32 %v7333, %v7644
        %v7709 = vmul.f32 %v7335, %v7645
        %v7710 = vmul.f32 %v7446, %v7646
        %v7711 = vmul.f32 %v7448, %v7647
        %v7712 = vmul.f32 %v7339, %v7648
        %v7713 = vmul.f32 %v7341, %v7649
        %v7714 = vmul.f32 %v7452, %v7650
        %v7715 = vmul.f32 %v7454, %v7651
        %v7716 = vmul.f32 %v7343, %v7652
        %v7717 = vmul.f32 %v7345, %v7653
        %v7718 = vmul.f32 %v7456, %v7654
        %v7719 = vmul.f32 %v7458, %v7655
        %v7720 = vmul.f32 %v7349, %v7656
        %v7721 = vmul.f32 %v7351, %v7657
        %v7722 = vmul.f32 %v7462, %v7658
        %v7723 = vmul.f32 %v7464, %v7659
        %v7724 = vmul.f32 %v7353, %v7660
        %v7725 = vmul.f32 %v7355, %v7661
        %v7726 = vmul.f32 %v7466, %v7662
        %v7727 = vmul.f32 %v7468, %v7663
        %v7728 = vmul.f32 %v7359, %v7664
        %v7729 = vmul.f32 %v7361, %v7665
        %v7730 = vmul.f32 %v7472, %v7666
        %v7731 = vmul.f32 %v7474, %v7667
        %v7732 = vmul.f32 %v7363, %v7668
        %v7733 = vmul.f32 %v7365, %v7669
        %v7734 = vmul.f32 %v7476, %v7670
        %v7735 = vmul.f32 %v7478, %v7671
        %v7736 = vmul.f32 %v7289, 0.5
        %v7737 = vmul.f32 %v7291, 0.5
        %v7738 = vmul.f32 %v7402, 0.5
        %v7739 = vmul.f32 %v7404, 0.5
        %v7740 = vmul.f32 %v7293, 0.5
        %v7741 = vmul.f32 %v7295, 0.5
        %v7742 = vmul.f32 %v7406, 0.5
        %v7743 = vmul.f32 %v7408, 0.5
        %v7744 = vmul.f32 %v7299, 0.5
        %v7745 = vmul.f32 %v7301, 0.5
        %v7746 = vmul.f32 %v7412, 0.5
        %v7747 = vmul.f32 %v7414, 0.5
        %v7748 = vmul.f32 %v7303, 0.5
        %v7749 = vmul.f32 %v7305, 0.5
        %v7750 = vmul.f32 %v7416, 0.5
        %v7751 = vmul.f32 %v7418, 0.5
        %v7752 = vmul.f32 %v7309, 0.5
        %v7753 = vmul.f32 %v7311, 0.5
        %v7754 = vmul.f32 %v7422, 0.5
        %v7755 = vmul.f32 %v7424, 0.5
        %v7756 = vmul.f32 %v7313, 0.5
        %v7757 = vmul.f32 %v7315, 0.5
        %v7758 = vmul.f32 %v7426, 0.5
        %v7759 = vmul.f32 %v7428, 0.5
        %v7760 = vmul.f32 %v7319, 0.5
        %v7761 = vmul.f32 %v7321, 0.5
        %v7762 = vmul.f32 %v7432, 0.5
        %v7763 = vmul.f32 %v7434, 0.5
        %v7764 = vmul.f32 %v7323, 0.5
        %v7765 = vmul.f32 %v7325, 0.5
        %v7766 = vmul.f32 %v7436, 0.5
        %v7767 = vmul.f32 %v7438, 0.5
        %v7768 = vmul.f32 %v7329, 0.5
        %v7769 = vmul.f32 %v7331, 0.5
        %v7770 = vmul.f32 %v7442, 0.5
        %v7771 = vmul.f32 %v7444, 0.5
        %v7772 = vmul.f32 %v7333, 0.5
        %v7773 = vmul.f32 %v7335, 0.5
        %v7774 = vmul.f32 %v7446, 0.5
        %v7775 = vmul.f32 %v7448, 0.5
        %v7776 = vmul.f32 %v7339, 0.5
        %v7777 = vmul.f32 %v7341, 0.5
        %v7778 = vmul.f32 %v7452, 0.5
        %v7779 = vmul.f32 %v7454, 0.5
        %v7780 = vmul.f32 %v7343, 0.5
        %v7781 = vmul.f32 %v7345, 0.5
        %v7782 = vmul.f32 %v7456, 0.5
        %v7783 = vmul.f32 %v7458, 0.5
        %v7784 = vmul.f32 %v7349, 0.5
        %v7785 = vmul.f32 %v7351, 0.5
        %v7786 = vmul.f32 %v7462, 0.5
        %v7787 = vmul.f32 %v7464, 0.5
        %v7788 = vmul.f32 %v7353, 0.5
        %v7789 = vmul.f32 %v7355, 0.5
        %v7790 = vmul.f32 %v7466, 0.5
        %v7791 = vmul.f32 %v7468, 0.5
        %v7792 = vmul.f32 %v7359, 0.5
        %v7793 = vmul.f32 %v7361, 0.5
        %v7794 = vmul.f32 %v7472, 0.5
        %v7795 = vmul.f32 %v7474, 0.5
        %v7796 = vmul.f32 %v7363, 0.5
        %v7797 = vmul.f32 %v7365, 0.5
        %v7798 = vmul.f32 %v7476, 0.5
        %v7799 = vmul.f32 %v7478, 0.5
        %v7800 = vmul.f32 %v7672, 0.7978846
        %v7801 = vmul.f32 %v7673, 0.7978846
        %v7802 = vmul.f32 %v7674, 0.7978846
        %v7803 = vmul.f32 %v7675, 0.7978846
        %v7804 = vmul.f32 %v7676, 0.7978846
        %v7805 = vmul.f32 %v7677, 0.7978846
        %v7806 = vmul.f32 %v7678, 0.7978846
        %v7807 = vmul.f32 %v7679, 0.7978846
        %v7808 = vmul.f32 %v7680, 0.7978846
        %v7809 = vmul.f32 %v7681, 0.7978846
        %v7810 = vmul.f32 %v7682, 0.7978846
        %v7811 = vmul.f32 %v7683, 0.7978846
        %v7812 = vmul.f32 %v7684, 0.7978846
        %v7813 = vmul.f32 %v7685, 0.7978846
        %v7814 = vmul.f32 %v7686, 0.7978846
        %v7815 = vmul.f32 %v7687, 0.7978846
        %v7816 = vmul.f32 %v7688, 0.7978846
        %v7817 = vmul.f32 %v7689, 0.7978846
        %v7818 = vmul.f32 %v7690, 0.7978846
        %v7819 = vmul.f32 %v7691, 0.7978846
        %v7820 = vmul.f32 %v7692, 0.7978846
        %v7821 = vmul.f32 %v7693, 0.7978846
        %v7822 = vmul.f32 %v7694, 0.7978846
        %v7823 = vmul.f32 %v7695, 0.7978846
        %v7824 = vmul.f32 %v7696, 0.7978846
        %v7825 = vmul.f32 %v7697, 0.7978846
        %v7826 = vmul.f32 %v7698, 0.7978846
        %v7827 = vmul.f32 %v7699, 0.7978846
        %v7828 = vmul.f32 %v7700, 0.7978846
        %v7829 = vmul.f32 %v7701, 0.7978846
        %v7830 = vmul.f32 %v7702, 0.7978846
        %v7831 = vmul.f32 %v7703, 0.7978846
        %v7832 = vmul.f32 %v7704, 0.7978846
        %v7833 = vmul.f32 %v7705, 0.7978846
        %v7834 = vmul.f32 %v7706, 0.7978846
        %v7835 = vmul.f32 %v7707, 0.7978846
        %v7836 = vmul.f32 %v7708, 0.7978846
        %v7837 = vmul.f32 %v7709, 0.7978846
        %v7838 = vmul.f32 %v7710, 0.7978846
        %v7839 = vmul.f32 %v7711, 0.7978846
        %v7840 = vmul.f32 %v7712, 0.7978846
        %v7841 = vmul.f32 %v7713, 0.7978846
        %v7842 = vmul.f32 %v7714, 0.7978846
        %v7843 = vmul.f32 %v7715, 0.7978846
        %v7844 = vmul.f32 %v7716, 0.7978846
        %v7845 = vmul.f32 %v7717, 0.7978846
        %v7846 = vmul.f32 %v7718, 0.7978846
        %v7847 = vmul.f32 %v7719, 0.7978846
        %v7848 = vmul.f32 %v7720, 0.7978846
        %v7849 = vmul.f32 %v7721, 0.7978846
        %v7850 = vmul.f32 %v7722, 0.7978846
        %v7851 = vmul.f32 %v7723, 0.7978846
        %v7852 = vmul.f32 %v7724, 0.7978846
        %v7853 = vmul.f32 %v7725, 0.7978846
        %v7854 = vmul.f32 %v7726, 0.7978846
        %v7855 = vmul.f32 %v7727, 0.7978846
        %v7856 = vmul.f32 %v7728, 0.7978846
        %v7857 = vmul.f32 %v7729, 0.7978846
        %v7858 = vmul.f32 %v7730, 0.7978846
        %v7859 = vmul.f32 %v7731, 0.7978846
        %v7860 = vmul.f32 %v7732, 0.7978846
        %v7861 = vmul.f32 %v7733, 0.7978846
        %v7862 = vmul.f32 %v7734, 0.7978846
        %v7863 = vmul.f32 %v7735, 0.7978846
        %v7864 = vtanh.pop %v7800
        %v7865 = vtanh.pop %v7801
        %v7866 = vtanh.pop %v7802
        %v7867 = vtanh.pop %v7803
        %v7868 = vtanh.pop %v7804
        %v7869 = vtanh.pop %v7805
        %v7870 = vtanh.pop %v7806
        %v7871 = vtanh.pop %v7807
        %v7872 = vtanh.pop %v7808
        %v7873 = vtanh.pop %v7809
        %v7874 = vtanh.pop %v7810
        %v7875 = vtanh.pop %v7811
        %v7876 = vtanh.pop %v7812
        %v7877 = vtanh.pop %v7813
        %v7878 = vtanh.pop %v7814
        %v7879 = vtanh.pop %v7815
        %v7880 = vtanh.pop %v7816
        %v7881 = vtanh.pop %v7817
        %v7882 = vtanh.pop %v7818
        %v7883 = vtanh.pop %v7819
        %v7884 = vtanh.pop %v7820
        %v7885 = vtanh.pop %v7821
        %v7886 = vtanh.pop %v7822
        %v7887 = vtanh.pop %v7823
        %v7888 = vtanh.pop %v7824
        %v7889 = vtanh.pop %v7825
        %v7890 = vtanh.pop %v7826
        %v7891 = vtanh.pop %v7827
        %v7892 = vtanh.pop %v7828
        %v7893 = vtanh.pop %v7829
        %v7894 = vtanh.pop %v7830
        %v7895 = vtanh.pop %v7831
        %v7896 = vtanh.pop %v7832
        %v7897 = vtanh.pop %v7833
        %v7898 = vtanh.pop %v7834
        %v7899 = vtanh.pop %v7835
        %v7900 = vtanh.pop %v7836
        %v7901 = vtanh.pop %v7837
        %v7902 = vtanh.pop %v7838
        %v7903 = vtanh.pop %v7839
        %v7904 = vtanh.pop %v7840
        %v7905 = vtanh.pop %v7841
        %v7906 = vtanh.pop %v7842
        %v7907 = vtanh.pop %v7843
        %v7908 = vtanh.pop %v7844
        %v7909 = vtanh.pop %v7845
        %v7910 = vtanh.pop %v7846
        %v7911 = vtanh.pop %v7847
        %v7912 = vtanh.pop %v7848
        %v7913 = vtanh.pop %v7849
        %v7914 = vtanh.pop %v7850
        %v7915 = vtanh.pop %v7851
        %v7916 = vtanh.pop %v7852
        %v7917 = vtanh.pop %v7853
        %v7918 = vtanh.pop %v7854
        %v7919 = vtanh.pop %v7855
        %v7920 = vtanh.pop %v7856
        %v7921 = vtanh.pop %v7857
        %v7922 = vtanh.pop %v7858
        %v7923 = vtanh.pop %v7859
        %v7924 = vtanh.pop %v7860
        %v7925 = vtanh.pop %v7861
        %v7926 = vtanh.pop %v7862
        %v7927 = vtanh.pop %v7863
        %v7928 = vadd.f32 %v7864, 1.0
        %v7929 = vadd.f32 %v7865, 1.0
        %v7930 = vadd.f32 %v7866, 1.0
        %v7931 = vadd.f32 %v7867, 1.0
        %v7932 = vadd.f32 %v7868, 1.0
        %v7933 = vadd.f32 %v7869, 1.0
        %v7934 = vadd.f32 %v7870, 1.0
        %v7935 = vadd.f32 %v7871, 1.0
        %v7936 = vadd.f32 %v7872, 1.0
        %v7937 = vadd.f32 %v7873, 1.0
        %v7938 = vadd.f32 %v7874, 1.0
        %v7939 = vadd.f32 %v7875, 1.0
        %v7940 = vadd.f32 %v7876, 1.0
        %v7941 = vadd.f32 %v7877, 1.0
        %v7942 = vadd.f32 %v7878, 1.0
        %v7943 = vadd.f32 %v7879, 1.0
        %v7944 = vadd.f32 %v7880, 1.0
        %v7945 = vadd.f32 %v7881, 1.0
        %v7946 = vadd.f32 %v7882, 1.0
        %v7947 = vadd.f32 %v7883, 1.0
        %v7948 = vadd.f32 %v7884, 1.0
        %v7949 = vadd.f32 %v7885, 1.0
        %v7950 = vadd.f32 %v7886, 1.0
        %v7951 = vadd.f32 %v7887, 1.0
        %v7952 = vadd.f32 %v7888, 1.0
        %v7953 = vadd.f32 %v7889, 1.0
        %v7954 = vadd.f32 %v7890, 1.0
        %v7955 = vadd.f32 %v7891, 1.0
        %v7956 = vadd.f32 %v7892, 1.0
        %v7957 = vadd.f32 %v7893, 1.0
        %v7958 = vadd.f32 %v7894, 1.0
        %v7959 = vadd.f32 %v7895, 1.0
        %v7960 = vadd.f32 %v7896, 1.0
        %v7961 = vadd.f32 %v7897, 1.0
        %v7962 = vadd.f32 %v7898, 1.0
        %v7963 = vadd.f32 %v7899, 1.0
        %v7964 = vadd.f32 %v7900, 1.0
        %v7965 = vadd.f32 %v7901, 1.0
        %v7966 = vadd.f32 %v7902, 1.0
        %v7967 = vadd.f32 %v7903, 1.0
        %v7968 = vadd.f32 %v7904, 1.0
        %v7969 = vadd.f32 %v7905, 1.0
        %v7970 = vadd.f32 %v7906, 1.0
        %v7971 = vadd.f32 %v7907, 1.0
        %v7972 = vadd.f32 %v7908, 1.0
        %v7973 = vadd.f32 %v7909, 1.0
        %v7974 = vadd.f32 %v7910, 1.0
        %v7975 = vadd.f32 %v7911, 1.0
        %v7976 = vadd.f32 %v7912, 1.0
        %v7977 = vadd.f32 %v7913, 1.0
        %v7978 = vadd.f32 %v7914, 1.0
        %v7979 = vadd.f32 %v7915, 1.0
        %v7980 = vadd.f32 %v7916, 1.0
        %v7981 = vadd.f32 %v7917, 1.0
        %v7982 = vadd.f32 %v7918, 1.0
        %v7983 = vadd.f32 %v7919, 1.0
        %v7984 = vadd.f32 %v7920, 1.0
        %v7985 = vadd.f32 %v7921, 1.0
        %v7986 = vadd.f32 %v7922, 1.0
        %v7987 = vadd.f32 %v7923, 1.0
        %v7988 = vadd.f32 %v7924, 1.0
        %v7989 = vadd.f32 %v7925, 1.0
        %v7990 = vadd.f32 %v7926, 1.0
        %v7991 = vadd.f32 %v7927, 1.0
        %v7992 = vmul.f32 %v7736, %v7928
        %v7993 = vmul.f32 %v7737, %v7929
        %v7994 = vmul.f32 %v7738, %v7930
        %v7995 = vmul.f32 %v7739, %v7931
        %v7996 = vmul.f32 %v7740, %v7932
        %v7997 = vmul.f32 %v7741, %v7933
        %v7998 = vmul.f32 %v7742, %v7934
        %v7999 = vmul.f32 %v7743, %v7935
        %v8000 = vmul.f32 %v7744, %v7936
        %v8001 = vmul.f32 %v7745, %v7937
        %v8002 = vmul.f32 %v7746, %v7938
        %v8003 = vmul.f32 %v7747, %v7939
        %v8004 = vmul.f32 %v7748, %v7940
        %v8005 = vmul.f32 %v7749, %v7941
        %v8006 = vmul.f32 %v7750, %v7942
        %v8007 = vmul.f32 %v7751, %v7943
        %v8008 = vmul.f32 %v7752, %v7944
        %v8009 = vmul.f32 %v7753, %v7945
        %v8010 = vmul.f32 %v7754, %v7946
        %v8011 = vmul.f32 %v7755, %v7947
        %v8012 = vmul.f32 %v7756, %v7948
        %v8013 = vmul.f32 %v7757, %v7949
        %v8014 = vmul.f32 %v7758, %v7950
        %v8015 = vmul.f32 %v7759, %v7951
        %v8016 = vmul.f32 %v7760, %v7952
        %v8017 = vmul.f32 %v7761, %v7953
        %v8018 = vmul.f32 %v7762, %v7954
        %v8019 = vmul.f32 %v7763, %v7955
        %v8020 = vmul.f32 %v7764, %v7956
        %v8021 = vmul.f32 %v7765, %v7957
        %v8022 = vmul.f32 %v7766, %v7958
        %v8023 = vmul.f32 %v7767, %v7959
        %v8024 = vmul.f32 %v7768, %v7960
        %v8025 = vmul.f32 %v7769, %v7961
        %v8026 = vmul.f32 %v7770, %v7962
        %v8027 = vmul.f32 %v7771, %v7963
        %v8028 = vmul.f32 %v7772, %v7964
        %v8029 = vmul.f32 %v7773, %v7965
        %v8030 = vmul.f32 %v7774, %v7966
        %v8031 = vmul.f32 %v7775, %v7967
        %v8032 = vmul.f32 %v7776, %v7968
        %v8033 = vmul.f32 %v7777, %v7969
        %v8034 = vmul.f32 %v7778, %v7970
        %v8035 = vmul.f32 %v7779, %v7971
        %v8036 = vmul.f32 %v7780, %v7972
        %v8037 = vmul.f32 %v7781, %v7973
        %v8038 = vmul.f32 %v7782, %v7974
        %v8039 = vmul.f32 %v7783, %v7975
        %v8040 = vmul.f32 %v7784, %v7976
        %v8041 = vmul.f32 %v7785, %v7977
        %v8042 = vmul.f32 %v7786, %v7978
        %v8043 = vmul.f32 %v7787, %v7979
        %v8044 = vmul.f32 %v7788, %v7980
        %v8045 = vmul.f32 %v7789, %v7981
        %v8046 = vmul.f32 %v7790, %v7982
        %v8047 = vmul.f32 %v7791, %v7983
        %v8048 = vmul.f32 %v7792, %v7984
        %v8049 = vmul.f32 %v7793, %v7985
        %v8050 = vmul.f32 %v7794, %v7986
        %v8051 = vmul.f32 %v7795, %v7987
        %v8052 = vmul.f32 %v7796, %v7988
        %v8053 = vmul.f32 %v7797, %v7989
        %v8054 = vmul.f32 %v7798, %v7990
        %v8055 = vmul.f32 %v7799, %v7991
        %v8056 = vpack.c.bf16 %v7996, %v7992
        %v8057 = vpack.c.bf16 %v7997, %v7993
        %v8058 = vpack.c.bf16 %v7998, %v7994
        %v8059 = vpack.c.bf16 %v7999, %v7995
        %v8060 = vpack.c.bf16 %v8004, %v8000
        %v8061 = vpack.c.bf16 %v8005, %v8001
        %v8062 = vpack.c.bf16 %v8006, %v8002
        %v8063 = vpack.c.bf16 %v8007, %v8003
        %v8064 = vpack.c.bf16 %v8012, %v8008
        %v8065 = vpack.c.bf16 %v8013, %v8009
        %v8066 = vpack.c.bf16 %v8014, %v8010
        %v8067 = vpack.c.bf16 %v8015, %v8011
        %v8068 = vpack.c.bf16 %v8020, %v8016
        %v8069 = vpack.c.bf16 %v8021, %v8017
        %v8070 = vpack.c.bf16 %v8022, %v8018
        %v8071 = vpack.c.bf16 %v8023, %v8019
        %v8072 = vpack.c.bf16 %v8028, %v8024
        %v8073 = vpack.c.bf16 %v8029, %v8025
        %v8074 = vpack.c.bf16 %v8030, %v8026
        %v8075 = vpack.c.bf16 %v8031, %v8027
        %v8076 = vpack.c.bf16 %v8036, %v8032
        %v8077 = vpack.c.bf16 %v8037, %v8033
        %v8078 = vpack.c.bf16 %v8038, %v8034
        %v8079 = vpack.c.bf16 %v8039, %v8035
        %v8080 = vpack.c.bf16 %v8044, %v8040
        %v8081 = vpack.c.bf16 %v8045, %v8041
        %v8082 = vpack.c.bf16 %v8046, %v8042
        %v8083 = vpack.c.bf16 %v8047, %v8043
        %v8084 = vpack.c.bf16 %v8052, %v8048
        %v8085 = vpack.c.bf16 %v8053, %v8049
        %v8086 = vpack.c.bf16 %v8054, %v8050
        %v8087 = vpack.c.bf16 %v8055, %v8051
        %v8088 = vld [vmem:[#allocation24] sm:$0xf]
        %v8089 = vld [vmem:[#allocation24 + $0x4] sm:$0xf]
        %v8090 = vld [vmem:[#allocation24 + $0x8] sm:$0xf]
        %v8091 = vld [vmem:[#allocation24 + $0xc] sm:$0xf]
        %v8092 = vld [vmem:[#allocation24 + $0x10] sm:$0xf]
        %v8093 = vld [vmem:[#allocation24 + $0x14] sm:$0xf]
        %v8094 = vld [vmem:[#allocation24 + $0x18] sm:$0xf]
        %v8095 = vld [vmem:[#allocation24 + $0x1c] sm:$0xf]
        %v8096 = vld [vmem:[#allocation24 + $0x20] sm:$0xf]
        %v8097 = vld [vmem:[#allocation24 + $0x24] sm:$0xf]
        %v8098 = vld [vmem:[#allocation24 + $0x28] sm:$0xf]
        %v8099 = vld [vmem:[#allocation24 + $0x2c] sm:$0xf]
        %v8100 = vld [vmem:[#allocation24 + $0x30] sm:$0xf]
        %v8101 = vld [vmem:[#allocation24 + $0x34] sm:$0xf]
        %v8102 = vld [vmem:[#allocation24 + $0x38] sm:$0xf]
        %v8103 = vld [vmem:[#allocation24 + $0x3c] sm:$0xf]
        %v8104 = vld [vmem:[#allocation24 + $0x40] sm:$0xf]
        %v8105 = vld [vmem:[#allocation24 + $0x44] sm:$0xf]
        %v8106 = vld [vmem:[#allocation24 + $0x48] sm:$0xf]
        %v8107 = vld [vmem:[#allocation24 + $0x4c] sm:$0xf]
        %v8108 = vld [vmem:[#allocation24 + $0x50] sm:$0xf]
        %v8109 = vld [vmem:[#allocation24 + $0x54] sm:$0xf]
        %v8110 = vld [vmem:[#allocation24 + $0x58] sm:$0xf]
        %v8111 = vld [vmem:[#allocation24 + $0x5c] sm:$0xf]
        %v8112 = vld [vmem:[#allocation24 + $0x60] sm:$0xf]
        %v8113 = vld [vmem:[#allocation24 + $0x64] sm:$0xf]
        %v8114 = vld [vmem:[#allocation24 + $0x68] sm:$0xf]
        %v8115 = vld [vmem:[#allocation24 + $0x6c] sm:$0xf]
        %v8116 = vld [vmem:[#allocation24 + $0x70] sm:$0xf]
        %v8117 = vld [vmem:[#allocation24 + $0x74] sm:$0xf]
        %v8118 = vld [vmem:[#allocation24 + $0x78] sm:$0xf]
        %v8119 = vld [vmem:[#allocation24 + $0x7c] sm:$0xf]
        %v8120 = vld [vmem:[#allocation24 + $0x80] sm:$0xf]
        %v8121 = vld [vmem:[#allocation24 + $0x84] sm:$0xf]
        %v8122 = vld [vmem:[#allocation24 + $0x88] sm:$0xf]
        %v8123 = vld [vmem:[#allocation24 + $0x8c] sm:$0xf]
        %v8124 = vld [vmem:[#allocation24 + $0x90] sm:$0xf]
        %v8125 = vld [vmem:[#allocation24 + $0x94] sm:$0xf]
        %v8126 = vld [vmem:[#allocation24 + $0x98] sm:$0xf]
        %v8127 = vld [vmem:[#allocation24 + $0x9c] sm:$0xf]
        %v8128 = vld [vmem:[#allocation24 + $0xa0] sm:$0xf]
        %v8129 = vld [vmem:[#allocation24 + $0xa4] sm:$0xf]
        %v8130 = vld [vmem:[#allocation24 + $0xa8] sm:$0xf]
        %v8131 = vld [vmem:[#allocation24 + $0xac] sm:$0xf]
        %v8132 = vld [vmem:[#allocation24 + $0xb0] sm:$0xf]
        %v8133 = vld [vmem:[#allocation24 + $0xb4] sm:$0xf]
        %v8134 = vld [vmem:[#allocation24 + $0xb8] sm:$0xf]
        %v8135 = vld [vmem:[#allocation24 + $0xbc] sm:$0xf]
        %v8136 = vld [vmem:[#allocation24 + $0xc0] sm:$0xf]
        %v8137 = vld [vmem:[#allocation24 + $0xc4] sm:$0xf]
        %v8138 = vld [vmem:[#allocation24 + $0xc8] sm:$0xf]
        %v8139 = vld [vmem:[#allocation24 + $0xcc] sm:$0xf]
        %v8140 = vld [vmem:[#allocation24 + $0xd0] sm:$0xf]
        %v8141 = vld [vmem:[#allocation24 + $0xd4] sm:$0xf]
        %v8142 = vld [vmem:[#allocation24 + $0xd8] sm:$0xf]
        %v8143 = vld [vmem:[#allocation24 + $0xdc] sm:$0xf]
        %v8144 = vld [vmem:[#allocation24 + $0xe0] sm:$0xf]
        %v8145 = vld [vmem:[#allocation24 + $0xe4] sm:$0xf]
        %v8146 = vld [vmem:[#allocation24 + $0xe8] sm:$0xf]
        %v8147 = vld [vmem:[#allocation24 + $0xec] sm:$0xf]
        %v8148 = vld [vmem:[#allocation24 + $0xf0] sm:$0xf]
        %v8149 = vld [vmem:[#allocation24 + $0xf4] sm:$0xf]
        %v8150 = vld [vmem:[#allocation24 + $0xf8] sm:$0xf]
        %v8151 = vld [vmem:[#allocation24 + $0xfc] sm:$0xf]
        %v8152 = vld [vmem:[#allocation26] sm:$0x1]
        %v8154 = vlaneseq
        %v8155 = vshrl.u32 %v8154, 7
        %v8156 = vsub.s32 0, %v8155
        %v8157 = vrot.slane %v8152, %v8156
        %v8223 = vunpack.c.l.b16 %v8088
        %v8224 = vunpack.c.l.b16 %v8089
        %v8225 = vunpack.c.l.b16 %v8090
        %v8226 = vunpack.c.l.b16 %v8091
        %v8227 = vunpack.c.l.b16 %v8092
        %v8228 = vunpack.c.l.b16 %v8093
        %v8229 = vunpack.c.l.b16 %v8094
        %v8230 = vunpack.c.l.b16 %v8095
        %v8231 = vunpack.c.l.b16 %v8096
        %v8232 = vunpack.c.l.b16 %v8097
        %v8233 = vunpack.c.l.b16 %v8098
        %v8234 = vunpack.c.l.b16 %v8099
        %v8235 = vunpack.c.l.b16 %v8100
        %v8236 = vunpack.c.l.b16 %v8101
        %v8237 = vunpack.c.l.b16 %v8102
        %v8238 = vunpack.c.l.b16 %v8103
        %v8239 = vunpack.c.l.b16 %v8104
        %v8240 = vunpack.c.l.b16 %v8105
        %v8241 = vunpack.c.l.b16 %v8106
        %v8242 = vunpack.c.l.b16 %v8107
        %v8243 = vunpack.c.l.b16 %v8108
        %v8244 = vunpack.c.l.b16 %v8109
        %v8245 = vunpack.c.l.b16 %v8110
        %v8246 = vunpack.c.l.b16 %v8111
        %v8247 = vunpack.c.l.b16 %v8112
        %v8248 = vunpack.c.l.b16 %v8113
        %v8249 = vunpack.c.l.b16 %v8114
        %v8250 = vunpack.c.l.b16 %v8115
        %v8251 = vunpack.c.l.b16 %v8116
        %v8252 = vunpack.c.l.b16 %v8117
        %v8253 = vunpack.c.l.b16 %v8118
        %v8254 = vunpack.c.l.b16 %v8119
        %v8255 = vunpack.c.l.b16 %v8120
        %v8256 = vunpack.c.l.b16 %v8121
        %v8257 = vunpack.c.l.b16 %v8122
        %v8258 = vunpack.c.l.b16 %v8123
        %v8259 = vunpack.c.l.b16 %v8124
        %v8260 = vunpack.c.l.b16 %v8125
        %v8261 = vunpack.c.l.b16 %v8126
        %v8262 = vunpack.c.l.b16 %v8127
        %v8263 = vunpack.c.l.b16 %v8128
        %v8264 = vunpack.c.l.b16 %v8129
        %v8265 = vunpack.c.l.b16 %v8130
        %v8266 = vunpack.c.l.b16 %v8131
        %v8267 = vunpack.c.l.b16 %v8132
        %v8268 = vunpack.c.l.b16 %v8133
        %v8269 = vunpack.c.l.b16 %v8134
        %v8270 = vunpack.c.l.b16 %v8135
        %v8271 = vunpack.c.l.b16 %v8136
        %v8272 = vunpack.c.l.b16 %v8137
        %v8273 = vunpack.c.l.b16 %v8138
        %v8274 = vunpack.c.l.b16 %v8139
        %v8275 = vunpack.c.l.b16 %v8140
        %v8276 = vunpack.c.l.b16 %v8141
        %v8277 = vunpack.c.l.b16 %v8142
        %v8278 = vunpack.c.l.b16 %v8143
        %v8279 = vunpack.c.l.b16 %v8144
        %v8280 = vunpack.c.l.b16 %v8145
        %v8281 = vunpack.c.l.b16 %v8146
        %v8282 = vunpack.c.l.b16 %v8147
        %v8283 = vunpack.c.l.b16 %v8148
        %v8284 = vunpack.c.l.b16 %v8149
        %v8285 = vunpack.c.l.b16 %v8150
        %v8286 = vunpack.c.l.b16 %v8151
        %v8287 = vpack.c.b16 %v8224, %v8223
        %v8288 = vpack.c.b16 %v8226, %v8225
        %v8289 = vpack.c.b16 %v8228, %v8227
        %v8290 = vpack.c.b16 %v8230, %v8229
        %v8291 = vpack.c.b16 %v8232, %v8231
        %v8292 = vpack.c.b16 %v8234, %v8233
        %v8293 = vpack.c.b16 %v8236, %v8235
        %v8294 = vpack.c.b16 %v8238, %v8237
        %v8295 = vpack.c.b16 %v8240, %v8239
        %v8296 = vpack.c.b16 %v8242, %v8241
        %v8297 = vpack.c.b16 %v8244, %v8243
        %v8298 = vpack.c.b16 %v8246, %v8245
        %v8299 = vpack.c.b16 %v8248, %v8247
        %v8300 = vpack.c.b16 %v8250, %v8249
        %v8301 = vpack.c.b16 %v8252, %v8251
        %v8302 = vpack.c.b16 %v8254, %v8253
        %v8303 = vpack.c.b16 %v8256, %v8255
        %v8304 = vpack.c.b16 %v8258, %v8257
        %v8305 = vpack.c.b16 %v8260, %v8259
        %v8306 = vpack.c.b16 %v8262, %v8261
        %v8307 = vpack.c.b16 %v8264, %v8263
        %v8308 = vpack.c.b16 %v8266, %v8265
        %v8309 = vpack.c.b16 %v8268, %v8267
        %v8310 = vpack.c.b16 %v8270, %v8269
        %v8311 = vpack.c.b16 %v8272, %v8271
        %v8312 = vpack.c.b16 %v8274, %v8273
        %v8313 = vpack.c.b16 %v8276, %v8275
        %v8314 = vpack.c.b16 %v8278, %v8277
        %v8315 = vpack.c.b16 %v8280, %v8279
        %v8316 = vpack.c.b16 %v8282, %v8281
        %v8317 = vpack.c.b16 %v8284, %v8283
        %v8318 = vpack.c.b16 %v8286, %v8285
        %8351 = vmatprep.subr.bf16.mxu0 0
        %8352 = vmatpush1.bf16.msra.mxu0 %v8287
        %8353 = vmatprep.subr.bf16.mxu0 0
        %8354 = vmatpush1.bf16.msra.mxu0 %v8288
        %8355 = vmatprep.subr.bf16.mxu0 0
        %8356 = vmatpush1.bf16.msra.mxu0 %v8289
        %8357 = vmatprep.subr.bf16.mxu0 0
        %8358 = vmatpush1.bf16.msra.mxu0 %v8290
        %8359 = vmatprep.subr.bf16.mxu0 0
        %8360 = vmatpush1.bf16.msra.mxu0 %v8291
        %8361 = vmatprep.subr.bf16.mxu0 0
        %8362 = vmatpush1.bf16.msra.mxu0 %v8292
        %8363 = vmatprep.subr.bf16.mxu0 0
        %8364 = vmatpush1.bf16.msra.mxu0 %v8293
        %8365 = vmatprep.subr.bf16.mxu0 0
        %8366 = vmatpush1.bf16.msra.mxu0 %v8294
        %8367 = vmatprep.subr.bf16.mxu0 0
        %8368 = vmatpush1.bf16.msra.mxu0 %v8295
        %8369 = vmatprep.subr.bf16.mxu0 0
        %8370 = vmatpush1.bf16.msra.mxu0 %v8296
        %8371 = vmatprep.subr.bf16.mxu0 0
        %8372 = vmatpush1.bf16.msra.mxu0 %v8297
        %8373 = vmatprep.subr.bf16.mxu0 0
        %8374 = vmatpush1.bf16.msra.mxu0 %v8298
        %8375 = vmatprep.subr.bf16.mxu0 0
        %8376 = vmatpush1.bf16.msra.mxu0 %v8299
        %8377 = vmatprep.subr.bf16.mxu0 0
        %8378 = vmatpush1.bf16.msra.mxu0 %v8300
        %8379 = vmatprep.subr.bf16.mxu0 0
        %8380 = vmatpush1.bf16.msra.mxu0 %v8301
        %8381 = vmatprep.subr.bf16.mxu0 0
        %8382 = vmatpush1.bf16.msra.mxu0 %v8302
        %8383 = vmatprep.mubr.bf16.mxu0 %v8057
        %8384 = vmatmul.mubr.bf16.gmra.mrb[0].mxu0 %v8056
        %v8385 = vpop.f32.mrb[0].mxu0
        %v8386 = vadd.f32 %v8157, %v8385
        %v8387 = vpop.f32.mrb[0].mxu0
        %v8388 = vpop.f32.mrb[0].mxu0
        %v8389 = vadd.f32 %v8157, %v8388
        %v8390 = vpop.f32.mrb[0].mxu0
        %8391 = vmatprep.mubr.bf16.mxu0 %v8061
        %8392 = vmatmul.mubr.bf16.gmra.mrb[0].mxu0 %v8060
        %v8393 = vpop.f32.mrb[0].mxu0
        %v8394 = vadd.f32 %v8157, %v8393
        %v8395 = vpop.f32.mrb[0].mxu0
        %v8396 = vpop.f32.mrb[0].mxu0
        %v8397 = vadd.f32 %v8157, %v8396
        %v8398 = vpop.f32.mrb[0].mxu0
        %8399 = vmatprep.mubr.bf16.mxu0 %v8065
        %8400 = vmatmul.mubr.bf16.gmra.mrb[0].mxu0 %v8064
        %v8401 = vpop.f32.mrb[0].mxu0
        %v8402 = vadd.f32 %v8157, %v8401
        %v8403 = vpop.f32.mrb[0].mxu0
        %v8404 = vpop.f32.mrb[0].mxu0
        %v8405 = vadd.f32 %v8157, %v8404
        %v8406 = vpop.f32.mrb[0].mxu0
        %8407 = vmatprep.mubr.bf16.mxu0 %v8069
        %8408 = vmatmul.mubr.bf16.gmra.mrb[0].mxu0 %v8068
        %v8409 = vpop.f32.mrb[0].mxu0
        %v8410 = vadd.f32 %v8157, %v8409
        %v8411 = vpop.f32.mrb[0].mxu0
        %v8412 = vpop.f32.mrb[0].mxu0
        %v8413 = vadd.f32 %v8157, %v8412
        %v8414 = vpop.f32.mrb[0].mxu0
        %8415 = vmatprep.mubr.bf16.mxu0 %v8073
        %8416 = vmatmul.mubr.bf16.gmra.mrb[0].mxu0 %v8072
        %v8417 = vpop.f32.mrb[0].mxu0
        %v8418 = vadd.f32 %v8157, %v8417
        %v8419 = vpop.f32.mrb[0].mxu0
        %v8420 = vpop.f32.mrb[0].mxu0
        %v8421 = vadd.f32 %v8157, %v8420
        %v8422 = vpop.f32.mrb[0].mxu0
        %8423 = vmatprep.mubr.bf16.mxu0 %v8077
        %8424 = vmatmul.mubr.bf16.gmra.mrb[0].mxu0 %v8076
        %v8425 = vpop.f32.mrb[0].mxu0
        %v8426 = vadd.f32 %v8157, %v8425
        %v8427 = vpop.f32.mrb[0].mxu0
        %v8428 = vpop.f32.mrb[0].mxu0
        %v8429 = vadd.f32 %v8157, %v8428
        %v8430 = vpop.f32.mrb[0].mxu0
        %8431 = vmatprep.mubr.bf16.mxu0 %v8081
        %8432 = vmatmul.mubr.bf16.gmra.mrb[0].mxu0 %v8080
        %v8433 = vpop.f32.mrb[0].mxu0
        %v8434 = vadd.f32 %v8157, %v8433
        %v8435 = vpop.f32.mrb[0].mxu0
        %v8436 = vpop.f32.mrb[0].mxu0
        %v8437 = vadd.f32 %v8157, %v8436
        %v8438 = vpop.f32.mrb[0].mxu0
        %8439 = vmatprep.mubr.bf16.mxu0 %v8085
        %8440 = vmatmul.mubr.bf16.gmra.mrb[0].mxu0 %v8084
        %v8441 = vpop.f32.mrb[0].mxu0
        %v8442 = vadd.f32 %v8157, %v8441
        %v8443 = vpop.f32.mrb[0].mxu0
        %v8444 = vpop.f32.mrb[0].mxu0
        %v8445 = vadd.f32 %v8157, %v8444
        %v8446 = vpop.f32.mrb[0].mxu0
        %8447 = vdwg.mxu0
        %8448 = vmatprep.subr.bf16.mxu0 0
        %8449 = vmatpush1.bf16.msra.mxu0 %v8303
        %8450 = vmatprep.subr.bf16.mxu0 0
        %8451 = vmatpush1.bf16.msra.mxu0 %v8304
        %8452 = vmatprep.subr.bf16.mxu0 0
        %8453 = vmatpush1.bf16.msra.mxu0 %v8305
        %8454 = vmatprep.subr.bf16.mxu0 0
        %8455 = vmatpush1.bf16.msra.mxu0 %v8306
        %8456 = vmatprep.subr.bf16.mxu0 0
        %8457 = vmatpush1.bf16.msra.mxu0 %v8307
        %8458 = vmatprep.subr.bf16.mxu0 0
        %8459 = vmatpush1.bf16.msra.mxu0 %v8308
        %8460 = vmatprep.subr.bf16.mxu0 0
        %8461 = vmatpush1.bf16.msra.mxu0 %v8309
        %8462 = vmatprep.subr.bf16.mxu0 0
        %8463 = vmatpush1.bf16.msra.mxu0 %v8310
        %8464 = vmatprep.subr.bf16.mxu0 0
        %8465 = vmatpush1.bf16.msra.mxu0 %v8311
        %8466 = vmatprep.subr.bf16.mxu0 0
        %8467 = vmatpush1.bf16.msra.mxu0 %v8312
        %8468 = vmatprep.subr.bf16.mxu0 0
        %8469 = vmatpush1.bf16.msra.mxu0 %v8313
        %8470 = vmatprep.subr.bf16.mxu0 0
        %8471 = vmatpush1.bf16.msra.mxu0 %v8314
        %8472 = vmatprep.subr.bf16.mxu0 0
        %8473 = vmatpush1.bf16.msra.mxu0 %v8315
        %8474 = vmatprep.subr.bf16.mxu0 0
        %8475 = vmatpush1.bf16.msra.mxu0 %v8316
        %8476 = vmatprep.subr.bf16.mxu0 0
        %8477 = vmatpush1.bf16.msra.mxu0 %v8317
        %8478 = vmatprep.subr.bf16.mxu0 0
        %8479 = vmatpush1.bf16.msra.mxu0 %v8318
        %8480 = vmatprep.mubr.bf16.mxu0 %v8059
        %8481 = vmatmul.mubr.bf16.gmra.mrb[0].mxu0 %v8058
        %v8482 = vpop.f32.mrb[0].mxu0
        %v8483 = vadd.f32 %v8386, %v8482
        %v8484 = vpop.f32.mrb[0].mxu0
        %v8485 = vpop.f32.mrb[0].mxu0
        %v8486 = vadd.f32 %v8389, %v8485
        %v8487 = vpop.f32.mrb[0].mxu0
        %8488 = vmatprep.mubr.bf16.mxu0 %v8063
        %8489 = vmatmul.mubr.bf16.gmra.mrb[0].mxu0 %v8062
        %v8490 = vpop.f32.mrb[0].mxu0
        %v8491 = vadd.f32 %v8394, %v8490
        %v8492 = vpop.f32.mrb[0].mxu0
        %v8493 = vpop.f32.mrb[0].mxu0
        %v8494 = vadd.f32 %v8397, %v8493
        %v8495 = vpop.f32.mrb[0].mxu0
        %8496 = vmatprep.mubr.bf16.mxu0 %v8067
        %8497 = vmatmul.mubr.bf16.gmra.mrb[0].mxu0 %v8066
        %v8498 = vpop.f32.mrb[0].mxu0
        %v8499 = vadd.f32 %v8402, %v8498
        %v8500 = vpop.f32.mrb[0].mxu0
        %v8501 = vpop.f32.mrb[0].mxu0
        %v8502 = vadd.f32 %v8405, %v8501
        %v8503 = vpop.f32.mrb[0].mxu0
        %8504 = vmatprep.mubr.bf16.mxu0 %v8071
        %8505 = vmatmul.mubr.bf16.gmra.mrb[0].mxu0 %v8070
        %v8506 = vpop.f32.mrb[0].mxu0
        %v8507 = vadd.f32 %v8410, %v8506
        %v8508 = vpop.f32.mrb[0].mxu0
        %v8509 = vpop.f32.mrb[0].mxu0
        %v8510 = vadd.f32 %v8413, %v8509
        %v8511 = vpop.f32.mrb[0].mxu0
        %8512 = vmatprep.mubr.bf16.mxu0 %v8075
        %8513 = vmatmul.mubr.bf16.gmra.mrb[0].mxu0 %v8074
        %v8514 = vpop.f32.mrb[0].mxu0
        %v8515 = vadd.f32 %v8418, %v8514
        %v8516 = vpop.f32.mrb[0].mxu0
        %v8517 = vpop.f32.mrb[0].mxu0
        %v8518 = vadd.f32 %v8421, %v8517
        %v8519 = vpop.f32.mrb[0].mxu0
        %8520 = vmatprep.mubr.bf16.mxu0 %v8079
        %8521 = vmatmul.mubr.bf16.gmra.mrb[0].mxu0 %v8078
        %v8522 = vpop.f32.mrb[0].mxu0
        %v8523 = vadd.f32 %v8426, %v8522
        %v8524 = vpop.f32.mrb[0].mxu0
        %v8525 = vpop.f32.mrb[0].mxu0
        %v8526 = vadd.f32 %v8429, %v8525
        %v8527 = vpop.f32.mrb[0].mxu0
        %8528 = vmatprep.mubr.bf16.mxu0 %v8083
        %8529 = vmatmul.mubr.bf16.gmra.mrb[0].mxu0 %v8082
        %v8530 = vpop.f32.mrb[0].mxu0
        %v8531 = vadd.f32 %v8434, %v8530
        %v8532 = vpop.f32.mrb[0].mxu0
        %v8533 = vpop.f32.mrb[0].mxu0
        %v8534 = vadd.f32 %v8437, %v8533
        %v8535 = vpop.f32.mrb[0].mxu0
        %8536 = vmatprep.mubr.bf16.mxu0 %v8087
        %8537 = vmatmul.mubr.bf16.gmra.mrb[0].mxu0 %v8086
        %v8538 = vpop.f32.mrb[0].mxu0
        %v8539 = vadd.f32 %v8442, %v8538
        %v8540 = vpop.f32.mrb[0].mxu0
        %v8541 = vpop.f32.mrb[0].mxu0
        %v8542 = vadd.f32 %v8445, %v8541
        %v8543 = vpop.f32.mrb[0].mxu0
        %8544 = vdwg.mxu0
        %v8545 = vadd.f32 %v6793, %v8483
        %v8546 = vadd.f32 %v6794, %v8486
        %v8547 = vadd.f32 %v6795, %v8491
        %v8548 = vadd.f32 %v6796, %v8494
        %v8549 = vadd.f32 %v6797, %v8499
        %v8550 = vadd.f32 %v6798, %v8502
        %v8551 = vadd.f32 %v6799, %v8507
        %v8552 = vadd.f32 %v6800, %v8510
        %v8553 = vadd.f32 %v6801, %v8515
        %v8554 = vadd.f32 %v6802, %v8518
        %v8555 = vadd.f32 %v6803, %v8523
        %v8556 = vadd.f32 %v6804, %v8526
        %v8557 = vadd.f32 %v6805, %v8531
        %v8558 = vadd.f32 %v6806, %v8534
        %v8559 = vadd.f32 %v6807, %v8539
        %v8560 = vadd.f32 %v6808, %v8542
        %8561 = vst [vmem:[%s630] sm:$0xff] %v8545
        %8562 = vst [vmem:[%s630 + $0x8] sm:$0xff] %v8546
        %8563 = vst [vmem:[%s630 + $0x10] sm:$0xff] %v8547
        %8564 = vst [vmem:[%s630 + $0x18] sm:$0xff] %v8548
        %8565 = vst [vmem:[%s630 + $0x20] sm:$0xff] %v8549
        %8566 = vst [vmem:[%s630 + $0x28] sm:$0xff] %v8550
        %8567 = vst [vmem:[%s630 + $0x30] sm:$0xff] %v8551
        %8568 = vst [vmem:[%s630 + $0x38] sm:$0xff] %v8552
        %8569 = vst [vmem:[%s630 + $0x40] sm:$0xff] %v8553
        %8570 = vst [vmem:[%s630 + $0x48] sm:$0xff] %v8554
        %8571 = vst [vmem:[%s630 + $0x50] sm:$0xff] %v8555
        %8572 = vst [vmem:[%s630 + $0x58] sm:$0xff] %v8556
        %8573 = vst [vmem:[%s630 + $0x60] sm:$0xff] %v8557
        %8574 = vst [vmem:[%s630 + $0x68] sm:$0xff] %v8558
        %8575 = vst [vmem:[%s630 + $0x70] sm:$0xff] %v8559
        %8576 = vst [vmem:[%s630 + $0x78] sm:$0xff] %v8560
        %s8577 = sand.u32 %s336, 1
        %s8578 = scalar_lea.sflag [#allocation8], %s8577
        %s8579 = sand.u32 %s336, 1
        %s8580 = smul.addr %s8579, 128
        %s8581 = scalar_lea.vmem [#allocation27], %s8580
        // Predicated region
        $region157: #{tpu_custom_call.1} parent=71 // pred_check
          %p8582 = pneg %p346
        $region158: #{tpu_custom_call.1} parent=71 // pred_check_branch
          %8584 = sbr.rel (%p8582) target = $region160
        $region159: #{tpu_custom_call.1} parent=71 // pred_region
          %s8585 = smul.u32 16, %s41
          %s8587 = ssub.s32 2048, 2048
          %8588 = vsyncadd %s8578, %s8587
          %s8589 = smul.addr %s40, 32
          %s8590 = sadd.s32 %s8585, %s8589
          %s8591 = smul.addr %s8590, 128
          %s8592 = scalar_lea.hbm %s13, %s8591
          %s8593 = sshll.u32 %s8581, 4
          %s8594 = int_to_ptr.vmem [resolvable:$true] %s8593
          %8599 = dma.vmem_to_hbm [thread:$0]  %s8594, 2048, %s8592, %s8578, 128, 128, 8
        $region160: #{tpu_custom_call.1} parent=71 // pred_fallthru
          _
      $region72: #{tpu_custom_call.1} parent=5 // pred_fallthru
        _
      %p8600 = scmp.le.s32.totalorder 2, %s31
      // Predicated region
      $region161: #{tpu_custom_call.1} parent=5 // pred_check
        %p8601 = pneg %p8600
      $region162: #{tpu_custom_call.1} parent=5 // pred_check_branch
        %8603 = sbr.rel (%p8601) target = $region164
      $region163: #{tpu_custom_call.1} parent=5 // pred_region
        %s8604 = ssub.s32 %s31, 2
        // Predicated region
        $region165: #{tpu_custom_call.1} parent=163 // pred_check
          %p8605 = pneg %p352
        $region166: #{tpu_custom_call.1} parent=163 // pred_check_branch
          %8607 = sbr.rel (%p8605) target = $region168
        $region167: #{tpu_custom_call.1} parent=163 // pred_region
          %s8608 = sand.u32 %s337, 1
          %s8609 = scalar_lea.sflag [#allocation8], %s8608
          %s8610 = sand.u32 %s337, 1
          %s8611 = smul.addr %s8610, 128
          %s8612 = scalar_lea.vmem [#allocation27], %s8611
          %8613 = dma.done %s8609, 2048
        $region168: #{tpu_custom_call.1} parent=163 // pred_fallthru
          _
      $region164: #{tpu_custom_call.1} parent=5 // pred_fallthru
        _
    $region6: #{tpu_custom_call.1} parent=1 // loop_footer
      %s35 = sadd.s32 1, %s31
    $region7: #{tpu_custom_call.1} parent=1 // loop_footer_branch
      %30 = sbr.rel target = $region3
    $region8: #{tpu_custom_call.1} parent=1 // loop_exit
      _
    %8614 = vsyncpa [#allocation7], 1
    %s8615 = scalar_lea.sflag [#allocation7], 1
    %8616 = vsyncpa %s8615, 1
    %8617 = vsyncpa [#allocation10], 1
    %8618 = vsyncpa [#allocation13], 1
    %8619 = vsyncpa [#allocation16], 1
    %8620 = vsyncpa [#allocation19], 1
    %8621 = vsyncpa [#allocation22], 1
    %8622 = vsyncpa [#allocation25], 1
    %8623 = vsyncpa [#allocation8], 1
    %s8624 = scalar_lea.sflag [#allocation8], 1
    %8625 = vsyncpa %s8624, 1

</llo_original>
